<compile_context>
chip_gen: v5e
topology: v5e:2x2
jax: 0.10.0
libtpu: 0.0.40
codegen_flags: <defaults>
</compile_context>

<pallas_src>
import jax
import jax.numpy as jnp
from jax import lax
from jax.experimental import pallas as pl
from jax.experimental.pallas import tpu as pltpu

NETWORK_DEPTH_3D = 4
BITS_CHANNEL_3D = 3 * NETWORK_DEPTH_3D           # 12
FEATURE_CHANNEL_3D = 2
LAYER2_CH = 64 * FEATURE_CHANNEL_3D              # 128
LAYER3_CH = 128 * FEATURE_CHANNEL_3D             # 256

# (Cin, Cout, kernel, stride, padding, output_padding) -- mirrors self.convt_par
CONVT_PAR = [
    (BITS_CHANNEL_3D, 128 * FEATURE_CHANNEL_3D, (4, 3, 3), (1, 2, 2), (1, 1, 1), (0, 1, 1)),
    (LAYER3_CH,       64 * FEATURE_CHANNEL_3D,  (4, 3, 3), (1, 2, 2), (1, 1, 1), (0, 1, 1)),
    (LAYER2_CH,       32 * FEATURE_CHANNEL_3D,  (4, 3, 3), (1, 2, 2), (1, 1, 1), (0, 1, 1)),
    (32 * FEATURE_CHANNEL_3D, 3,                (4, 3, 3), (1, 2, 2), (1, 1, 1), (0, 1, 1)),
]

KT = 4   # temporal kernel extent; spatial kernel is 3x3

# (output phase, input row/col offset) -> original (temporally/spatially flipped)
# kernel tap used by that phase; missing entries contribute zero.
_PHASE_TAP = {(0, 0): 1, (1, 0): 2, (1, 1): 0}

_ACC_BUDGET = 512 * 1024   # target size (bytes) of the f32 accumulator scratch


def _round_up(x, m):
    return ((x + m - 1) // m) * m


def _layer_cfg(cin, cout):
    fold_all = (16 * cin <= 256)        # layer 1: fold kt/dh/dw into K (-> 256)
    transpose_out = (4 * cout < 128)    # layer 4: lane-dense transposed matmul
    return fold_all, transpose_out


# ----------------------------------------------------------------------------
# Weight packing (done once, outside the per-call hot path)
# ----------------------------------------------------------------------------
def _tap(w, koff, dh, dw, ph, pw):
    cin, cout = int(w.shape[0]), int(w.shape[1])
    kh = _PHASE_TAP.get((ph, dh))
    kw = _PHASE_TAP.get((pw, dw))
    if kh is None or kw is None:
        return jnp.zeros((cin, cout), jnp.float32)
    return w[:, :, KT - 1 - koff, kh, kw].astype(jnp.float32)


def _pack_weights(w, b, fold_all, transpose_out):
    """Pack a PyTorch ConvTranspose3d weight (Cin, Cout, 4, 3, 3) into bf16.

    Non-folded layers: wp (8, 2*Cin, 4*Cout), leading dim = kt*2 + dw,
                       rows ordered (dh, ci), cols ordered (ph, pw, co).
      (last layer:     wp (8, 4*Cout, 2*Cin) -- transposed for lane-dense out)
    Layer 1 (fold_all): wp (1, Kpad, 4*Cout), rows (kt, dh, dw, ci) padded to 256.
    Bias is replicated over the 4 output phases.
    """
    cin, cout = int(w.shape[0]), int(w.shape[1])
    c4 = 4 * cout

    def tap_cols(koff, dh, dw):   # (cin, c4), columns ordered (ph, pw, co)
        return jnp.concatenate(
            [_tap(w, koff, dh, dw, ph, pw) for ph in range(2) for pw in range(2)],
            axis=1)

    if fold_all:
        mat = jnp.concatenate(
            [tap_cols(koff, dh, dw)
             for koff in range(KT) for dh in range(2) for dw in range(2)],
            axis=0)                                        # (16*cin, c4)
        kdim = _round_up(mat.shape[0], 128)
        mat = jnp.pad(mat, ((0, kdim - mat.shape[0]), (0, 0)))
        wp = mat[None]                                     # (1, kdim, c4)
    else:
        mats = []
        for koff in range(KT):
            for dw in range(2):
                m = jnp.concatenate(
                    [tap_cols(koff, dh, dw) for dh in range(2)], axis=0)   # (2*cin, c4)
                mats.append(m.T if transpose_out else m)
        wp = jnp.stack(mats, axis=0)                       # (8, 2*cin, c4) / (8, c4, 2*cin)

    bias = jnp.tile(b.astype(jnp.float32), 4)
    b4 = bias.reshape(c4, 1) if transpose_out else bias.reshape(1, c4)
    return wp.astype(jnp.bfloat16), b4


def prepare_params(params):
    """Pre-flip/fold/cast all layer weights once."""
    packed = []
    for (w, b), (cin, cout, *_rest) in zip(params, CONVT_PAR):
        fold_all, transpose_out = _layer_cfg(cin, cout)
        packed.append(_pack_weights(w, b, fold_all, transpose_out))
    return packed


# ----------------------------------------------------------------------------
# Pallas kernel: stride-1 phase conv, accumulated over the kt grid axis
# ----------------------------------------------------------------------------
def _make_kernel(n_kt, n_dw, th, wt, wc, kdim, c4, transpose_out):
    rows = th * wc

    def kernel(x_ref, w_ref, b_ref, o_ref, acc_ref):
        # x_ref  : (1, 1, th, wt, kdim) bf16 -- one (batch, t_in, H-tile) window
        # w_ref  : (n_kt*n_dw, kdim, c4) bf16   [or (.., c4, kdim) transposed]
        # b_ref  : (1, c4) f32                  [or (c4, 1)]
        # o_ref  : (1, 1, th, wc, c4) bf16      [or (1, 1, c4, th*wc) f32]
        # acc_ref: (rows, c4) f32 VMEM scratch  [or (c4, rows)]
        k = pl.program_id(3)

        @pl.when(k == 0)
        def _init():
            acc_ref[...] = jnp.zeros_like(acc_ref)

        for dw in range(n_dw):
            if n_dw == 1:
                slab = x_ref[0, 0, :, :, :]                    # (th, wc, kdim)
            else:
                # dw in {0, 1}: statically shifted W window inside the block
                slab = x_ref[0, 0, :, dw:dw + wc, :]           # (th, wc, kdim)
            flat = slab.reshape(rows, kdim)
            wmat = w_ref[k * n_dw + dw]
            if transpose_out:
                # (c4, K) x (rows, K)^T -> (c4, rows): lane-dense result
                acc_ref[...] += lax.dot_general(
                    wmat, flat, (((1,), (1,)), ((), ())),
                    preferred_element_type=jnp.float32)
            else:
                acc_ref[...] += jnp.dot(flat, wmat,
                                        preferred_element_type=jnp.float32)

        @pl.when(k == n_kt - 1)
        def _finalize():
            y = jnp.maximum(acc_ref[...] + b_ref[...], 0.0)
            if transpose_out:
                o_ref[...] = y.reshape(1, 1, c4, rows).astype(o_ref.dtype)
            else:
                o_ref[...] = y.reshape(1, 1, th, wc, c4).astype(o_ref.dtype)

    return kernel


def _choose_th(h, wcols, c4, transpose_out):
    """Largest divisor of H whose tile keeps rows ~128-512 and the f32
    accumulator under ~512 KiB."""
    if transpose_out:
        rows_max = 512
    else:
        rows_max = min(512, max(8, _ACC_BUDGET // (4 * c4)))
    rows_max = max(rows_max, wcols)                      # th = 1 always possible
    divs = [d for d in range(1, h + 1) if h % d == 0]
    cands = [d for d in divs if d * wcols <= rows_max] or [1]
    if transpose_out:
        # the flattened (th*wcols) output block tiles the last array dim, so it
        # must be a multiple of 128 unless it covers the whole dim (th == h).
        ok = [d for d in cands if (d * wcols) % 128 == 0]
        return max(ok) if ok else h
    return max(cands)


# ----------------------------------------------------------------------------
# One ConvTranspose3d + ReLU layer
# ----------------------------------------------------------------------------
def convtranspose3d_relu(x, wp, b4, cout, fold_all, transpose_out):
    """x: (N, T, H, W, Cin) bf16.  Returns (N, T+1, 2H, 2W, Cout) bf16 (NDHWC),
    or for the transposed last layer the final (N, Cout, T+1, 2H, 2W) f32."""
    n, t, h, w, cin = x.shape
    to = t + 1
    c4 = 4 * cout

    if fold_all:
        # layer 1: fold kt / dh / dw into the contraction dim (K -> 256)
        n_kt, n_dw = 1, 1
        wc = _round_up(w, 16)
        wt = wc
        xp = jnp.pad(x, ((0, 0), (2, 2), (0, 1), (0, 1), (0, 0)))
        xdw = jnp.concatenate([xp[:, :, :, 0:w, :], xp[:, :, :, 1:w + 1, :]], axis=-1)
        xdh = jnp.concatenate([xdw[:, :, 0:h, :, :], xdw[:, :, 1:h + 1, :, :]], axis=-1)
        xf = jnp.concatenate([xdh[:, k:k + to] for k in range(KT)], axis=-1)
        kdim = int(wp.shape[1])
        xf = jnp.pad(xf, ((0, 0), (0, 0), (0, 0),
                          (0, wt - w), (0, kdim - xf.shape[-1])))
    else:
        # fold only dh into K (halo-free H tiles); dw comes from an in-block
        # shifted slice, kt from the innermost grid axis.
        n_kt, n_dw = KT, 2
        wc = _round_up(w, 16)
        wt = wc + 8                         # room for the +1 conv pad column
        xp = jnp.pad(x, ((0, 0), (2, 2), (0, 1), (0, wt - w), (0, 0)))
        xf = jnp.concatenate([xp[:, :, 0:h, :, :], xp[:, :, 1:h + 1, :, :]], axis=-1)
        kdim = 2 * cin

    xf = xf.astype(jnp.bfloat16)
    th = _choose_th(h, wc, c4, transpose_out)
    rows = th * wc
    grid = (n, to, h // th, n_kt)

    in_specs = [
        pl.BlockSpec((1, 1, th, wt, kdim),
                     lambda ni, ti, hi, k: (ni, ti + k, hi, 0, 0)),
        # weights / bias never change: full-array blocks, fetched once.
        pl.BlockSpec(wp.shape, lambda ni, ti, hi, k: (0, 0, 0)),
        pl.BlockSpec(b4.shape, lambda ni, ti, hi, k: (0, 0)),
    ]
    if transpose_out:
        out_shape = jax.ShapeDtypeStruct((n, to, c4, h * wc), jnp.float32)
        out_spec = pl.BlockSpec((1, 1, c4, rows),
                                lambda ni, ti, hi, k: (ni, ti, 0, hi))
        acc_shape = (c4, rows)
    else:
        out_shape = jax.ShapeDtypeStruct((n, to, h, wc, c4), jnp.bfloat16)
        out_spec = pl.BlockSpec((1, 1, th, wc, c4),
                                lambda ni, ti, hi, k: (ni, ti, hi, 0, 0))
        acc_shape = (rows, c4)

    y = pl.pallas_call(
        _make_kernel(n_kt, n_dw, th, wt, wc, kdim, c4, transpose_out),
        out_shape=out_shape,
        grid_spec=pltpu.PrefetchScalarGridSpec(
            num_scalar_prefetch=0,
            grid=grid,
            in_specs=in_specs,
            out_specs=out_spec,
            scratch_shapes=[pltpu.VMEM(acc_shape, jnp.float32)],
        ),
        compiler_params=pltpu.CompilerParams(
            # N / T / H-tile steps are independent (megacore can shard them);
            # the kt axis accumulates into scratch -> arbitrary (and last).
            dimension_semantics=("parallel", "parallel", "parallel", "arbitrary"),
        ),
    )(xf, wp, b4)

    if transpose_out:
        # (n, to, (ph,pw,co), h*wc) -> crop W -> fused depth-to-space + NCDHW
        y = y.reshape(n, to, c4, h, wc)[:, :, :, :, :w]
        y = y.reshape(n, to, 2, 2, cout, h, w)
        y = y.transpose(0, 4, 1, 5, 2, 6, 3).reshape(n, cout, to, 2 * h, 2 * w)
        return y
    # (n, to, h, wc, (ph,pw,co)) -> crop W -> depth-to-space (NDHWC, next layer)
    y = y[:, :, :, :w, :]
    y = y.reshape(n, to, h, w, 2, 2, cout)
    y = y.transpose(0, 1, 2, 4, 3, 5, 6).reshape(n, to, 2 * h, 2 * w, cout)
    return y


@jax.jit
def video_decoder_forward(x_ncdhw, packed_params):
    """VideoDecoder forward: (N, 12, T, H, W) f32 -> (N, 3, T+4, 16H, 16W) f32."""
    x = jnp.transpose(x_ncdhw, (0, 2, 3, 4, 1)).astype(jnp.bfloat16)   # -> NDHWC
    for (wp, b4), (cin, cout, *_rest) in zip(packed_params, CONVT_PAR):
        fold_all, transpose_out = _layer_cfg(cin, cout)
        x = convtranspose3d_relu(x, wp, b4, cout, fold_all, transpose_out)
    return x   # last (transposed) layer already returns NCDHW f32


def video_decoder_reference(x_ncdhw, params):
    """Pure-JAX (XLA conv, f32 HIGHEST) reference for correctness checking."""
    x = jnp.transpose(x_ncdhw, (0, 2, 3, 4, 1))
    for (w, b), (_, _, k, s, p, op) in zip(params, CONVT_PAR):
        wf = jnp.flip(w, axis=(2, 3, 4)).transpose(2, 3, 4, 0, 1)
        pads = [(k[i] - 1 - p[i], k[i] - 1 - p[i] + op[i]) for i in range(3)]
        y = jax.lax.conv_general_dilated(
            x, wf, window_strides=(1, 1, 1), padding=pads,
            lhs_dilation=s, rhs_dilation=(1, 1, 1),
            dimension_numbers=("NDHWC", "DHWIO", "NDHWC"),
            precision=jax.lax.Precision.HIGHEST,
        )
        x = jnp.maximum(y + b, 0.0)
    return jnp.transpose(x, (0, 4, 1, 2, 3))


if __name__ == "__main__":
    key = jax.random.PRNGKey(0)
    keys = jax.random.split(key, 9)

    # Small latent input consistent with the decoder: (N, BITS_CHANNEL_3D, T, H, W)
    N, T, H, W = 2, 2, 4, 4
    x = jax.random.normal(keys[0], (N, BITS_CHANNEL_3D, T, H, W), jnp.float32)

    # Deterministic synthetic parameters (PyTorch ConvTranspose3d weight layout:
    # (Cin, Cout, kT, kH, kW); bias: (Cout,)).
    params = []
    for i, (cin, cout, k, _, _, _) in enumerate(CONVT_PAR):
        w = 0.05 * jax.random.normal(keys[1 + 2 * i], (cin, cout) + k, jnp.float32)
        b = 0.05 * jax.random.normal(keys[2 + 2 * i], (cout,), jnp.float32)
        params.append((w, b))

    packed = prepare_params(params)

    y = jax.block_until_ready(video_decoder_forward(x, packed))
    assert y.shape == (N, 3, T + 4, 16 * H, 16 * W), y.shape

    y_ref = jax.block_until_ready(video_decoder_reference(x, params))
    max_err = float(jnp.max(jnp.abs(y - y_ref)))
    # bf16 matmul operands (f32 accumulation) across 4 stacked conv layers vs a
    # full-f32 HIGHEST reference: allow 2% of the output dynamic range.
    tol = 2e-2 * (1.0 + float(jnp.max(jnp.abs(y_ref))))
    assert max_err < tol, f"mismatch vs reference: {max_err} >= {tol}"

    print("KERNEL_OK")
</pallas_src>

<mosaic_0001>
module attributes {stable_mosaic.version = 11 : i64} {
  func.func @kernel(%arg0: i32, %arg1: i32, %arg2: i32, %arg3: i32, %arg4: memref<1x1x4x16x256xbf16, #tpu.memory_space<vmem>>, %arg5: memref<1x256x1024xbf16, #tpu.memory_space<vmem>>, %arg6: memref<1x1024xf32, #tpu.memory_space<vmem>>, %arg7: memref<1x1x4x16x1024xbf16, #tpu.memory_space<vmem>>, %arg8: memref<64x1024xf32, #tpu.memory_space<vmem>>) attributes {dimension_semantics = [#tpu.dimension_semantics<parallel>, #tpu.dimension_semantics<parallel>, #tpu.dimension_semantics<parallel>, #tpu.dimension_semantics<arbitrary>], iteration_bounds = array<i64: 2, 3, 1, 1>, scalar_prefetch = 0 : i64, scratch_operands = 1 : i64, tpu.core_type = #tpu.core_type<tc>, window_params = [{transform_indices = @transform_0, window_bounds = array<i64: 1, 1, 4, 16, 256>}, {pipeline_mode = #tpu.pipeline_mode<synchronous>, transform_indices = @transform_1, window_bounds = array<i64: 1, 256, 1024>}, {pipeline_mode = #tpu.pipeline_mode<synchronous>, transform_indices = @transform_2, window_bounds = array<i64: 1, 1024>}, {transform_indices = @transform_3, window_bounds = array<i64: 1, 1, 4, 16, 1024>}]} {
    %c0_i32 = arith.constant 0 : i32
    %0 = arith.cmpi eq, %arg3, %c0_i32 : i32
    %1 = arith.extui %0 : i1 to i32
    %c0_i32_0 = arith.constant 0 : i32
    %2 = arith.cmpi ne, %1, %c0_i32_0 : i32
    scf.if %2 {
      %cst_14 = arith.constant 0.000000e+00 : f32
      %18 = vector.broadcast %cst_14 : f32 to vector<64x1024xf32>
      %c0_15 = arith.constant 0 : index
      %c0_16 = arith.constant 0 : index
      %19 = vector.load %arg8[%c0_15, %c0_16] : memref<64x1024xf32, #tpu.memory_space<vmem>>, vector<64x1024xf32>
      tpu.vector_store %arg8[%c0_15, %c0_16], %18 {strides = array<i32>} : memref<64x1024xf32, #tpu.memory_space<vmem>>, vector<64x1024xf32>,
    } else {
    }
    %c0 = arith.constant 0 : index
    %c0_1 = arith.constant 0 : index
    %c0_2 = arith.constant 0 : index
    %c0_3 = arith.constant 0 : index
    %c0_4 = arith.constant 0 : index
    %3 = vector.load %arg4[%c0, %c0_1, %c0_2, %c0_3, %c0_4] : memref<1x1x4x16x256xbf16, #tpu.memory_space<vmem>>, vector<1x1x4x16x256xbf16>
    %4 = vector.shape_cast %3 : vector<1x1x4x16x256xbf16> to vector<4x16x256xbf16>
    %5 = vector.shape_cast %4 : vector<4x16x256xbf16> to vector<64x256xbf16>
    %c1_i32 = arith.constant 1 : i32
    %6 = arith.muli %arg3, %c1_i32 : i32
    %c0_i32_5 = arith.constant 0 : i32
    %7 = arith.addi %6, %c0_i32_5 : i32
    %8 = arith.index_cast %7 : i32 to index
    %c0_6 = arith.constant 0 : index
    %c0_7 = arith.constant 0 : index
    %9 = vector.load %arg5[%8, %c0_6, %c0_7] : memref<1x256x1024xbf16, #tpu.memory_space<vmem>>, vector<1x256x1024xbf16>
    %10 = vector.shape_cast %9 : vector<1x256x1024xbf16> to vector<256x1024xbf16>
    %c0_8 = arith.constant 0 : index
    %c0_9 = arith.constant 0 : index
    %11 = vector.load %arg8[%c0_8, %c0_9] : memref<64x1024xf32, #tpu.memory_space<vmem>>, vector<64x1024xf32>
    %cst = arith.constant dense<0.000000e+00> : vector<64x1024xf32>
    %12 = tpu.matmul %5, %10, %cst {dimension_numbers = #tpu.dot_dimension_numbers<[1], [0], [0], [1], [0, 0, 1, 1], [], []>} : vector<64x256xbf16>, vector<256x1024xbf16>, vector<64x1024xf32> -> vector<64x1024xf32>
    %13 = arith.addf %11, %12 : vector<64x1024xf32>
    %c0_10 = arith.constant 0 : index
    %c0_11 = arith.constant 0 : index
    %14 = vector.load %arg8[%c0_10, %c0_11] : memref<64x1024xf32, #tpu.memory_space<vmem>>, vector<64x1024xf32>
    tpu.vector_store %arg8[%c0_10, %c0_11], %13 {strides = array<i32>} : memref<64x1024xf32, #tpu.memory_space<vmem>>, vector<64x1024xf32>,
    %c0_i32_12 = arith.constant 0 : i32
    %15 = arith.cmpi eq, %arg3, %c0_i32_12 : i32
    %16 = arith.extui %15 : i1 to i32
    %c0_i32_13 = arith.constant 0 : i32
    %17 = arith.cmpi ne, %16, %c0_i32_13 : i32
    scf.if %17 {
      %c0_14 = arith.constant 0 : index
      %c0_15 = arith.constant 0 : index
      %18 = vector.load %arg8[%c0_14, %c0_15] : memref<64x1024xf32, #tpu.memory_space<vmem>>, vector<64x1024xf32>
      %c0_16 = arith.constant 0 : index
      %c0_17 = arith.constant 0 : index
      %19 = vector.load %arg6[%c0_16, %c0_17] : memref<1x1024xf32, #tpu.memory_space<vmem>>, vector<1x1024xf32>
      %20 = vector.broadcast %19 : vector<1x1024xf32> to vector<64x1024xf32>
      %21 = arith.addf %18, %20 : vector<64x1024xf32>
      %cst_18 = arith.constant 0.000000e+00 : f32
      %22 = vector.broadcast %cst_18 : f32 to vector<64x1024xf32>
      %23 = arith.maximumf %21, %22 : vector<64x1024xf32>
      %24 = vector.shape_cast %23 : vector<64x1024xf32> to vector<1x1x4x16x1024xf32>
      %25 = arith.truncf %24 : vector<1x1x4x16x1024xf32> to vector<1x1x4x16x1024xbf16>
      %c0_19 = arith.constant 0 : index
      %c0_20 = arith.constant 0 : index
      %c0_21 = arith.constant 0 : index
      %c0_22 = arith.constant 0 : index
      %c0_23 = arith.constant 0 : index
      %26 = vector.load %arg7[%c0_19, %c0_20, %c0_21, %c0_22, %c0_23] : memref<1x1x4x16x1024xbf16, #tpu.memory_space<vmem>>, vector<1x1x4x16x1024xbf16>
      tpu.vector_store %arg7[%c0_19, %c0_20, %c0_21, %c0_22, %c0_23], %25 {strides = array<i32>} : memref<1x1x4x16x1024xbf16, #tpu.memory_space<vmem>>, vector<1x1x4x16x1024xbf16>,
    } else {
    }
    return
  }
  func.func @transform_0(%arg0: i32, %arg1: i32, %arg2: i32, %arg3: i32) -> (i32, i32, i32, i32, i32) {
    %0 = arith.addi %arg1, %arg3 : i32
    %c0_i32 = arith.constant 0 : i32
    %c0_i32_0 = arith.constant 0 : i32
    %c0_i32_1 = arith.constant 0 : i32
    return %arg0, %0, %arg2, %c0_i32, %c0_i32_0 : i32, i32, i32, i32, i32
  }
  func.func @transform_1(%arg0: i32, %arg1: i32, %arg2: i32, %arg3: i32) -> (i32, i32, i32) {
    %c0_i32 = arith.constant 0 : i32
    %c0_i32_0 = arith.constant 0 : i32
    %c0_i32_1 = arith.constant 0 : i32
    %c0_i32_2 = arith.constant 0 : i32
    return %c0_i32, %c0_i32_0, %c0_i32_1 : i32, i32, i32
  }
  func.func @transform_2(%arg0: i32, %arg1: i32, %arg2: i32, %arg3: i32) -> (i32, i32) {
    %c0_i32 = arith.constant 0 : i32
    %c0_i32_0 = arith.constant 0 : i32
    %c0_i32_1 = arith.constant 0 : i32
    return %c0_i32, %c0_i32_0 : i32, i32
  }
  func.func @transform_3(%arg0: i32, %arg1: i32, %arg2: i32, %arg3: i32) -> (i32, i32, i32, i32, i32) {
    %c0_i32 = arith.constant 0 : i32
    %c0_i32_0 = arith.constant 0 : i32
    %c0_i32_1 = arith.constant 0 : i32
    return %arg0, %arg1, %arg2, %c0_i32, %c0_i32_0 : i32, i32, i32, i32, i32
  }
}

module attributes {stable_mosaic.version = 11 : i64} {
  func.func @kernel(%arg0: i32, %arg1: i32, %arg2: i32, %arg3: i32, %arg4: memref<1x1x8x24x512xbf16, #tpu.memory_space<vmem>>, %arg5: memref<8x512x512xbf16, #tpu.memory_space<vmem>>, %arg6: memref<1x512xf32, #tpu.memory_space<vmem>>, %arg7: memref<1x1x8x16x512xbf16, #tpu.memory_space<vmem>>, %arg8: memref<128x512xf32, #tpu.memory_space<vmem>>) attributes {dimension_semantics = [#tpu.dimension_semantics<parallel>, #tpu.dimension_semantics<parallel>, #tpu.dimension_semantics<parallel>, #tpu.dimension_semantics<arbitrary>], iteration_bounds = array<i64: 2, 4, 1, 4>, scalar_prefetch = 0 : i64, scratch_operands = 1 : i64, tpu.core_type = #tpu.core_type<tc>, window_params = [{transform_indices = @transform_0, window_bounds = array<i64: 1, 1, 8, 24, 512>}, {pipeline_mode = #tpu.pipeline_mode<synchronous>, transform_indices = @transform_1, window_bounds = array<i64: 8, 512, 512>}, {pipeline_mode = #tpu.pipeline_mode<synchronous>, transform_indices = @transform_2, window_bounds = array<i64: 1, 512>}, {transform_indices = @transform_3, window_bounds = array<i64: 1, 1, 8, 16, 512>}]} {
    %c0_i32 = arith.constant 0 : i32
    %0 = arith.cmpi eq, %arg3, %c0_i32 : i32
    %1 = arith.extui %0 : i1 to i32
    %c0_i32_0 = arith.constant 0 : i32
    %2 = arith.cmpi ne, %1, %c0_i32_0 : i32
    scf.if %2 {
      %cst_25 = arith.constant 0.000000e+00 : f32
      %30 = vector.broadcast %cst_25 : f32 to vector<128x512xf32>
      %c0_26 = arith.constant 0 : index
      %c0_27 = arith.constant 0 : index
      %31 = vector.load %arg8[%c0_26, %c0_27] : memref<128x512xf32, #tpu.memory_space<vmem>>, vector<128x512xf32>
      tpu.vector_store %arg8[%c0_26, %c0_27], %30 {strides = array<i32>} : memref<128x512xf32, #tpu.memory_space<vmem>>, vector<128x512xf32>,
    } else {
    }
    %c0 = arith.constant 0 : index
    %c0_1 = arith.constant 0 : index
    %c0_2 = arith.constant 0 : index
    %c0_3 = arith.constant 0 : index
    %c0_4 = arith.constant 0 : index
    %3 = vector.load %arg4[%c0, %c0_1, %c0_2, %c0_3, %c0_4] : memref<1x1x8x24x512xbf16, #tpu.memory_space<vmem>>, vector<1x1x8x16x512xbf16>
    %4 = vector.shape_cast %3 : vector<1x1x8x16x512xbf16> to vector<8x16x512xbf16>
    %5 = vector.shape_cast %4 : vector<8x16x512xbf16> to vector<128x512xbf16>
    %c2_i32 = arith.constant 2 : i32
    %6 = arith.muli %arg3, %c2_i32 : i32
    %c0_i32_5 = arith.constant 0 : i32
    %7 = arith.addi %6, %c0_i32_5 : i32
    %8 = arith.index_cast %7 : i32 to index
    %c0_6 = arith.constant 0 : index
    %c0_7 = arith.constant 0 : index
    %9 = vector.load %arg5[%8, %c0_6, %c0_7] : memref<8x512x512xbf16, #tpu.memory_space<vmem>>, vector<1x512x512xbf16>
    %10 = vector.shape_cast %9 : vector<1x512x512xbf16> to vector<512x512xbf16>
    %c0_8 = arith.constant 0 : index
    %c0_9 = arith.constant 0 : index
    %11 = vector.load %arg8[%c0_8, %c0_9] : memref<128x512xf32, #tpu.memory_space<vmem>>, vector<128x512xf32>
    %cst = arith.constant dense<0.000000e+00> : vector<128x512xf32>
    %12 = tpu.matmul %5, %10, %cst {dimension_numbers = #tpu.dot_dimension_numbers<[1], [0], [0], [1], [0, 0, 1, 1], [], []>} : vector<128x512xbf16>, vector<512x512xbf16>, vector<128x512xf32> -> vector<128x512xf32>
    %13 = arith.addf %11, %12 : vector<128x512xf32>
    %c0_10 = arith.constant 0 : index
    %c0_11 = arith.constant 0 : index
    %14 = vector.load %arg8[%c0_10, %c0_11] : memref<128x512xf32, #tpu.memory_space<vmem>>, vector<128x512xf32>
    tpu.vector_store %arg8[%c0_10, %c0_11], %13 {strides = array<i32>} : memref<128x512xf32, #tpu.memory_space<vmem>>, vector<128x512xf32>,
    %c0_12 = arith.constant 0 : index
    %c0_13 = arith.constant 0 : index
    %c0_14 = arith.constant 0 : index
    %c1 = arith.constant 1 : index
    %c0_15 = arith.constant 0 : index
    %15 = vector.load %arg4[%c0_12, %c0_13, %c0_14, %c1, %c0_15] : memref<1x1x8x24x512xbf16, #tpu.memory_space<vmem>>, vector<1x1x8x16x512xbf16>
    %16 = vector.shape_cast %15 : vector<1x1x8x16x512xbf16> to vector<8x16x512xbf16>
    %17 = vector.shape_cast %16 : vector<8x16x512xbf16> to vector<128x512xbf16>
    %c2_i32_16 = arith.constant 2 : i32
    %18 = arith.muli %arg3, %c2_i32_16 : i32
    %c1_i32 = arith.constant 1 : i32
    %19 = arith.addi %18, %c1_i32 : i32
    %20 = arith.index_cast %19 : i32 to index
    %c0_17 = arith.constant 0 : index
    %c0_18 = arith.constant 0 : index
    %21 = vector.load %arg5[%20, %c0_17, %c0_18] : memref<8x512x512xbf16, #tpu.memory_space<vmem>>, vector<1x512x512xbf16>
    %22 = vector.shape_cast %21 : vector<1x512x512xbf16> to vector<512x512xbf16>
    %c0_19 = arith.constant 0 : index
    %c0_20 = arith.constant 0 : index
    %23 = vector.load %arg8[%c0_19, %c0_20] : memref<128x512xf32, #tpu.memory_space<vmem>>, vector<128x512xf32>
    %cst_21 = arith.constant dense<0.000000e+00> : vector<128x512xf32>
    %24 = tpu.matmul %17, %22, %cst_21 {dimension_numbers = #tpu.dot_dimension_numbers<[1], [0], [0], [1], [0, 0, 1, 1], [], []>} : vector<128x512xbf16>, vector<512x512xbf16>, vector<128x512xf32> -> vector<128x512xf32>
    %25 = arith.addf %23, %24 : vector<128x512xf32>
    %c0_22 = arith.constant 0 : index
    %c0_23 = arith.constant 0 : index
    %26 = vector.load %arg8[%c0_22, %c0_23] : memref<128x512xf32, #tpu.memory_space<vmem>>, vector<128x512xf32>
    tpu.vector_store %arg8[%c0_22, %c0_23], %25 {strides = array<i32>} : memref<128x512xf32, #tpu.memory_space<vmem>>, vector<128x512xf32>,
    %c3_i32 = arith.constant 3 : i32
    %27 = arith.cmpi eq, %arg3, %c3_i32 : i32
    %28 = arith.extui %27 : i1 to i32
    %c0_i32_24 = arith.constant 0 : i32
    %29 = arith.cmpi ne, %28, %c0_i32_24 : i32
    scf.if %29 {
      %c0_25 = arith.constant 0 : index
      %c0_26 = arith.constant 0 : index
      %30 = vector.load %arg8[%c0_25, %c0_26] : memref<128x512xf32, #tpu.memory_space<vmem>>, vector<128x512xf32>
      %c0_27 = arith.constant 0 : index
      %c0_28 = arith.constant 0 : index
      %31 = vector.load %arg6[%c0_27, %c0_28] : memref<1x512xf32, #tpu.memory_space<vmem>>, vector<1x512xf32>
      %32 = vector.broadcast %31 : vector<1x512xf32> to vector<128x512xf32>
      %33 = arith.addf %30, %32 : vector<128x512xf32>
      %cst_29 = arith.constant 0.000000e+00 : f32
      %34 = vector.broadcast %cst_29 : f32 to vector<128x512xf32>
      %35 = arith.maximumf %33, %34 : vector<128x512xf32>
      %36 = vector.shape_cast %35 : vector<128x512xf32> to vector<1x1x8x16x512xf32>
      %37 = arith.truncf %36 : vector<1x1x8x16x512xf32> to vector<1x1x8x16x512xbf16>
      %c0_30 = arith.constant 0 : index
      %c0_31 = arith.constant 0 : index
      %c0_32 = arith.constant 0 : index
      %c0_33 = arith.constant 0 : index
      %c0_34 = arith.constant 0 : index
      %38 = vector.load %arg7[%c0_30, %c0_31, %c0_32, %c0_33, %c0_34] : memref<1x1x8x16x512xbf16, #tpu.memory_space<vmem>>, vector<1x1x8x16x512xbf16>
      tpu.vector_store %arg7[%c0_30, %c0_31, %c0_32, %c0_33, %c0_34], %37 {strides = array<i32>} : memref<1x1x8x16x512xbf16, #tpu.memory_space<vmem>>, vector<1x1x8x16x512xbf16>,
    } else {
    }
    return
  }
  func.func @transform_0(%arg0: i32, %arg1: i32, %arg2: i32, %arg3: i32) -> (i32, i32, i32, i32, i32) {
    %0 = arith.addi %arg1, %arg3 : i32
    %c0_i32 = arith.constant 0 : i32
    %c0_i32_0 = arith.constant 0 : i32
    %c0_i32_1 = arith.constant 0 : i32
    return %arg0, %0, %arg2, %c0_i32, %c0_i32_0 : i32, i32, i32, i32, i32
  }
  func.func @transform_1(%arg0: i32, %arg1: i32, %arg2: i32, %arg3: i32) -> (i32, i32, i32) {
    %c0_i32 = arith.constant 0 : i32
    %c0_i32_0 = arith.constant 0 : i32
    %c0_i32_1 = arith.constant 0 : i32
    %c0_i32_2 = arith.constant 0 : i32
    return %c0_i32, %c0_i32_0, %c0_i32_1 : i32, i32, i32
  }
  func.func @transform_2(%arg0: i32, %arg1: i32, %arg2: i32, %arg3: i32) -> (i32, i32) {
    %c0_i32 = arith.constant 0 : i32
    %c0_i32_0 = arith.constant 0 : i32
    %c0_i32_1 = arith.constant 0 : i32
    return %c0_i32, %c0_i32_0 : i32, i32
  }
  func.func @transform_3(%arg0: i32, %arg1: i32, %arg2: i32, %arg3: i32) -> (i32, i32, i32, i32, i32) {
    %c0_i32 = arith.constant 0 : i32
    %c0_i32_0 = arith.constant 0 : i32
    %c0_i32_1 = arith.constant 0 : i32
    return %arg0, %arg1, %arg2, %c0_i32, %c0_i32_0 : i32, i32, i32, i32, i32
  }
}

module attributes {stable_mosaic.version = 11 : i64} {
  func.func @kernel(%arg0: i32, %arg1: i32, %arg2: i32, %arg3: i32, %arg4: memref<1x1x16x24x256xbf16, #tpu.memory_space<vmem>>, %arg5: memref<8x256x256xbf16, #tpu.memory_space<vmem>>, %arg6: memref<1x256xf32, #tpu.memory_space<vmem>>, %arg7: memref<1x1x16x16x256xbf16, #tpu.memory_space<vmem>>, %arg8: memref<256x256xf32, #tpu.memory_space<vmem>>) attributes {dimension_semantics = [#tpu.dimension_semantics<parallel>, #tpu.dimension_semantics<parallel>, #tpu.dimension_semantics<parallel>, #tpu.dimension_semantics<arbitrary>], iteration_bounds = array<i64: 2, 5, 1, 4>, scalar_prefetch = 0 : i64, scratch_operands = 1 : i64, tpu.core_type = #tpu.core_type<tc>, window_params = [{transform_indices = @transform_0, window_bounds = array<i64: 1, 1, 16, 24, 256>}, {pipeline_mode = #tpu.pipeline_mode<synchronous>, transform_indices = @transform_1, window_bounds = array<i64: 8, 256, 256>}, {pipeline_mode = #tpu.pipeline_mode<synchronous>, transform_indices = @transform_2, window_bounds = array<i64: 1, 256>}, {transform_indices = @transform_3, window_bounds = array<i64: 1, 1, 16, 16, 256>}]} {
    %c0_i32 = arith.constant 0 : i32
    %0 = arith.cmpi eq, %arg3, %c0_i32 : i32
    %1 = arith.extui %0 : i1 to i32
    %c0_i32_0 = arith.constant 0 : i32
    %2 = arith.cmpi ne, %1, %c0_i32_0 : i32
    scf.if %2 {
      %cst_25 = arith.constant 0.000000e+00 : f32
      %30 = vector.broadcast %cst_25 : f32 to vector<256x256xf32>
      %c0_26 = arith.constant 0 : index
      %c0_27 = arith.constant 0 : index
      %31 = vector.load %arg8[%c0_26, %c0_27] : memref<256x256xf32, #tpu.memory_space<vmem>>, vector<256x256xf32>
      tpu.vector_store %arg8[%c0_26, %c0_27], %30 {strides = array<i32>} : memref<256x256xf32, #tpu.memory_space<vmem>>, vector<256x256xf32>,
    } else {
    }
    %c0 = arith.constant 0 : index
    %c0_1 = arith.constant 0 : index
    %c0_2 = arith.constant 0 : index
    %c0_3 = arith.constant 0 : index
    %c0_4 = arith.constant 0 : index
    %3 = vector.load %arg4[%c0, %c0_1, %c0_2, %c0_3, %c0_4] : memref<1x1x16x24x256xbf16, #tpu.memory_space<vmem>>, vector<1x1x16x16x256xbf16>
    %4 = vector.shape_cast %3 : vector<1x1x16x16x256xbf16> to vector<16x16x256xbf16>
    %5 = vector.shape_cast %4 : vector<16x16x256xbf16> to vector<256x256xbf16>
    %c2_i32 = arith.constant 2 : i32
    %6 = arith.muli %arg3, %c2_i32 : i32
    %c0_i32_5 = arith.constant 0 : i32
    %7 = arith.addi %6, %c0_i32_5 : i32
    %8 = arith.index_cast %7 : i32 to index
    %c0_6 = arith.constant 0 : index
    %c0_7 = arith.constant 0 : index
    %9 = vector.load %arg5[%8, %c0_6, %c0_7] : memref<8x256x256xbf16, #tpu.memory_space<vmem>>, vector<1x256x256xbf16>
    %10 = vector.shape_cast %9 : vector<1x256x256xbf16> to vector<256x256xbf16>
    %c0_8 = arith.constant 0 : index
    %c0_9 = arith.constant 0 : index
    %11 = vector.load %arg8[%c0_8, %c0_9] : memref<256x256xf32, #tpu.memory_space<vmem>>, vector<256x256xf32>
    %cst = arith.constant dense<0.000000e+00> : vector<256x256xf32>
    %12 = tpu.matmul %5, %10, %cst {dimension_numbers = #tpu.dot_dimension_numbers<[1], [0], [0], [1], [0, 0, 1, 1], [], []>} : vector<256x256xbf16>, vector<256x256xbf16>, vector<256x256xf32> -> vector<256x256xf32>
    %13 = arith.addf %11, %12 : vector<256x256xf32>
    %c0_10 = arith.constant 0 : index
    %c0_11 = arith.constant 0 : index
    %14 = vector.load %arg8[%c0_10, %c0_11] : memref<256x256xf32, #tpu.memory_space<vmem>>, vector<256x256xf32>
    tpu.vector_store %arg8[%c0_10, %c0_11], %13 {strides = array<i32>} : memref<256x256xf32, #tpu.memory_space<vmem>>, vector<256x256xf32>,
    %c0_12 = arith.constant 0 : index
    %c0_13 = arith.constant 0 : index
    %c0_14 = arith.constant 0 : index
    %c1 = arith.constant 1 : index
    %c0_15 = arith.constant 0 : index
    %15 = vector.load %arg4[%c0_12, %c0_13, %c0_14, %c1, %c0_15] : memref<1x1x16x24x256xbf16, #tpu.memory_space<vmem>>, vector<1x1x16x16x256xbf16>
    %16 = vector.shape_cast %15 : vector<1x1x16x16x256xbf16> to vector<16x16x256xbf16>
    %17 = vector.shape_cast %16 : vector<16x16x256xbf16> to vector<256x256xbf16>
    %c2_i32_16 = arith.constant 2 : i32
    %18 = arith.muli %arg3, %c2_i32_16 : i32
    %c1_i32 = arith.constant 1 : i32
    %19 = arith.addi %18, %c1_i32 : i32
    %20 = arith.index_cast %19 : i32 to index
    %c0_17 = arith.constant 0 : index
    %c0_18 = arith.constant 0 : index
    %21 = vector.load %arg5[%20, %c0_17, %c0_18] : memref<8x256x256xbf16, #tpu.memory_space<vmem>>, vector<1x256x256xbf16>
    %22 = vector.shape_cast %21 : vector<1x256x256xbf16> to vector<256x256xbf16>
    %c0_19 = arith.constant 0 : index
    %c0_20 = arith.constant 0 : index
    %23 = vector.load %arg8[%c0_19, %c0_20] : memref<256x256xf32, #tpu.memory_space<vmem>>, vector<256x256xf32>
    %cst_21 = arith.constant dense<0.000000e+00> : vector<256x256xf32>
    %24 = tpu.matmul %17, %22, %cst_21 {dimension_numbers = #tpu.dot_dimension_numbers<[1], [0], [0], [1], [0, 0, 1, 1], [], []>} : vector<256x256xbf16>, vector<256x256xbf16>, vector<256x256xf32> -> vector<256x256xf32>
    %25 = arith.addf %23, %24 : vector<256x256xf32>
    %c0_22 = arith.constant 0 : index
    %c0_23 = arith.constant 0 : index
    %26 = vector.load %arg8[%c0_22, %c0_23] : memref<256x256xf32, #tpu.memory_space<vmem>>, vector<256x256xf32>
    tpu.vector_store %arg8[%c0_22, %c0_23], %25 {strides = array<i32>} : memref<256x256xf32, #tpu.memory_space<vmem>>, vector<256x256xf32>,
    %c3_i32 = arith.constant 3 : i32
    %27 = arith.cmpi eq, %arg3, %c3_i32 : i32
    %28 = arith.extui %27 : i1 to i32
    %c0_i32_24 = arith.constant 0 : i32
    %29 = arith.cmpi ne, %28, %c0_i32_24 : i32
    scf.if %29 {
      %c0_25 = arith.constant 0 : index
      %c0_26 = arith.constant 0 : index
      %30 = vector.load %arg8[%c0_25, %c0_26] : memref<256x256xf32, #tpu.memory_space<vmem>>, vector<256x256xf32>
      %c0_27 = arith.constant 0 : index
      %c0_28 = arith.constant 0 : index
      %31 = vector.load %arg6[%c0_27, %c0_28] : memref<1x256xf32, #tpu.memory_space<vmem>>, vector<1x256xf32>
      %32 = vector.broadcast %31 : vector<1x256xf32> to vector<256x256xf32>
      %33 = arith.addf %30, %32 : vector<256x256xf32>
      %cst_29 = arith.constant 0.000000e+00 : f32
      %34 = vector.broadcast %cst_29 : f32 to vector<256x256xf32>
      %35 = arith.maximumf %33, %34 : vector<256x256xf32>
      %36 = vector.shape_cast %35 : vector<256x256xf32> to vector<1x1x16x16x256xf32>
      %37 = arith.truncf %36 : vector<1x1x16x16x256xf32> to vector<1x1x16x16x256xbf16>
      %c0_30 = arith.constant 0 : index
      %c0_31 = arith.constant 0 : index
      %c0_32 = arith.constant 0 : index
      %c0_33 = arith.constant 0 : index
      %c0_34 = arith.constant 0 : index
      %38 = vector.load %arg7[%c0_30, %c0_31, %c0_32, %c0_33, %c0_34] : memref<1x1x16x16x256xbf16, #tpu.memory_space<vmem>>, vector<1x1x16x16x256xbf16>
      tpu.vector_store %arg7[%c0_30, %c0_31, %c0_32, %c0_33, %c0_34], %37 {strides = array<i32>} : memref<1x1x16x16x256xbf16, #tpu.memory_space<vmem>>, vector<1x1x16x16x256xbf16>,
    } else {
    }
    return
  }
  func.func @transform_0(%arg0: i32, %arg1: i32, %arg2: i32, %arg3: i32) -> (i32, i32, i32, i32, i32) {
    %0 = arith.addi %arg1, %arg3 : i32
    %c0_i32 = arith.constant 0 : i32
    %c0_i32_0 = arith.constant 0 : i32
    %c0_i32_1 = arith.constant 0 : i32
    return %arg0, %0, %arg2, %c0_i32, %c0_i32_0 : i32, i32, i32, i32, i32
  }
  func.func @transform_1(%arg0: i32, %arg1: i32, %arg2: i32, %arg3: i32) -> (i32, i32, i32) {
    %c0_i32 = arith.constant 0 : i32
    %c0_i32_0 = arith.constant 0 : i32
    %c0_i32_1 = arith.constant 0 : i32
    %c0_i32_2 = arith.constant 0 : i32
    return %c0_i32, %c0_i32_0, %c0_i32_1 : i32, i32, i32
  }
  func.func @transform_2(%arg0: i32, %arg1: i32, %arg2: i32, %arg3: i32) -> (i32, i32) {
    %c0_i32 = arith.constant 0 : i32
    %c0_i32_0 = arith.constant 0 : i32
    %c0_i32_1 = arith.constant 0 : i32
    return %c0_i32, %c0_i32_0 : i32, i32
  }
  func.func @transform_3(%arg0: i32, %arg1: i32, %arg2: i32, %arg3: i32) -> (i32, i32, i32, i32, i32) {
    %c0_i32 = arith.constant 0 : i32
    %c0_i32_0 = arith.constant 0 : i32
    %c0_i32_1 = arith.constant 0 : i32
    return %arg0, %arg1, %arg2, %c0_i32, %c0_i32_0 : i32, i32, i32, i32, i32
  }
}

module attributes {stable_mosaic.version = 11 : i64} {
  func.func @kernel(%arg0: i32, %arg1: i32, %arg2: i32, %arg3: i32, %arg4: memref<1x1x16x40x128xbf16, #tpu.memory_space<vmem>>, %arg5: memref<8x12x128xbf16, #tpu.memory_space<vmem>>, %arg6: memref<12x1xf32, #tpu.memory_space<vmem>>, %arg7: memref<1x1x12x512xf32, #tpu.memory_space<vmem>>, %arg8: memref<12x512xf32, #tpu.memory_space<vmem>>) attributes {dimension_semantics = [#tpu.dimension_semantics<parallel>, #tpu.dimension_semantics<parallel>, #tpu.dimension_semantics<parallel>, #tpu.dimension_semantics<arbitrary>], iteration_bounds = array<i64: 2, 6, 2, 4>, scalar_prefetch = 0 : i64, scratch_operands = 1 : i64, tpu.core_type = #tpu.core_type<tc>, window_params = [{transform_indices = @transform_0, window_bounds = array<i64: 1, 1, 16, 40, 128>}, {pipeline_mode = #tpu.pipeline_mode<synchronous>, transform_indices = @transform_1, window_bounds = array<i64: 8, 12, 128>}, {pipeline_mode = #tpu.pipeline_mode<synchronous>, transform_indices = @transform_2, window_bounds = array<i64: 12, 1>}, {transform_indices = @transform_3, window_bounds = array<i64: 1, 1, 12, 512>}]} {
    %c0_i32 = arith.constant 0 : i32
    %0 = arith.cmpi eq, %arg3, %c0_i32 : i32
    %1 = arith.extui %0 : i1 to i32
    %c0_i32_0 = arith.constant 0 : i32
    %2 = arith.cmpi ne, %1, %c0_i32_0 : i32
    scf.if %2 {
      %cst_25 = arith.constant 0.000000e+00 : f32
      %30 = vector.broadcast %cst_25 : f32 to vector<12x512xf32>
      %c0_26 = arith.constant 0 : index
      %c0_27 = arith.constant 0 : index
      %31 = vector.load %arg8[%c0_26, %c0_27] : memref<12x512xf32, #tpu.memory_space<vmem>>, vector<12x512xf32>
      tpu.vector_store %arg8[%c0_26, %c0_27], %30 {strides = array<i32>} : memref<12x512xf32, #tpu.memory_space<vmem>>, vector<12x512xf32>,
    } else {
    }
    %c0 = arith.constant 0 : index
    %c0_1 = arith.constant 0 : index
    %c0_2 = arith.constant 0 : index
    %c0_3 = arith.constant 0 : index
    %c0_4 = arith.constant 0 : index
    %3 = vector.load %arg4[%c0, %c0_1, %c0_2, %c0_3, %c0_4] : memref<1x1x16x40x128xbf16, #tpu.memory_space<vmem>>, vector<1x1x16x32x128xbf16>
    %4 = vector.shape_cast %3 : vector<1x1x16x32x128xbf16> to vector<16x32x128xbf16>
    %5 = vector.shape_cast %4 : vector<16x32x128xbf16> to vector<512x128xbf16>
    %c2_i32 = arith.constant 2 : i32
    %6 = arith.muli %arg3, %c2_i32 : i32
    %c0_i32_5 = arith.constant 0 : i32
    %7 = arith.addi %6, %c0_i32_5 : i32
    %8 = arith.index_cast %7 : i32 to index
    %c0_6 = arith.constant 0 : index
    %c0_7 = arith.constant 0 : index
    %9 = vector.load %arg5[%8, %c0_6, %c0_7] : memref<8x12x128xbf16, #tpu.memory_space<vmem>>, vector<1x12x128xbf16>
    %10 = vector.shape_cast %9 : vector<1x12x128xbf16> to vector<12x128xbf16>
    %c0_8 = arith.constant 0 : index
    %c0_9 = arith.constant 0 : index
    %11 = vector.load %arg8[%c0_8, %c0_9] : memref<12x512xf32, #tpu.memory_space<vmem>>, vector<12x512xf32>
    %cst = arith.constant dense<0.000000e+00> : vector<12x512xf32>
    %12 = tpu.matmul %10, %5, %cst {dimension_numbers = #tpu.dot_dimension_numbers<[1], [1], [0], [0], [0, 0, 1, 0], [], []>} : vector<12x128xbf16>, vector<512x128xbf16>, vector<12x512xf32> -> vector<12x512xf32>
    %13 = arith.addf %11, %12 : vector<12x512xf32>
    %c0_10 = arith.constant 0 : index
    %c0_11 = arith.constant 0 : index
    %14 = vector.load %arg8[%c0_10, %c0_11] : memref<12x512xf32, #tpu.memory_space<vmem>>, vector<12x512xf32>
    tpu.vector_store %arg8[%c0_10, %c0_11], %13 {strides = array<i32>} : memref<12x512xf32, #tpu.memory_space<vmem>>, vector<12x512xf32>,
    %c0_12 = arith.constant 0 : index
    %c0_13 = arith.constant 0 : index
    %c0_14 = arith.constant 0 : index
    %c1 = arith.constant 1 : index
    %c0_15 = arith.constant 0 : index
    %15 = vector.load %arg4[%c0_12, %c0_13, %c0_14, %c1, %c0_15] : memref<1x1x16x40x128xbf16, #tpu.memory_space<vmem>>, vector<1x1x16x32x128xbf16>
    %16 = vector.shape_cast %15 : vector<1x1x16x32x128xbf16> to vector<16x32x128xbf16>
    %17 = vector.shape_cast %16 : vector<16x32x128xbf16> to vector<512x128xbf16>
    %c2_i32_16 = arith.constant 2 : i32
    %18 = arith.muli %arg3, %c2_i32_16 : i32
    %c1_i32 = arith.constant 1 : i32
    %19 = arith.addi %18, %c1_i32 : i32
    %20 = arith.index_cast %19 : i32 to index
    %c0_17 = arith.constant 0 : index
    %c0_18 = arith.constant 0 : index
    %21 = vector.load %arg5[%20, %c0_17, %c0_18] : memref<8x12x128xbf16, #tpu.memory_space<vmem>>, vector<1x12x128xbf16>
    %22 = vector.shape_cast %21 : vector<1x12x128xbf16> to vector<12x128xbf16>
    %c0_19 = arith.constant 0 : index
    %c0_20 = arith.constant 0 : index
    %23 = vector.load %arg8[%c0_19, %c0_20] : memref<12x512xf32, #tpu.memory_space<vmem>>, vector<12x512xf32>
    %cst_21 = arith.constant dense<0.000000e+00> : vector<12x512xf32>
    %24 = tpu.matmul %22, %17, %cst_21 {dimension_numbers = #tpu.dot_dimension_numbers<[1], [1], [0], [0], [0, 0, 1, 0], [], []>} : vector<12x128xbf16>, vector<512x128xbf16>, vector<12x512xf32> -> vector<12x512xf32>
    %25 = arith.addf %23, %24 : vector<12x512xf32>
    %c0_22 = arith.constant 0 : index
    %c0_23 = arith.constant 0 : index
    %26 = vector.load %arg8[%c0_22, %c0_23] : memref<12x512xf32, #tpu.memory_space<vmem>>, vector<12x512xf32>
    tpu.vector_store %arg8[%c0_22, %c0_23], %25 {strides = array<i32>} : memref<12x512xf32, #tpu.memory_space<vmem>>, vector<12x512xf32>,
    %c3_i32 = arith.constant 3 : i32
    %27 = arith.cmpi eq, %arg3, %c3_i32 : i32
    %28 = arith.extui %27 : i1 to i32
    %c0_i32_24 = arith.constant 0 : i32
    %29 = arith.cmpi ne, %28, %c0_i32_24 : i32
    scf.if %29 {
      %c0_25 = arith.constant 0 : index
      %c0_26 = arith.constant 0 : index
      %30 = vector.load %arg8[%c0_25, %c0_26] : memref<12x512xf32, #tpu.memory_space<vmem>>, vector<12x512xf32>
      %c0_27 = arith.constant 0 : index
      %c0_28 = arith.constant 0 : index
      %31 = vector.load %arg6[%c0_27, %c0_28] : memref<12x1xf32, #tpu.memory_space<vmem>>, vector<12x1xf32>
      %32 = vector.broadcast %31 : vector<12x1xf32> to vector<12x512xf32>
      %33 = arith.addf %30, %32 : vector<12x512xf32>
      %cst_29 = arith.constant 0.000000e+00 : f32
      %34 = vector.broadcast %cst_29 : f32 to vector<12x512xf32>
      %35 = arith.maximumf %33, %34 : vector<12x512xf32>
      %36 = vector.shape_cast %35 : vector<12x512xf32> to vector<1x1x12x512xf32>
      %c0_30 = arith.constant 0 : index
      %c0_31 = arith.constant 0 : index
      %c0_32 = arith.constant 0 : index
      %c0_33 = arith.constant 0 : index
      %37 = vector.load %arg7[%c0_30, %c0_31, %c0_32, %c0_33] : memref<1x1x12x512xf32, #tpu.memory_space<vmem>>, vector<1x1x12x512xf32>
      tpu.vector_store %arg7[%c0_30, %c0_31, %c0_32, %c0_33], %36 {strides = array<i32>} : memref<1x1x12x512xf32, #tpu.memory_space<vmem>>, vector<1x1x12x512xf32>,
    } else {
    }
    return
  }
  func.func @transform_0(%arg0: i32, %arg1: i32, %arg2: i32, %arg3: i32) -> (i32, i32, i32, i32, i32) {
    %0 = arith.addi %arg1, %arg3 : i32
    %c0_i32 = arith.constant 0 : i32
    %c0_i32_0 = arith.constant 0 : i32
    %c0_i32_1 = arith.constant 0 : i32
    return %arg0, %0, %arg2, %c0_i32, %c0_i32_0 : i32, i32, i32, i32, i32
  }
  func.func @transform_1(%arg0: i32, %arg1: i32, %arg2: i32, %arg3: i32) -> (i32, i32, i32) {
    %c0_i32 = arith.constant 0 : i32
    %c0_i32_0 = arith.constant 0 : i32
    %c0_i32_1 = arith.constant 0 : i32
    %c0_i32_2 = arith.constant 0 : i32
    return %c0_i32, %c0_i32_0, %c0_i32_1 : i32, i32, i32
  }
  func.func @transform_2(%arg0: i32, %arg1: i32, %arg2: i32, %arg3: i32) -> (i32, i32) {
    %c0_i32 = arith.constant 0 : i32
    %c0_i32_0 = arith.constant 0 : i32
    %c0_i32_1 = arith.constant 0 : i32
    return %c0_i32, %c0_i32_0 : i32, i32
  }
  func.func @transform_3(%arg0: i32, %arg1: i32, %arg2: i32, %arg3: i32) -> (i32, i32, i32, i32) {
    %c0_i32 = arith.constant 0 : i32
    %c0_i32_0 = arith.constant 0 : i32
    return %arg0, %arg1, %c0_i32, %arg2 : i32, i32, i32, i32
  }
}

</mosaic_0001>

<llo_original>
// kernel: video_decoder_forward.4
$region0: #{video_decoder_forward.4}
  #allocation0 [shape = 'u32[]', space=smem, size = 0x4, offset = 0x4, fixed_abs, tag = 'smem constant byte address 0x4 - core index']
  #allocation1 [shape = 'u32[72,128]{1,0:T(1,128)}', space=vmem, size = 0x9000, scoped, tag = 'internal scratch']
  #allocation2 [shape = 'f32[64,1024]{1,0:T(8,128)}', space=vmem, size = 0x40000, scoped, tag = 'scratch operand']
  %s0 = inlined_call_operand.vmem [shape: bf16[2,3,4,16,256], index: 0, kind: input, shape index: {}]
  %s1 = inlined_call_operand.hbm [shape: bf16[1,256,1024], index: 1, kind: input, shape index: {}]
  %s2 = inlined_call_operand.hbm [shape: f32[1,1024], index: 2, kind: input, shape index: {}]
  %s3 = inlined_call_operand.vmem [shape: bf16[2,3,4,16,1024], index: 3, kind: output, shape index: {}]
  %s4 = sld [smem:[#allocation0]]
  $region61: #{video_decoder_forward.4} parent=0
    _
  %s6 = ssub.s32 1, %s4
  %s7 = scalar_select 0, %s6, %s4
  $region1: #{video_decoder_forward.4} parent=0
    #allocation3 [shape = 'u8[524288]{0}', space=vmem, size = 0x80000, scoped, tag = 'input window, operand 1, single buffered']
    #allocation4 [shape = 's32[2]{0}', space=sflag, size = 0x8, scoped, tag = 'scoped memory for video_decoder_forward.4']
    #allocation5 [shape = 'u8[4096]{0}', space=vmem, size = 0x1000, scoped, tag = 'input window, operand 2, single buffered']
    #allocation6 [shape = 's32[1]{0}', space=sflag, size = 0x4, scoped, tag = 'scoped memory for video_decoder_forward.4']
    %8 = vsyncpa [#allocation4], 0
    %9 = vsyncpa [#allocation6], 0
    loop: start=0, step=1, limit=8
    $region2: #{video_decoder_forward.4} parent=1 // loop_pre_header
      _
    $region3: #{video_decoder_forward.4} parent=1 // loop_header
      %s11 = sphi 0, %s15
      %p12 = scmp.ge.s32.totalorder %s11, 8
      %s18 = sphi 0, %s44
      %s19 = sphi 0, %s40
      %s20 = sphi 0, %s36
      %s21 = sphi 0, %s32
      %s22 = sphi 0, %s18
      %s23 = sphi 0, %s19
      %s24 = sphi 0, %s20
      %s25 = sphi 0, %s21
      %s26 = sphi 0, %s22
      %s27 = sphi 0, %s23
      %s28 = sphi 0, %s24
      %s29 = sphi 0, %s25
      %s53 = sphi 0, %s55
      %s56 = sphi 0, %s53
      %s57 = sphi 0, %s56
      %s73 = sphi 0, %s57
      %s77 = sphi 0, %s77
      %s79 = sphi 0, %s77
      %s80 = sphi 0, %s79
      %s94 = sphi 0, %s80
      %s98 = sphi 0, %s98
      %s100 = sphi 0, %s98
      %s101 = sphi 0, %s100
      %s115 = sphi 0, %s101
      %s125 = sphi 0, %s127
      %s128 = sphi 0, %s125
      %s129 = sphi 0, %s128
      %s145 = sphi 0, %s129
    $region4: #{video_decoder_forward.4} parent=1 // loop_header_branch
      %14 = sbr.rel (%p12) target = $region8
    $region5: #{video_decoder_forward.4} parent=1 // loop_body
      %s16 = ssub.s32 %s11, 1
      %s17 = ssub.s32 %s11, 2
      %s30 = sadd.s32 1, %s21
      %p31 = scmp.ge.s32.totalorder %s30, 1
      %s32 = scalar_select %p31, 0, %s30
      %s33 = sadd.s32 1, %s20
      %s34 = scalar_select %p31, %s33, %s20
      %p35 = scmp.ge.s32.totalorder %s34, 1
      %s36 = scalar_select %p35, 0, %s34
      %s37 = sadd.s32 1, %s19
      %s38 = scalar_select %p35, %s37, %s19
      %p39 = scmp.ge.s32.totalorder %s38, 3
      %s40 = scalar_select %p39, 0, %s38
      %s41 = sadd.s32 1, %s18
      %s42 = scalar_select %p39, %s41, %s18
      %p43 = scmp.ge.s32.totalorder %s42, 2
      %s44 = scalar_select %p43, 0, %s42
      %s45 = sadd.s32 %s19, %s21
      %s46 = sadd.s32 %s40, %s32
      %s47 = ssub.s32 %s18, %s44
      %s48 = ssub.s32 %s45, %s46
      %s49 = sor.u32 %s47, %s48
      %s50 = ssub.s32 %s20, %s36
      %s51 = sor.u32 %s49, %s50
      %p52 = scmp.eq.s32.totalorder %s51, 0
      %s54 = sadd.s32 %s53, 1
      %s55 = scalar_select %p52, %s53, %s54
      %p58 = pneg %p52
      %p59 = scmp.eq.s32.totalorder %s11, 5
      %p60 = por %p58, %p59
      %p61 = scmp.ne.s32.totalorder %s53, %s56
      %p62 = scmp.eq.s32.totalorder %s11, 0
      %p63 = por %p61, %p62
      %p64 = scmp.ne.s32.totalorder %s53, %s56
      %p65 = scmp.eq.s32.totalorder %s16, 5
      %p66 = por %p64, %p65
      %p67 = scmp.ne.s32.totalorder %s56, %s57
      %p68 = scmp.eq.s32.totalorder %s16, 0
      %p69 = por %p67, %p68
      %p70 = scmp.ne.s32.totalorder %s56, %s57
      %p71 = scmp.eq.s32.totalorder %s17, 5
      %p72 = por %p70, %p71
      %p74 = scmp.ne.s32.totalorder %s57, %s73
      %p75 = scmp.eq.s32.totalorder %s17, 0
      %p76 = por %p74, %p75
      %s78 = sadd.s32 %s77, 1
      %p81 = scmp.eq.s32.totalorder %s11, 5
      %p82 = scmp.ne.s32.totalorder %s77, %s79
      %p83 = scmp.eq.s32.totalorder %s11, 0
      %p84 = por %p82, %p83
      %p85 = scmp.ne.s32.totalorder %s77, %s79
      %p86 = scmp.eq.s32.totalorder %s16, 5
      %p87 = por %p85, %p86
      %p88 = scmp.ne.s32.totalorder %s79, %s80
      %p89 = scmp.eq.s32.totalorder %s16, 0
      %p90 = por %p88, %p89
      %p91 = scmp.ne.s32.totalorder %s79, %s80
      %p92 = scmp.eq.s32.totalorder %s17, 5
      %p93 = por %p91, %p92
      %p95 = scmp.ne.s32.totalorder %s80, %s94
      %p96 = scmp.eq.s32.totalorder %s17, 0
      %p97 = por %p95, %p96
      %s99 = sadd.s32 %s98, 1
      %p102 = scmp.eq.s32.totalorder %s11, 5
      %p103 = scmp.ne.s32.totalorder %s98, %s100
      %p104 = scmp.eq.s32.totalorder %s11, 0
      %p105 = por %p103, %p104
      %p106 = scmp.ne.s32.totalorder %s98, %s100
      %p107 = scmp.eq.s32.totalorder %s16, 5
      %p108 = por %p106, %p107
      %p109 = scmp.ne.s32.totalorder %s100, %s101
      %p110 = scmp.eq.s32.totalorder %s16, 0
      %p111 = por %p109, %p110
      %p112 = scmp.ne.s32.totalorder %s100, %s101
      %p113 = scmp.eq.s32.totalorder %s17, 5
      %p114 = por %p112, %p113
      %p116 = scmp.ne.s32.totalorder %s101, %s115
      %p117 = scmp.eq.s32.totalorder %s17, 0
      %p118 = por %p116, %p117
      %s119 = ssub.s32 %s18, %s44
      %s120 = ssub.s32 %s19, %s40
      %s121 = sor.u32 %s119, %s120
      %s122 = ssub.s32 %s20, %s36
      %s123 = sor.u32 %s121, %s122
      %p124 = scmp.eq.s32.totalorder %s123, 0
      %s126 = sadd.s32 %s125, 1
      %s127 = scalar_select %p124, %s125, %s126
      %p130 = pneg %p124
      %p131 = scmp.eq.s32.totalorder %s11, 5
      %p132 = por %p130, %p131
      %p133 = scmp.ne.s32.totalorder %s125, %s128
      %p134 = scmp.eq.s32.totalorder %s11, 0
      %p135 = por %p133, %p134
      %p136 = scmp.ne.s32.totalorder %s125, %s128
      %p137 = scmp.eq.s32.totalorder %s16, 5
      %p138 = por %p136, %p137
      %p139 = scmp.ne.s32.totalorder %s128, %s129
      %p140 = scmp.eq.s32.totalorder %s16, 0
      %p141 = por %p139, %p140
      %p142 = scmp.ne.s32.totalorder %s128, %s129
      %p143 = scmp.eq.s32.totalorder %s17, 5
      %p144 = por %p142, %p143
      %p146 = scmp.ne.s32.totalorder %s129, %s145
      %p147 = scmp.eq.s32.totalorder %s17, 0
      %p148 = por %p146, %p147
      %p149 = scmp.le.s32.totalorder 1, %s11
      %p150 = scmp.lt.s32.totalorder %s11, 7
      %p151 = pnand %p149, %p150
      %p152 = pneg %p151
      // Predicated region
      $region9: #{video_decoder_forward.4} parent=5 // pred_check
        _
      $region10: #{video_decoder_forward.4} parent=5 // pred_check_branch
        %154 = sbr.rel (%p151) target = $region12
      $region11: #{video_decoder_forward.4} parent=5 // pred_region
        %s155 = ssub.s32 %s11, 1
        // Predicated region
        $region13: #{video_decoder_forward.4} parent=11 // pred_check
          %p156 = pneg %p90
        $region14: #{video_decoder_forward.4} parent=11 // pred_check_branch
          %158 = sbr.rel (%p156) target = $region16
        $region15: #{video_decoder_forward.4} parent=11 // pred_region
          %160 = vsyncadd [#allocation4], 0
          %s161 = sshll.u32 %s1, 4
          %s162 = int_to_ptr.hbm [resolvable:$true] %s161
          %s163 = sshll.u32 [#allocation3], 4
          %s164 = int_to_ptr.vmem [resolvable:$true] %s163
          %169 = dma.hbm_to_vmem [thread:$0]  %s162, 16384, %s164, [#allocation4], 512, 512, 32
        $region16: #{video_decoder_forward.4} parent=11 // pred_fallthru
          _
        // Predicated region
        $region17: #{video_decoder_forward.4} parent=11 // pred_check
          %p170 = pneg %p111
        $region18: #{video_decoder_forward.4} parent=11 // pred_check_branch
          %172 = sbr.rel (%p170) target = $region20
        $region19: #{video_decoder_forward.4} parent=11 // pred_region
          %174 = vsyncadd [#allocation6], 0
          %s176 = sshll.u32 %s2, 4
          %s177 = int_to_ptr.hbm [resolvable:$true] %s176
          %s178 = sshll.u32 [#allocation5], 4
          %s179 = int_to_ptr.vmem [resolvable:$true] %s178
          %181 = dma.hbm_to_vmem [thread:$0]  %s177, 128, %s179, [#allocation6]
        $region20: #{video_decoder_forward.4} parent=11 // pred_fallthru
          _
      $region12: #{video_decoder_forward.4} parent=5 // pred_fallthru
        _
      %p182 = scmp.lt.s32.totalorder %s11, 6
      // Predicated region
      $region21: #{video_decoder_forward.4} parent=5 // pred_check
        %p183 = pneg %p182
      $region22: #{video_decoder_forward.4} parent=5 // pred_check_branch
        %185 = sbr.rel (%p183) target = $region24
      $region23: #{video_decoder_forward.4} parent=5 // pred_region
        // Predicated region
        $region25: #{video_decoder_forward.4} parent=23 // pred_check
          %p186 = pneg %p63
        $region26: #{video_decoder_forward.4} parent=23 // pred_check_branch
          %188 = sbr.rel (%p186) target = $region28
        $region27: #{video_decoder_forward.4} parent=23 // pred_region
          %s189 = sadd.s32 %s19, %s21
          %s190 = smul.u32 4, %s20
          %p191 = scmp.lt.s32.totalorder %s18, 1
          %s192 = scalar_select %p191, %s18, 1
          %p193 = scmp.lt.s32.totalorder %s189, 2
          %s194 = scalar_select %p193, %s189, 2
          %p195 = scmp.lt.s32.totalorder %s190, 3
          %s196 = scalar_select %p195, %s190, 3
          %s197 = smul.addr %s196, 4
          %s198 = smul.addr %s194, 16
          %s199 = sadd.s32 %s197, %s198
          %s200 = smul.addr %s192, 48
          %s201 = sadd.s32 %s199, %s200
          %s202 = smul.addr %s201, 4
          %s203 = scalar_lea.vmem %s0, %s202
          %s204 = sadd.s32 %s19, %s21
          %s205 = smul.u32 4, %s20
        $region28: #{video_decoder_forward.4} parent=23 // pred_fallthru
          _
      $region24: #{video_decoder_forward.4} parent=5 // pred_fallthru
        _
      %p206 = scmp.le.s32.totalorder 1, %s11
      %p207 = scmp.lt.s32.totalorder %s11, 7
      %p208 = pnand %p206, %p207
      %p209 = pneg %p208
      // Predicated region
      $region29: #{video_decoder_forward.4} parent=5 // pred_check
        _
      $region30: #{video_decoder_forward.4} parent=5 // pred_check_branch
        %211 = sbr.rel (%p208) target = $region32
      $region31: #{video_decoder_forward.4} parent=5 // pred_region
        %s212 = ssub.s32 %s11, 1
        // Predicated region
        $region33: #{video_decoder_forward.4} parent=31 // pred_check
          %p213 = pneg %p90
        $region34: #{video_decoder_forward.4} parent=31 // pred_check_branch
          %215 = sbr.rel (%p213) target = $region36
        $region35: #{video_decoder_forward.4} parent=31 // pred_region
          %217 = dma.done [#allocation4], 16384
        $region36: #{video_decoder_forward.4} parent=31 // pred_fallthru
          _
        // Predicated region
        $region37: #{video_decoder_forward.4} parent=31 // pred_check
          %p218 = pneg %p111
        $region38: #{video_decoder_forward.4} parent=31 // pred_check_branch
          %220 = sbr.rel (%p218) target = $region40
        $region39: #{video_decoder_forward.4} parent=31 // pred_region
          %222 = dma.done [#allocation6], 128
        $region40: #{video_decoder_forward.4} parent=31 // pred_fallthru
          _
        %s223 = sadd.s32 %s23, %s25
        %s224 = smul.u32 4, %s24
        %p225 = scmp.lt.s32.totalorder %s22, 1
        %s226 = scalar_select %p225, %s22, 1
        %p227 = scmp.lt.s32.totalorder %s223, 2
        %s228 = scalar_select %p227, %s223, 2
        %p229 = scmp.lt.s32.totalorder %s224, 3
        %s230 = scalar_select %p229, %s224, 3
        %s231 = smul.addr %s230, 4
        %s232 = smul.addr %s228, 16
        %s233 = sadd.s32 %s231, %s232
        %s234 = smul.addr %s226, 48
        %s235 = sadd.s32 %s233, %s234
        %s236 = smul.addr %s235, 4
        %s237 = scalar_lea.vmem %s0, %s236
        %p238 = pneg %p69
        %p239 = pneg %p66
        %p240 = pneg %p90
        %p241 = pneg %p87
        %p242 = pneg %p111
        %p243 = pneg %p108
        %p244 = pneg %p141
        %p245 = pneg %p138
        %s246 = smul.u32 4, %s24
        %p247 = scmp.lt.s32.totalorder %s22, 1
        %s248 = scalar_select %p247, %s22, 1
        %p249 = scmp.lt.s32.totalorder %s23, 2
        %s250 = scalar_select %p249, %s23, 2
        %p251 = scmp.lt.s32.totalorder %s246, 3
        %s252 = scalar_select %p251, %s246, 3
        %s253 = smul.addr %s252, 16
        %s254 = smul.addr %s250, 64
        %s255 = sadd.s32 %s253, %s254
        %s256 = smul.addr %s248, 192
        %s257 = sadd.s32 %s255, %s256
        %s258 = smul.addr %s257, 4
        %s259 = scalar_lea.vmem %s3, %s258
        %s260 = sadd.s32 %s23, %s25
        %s261 = smul.u32 4, %s24
        %p262 = scmp.lt.s32.totalorder %s22, 1
        %s263 = scalar_select %p262, %s22, 1
        %p264 = scmp.lt.s32.totalorder %s260, 2
        %s265 = scalar_select %p264, %s260, 2
        %p266 = scmp.lt.s32.totalorder %s261, 3
        %s267 = scalar_select %p266, %s261, 3
        %s268 = smul.addr %s267, 4
        %s269 = smul.addr %s265, 16
        %s270 = sadd.s32 %s268, %s269
        %s271 = smul.addr %s263, 48
        %s272 = sadd.s32 %s270, %s271
        %s273 = smul.addr %s272, 4
        %s274 = scalar_lea.vmem %s0, %s273
        %s275 = sadd.s32 %s23, %s25
        %s276 = smul.u32 4, %s24
        %s277 = smul.u32 4, %s24
        %p278 = scmp.lt.s32.totalorder %s22, 1
        %s279 = scalar_select %p278, %s22, 1
        %p280 = scmp.lt.s32.totalorder %s23, 2
        %s281 = scalar_select %p280, %s23, 2
        %p282 = scmp.lt.s32.totalorder %s277, 3
        %s283 = scalar_select %p282, %s277, 3
        %s284 = smul.addr %s283, 16
        %s285 = smul.addr %s281, 64
        %s286 = sadd.s32 %s284, %s285
        %s287 = smul.addr %s279, 192
        %s288 = sadd.s32 %s286, %s287
        %s289 = smul.addr %s288, 4
        %s290 = scalar_lea.vmem %s3, %s289
        %s291 = smul.u32 4, %s24
        %p292 = scmp.eq.s32.totalorder %s25, 0
        // Predicated region
        $region41: #{video_decoder_forward.4} parent=31 // pred_check
          %p293 = pneg %p292
        $region42: #{video_decoder_forward.4} parent=31 // pred_check_branch
          %295 = sbr.rel (%p293) target = $region44
        $region43: #{video_decoder_forward.4} parent=31 // pred_region
          %296 = vst [vmem:[#allocation2] sm:$0xff] 0.0
          %297 = vst [vmem:[#allocation2 + $0x8] sm:$0xff] 0.0
          %298 = vst [vmem:[#allocation2 + $0x10] sm:$0xff] 0.0
          %299 = vst [vmem:[#allocation2 + $0x18] sm:$0xff] 0.0
          %300 = vst [vmem:[#allocation2 + $0x20] sm:$0xff] 0.0
          %301 = vst [vmem:[#allocation2 + $0x28] sm:$0xff] 0.0
          %302 = vst [vmem:[#allocation2 + $0x30] sm:$0xff] 0.0
          %303 = vst [vmem:[#allocation2 + $0x38] sm:$0xff] 0.0
          %304 = vst [vmem:[#allocation2 + $0x40] sm:$0xff] 0.0
          %305 = vst [vmem:[#allocation2 + $0x48] sm:$0xff] 0.0
          %306 = vst [vmem:[#allocation2 + $0x50] sm:$0xff] 0.0
          %307 = vst [vmem:[#allocation2 + $0x58] sm:$0xff] 0.0
          %308 = vst [vmem:[#allocation2 + $0x60] sm:$0xff] 0.0
          %309 = vst [vmem:[#allocation2 + $0x68] sm:$0xff] 0.0
          %310 = vst [vmem:[#allocation2 + $0x70] sm:$0xff] 0.0
          %311 = vst [vmem:[#allocation2 + $0x78] sm:$0xff] 0.0
          %312 = vst [vmem:[#allocation2 + $0x80] sm:$0xff] 0.0
          %313 = vst [vmem:[#allocation2 + $0x88] sm:$0xff] 0.0
          %314 = vst [vmem:[#allocation2 + $0x90] sm:$0xff] 0.0
          %315 = vst [vmem:[#allocation2 + $0x98] sm:$0xff] 0.0
          %316 = vst [vmem:[#allocation2 + $0xa0] sm:$0xff] 0.0
          %317 = vst [vmem:[#allocation2 + $0xa8] sm:$0xff] 0.0
          %318 = vst [vmem:[#allocation2 + $0xb0] sm:$0xff] 0.0
          %319 = vst [vmem:[#allocation2 + $0xb8] sm:$0xff] 0.0
          %320 = vst [vmem:[#allocation2 + $0xc0] sm:$0xff] 0.0
          %321 = vst [vmem:[#allocation2 + $0xc8] sm:$0xff] 0.0
          %322 = vst [vmem:[#allocation2 + $0xd0] sm:$0xff] 0.0
          %323 = vst [vmem:[#allocation2 + $0xd8] sm:$0xff] 0.0
          %324 = vst [vmem:[#allocation2 + $0xe0] sm:$0xff] 0.0
          %325 = vst [vmem:[#allocation2 + $0xe8] sm:$0xff] 0.0
          %326 = vst [vmem:[#allocation2 + $0xf0] sm:$0xff] 0.0
          %327 = vst [vmem:[#allocation2 + $0xf8] sm:$0xff] 0.0
          %328 = vst [vmem:[#allocation2 + $0x100] sm:$0xff] 0.0
          %329 = vst [vmem:[#allocation2 + $0x108] sm:$0xff] 0.0
          %330 = vst [vmem:[#allocation2 + $0x110] sm:$0xff] 0.0
          %331 = vst [vmem:[#allocation2 + $0x118] sm:$0xff] 0.0
          %332 = vst [vmem:[#allocation2 + $0x120] sm:$0xff] 0.0
          %333 = vst [vmem:[#allocation2 + $0x128] sm:$0xff] 0.0
          %334 = vst [vmem:[#allocation2 + $0x130] sm:$0xff] 0.0
          %335 = vst [vmem:[#allocation2 + $0x138] sm:$0xff] 0.0
          %336 = vst [vmem:[#allocation2 + $0x140] sm:$0xff] 0.0
          %337 = vst [vmem:[#allocation2 + $0x148] sm:$0xff] 0.0
          %338 = vst [vmem:[#allocation2 + $0x150] sm:$0xff] 0.0
          %339 = vst [vmem:[#allocation2 + $0x158] sm:$0xff] 0.0
          %340 = vst [vmem:[#allocation2 + $0x160] sm:$0xff] 0.0
          %341 = vst [vmem:[#allocation2 + $0x168] sm:$0xff] 0.0
          %342 = vst [vmem:[#allocation2 + $0x170] sm:$0xff] 0.0
          %343 = vst [vmem:[#allocation2 + $0x178] sm:$0xff] 0.0
          %344 = vst [vmem:[#allocation2 + $0x180] sm:$0xff] 0.0
          %345 = vst [vmem:[#allocation2 + $0x188] sm:$0xff] 0.0
          %346 = vst [vmem:[#allocation2 + $0x190] sm:$0xff] 0.0
          %347 = vst [vmem:[#allocation2 + $0x198] sm:$0xff] 0.0
          %348 = vst [vmem:[#allocation2 + $0x1a0] sm:$0xff] 0.0
          %349 = vst [vmem:[#allocation2 + $0x1a8] sm:$0xff] 0.0
          %350 = vst [vmem:[#allocation2 + $0x1b0] sm:$0xff] 0.0
          %351 = vst [vmem:[#allocation2 + $0x1b8] sm:$0xff] 0.0
          %352 = vst [vmem:[#allocation2 + $0x1c0] sm:$0xff] 0.0
          %353 = vst [vmem:[#allocation2 + $0x1c8] sm:$0xff] 0.0
          %354 = vst [vmem:[#allocation2 + $0x1d0] sm:$0xff] 0.0
          %355 = vst [vmem:[#allocation2 + $0x1d8] sm:$0xff] 0.0
          %356 = vst [vmem:[#allocation2 + $0x1e0] sm:$0xff] 0.0
          %357 = vst [vmem:[#allocation2 + $0x1e8] sm:$0xff] 0.0
          %358 = vst [vmem:[#allocation2 + $0x1f0] sm:$0xff] 0.0
          %359 = vst [vmem:[#allocation2 + $0x1f8] sm:$0xff] 0.0
        $region44: #{video_decoder_forward.4} parent=31 // pred_fallthru
          _
        %v360 = vld [vmem:[%s274] sm:$0xff]
        %v361 = vld [vmem:[%s274 + $0x8] sm:$0xff]
        %v362 = vld [vmem:[%s274 + $0x10] sm:$0xff]
        %v363 = vld [vmem:[%s274 + $0x18] sm:$0xff]
        %v364 = vld [vmem:[%s274 + $0x20] sm:$0xff]
        %v365 = vld [vmem:[%s274 + $0x28] sm:$0xff]
        %v366 = vld [vmem:[%s274 + $0x30] sm:$0xff]
        %v367 = vld [vmem:[%s274 + $0x38] sm:$0xff]
        %s368 = smul.u32 %s25, 256
        %s369 = smul.addr %s368, 4
        %s370 = scalar_lea.vmem [#allocation3], %s369
        %v371 = vld [vmem:[%s370] sm:$0xff]
        %v372 = vld [vmem:[%s370 + $0x8] sm:$0xff]
        %v373 = vld [vmem:[%s370 + $0x10] sm:$0xff]
        %v374 = vld [vmem:[%s370 + $0x18] sm:$0xff]
        %v375 = vld [vmem:[%s370 + $0x20] sm:$0xff]
        %v376 = vld [vmem:[%s370 + $0x28] sm:$0xff]
        %v377 = vld [vmem:[%s370 + $0x30] sm:$0xff]
        %v378 = vld [vmem:[%s370 + $0x38] sm:$0xff]
        %v379 = vld [vmem:[%s370 + $0x40] sm:$0xff]
        %v380 = vld [vmem:[%s370 + $0x48] sm:$0xff]
        %v381 = vld [vmem:[%s370 + $0x50] sm:$0xff]
        %v382 = vld [vmem:[%s370 + $0x58] sm:$0xff]
        %v383 = vld [vmem:[%s370 + $0x60] sm:$0xff]
        %v384 = vld [vmem:[%s370 + $0x68] sm:$0xff]
        %v385 = vld [vmem:[%s370 + $0x70] sm:$0xff]
        %v386 = vld [vmem:[%s370 + $0x78] sm:$0xff]
        %v387 = vld [vmem:[%s370 + $0x80] sm:$0xff]
        %v388 = vld [vmem:[%s370 + $0x88] sm:$0xff]
        %v389 = vld [vmem:[%s370 + $0x90] sm:$0xff]
        %v390 = vld [vmem:[%s370 + $0x98] sm:$0xff]
        %v391 = vld [vmem:[%s370 + $0xa0] sm:$0xff]
        %v392 = vld [vmem:[%s370 + $0xa8] sm:$0xff]
        %v393 = vld [vmem:[%s370 + $0xb0] sm:$0xff]
        %v394 = vld [vmem:[%s370 + $0xb8] sm:$0xff]
        %v395 = vld [vmem:[%s370 + $0xc0] sm:$0xff]
        %v396 = vld [vmem:[%s370 + $0xc8] sm:$0xff]
        %v397 = vld [vmem:[%s370 + $0xd0] sm:$0xff]
        %v398 = vld [vmem:[%s370 + $0xd8] sm:$0xff]
        %v399 = vld [vmem:[%s370 + $0xe0] sm:$0xff]
        %v400 = vld [vmem:[%s370 + $0xe8] sm:$0xff]
        %v401 = vld [vmem:[%s370 + $0xf0] sm:$0xff]
        %v402 = vld [vmem:[%s370 + $0xf8] sm:$0xff]
        %v403 = vld [vmem:[%s370 + $0x100] sm:$0xff]
        %v404 = vld [vmem:[%s370 + $0x108] sm:$0xff]
        %v405 = vld [vmem:[%s370 + $0x110] sm:$0xff]
        %v406 = vld [vmem:[%s370 + $0x118] sm:$0xff]
        %v407 = vld [vmem:[%s370 + $0x120] sm:$0xff]
        %v408 = vld [vmem:[%s370 + $0x128] sm:$0xff]
        %v409 = vld [vmem:[%s370 + $0x130] sm:$0xff]
        %v410 = vld [vmem:[%s370 + $0x138] sm:$0xff]
        %v411 = vld [vmem:[%s370 + $0x140] sm:$0xff]
        %v412 = vld [vmem:[%s370 + $0x148] sm:$0xff]
        %v413 = vld [vmem:[%s370 + $0x150] sm:$0xff]
        %v414 = vld [vmem:[%s370 + $0x158] sm:$0xff]
        %v415 = vld [vmem:[%s370 + $0x160] sm:$0xff]
        %v416 = vld [vmem:[%s370 + $0x168] sm:$0xff]
        %v417 = vld [vmem:[%s370 + $0x170] sm:$0xff]
        %v418 = vld [vmem:[%s370 + $0x178] sm:$0xff]
        %v419 = vld [vmem:[%s370 + $0x180] sm:$0xff]
        %v420 = vld [vmem:[%s370 + $0x188] sm:$0xff]
        %v421 = vld [vmem:[%s370 + $0x190] sm:$0xff]
        %v422 = vld [vmem:[%s370 + $0x198] sm:$0xff]
        %v423 = vld [vmem:[%s370 + $0x1a0] sm:$0xff]
        %v424 = vld [vmem:[%s370 + $0x1a8] sm:$0xff]
        %v425 = vld [vmem:[%s370 + $0x1b0] sm:$0xff]
        %v426 = vld [vmem:[%s370 + $0x1b8] sm:$0xff]
        %v427 = vld [vmem:[%s370 + $0x1c0] sm:$0xff]
        %v428 = vld [vmem:[%s370 + $0x1c8] sm:$0xff]
        %v429 = vld [vmem:[%s370 + $0x1d0] sm:$0xff]
        %v430 = vld [vmem:[%s370 + $0x1d8] sm:$0xff]
        %v431 = vld [vmem:[%s370 + $0x1e0] sm:$0xff]
        %v432 = vld [vmem:[%s370 + $0x1e8] sm:$0xff]
        %v433 = vld [vmem:[%s370 + $0x1f0] sm:$0xff]
        %v434 = vld [vmem:[%s370 + $0x1f8] sm:$0xff]
        %v435 = vld [vmem:[%s370 + $0x200] sm:$0xff]
        %v436 = vld [vmem:[%s370 + $0x208] sm:$0xff]
        %v437 = vld [vmem:[%s370 + $0x210] sm:$0xff]
        %v438 = vld [vmem:[%s370 + $0x218] sm:$0xff]
        %v439 = vld [vmem:[%s370 + $0x220] sm:$0xff]
        %v440 = vld [vmem:[%s370 + $0x228] sm:$0xff]
        %v441 = vld [vmem:[%s370 + $0x230] sm:$0xff]
        %v442 = vld [vmem:[%s370 + $0x238] sm:$0xff]
        %v443 = vld [vmem:[%s370 + $0x240] sm:$0xff]
        %v444 = vld [vmem:[%s370 + $0x248] sm:$0xff]
        %v445 = vld [vmem:[%s370 + $0x250] sm:$0xff]
        %v446 = vld [vmem:[%s370 + $0x258] sm:$0xff]
        %v447 = vld [vmem:[%s370 + $0x260] sm:$0xff]
        %v448 = vld [vmem:[%s370 + $0x268] sm:$0xff]
        %v449 = vld [vmem:[%s370 + $0x270] sm:$0xff]
        %v450 = vld [vmem:[%s370 + $0x278] sm:$0xff]
        %v451 = vld [vmem:[%s370 + $0x280] sm:$0xff]
        %v452 = vld [vmem:[%s370 + $0x288] sm:$0xff]
        %v453 = vld [vmem:[%s370 + $0x290] sm:$0xff]
        %v454 = vld [vmem:[%s370 + $0x298] sm:$0xff]
        %v455 = vld [vmem:[%s370 + $0x2a0] sm:$0xff]
        %v456 = vld [vmem:[%s370 + $0x2a8] sm:$0xff]
        %v457 = vld [vmem:[%s370 + $0x2b0] sm:$0xff]
        %v458 = vld [vmem:[%s370 + $0x2b8] sm:$0xff]
        %v459 = vld [vmem:[%s370 + $0x2c0] sm:$0xff]
        %v460 = vld [vmem:[%s370 + $0x2c8] sm:$0xff]
        %v461 = vld [vmem:[%s370 + $0x2d0] sm:$0xff]
        %v462 = vld [vmem:[%s370 + $0x2d8] sm:$0xff]
        %v463 = vld [vmem:[%s370 + $0x2e0] sm:$0xff]
        %v464 = vld [vmem:[%s370 + $0x2e8] sm:$0xff]
        %v465 = vld [vmem:[%s370 + $0x2f0] sm:$0xff]
        %v466 = vld [vmem:[%s370 + $0x2f8] sm:$0xff]
        %v467 = vld [vmem:[%s370 + $0x300] sm:$0xff]
        %v468 = vld [vmem:[%s370 + $0x308] sm:$0xff]
        %v469 = vld [vmem:[%s370 + $0x310] sm:$0xff]
        %v470 = vld [vmem:[%s370 + $0x318] sm:$0xff]
        %v471 = vld [vmem:[%s370 + $0x320] sm:$0xff]
        %v472 = vld [vmem:[%s370 + $0x328] sm:$0xff]
        %v473 = vld [vmem:[%s370 + $0x330] sm:$0xff]
        %v474 = vld [vmem:[%s370 + $0x338] sm:$0xff]
        %v475 = vld [vmem:[%s370 + $0x340] sm:$0xff]
        %v476 = vld [vmem:[%s370 + $0x348] sm:$0xff]
        %v477 = vld [vmem:[%s370 + $0x350] sm:$0xff]
        %v478 = vld [vmem:[%s370 + $0x358] sm:$0xff]
        %v479 = vld [vmem:[%s370 + $0x360] sm:$0xff]
        %v480 = vld [vmem:[%s370 + $0x368] sm:$0xff]
        %v481 = vld [vmem:[%s370 + $0x370] sm:$0xff]
        %v482 = vld [vmem:[%s370 + $0x378] sm:$0xff]
        %v483 = vld [vmem:[%s370 + $0x380] sm:$0xff]
        %v484 = vld [vmem:[%s370 + $0x388] sm:$0xff]
        %v485 = vld [vmem:[%s370 + $0x390] sm:$0xff]
        %v486 = vld [vmem:[%s370 + $0x398] sm:$0xff]
        %v487 = vld [vmem:[%s370 + $0x3a0] sm:$0xff]
        %v488 = vld [vmem:[%s370 + $0x3a8] sm:$0xff]
        %v489 = vld [vmem:[%s370 + $0x3b0] sm:$0xff]
        %v490 = vld [vmem:[%s370 + $0x3b8] sm:$0xff]
        %v491 = vld [vmem:[%s370 + $0x3c0] sm:$0xff]
        %v492 = vld [vmem:[%s370 + $0x3c8] sm:$0xff]
        %v493 = vld [vmem:[%s370 + $0x3d0] sm:$0xff]
        %v494 = vld [vmem:[%s370 + $0x3d8] sm:$0xff]
        %v495 = vld [vmem:[%s370 + $0x3e0] sm:$0xff]
        %v496 = vld [vmem:[%s370 + $0x3e8] sm:$0xff]
        %v497 = vld [vmem:[%s370 + $0x3f0] sm:$0xff]
        %v498 = vld [vmem:[%s370 + $0x3f8] sm:$0xff]
        %v499 = vld [vmem:[#allocation2] sm:$0xff]
        %v500 = vld [vmem:[#allocation2 + $0x8] sm:$0xff]
        %v501 = vld [vmem:[#allocation2 + $0x10] sm:$0xff]
        %v502 = vld [vmem:[#allocation2 + $0x18] sm:$0xff]
        %v503 = vld [vmem:[#allocation2 + $0x20] sm:$0xff]
        %v504 = vld [vmem:[#allocation2 + $0x28] sm:$0xff]
        %v505 = vld [vmem:[#allocation2 + $0x30] sm:$0xff]
        %v506 = vld [vmem:[#allocation2 + $0x38] sm:$0xff]
        %v507 = vld [vmem:[#allocation2 + $0x40] sm:$0xff]
        %v508 = vld [vmem:[#allocation2 + $0x48] sm:$0xff]
        %v509 = vld [vmem:[#allocation2 + $0x50] sm:$0xff]
        %v510 = vld [vmem:[#allocation2 + $0x58] sm:$0xff]
        %v511 = vld [vmem:[#allocation2 + $0x60] sm:$0xff]
        %v512 = vld [vmem:[#allocation2 + $0x68] sm:$0xff]
        %v513 = vld [vmem:[#allocation2 + $0x70] sm:$0xff]
        %v514 = vld [vmem:[#allocation2 + $0x78] sm:$0xff]
        %v515 = vld [vmem:[#allocation2 + $0x80] sm:$0xff]
        %v516 = vld [vmem:[#allocation2 + $0x88] sm:$0xff]
        %v517 = vld [vmem:[#allocation2 + $0x90] sm:$0xff]
        %v518 = vld [vmem:[#allocation2 + $0x98] sm:$0xff]
        %v519 = vld [vmem:[#allocation2 + $0xa0] sm:$0xff]
        %v520 = vld [vmem:[#allocation2 + $0xa8] sm:$0xff]
        %v521 = vld [vmem:[#allocation2 + $0xb0] sm:$0xff]
        %v522 = vld [vmem:[#allocation2 + $0xb8] sm:$0xff]
        %v523 = vld [vmem:[#allocation2 + $0xc0] sm:$0xff]
        %v524 = vld [vmem:[#allocation2 + $0xc8] sm:$0xff]
        %v525 = vld [vmem:[#allocation2 + $0xd0] sm:$0xff]
        %v526 = vld [vmem:[#allocation2 + $0xd8] sm:$0xff]
        %v527 = vld [vmem:[#allocation2 + $0xe0] sm:$0xff]
        %v528 = vld [vmem:[#allocation2 + $0xe8] sm:$0xff]
        %v529 = vld [vmem:[#allocation2 + $0xf0] sm:$0xff]
        %v530 = vld [vmem:[#allocation2 + $0xf8] sm:$0xff]
        %v531 = vld [vmem:[#allocation2 + $0x100] sm:$0xff]
        %v532 = vld [vmem:[#allocation2 + $0x108] sm:$0xff]
        %v533 = vld [vmem:[#allocation2 + $0x110] sm:$0xff]
        %v534 = vld [vmem:[#allocation2 + $0x118] sm:$0xff]
        %v535 = vld [vmem:[#allocation2 + $0x120] sm:$0xff]
        %v536 = vld [vmem:[#allocation2 + $0x128] sm:$0xff]
        %v537 = vld [vmem:[#allocation2 + $0x130] sm:$0xff]
        %v538 = vld [vmem:[#allocation2 + $0x138] sm:$0xff]
        %v539 = vld [vmem:[#allocation2 + $0x140] sm:$0xff]
        %v540 = vld [vmem:[#allocation2 + $0x148] sm:$0xff]
        %v541 = vld [vmem:[#allocation2 + $0x150] sm:$0xff]
        %v542 = vld [vmem:[#allocation2 + $0x158] sm:$0xff]
        %v543 = vld [vmem:[#allocation2 + $0x160] sm:$0xff]
        %v544 = vld [vmem:[#allocation2 + $0x168] sm:$0xff]
        %v545 = vld [vmem:[#allocation2 + $0x170] sm:$0xff]
        %v546 = vld [vmem:[#allocation2 + $0x178] sm:$0xff]
        %v547 = vld [vmem:[#allocation2 + $0x180] sm:$0xff]
        %v548 = vld [vmem:[#allocation2 + $0x188] sm:$0xff]
        %v549 = vld [vmem:[#allocation2 + $0x190] sm:$0xff]
        %v550 = vld [vmem:[#allocation2 + $0x198] sm:$0xff]
        %v551 = vld [vmem:[#allocation2 + $0x1a0] sm:$0xff]
        %v552 = vld [vmem:[#allocation2 + $0x1a8] sm:$0xff]
        %v553 = vld [vmem:[#allocation2 + $0x1b0] sm:$0xff]
        %v554 = vld [vmem:[#allocation2 + $0x1b8] sm:$0xff]
        %v555 = vld [vmem:[#allocation2 + $0x1c0] sm:$0xff]
        %v556 = vld [vmem:[#allocation2 + $0x1c8] sm:$0xff]
        %v557 = vld [vmem:[#allocation2 + $0x1d0] sm:$0xff]
        %v558 = vld [vmem:[#allocation2 + $0x1d8] sm:$0xff]
        %v559 = vld [vmem:[#allocation2 + $0x1e0] sm:$0xff]
        %v560 = vld [vmem:[#allocation2 + $0x1e8] sm:$0xff]
        %v561 = vld [vmem:[#allocation2 + $0x1f0] sm:$0xff]
        %v562 = vld [vmem:[#allocation2 + $0x1f8] sm:$0xff]
        %v571 = vunpack.c.l.b16 %v360
        %v572 = vunpack.c.h.b16 %v360
        %v573 = vunpack.c.l.b16 %v361
        %v574 = vunpack.c.h.b16 %v361
        %v575 = vunpack.c.l.b16 %v362
        %v576 = vunpack.c.h.b16 %v362
        %v577 = vunpack.c.l.b16 %v363
        %v578 = vunpack.c.h.b16 %v363
        %v579 = vunpack.c.l.b16 %v364
        %v580 = vunpack.c.h.b16 %v364
        %v581 = vunpack.c.l.b16 %v365
        %v582 = vunpack.c.h.b16 %v365
        %v583 = vunpack.c.l.b16 %v366
        %v584 = vunpack.c.h.b16 %v366
        %v585 = vunpack.c.l.b16 %v367
        %v586 = vunpack.c.h.b16 %v367
        %v587 = vpack.c.b16 %v573, %v571
        %v588 = vpack.c.b16 %v574, %v572
        %v589 = vpack.c.b16 %v577, %v575
        %v590 = vpack.c.b16 %v578, %v576
        %v591 = vpack.c.b16 %v581, %v579
        %v592 = vpack.c.b16 %v582, %v580
        %v593 = vpack.c.b16 %v585, %v583
        %v594 = vpack.c.b16 %v586, %v584
        %v731 = vunpack.c.l.b16 %v371
        %v732 = vunpack.c.h.b16 %v371
        %v733 = vunpack.c.l.b16 %v372
        %v734 = vunpack.c.h.b16 %v372
        %v735 = vunpack.c.l.b16 %v373
        %v736 = vunpack.c.h.b16 %v373
        %v737 = vunpack.c.l.b16 %v374
        %v738 = vunpack.c.h.b16 %v374
        %v739 = vunpack.c.l.b16 %v375
        %v740 = vunpack.c.h.b16 %v375
        %v741 = vunpack.c.l.b16 %v376
        %v742 = vunpack.c.h.b16 %v376
        %v743 = vunpack.c.l.b16 %v377
        %v744 = vunpack.c.h.b16 %v377
        %v745 = vunpack.c.l.b16 %v378
        %v746 = vunpack.c.h.b16 %v378
        %v747 = vunpack.c.l.b16 %v379
        %v748 = vunpack.c.h.b16 %v379
        %v749 = vunpack.c.l.b16 %v380
        %v750 = vunpack.c.h.b16 %v380
        %v751 = vunpack.c.l.b16 %v381
        %v752 = vunpack.c.h.b16 %v381
        %v753 = vunpack.c.l.b16 %v382
        %v754 = vunpack.c.h.b16 %v382
        %v755 = vunpack.c.l.b16 %v383
        %v756 = vunpack.c.h.b16 %v383
        %v757 = vunpack.c.l.b16 %v384
        %v758 = vunpack.c.h.b16 %v384
        %v759 = vunpack.c.l.b16 %v385
        %v760 = vunpack.c.h.b16 %v385
        %v761 = vunpack.c.l.b16 %v386
        %v762 = vunpack.c.h.b16 %v386
        %v763 = vunpack.c.l.b16 %v387
        %v764 = vunpack.c.h.b16 %v387
        %v765 = vunpack.c.l.b16 %v388
        %v766 = vunpack.c.h.b16 %v388
        %v767 = vunpack.c.l.b16 %v389
        %v768 = vunpack.c.h.b16 %v389
        %v769 = vunpack.c.l.b16 %v390
        %v770 = vunpack.c.h.b16 %v390
        %v771 = vunpack.c.l.b16 %v391
        %v772 = vunpack.c.h.b16 %v391
        %v773 = vunpack.c.l.b16 %v392
        %v774 = vunpack.c.h.b16 %v392
        %v775 = vunpack.c.l.b16 %v393
        %v776 = vunpack.c.h.b16 %v393
        %v777 = vunpack.c.l.b16 %v394
        %v778 = vunpack.c.h.b16 %v394
        %v779 = vunpack.c.l.b16 %v395
        %v780 = vunpack.c.h.b16 %v395
        %v781 = vunpack.c.l.b16 %v396
        %v782 = vunpack.c.h.b16 %v396
        %v783 = vunpack.c.l.b16 %v397
        %v784 = vunpack.c.h.b16 %v397
        %v785 = vunpack.c.l.b16 %v398
        %v786 = vunpack.c.h.b16 %v398
        %v787 = vunpack.c.l.b16 %v399
        %v788 = vunpack.c.h.b16 %v399
        %v789 = vunpack.c.l.b16 %v400
        %v790 = vunpack.c.h.b16 %v400
        %v791 = vunpack.c.l.b16 %v401
        %v792 = vunpack.c.h.b16 %v401
        %v793 = vunpack.c.l.b16 %v402
        %v794 = vunpack.c.h.b16 %v402
        %v795 = vunpack.c.l.b16 %v403
        %v796 = vunpack.c.h.b16 %v403
        %v797 = vunpack.c.l.b16 %v404
        %v798 = vunpack.c.h.b16 %v404
        %v799 = vunpack.c.l.b16 %v405
        %v800 = vunpack.c.h.b16 %v405
        %v801 = vunpack.c.l.b16 %v406
        %v802 = vunpack.c.h.b16 %v406
        %v803 = vunpack.c.l.b16 %v407
        %v804 = vunpack.c.h.b16 %v407
        %v805 = vunpack.c.l.b16 %v408
        %v806 = vunpack.c.h.b16 %v408
        %v807 = vunpack.c.l.b16 %v409
        %v808 = vunpack.c.h.b16 %v409
        %v809 = vunpack.c.l.b16 %v410
        %v810 = vunpack.c.h.b16 %v410
        %v811 = vunpack.c.l.b16 %v411
        %v812 = vunpack.c.h.b16 %v411
        %v813 = vunpack.c.l.b16 %v412
        %v814 = vunpack.c.h.b16 %v412
        %v815 = vunpack.c.l.b16 %v413
        %v816 = vunpack.c.h.b16 %v413
        %v817 = vunpack.c.l.b16 %v414
        %v818 = vunpack.c.h.b16 %v414
        %v819 = vunpack.c.l.b16 %v415
        %v820 = vunpack.c.h.b16 %v415
        %v821 = vunpack.c.l.b16 %v416
        %v822 = vunpack.c.h.b16 %v416
        %v823 = vunpack.c.l.b16 %v417
        %v824 = vunpack.c.h.b16 %v417
        %v825 = vunpack.c.l.b16 %v418
        %v826 = vunpack.c.h.b16 %v418
        %v827 = vunpack.c.l.b16 %v419
        %v828 = vunpack.c.h.b16 %v419
        %v829 = vunpack.c.l.b16 %v420
        %v830 = vunpack.c.h.b16 %v420
        %v831 = vunpack.c.l.b16 %v421
        %v832 = vunpack.c.h.b16 %v421
        %v833 = vunpack.c.l.b16 %v422
        %v834 = vunpack.c.h.b16 %v422
        %v835 = vunpack.c.l.b16 %v423
        %v836 = vunpack.c.h.b16 %v423
        %v837 = vunpack.c.l.b16 %v424
        %v838 = vunpack.c.h.b16 %v424
        %v839 = vunpack.c.l.b16 %v425
        %v840 = vunpack.c.h.b16 %v425
        %v841 = vunpack.c.l.b16 %v426
        %v842 = vunpack.c.h.b16 %v426
        %v843 = vunpack.c.l.b16 %v427
        %v844 = vunpack.c.h.b16 %v427
        %v845 = vunpack.c.l.b16 %v428
        %v846 = vunpack.c.h.b16 %v428
        %v847 = vunpack.c.l.b16 %v429
        %v848 = vunpack.c.h.b16 %v429
        %v849 = vunpack.c.l.b16 %v430
        %v850 = vunpack.c.h.b16 %v430
        %v851 = vunpack.c.l.b16 %v431
        %v852 = vunpack.c.h.b16 %v431
        %v853 = vunpack.c.l.b16 %v432
        %v854 = vunpack.c.h.b16 %v432
        %v855 = vunpack.c.l.b16 %v433
        %v856 = vunpack.c.h.b16 %v433
        %v857 = vunpack.c.l.b16 %v434
        %v858 = vunpack.c.h.b16 %v434
        %v859 = vunpack.c.l.b16 %v435
        %v860 = vunpack.c.h.b16 %v435
        %v861 = vunpack.c.l.b16 %v436
        %v862 = vunpack.c.h.b16 %v436
        %v863 = vunpack.c.l.b16 %v437
        %v864 = vunpack.c.h.b16 %v437
        %v865 = vunpack.c.l.b16 %v438
        %v866 = vunpack.c.h.b16 %v438
        %v867 = vunpack.c.l.b16 %v439
        %v868 = vunpack.c.h.b16 %v439
        %v869 = vunpack.c.l.b16 %v440
        %v870 = vunpack.c.h.b16 %v440
        %v871 = vunpack.c.l.b16 %v441
        %v872 = vunpack.c.h.b16 %v441
        %v873 = vunpack.c.l.b16 %v442
        %v874 = vunpack.c.h.b16 %v442
        %v875 = vunpack.c.l.b16 %v443
        %v876 = vunpack.c.h.b16 %v443
        %v877 = vunpack.c.l.b16 %v444
        %v878 = vunpack.c.h.b16 %v444
        %v879 = vunpack.c.l.b16 %v445
        %v880 = vunpack.c.h.b16 %v445
        %v881 = vunpack.c.l.b16 %v446
        %v882 = vunpack.c.h.b16 %v446
        %v883 = vunpack.c.l.b16 %v447
        %v884 = vunpack.c.h.b16 %v447
        %v885 = vunpack.c.l.b16 %v448
        %v886 = vunpack.c.h.b16 %v448
        %v887 = vunpack.c.l.b16 %v449
        %v888 = vunpack.c.h.b16 %v449
        %v889 = vunpack.c.l.b16 %v450
        %v890 = vunpack.c.h.b16 %v450
        %v891 = vunpack.c.l.b16 %v451
        %v892 = vunpack.c.h.b16 %v451
        %v893 = vunpack.c.l.b16 %v452
        %v894 = vunpack.c.h.b16 %v452
        %v895 = vunpack.c.l.b16 %v453
        %v896 = vunpack.c.h.b16 %v453
        %v897 = vunpack.c.l.b16 %v454
        %v898 = vunpack.c.h.b16 %v454
        %v899 = vunpack.c.l.b16 %v455
        %v900 = vunpack.c.h.b16 %v455
        %v901 = vunpack.c.l.b16 %v456
        %v902 = vunpack.c.h.b16 %v456
        %v903 = vunpack.c.l.b16 %v457
        %v904 = vunpack.c.h.b16 %v457
        %v905 = vunpack.c.l.b16 %v458
        %v906 = vunpack.c.h.b16 %v458
        %v907 = vunpack.c.l.b16 %v459
        %v908 = vunpack.c.h.b16 %v459
        %v909 = vunpack.c.l.b16 %v460
        %v910 = vunpack.c.h.b16 %v460
        %v911 = vunpack.c.l.b16 %v461
        %v912 = vunpack.c.h.b16 %v461
        %v913 = vunpack.c.l.b16 %v462
        %v914 = vunpack.c.h.b16 %v462
        %v915 = vunpack.c.l.b16 %v463
        %v916 = vunpack.c.h.b16 %v463
        %v917 = vunpack.c.l.b16 %v464
        %v918 = vunpack.c.h.b16 %v464
        %v919 = vunpack.c.l.b16 %v465
        %v920 = vunpack.c.h.b16 %v465
        %v921 = vunpack.c.l.b16 %v466
        %v922 = vunpack.c.h.b16 %v466
        %v923 = vunpack.c.l.b16 %v467
        %v924 = vunpack.c.h.b16 %v467
        %v925 = vunpack.c.l.b16 %v468
        %v926 = vunpack.c.h.b16 %v468
        %v927 = vunpack.c.l.b16 %v469
        %v928 = vunpack.c.h.b16 %v469
        %v929 = vunpack.c.l.b16 %v470
        %v930 = vunpack.c.h.b16 %v470
        %v931 = vunpack.c.l.b16 %v471
        %v932 = vunpack.c.h.b16 %v471
        %v933 = vunpack.c.l.b16 %v472
        %v934 = vunpack.c.h.b16 %v472
        %v935 = vunpack.c.l.b16 %v473
        %v936 = vunpack.c.h.b16 %v473
        %v937 = vunpack.c.l.b16 %v474
        %v938 = vunpack.c.h.b16 %v474
        %v939 = vunpack.c.l.b16 %v475
        %v940 = vunpack.c.h.b16 %v475
        %v941 = vunpack.c.l.b16 %v476
        %v942 = vunpack.c.h.b16 %v476
        %v943 = vunpack.c.l.b16 %v477
        %v944 = vunpack.c.h.b16 %v477
        %v945 = vunpack.c.l.b16 %v478
        %v946 = vunpack.c.h.b16 %v478
        %v947 = vunpack.c.l.b16 %v479
        %v948 = vunpack.c.h.b16 %v479
        %v949 = vunpack.c.l.b16 %v480
        %v950 = vunpack.c.h.b16 %v480
        %v951 = vunpack.c.l.b16 %v481
        %v952 = vunpack.c.h.b16 %v481
        %v953 = vunpack.c.l.b16 %v482
        %v954 = vunpack.c.h.b16 %v482
        %v955 = vunpack.c.l.b16 %v483
        %v956 = vunpack.c.h.b16 %v483
        %v957 = vunpack.c.l.b16 %v484
        %v958 = vunpack.c.h.b16 %v484
        %v959 = vunpack.c.l.b16 %v485
        %v960 = vunpack.c.h.b16 %v485
        %v961 = vunpack.c.l.b16 %v486
        %v962 = vunpack.c.h.b16 %v486
        %v963 = vunpack.c.l.b16 %v487
        %v964 = vunpack.c.h.b16 %v487
        %v965 = vunpack.c.l.b16 %v488
        %v966 = vunpack.c.h.b16 %v488
        %v967 = vunpack.c.l.b16 %v489
        %v968 = vunpack.c.h.b16 %v489
        %v969 = vunpack.c.l.b16 %v490
        %v970 = vunpack.c.h.b16 %v490
        %v971 = vunpack.c.l.b16 %v491
        %v972 = vunpack.c.h.b16 %v491
        %v973 = vunpack.c.l.b16 %v492
        %v974 = vunpack.c.h.b16 %v492
        %v975 = vunpack.c.l.b16 %v493
        %v976 = vunpack.c.h.b16 %v493
        %v977 = vunpack.c.l.b16 %v494
        %v978 = vunpack.c.h.b16 %v494
        %v979 = vunpack.c.l.b16 %v495
        %v980 = vunpack.c.h.b16 %v495
        %v981 = vunpack.c.l.b16 %v496
        %v982 = vunpack.c.h.b16 %v496
        %v983 = vunpack.c.l.b16 %v497
        %v984 = vunpack.c.h.b16 %v497
        %v985 = vunpack.c.l.b16 %v498
        %v986 = vunpack.c.h.b16 %v498
        %v987 = vpack.c.b16 %v739, %v731
        %v988 = vpack.c.b16 %v740, %v732
        %v989 = vpack.c.b16 %v741, %v733
        %v990 = vpack.c.b16 %v742, %v734
        %v991 = vpack.c.b16 %v743, %v735
        %v992 = vpack.c.b16 %v744, %v736
        %v993 = vpack.c.b16 %v745, %v737
        %v994 = vpack.c.b16 %v746, %v738
        %v995 = vpack.c.b16 %v755, %v747
        %v996 = vpack.c.b16 %v756, %v748
        %v997 = vpack.c.b16 %v757, %v749
        %v998 = vpack.c.b16 %v758, %v750
        %v999 = vpack.c.b16 %v759, %v751
        %v1000 = vpack.c.b16 %v760, %v752
        %v1001 = vpack.c.b16 %v761, %v753
        %v1002 = vpack.c.b16 %v762, %v754
        %v1003 = vpack.c.b16 %v771, %v763
        %v1004 = vpack.c.b16 %v772, %v764
        %v1005 = vpack.c.b16 %v773, %v765
        %v1006 = vpack.c.b16 %v774, %v766
        %v1007 = vpack.c.b16 %v775, %v767
        %v1008 = vpack.c.b16 %v776, %v768
        %v1009 = vpack.c.b16 %v777, %v769
        %v1010 = vpack.c.b16 %v778, %v770
        %v1011 = vpack.c.b16 %v787, %v779
        %v1012 = vpack.c.b16 %v788, %v780
        %v1013 = vpack.c.b16 %v789, %v781
        %v1014 = vpack.c.b16 %v790, %v782
        %v1015 = vpack.c.b16 %v791, %v783
        %v1016 = vpack.c.b16 %v792, %v784
        %v1017 = vpack.c.b16 %v793, %v785
        %v1018 = vpack.c.b16 %v794, %v786
        %v1019 = vpack.c.b16 %v803, %v795
        %v1020 = vpack.c.b16 %v804, %v796
        %v1021 = vpack.c.b16 %v805, %v797
        %v1022 = vpack.c.b16 %v806, %v798
        %v1023 = vpack.c.b16 %v807, %v799
        %v1024 = vpack.c.b16 %v808, %v800
        %v1025 = vpack.c.b16 %v809, %v801
        %v1026 = vpack.c.b16 %v810, %v802
        %v1027 = vpack.c.b16 %v819, %v811
        %v1028 = vpack.c.b16 %v820, %v812
        %v1029 = vpack.c.b16 %v821, %v813
        %v1030 = vpack.c.b16 %v822, %v814
        %v1031 = vpack.c.b16 %v823, %v815
        %v1032 = vpack.c.b16 %v824, %v816
        %v1033 = vpack.c.b16 %v825, %v817
        %v1034 = vpack.c.b16 %v826, %v818
        %v1035 = vpack.c.b16 %v835, %v827
        %v1036 = vpack.c.b16 %v836, %v828
        %v1037 = vpack.c.b16 %v837, %v829
        %v1038 = vpack.c.b16 %v838, %v830
        %v1039 = vpack.c.b16 %v839, %v831
        %v1040 = vpack.c.b16 %v840, %v832
        %v1041 = vpack.c.b16 %v841, %v833
        %v1042 = vpack.c.b16 %v842, %v834
        %v1043 = vpack.c.b16 %v851, %v843
        %v1044 = vpack.c.b16 %v852, %v844
        %v1045 = vpack.c.b16 %v853, %v845
        %v1046 = vpack.c.b16 %v854, %v846
        %v1047 = vpack.c.b16 %v855, %v847
        %v1048 = vpack.c.b16 %v856, %v848
        %v1049 = vpack.c.b16 %v857, %v849
        %v1050 = vpack.c.b16 %v858, %v850
        %v1051 = vpack.c.b16 %v867, %v859
        %v1052 = vpack.c.b16 %v868, %v860
        %v1053 = vpack.c.b16 %v869, %v861
        %v1054 = vpack.c.b16 %v870, %v862
        %v1055 = vpack.c.b16 %v871, %v863
        %v1056 = vpack.c.b16 %v872, %v864
        %v1057 = vpack.c.b16 %v873, %v865
        %v1058 = vpack.c.b16 %v874, %v866
        %v1059 = vpack.c.b16 %v883, %v875
        %v1060 = vpack.c.b16 %v884, %v876
        %v1061 = vpack.c.b16 %v885, %v877
        %v1062 = vpack.c.b16 %v886, %v878
        %v1063 = vpack.c.b16 %v887, %v879
        %v1064 = vpack.c.b16 %v888, %v880
        %v1065 = vpack.c.b16 %v889, %v881
        %v1066 = vpack.c.b16 %v890, %v882
        %v1067 = vpack.c.b16 %v899, %v891
        %v1068 = vpack.c.b16 %v900, %v892
        %v1069 = vpack.c.b16 %v901, %v893
        %v1070 = vpack.c.b16 %v902, %v894
        %v1071 = vpack.c.b16 %v903, %v895
        %v1072 = vpack.c.b16 %v904, %v896
        %v1073 = vpack.c.b16 %v905, %v897
        %v1074 = vpack.c.b16 %v906, %v898
        %v1075 = vpack.c.b16 %v915, %v907
        %v1076 = vpack.c.b16 %v916, %v908
        %v1077 = vpack.c.b16 %v917, %v909
        %v1078 = vpack.c.b16 %v918, %v910
        %v1079 = vpack.c.b16 %v919, %v911
        %v1080 = vpack.c.b16 %v920, %v912
        %v1081 = vpack.c.b16 %v921, %v913
        %v1082 = vpack.c.b16 %v922, %v914
        %v1083 = vpack.c.b16 %v931, %v923
        %v1084 = vpack.c.b16 %v932, %v924
        %v1085 = vpack.c.b16 %v933, %v925
        %v1086 = vpack.c.b16 %v934, %v926
        %v1087 = vpack.c.b16 %v935, %v927
        %v1088 = vpack.c.b16 %v936, %v928
        %v1089 = vpack.c.b16 %v937, %v929
        %v1090 = vpack.c.b16 %v938, %v930
        %v1091 = vpack.c.b16 %v947, %v939
        %v1092 = vpack.c.b16 %v948, %v940
        %v1093 = vpack.c.b16 %v949, %v941
        %v1094 = vpack.c.b16 %v950, %v942
        %v1095 = vpack.c.b16 %v951, %v943
        %v1096 = vpack.c.b16 %v952, %v944
        %v1097 = vpack.c.b16 %v953, %v945
        %v1098 = vpack.c.b16 %v954, %v946
        %v1099 = vpack.c.b16 %v963, %v955
        %v1100 = vpack.c.b16 %v964, %v956
        %v1101 = vpack.c.b16 %v965, %v957
        %v1102 = vpack.c.b16 %v966, %v958
        %v1103 = vpack.c.b16 %v967, %v959
        %v1104 = vpack.c.b16 %v968, %v960
        %v1105 = vpack.c.b16 %v969, %v961
        %v1106 = vpack.c.b16 %v970, %v962
        %v1107 = vpack.c.b16 %v979, %v971
        %v1108 = vpack.c.b16 %v980, %v972
        %v1109 = vpack.c.b16 %v981, %v973
        %v1110 = vpack.c.b16 %v982, %v974
        %v1111 = vpack.c.b16 %v983, %v975
        %v1112 = vpack.c.b16 %v984, %v976
        %v1113 = vpack.c.b16 %v985, %v977
        %v1114 = vpack.c.b16 %v986, %v978
        %1243 = vmatpush.bf16.msra.mxu0 %v1043
        %1244 = vmatpush.bf16.msra.mxu0 %v1035
        %1245 = vmatpush.bf16.msra.mxu0 %v1027
        %1246 = vmatpush.bf16.msra.mxu0 %v1019
        %1247 = vmatpush.bf16.msra.mxu0 %v1011
        %1248 = vmatpush.bf16.msra.mxu0 %v1003
        %1249 = vmatpush.bf16.msra.mxu0 %v995
        %1250 = vmatpush.bf16.msra.mxu0 %v987
        %1251 = vmatmul.bf16.gmra.mxu0 %v587
        %v1252 = vpop.f32.mrf.mxu0
        %v1253 = vadd.f32 0.0, %v1252
        %v1254 = vpop.f32.mrf.mxu0
        %v1255 = vadd.f32 0.0, %v1254
        %1256 = vmatmul.bf16.gmra.mxu0 %v589
        %v1257 = vpop.f32.mrf.mxu0
        %v1258 = vadd.f32 0.0, %v1257
        %v1259 = vpop.f32.mrf.mxu0
        %v1260 = vadd.f32 0.0, %v1259
        %1261 = vmatmul.bf16.gmra.mxu0 %v591
        %v1262 = vpop.f32.mrf.mxu0
        %v1263 = vadd.f32 0.0, %v1262
        %v1264 = vpop.f32.mrf.mxu0
        %v1265 = vadd.f32 0.0, %v1264
        %1266 = vmatmul.bf16.gmra.mxu0 %v593
        %v1267 = vpop.f32.mrf.mxu0
        %v1268 = vadd.f32 0.0, %v1267
        %v1269 = vpop.f32.mrf.mxu0
        %v1270 = vadd.f32 0.0, %v1269
        %1271 = vdwg.mxu0
        %1272 = vmatpush.bf16.msra.mxu0 %v1107
        %1273 = vmatpush.bf16.msra.mxu0 %v1099
        %1274 = vmatpush.bf16.msra.mxu0 %v1091
        %1275 = vmatpush.bf16.msra.mxu0 %v1083
        %1276 = vmatpush.bf16.msra.mxu0 %v1075
        %1277 = vmatpush.bf16.msra.mxu0 %v1067
        %1278 = vmatpush.bf16.msra.mxu0 %v1059
        %1279 = vmatpush.bf16.msra.mxu0 %v1051
        %1280 = vmatmul.bf16.gmra.mxu0 %v588
        %v1281 = vpop.f32.mrf.mxu0
        %v1282 = vadd.f32 %v1253, %v1281
        %v1283 = vpop.f32.mrf.mxu0
        %v1284 = vadd.f32 %v1255, %v1283
        %1285 = vmatmul.bf16.gmra.mxu0 %v590
        %v1286 = vpop.f32.mrf.mxu0
        %v1287 = vadd.f32 %v1258, %v1286
        %v1288 = vpop.f32.mrf.mxu0
        %v1289 = vadd.f32 %v1260, %v1288
        %1290 = vmatmul.bf16.gmra.mxu0 %v592
        %v1291 = vpop.f32.mrf.mxu0
        %v1292 = vadd.f32 %v1263, %v1291
        %v1293 = vpop.f32.mrf.mxu0
        %v1294 = vadd.f32 %v1265, %v1293
        %1295 = vmatmul.bf16.gmra.mxu0 %v594
        %v1296 = vpop.f32.mrf.mxu0
        %v1297 = vadd.f32 %v1268, %v1296
        %v1298 = vpop.f32.mrf.mxu0
        %v1299 = vadd.f32 %v1270, %v1298
        %1300 = vdwg.mxu0
        %1301 = vmatpush.bf16.msra.mxu0 %v1044
        %1302 = vmatpush.bf16.msra.mxu0 %v1036
        %1303 = vmatpush.bf16.msra.mxu0 %v1028
        %1304 = vmatpush.bf16.msra.mxu0 %v1020
        %1305 = vmatpush.bf16.msra.mxu0 %v1012
        %1306 = vmatpush.bf16.msra.mxu0 %v1004
        %1307 = vmatpush.bf16.msra.mxu0 %v996
        %1308 = vmatpush.bf16.msra.mxu0 %v988
        %1309 = vmatmul.bf16.gmra.mxu0 %v587
        %v1310 = vpop.f32.mrf.mxu0
        %v1311 = vadd.f32 0.0, %v1310
        %v1312 = vpop.f32.mrf.mxu0
        %v1313 = vadd.f32 0.0, %v1312
        %1314 = vmatmul.bf16.gmra.mxu0 %v589
        %v1315 = vpop.f32.mrf.mxu0
        %v1316 = vadd.f32 0.0, %v1315
        %v1317 = vpop.f32.mrf.mxu0
        %v1318 = vadd.f32 0.0, %v1317
        %1319 = vmatmul.bf16.gmra.mxu0 %v591
        %v1320 = vpop.f32.mrf.mxu0
        %v1321 = vadd.f32 0.0, %v1320
        %v1322 = vpop.f32.mrf.mxu0
        %v1323 = vadd.f32 0.0, %v1322
        %1324 = vmatmul.bf16.gmra.mxu0 %v593
        %v1325 = vpop.f32.mrf.mxu0
        %v1326 = vadd.f32 0.0, %v1325
        %v1327 = vpop.f32.mrf.mxu0
        %v1328 = vadd.f32 0.0, %v1327
        %1329 = vdwg.mxu0
        %1330 = vmatpush.bf16.msra.mxu0 %v1108
        %1331 = vmatpush.bf16.msra.mxu0 %v1100
        %1332 = vmatpush.bf16.msra.mxu0 %v1092
        %1333 = vmatpush.bf16.msra.mxu0 %v1084
        %1334 = vmatpush.bf16.msra.mxu0 %v1076
        %1335 = vmatpush.bf16.msra.mxu0 %v1068
        %1336 = vmatpush.bf16.msra.mxu0 %v1060
        %1337 = vmatpush.bf16.msra.mxu0 %v1052
        %1338 = vmatmul.bf16.gmra.mxu0 %v588
        %v1339 = vpop.f32.mrf.mxu0
        %v1340 = vadd.f32 %v1311, %v1339
        %v1341 = vpop.f32.mrf.mxu0
        %v1342 = vadd.f32 %v1313, %v1341
        %1343 = vmatmul.bf16.gmra.mxu0 %v590
        %v1344 = vpop.f32.mrf.mxu0
        %v1345 = vadd.f32 %v1316, %v1344
        %v1346 = vpop.f32.mrf.mxu0
        %v1347 = vadd.f32 %v1318, %v1346
        %1348 = vmatmul.bf16.gmra.mxu0 %v592
        %v1349 = vpop.f32.mrf.mxu0
        %v1350 = vadd.f32 %v1321, %v1349
        %v1351 = vpop.f32.mrf.mxu0
        %v1352 = vadd.f32 %v1323, %v1351
        %1353 = vmatmul.bf16.gmra.mxu0 %v594
        %v1354 = vpop.f32.mrf.mxu0
        %v1355 = vadd.f32 %v1326, %v1354
        %v1356 = vpop.f32.mrf.mxu0
        %v1357 = vadd.f32 %v1328, %v1356
        %1358 = vdwg.mxu0
        %1359 = vmatpush.bf16.msra.mxu0 %v1045
        %1360 = vmatpush.bf16.msra.mxu0 %v1037
        %1361 = vmatpush.bf16.msra.mxu0 %v1029
        %1362 = vmatpush.bf16.msra.mxu0 %v1021
        %1363 = vmatpush.bf16.msra.mxu0 %v1013
        %1364 = vmatpush.bf16.msra.mxu0 %v1005
        %1365 = vmatpush.bf16.msra.mxu0 %v997
        %1366 = vmatpush.bf16.msra.mxu0 %v989
        %1367 = vmatmul.bf16.gmra.mxu0 %v587
        %v1368 = vpop.f32.mrf.mxu0
        %v1369 = vadd.f32 0.0, %v1368
        %v1370 = vpop.f32.mrf.mxu0
        %v1371 = vadd.f32 0.0, %v1370
        %1372 = vmatmul.bf16.gmra.mxu0 %v589
        %v1373 = vpop.f32.mrf.mxu0
        %v1374 = vadd.f32 0.0, %v1373
        %v1375 = vpop.f32.mrf.mxu0
        %v1376 = vadd.f32 0.0, %v1375
        %1377 = vmatmul.bf16.gmra.mxu0 %v591
        %v1378 = vpop.f32.mrf.mxu0
        %v1379 = vadd.f32 0.0, %v1378
        %v1380 = vpop.f32.mrf.mxu0
        %v1381 = vadd.f32 0.0, %v1380
        %1382 = vmatmul.bf16.gmra.mxu0 %v593
        %v1383 = vpop.f32.mrf.mxu0
        %v1384 = vadd.f32 0.0, %v1383
        %v1385 = vpop.f32.mrf.mxu0
        %v1386 = vadd.f32 0.0, %v1385
        %1387 = vdwg.mxu0
        %1388 = vmatpush.bf16.msra.mxu0 %v1109
        %1389 = vmatpush.bf16.msra.mxu0 %v1101
        %1390 = vmatpush.bf16.msra.mxu0 %v1093
        %1391 = vmatpush.bf16.msra.mxu0 %v1085
        %1392 = vmatpush.bf16.msra.mxu0 %v1077
        %1393 = vmatpush.bf16.msra.mxu0 %v1069
        %1394 = vmatpush.bf16.msra.mxu0 %v1061
        %1395 = vmatpush.bf16.msra.mxu0 %v1053
        %1396 = vmatmul.bf16.gmra.mxu0 %v588
        %v1397 = vpop.f32.mrf.mxu0
        %v1398 = vadd.f32 %v1369, %v1397
        %v1399 = vpop.f32.mrf.mxu0
        %v1400 = vadd.f32 %v1371, %v1399
        %1401 = vmatmul.bf16.gmra.mxu0 %v590
        %v1402 = vpop.f32.mrf.mxu0
        %v1403 = vadd.f32 %v1374, %v1402
        %v1404 = vpop.f32.mrf.mxu0
        %v1405 = vadd.f32 %v1376, %v1404
        %1406 = vmatmul.bf16.gmra.mxu0 %v592
        %v1407 = vpop.f32.mrf.mxu0
        %v1408 = vadd.f32 %v1379, %v1407
        %v1409 = vpop.f32.mrf.mxu0
        %v1410 = vadd.f32 %v1381, %v1409
        %1411 = vmatmul.bf16.gmra.mxu0 %v594
        %v1412 = vpop.f32.mrf.mxu0
        %v1413 = vadd.f32 %v1384, %v1412
        %v1414 = vpop.f32.mrf.mxu0
        %v1415 = vadd.f32 %v1386, %v1414
        %1416 = vdwg.mxu0
        %1417 = vmatpush.bf16.msra.mxu0 %v1046
        %1418 = vmatpush.bf16.msra.mxu0 %v1038
        %1419 = vmatpush.bf16.msra.mxu0 %v1030
        %1420 = vmatpush.bf16.msra.mxu0 %v1022
        %1421 = vmatpush.bf16.msra.mxu0 %v1014
        %1422 = vmatpush.bf16.msra.mxu0 %v1006
        %1423 = vmatpush.bf16.msra.mxu0 %v998
        %1424 = vmatpush.bf16.msra.mxu0 %v990
        %1425 = vmatmul.bf16.gmra.mxu0 %v587
        %v1426 = vpop.f32.mrf.mxu0
        %v1427 = vadd.f32 0.0, %v1426
        %v1428 = vpop.f32.mrf.mxu0
        %v1429 = vadd.f32 0.0, %v1428
        %1430 = vmatmul.bf16.gmra.mxu0 %v589
        %v1431 = vpop.f32.mrf.mxu0
        %v1432 = vadd.f32 0.0, %v1431
        %v1433 = vpop.f32.mrf.mxu0
        %v1434 = vadd.f32 0.0, %v1433
        %1435 = vmatmul.bf16.gmra.mxu0 %v591
        %v1436 = vpop.f32.mrf.mxu0
        %v1437 = vadd.f32 0.0, %v1436
        %v1438 = vpop.f32.mrf.mxu0
        %v1439 = vadd.f32 0.0, %v1438
        %1440 = vmatmul.bf16.gmra.mxu0 %v593
        %v1441 = vpop.f32.mrf.mxu0
        %v1442 = vadd.f32 0.0, %v1441
        %v1443 = vpop.f32.mrf.mxu0
        %v1444 = vadd.f32 0.0, %v1443
        %1445 = vdwg.mxu0
        %1446 = vmatpush.bf16.msra.mxu0 %v1110
        %1447 = vmatpush.bf16.msra.mxu0 %v1102
        %1448 = vmatpush.bf16.msra.mxu0 %v1094
        %1449 = vmatpush.bf16.msra.mxu0 %v1086
        %1450 = vmatpush.bf16.msra.mxu0 %v1078
        %1451 = vmatpush.bf16.msra.mxu0 %v1070
        %1452 = vmatpush.bf16.msra.mxu0 %v1062
        %1453 = vmatpush.bf16.msra.mxu0 %v1054
        %1454 = vmatmul.bf16.gmra.mxu0 %v588
        %v1455 = vpop.f32.mrf.mxu0
        %v1456 = vadd.f32 %v1427, %v1455
        %v1457 = vpop.f32.mrf.mxu0
        %v1458 = vadd.f32 %v1429, %v1457
        %1459 = vmatmul.bf16.gmra.mxu0 %v590
        %v1460 = vpop.f32.mrf.mxu0
        %v1461 = vadd.f32 %v1432, %v1460
        %v1462 = vpop.f32.mrf.mxu0
        %v1463 = vadd.f32 %v1434, %v1462
        %1464 = vmatmul.bf16.gmra.mxu0 %v592
        %v1465 = vpop.f32.mrf.mxu0
        %v1466 = vadd.f32 %v1437, %v1465
        %v1467 = vpop.f32.mrf.mxu0
        %v1468 = vadd.f32 %v1439, %v1467
        %1469 = vmatmul.bf16.gmra.mxu0 %v594
        %v1470 = vpop.f32.mrf.mxu0
        %v1471 = vadd.f32 %v1442, %v1470
        %v1472 = vpop.f32.mrf.mxu0
        %v1473 = vadd.f32 %v1444, %v1472
        %1474 = vdwg.mxu0
        %1475 = vmatpush.bf16.msra.mxu0 %v1047
        %1476 = vmatpush.bf16.msra.mxu0 %v1039
        %1477 = vmatpush.bf16.msra.mxu0 %v1031
        %1478 = vmatpush.bf16.msra.mxu0 %v1023
        %1479 = vmatpush.bf16.msra.mxu0 %v1015
        %1480 = vmatpush.bf16.msra.mxu0 %v1007
        %1481 = vmatpush.bf16.msra.mxu0 %v999
        %1482 = vmatpush.bf16.msra.mxu0 %v991
        %1483 = vmatmul.bf16.gmra.mxu0 %v587
        %v1484 = vpop.f32.mrf.mxu0
        %v1485 = vadd.f32 0.0, %v1484
        %v1486 = vpop.f32.mrf.mxu0
        %v1487 = vadd.f32 0.0, %v1486
        %1488 = vmatmul.bf16.gmra.mxu0 %v589
        %v1489 = vpop.f32.mrf.mxu0
        %v1490 = vadd.f32 0.0, %v1489
        %v1491 = vpop.f32.mrf.mxu0
        %v1492 = vadd.f32 0.0, %v1491
        %1493 = vmatmul.bf16.gmra.mxu0 %v591
        %v1494 = vpop.f32.mrf.mxu0
        %v1495 = vadd.f32 0.0, %v1494
        %v1496 = vpop.f32.mrf.mxu0
        %v1497 = vadd.f32 0.0, %v1496
        %1498 = vmatmul.bf16.gmra.mxu0 %v593
        %v1499 = vpop.f32.mrf.mxu0
        %v1500 = vadd.f32 0.0, %v1499
        %v1501 = vpop.f32.mrf.mxu0
        %v1502 = vadd.f32 0.0, %v1501
        %1503 = vdwg.mxu0
        %1504 = vmatpush.bf16.msra.mxu0 %v1111
        %1505 = vmatpush.bf16.msra.mxu0 %v1103
        %1506 = vmatpush.bf16.msra.mxu0 %v1095
        %1507 = vmatpush.bf16.msra.mxu0 %v1087
        %1508 = vmatpush.bf16.msra.mxu0 %v1079
        %1509 = vmatpush.bf16.msra.mxu0 %v1071
        %1510 = vmatpush.bf16.msra.mxu0 %v1063
        %1511 = vmatpush.bf16.msra.mxu0 %v1055
        %1512 = vmatmul.bf16.gmra.mxu0 %v588
        %v1513 = vpop.f32.mrf.mxu0
        %v1514 = vadd.f32 %v1485, %v1513
        %v1515 = vpop.f32.mrf.mxu0
        %v1516 = vadd.f32 %v1487, %v1515
        %1517 = vmatmul.bf16.gmra.mxu0 %v590
        %v1518 = vpop.f32.mrf.mxu0
        %v1519 = vadd.f32 %v1490, %v1518
        %v1520 = vpop.f32.mrf.mxu0
        %v1521 = vadd.f32 %v1492, %v1520
        %1522 = vmatmul.bf16.gmra.mxu0 %v592
        %v1523 = vpop.f32.mrf.mxu0
        %v1524 = vadd.f32 %v1495, %v1523
        %v1525 = vpop.f32.mrf.mxu0
        %v1526 = vadd.f32 %v1497, %v1525
        %1527 = vmatmul.bf16.gmra.mxu0 %v594
        %v1528 = vpop.f32.mrf.mxu0
        %v1529 = vadd.f32 %v1500, %v1528
        %v1530 = vpop.f32.mrf.mxu0
        %v1531 = vadd.f32 %v1502, %v1530
        %1532 = vdwg.mxu0
        %1533 = vmatpush.bf16.msra.mxu0 %v1048
        %1534 = vmatpush.bf16.msra.mxu0 %v1040
        %1535 = vmatpush.bf16.msra.mxu0 %v1032
        %1536 = vmatpush.bf16.msra.mxu0 %v1024
        %1537 = vmatpush.bf16.msra.mxu0 %v1016
        %1538 = vmatpush.bf16.msra.mxu0 %v1008
        %1539 = vmatpush.bf16.msra.mxu0 %v1000
        %1540 = vmatpush.bf16.msra.mxu0 %v992
        %1541 = vmatmul.bf16.gmra.mxu0 %v587
        %v1542 = vpop.f32.mrf.mxu0
        %v1543 = vadd.f32 0.0, %v1542
        %v1544 = vpop.f32.mrf.mxu0
        %v1545 = vadd.f32 0.0, %v1544
        %1546 = vmatmul.bf16.gmra.mxu0 %v589
        %v1547 = vpop.f32.mrf.mxu0
        %v1548 = vadd.f32 0.0, %v1547
        %v1549 = vpop.f32.mrf.mxu0
        %v1550 = vadd.f32 0.0, %v1549
        %1551 = vmatmul.bf16.gmra.mxu0 %v591
        %v1552 = vpop.f32.mrf.mxu0
        %v1553 = vadd.f32 0.0, %v1552
        %v1554 = vpop.f32.mrf.mxu0
        %v1555 = vadd.f32 0.0, %v1554
        %1556 = vmatmul.bf16.gmra.mxu0 %v593
        %v1557 = vpop.f32.mrf.mxu0
        %v1558 = vadd.f32 0.0, %v1557
        %v1559 = vpop.f32.mrf.mxu0
        %v1560 = vadd.f32 0.0, %v1559
        %1561 = vdwg.mxu0
        %1562 = vmatpush.bf16.msra.mxu0 %v1112
        %1563 = vmatpush.bf16.msra.mxu0 %v1104
        %1564 = vmatpush.bf16.msra.mxu0 %v1096
        %1565 = vmatpush.bf16.msra.mxu0 %v1088
        %1566 = vmatpush.bf16.msra.mxu0 %v1080
        %1567 = vmatpush.bf16.msra.mxu0 %v1072
        %1568 = vmatpush.bf16.msra.mxu0 %v1064
        %1569 = vmatpush.bf16.msra.mxu0 %v1056
        %1570 = vmatmul.bf16.gmra.mxu0 %v588
        %v1571 = vpop.f32.mrf.mxu0
        %v1572 = vadd.f32 %v1543, %v1571
        %v1573 = vpop.f32.mrf.mxu0
        %v1574 = vadd.f32 %v1545, %v1573
        %1575 = vmatmul.bf16.gmra.mxu0 %v590
        %v1576 = vpop.f32.mrf.mxu0
        %v1577 = vadd.f32 %v1548, %v1576
        %v1578 = vpop.f32.mrf.mxu0
        %v1579 = vadd.f32 %v1550, %v1578
        %1580 = vmatmul.bf16.gmra.mxu0 %v592
        %v1581 = vpop.f32.mrf.mxu0
        %v1582 = vadd.f32 %v1553, %v1581
        %v1583 = vpop.f32.mrf.mxu0
        %v1584 = vadd.f32 %v1555, %v1583
        %1585 = vmatmul.bf16.gmra.mxu0 %v594
        %v1586 = vpop.f32.mrf.mxu0
        %v1587 = vadd.f32 %v1558, %v1586
        %v1588 = vpop.f32.mrf.mxu0
        %v1589 = vadd.f32 %v1560, %v1588
        %1590 = vdwg.mxu0
        %1591 = vmatpush.bf16.msra.mxu0 %v1049
        %1592 = vmatpush.bf16.msra.mxu0 %v1041
        %1593 = vmatpush.bf16.msra.mxu0 %v1033
        %1594 = vmatpush.bf16.msra.mxu0 %v1025
        %1595 = vmatpush.bf16.msra.mxu0 %v1017
        %1596 = vmatpush.bf16.msra.mxu0 %v1009
        %1597 = vmatpush.bf16.msra.mxu0 %v1001
        %1598 = vmatpush.bf16.msra.mxu0 %v993
        %1599 = vmatmul.bf16.gmra.mxu0 %v587
        %v1600 = vpop.f32.mrf.mxu0
        %v1601 = vadd.f32 0.0, %v1600
        %v1602 = vpop.f32.mrf.mxu0
        %v1603 = vadd.f32 0.0, %v1602
        %1604 = vmatmul.bf16.gmra.mxu0 %v589
        %v1605 = vpop.f32.mrf.mxu0
        %v1606 = vadd.f32 0.0, %v1605
        %v1607 = vpop.f32.mrf.mxu0
        %v1608 = vadd.f32 0.0, %v1607
        %1609 = vmatmul.bf16.gmra.mxu0 %v591
        %v1610 = vpop.f32.mrf.mxu0
        %v1611 = vadd.f32 0.0, %v1610
        %v1612 = vpop.f32.mrf.mxu0
        %v1613 = vadd.f32 0.0, %v1612
        %1614 = vmatmul.bf16.gmra.mxu0 %v593
        %v1615 = vpop.f32.mrf.mxu0
        %v1616 = vadd.f32 0.0, %v1615
        %v1617 = vpop.f32.mrf.mxu0
        %v1618 = vadd.f32 0.0, %v1617
        %1619 = vdwg.mxu0
        %1620 = vmatpush.bf16.msra.mxu0 %v1113
        %1621 = vmatpush.bf16.msra.mxu0 %v1105
        %1622 = vmatpush.bf16.msra.mxu0 %v1097
        %1623 = vmatpush.bf16.msra.mxu0 %v1089
        %1624 = vmatpush.bf16.msra.mxu0 %v1081
        %1625 = vmatpush.bf16.msra.mxu0 %v1073
        %1626 = vmatpush.bf16.msra.mxu0 %v1065
        %1627 = vmatpush.bf16.msra.mxu0 %v1057
        %1628 = vmatmul.bf16.gmra.mxu0 %v588
        %v1629 = vpop.f32.mrf.mxu0
        %v1630 = vadd.f32 %v1601, %v1629
        %v1631 = vpop.f32.mrf.mxu0
        %v1632 = vadd.f32 %v1603, %v1631
        %1633 = vmatmul.bf16.gmra.mxu0 %v590
        %v1634 = vpop.f32.mrf.mxu0
        %v1635 = vadd.f32 %v1606, %v1634
        %v1636 = vpop.f32.mrf.mxu0
        %v1637 = vadd.f32 %v1608, %v1636
        %1638 = vmatmul.bf16.gmra.mxu0 %v592
        %v1639 = vpop.f32.mrf.mxu0
        %v1640 = vadd.f32 %v1611, %v1639
        %v1641 = vpop.f32.mrf.mxu0
        %v1642 = vadd.f32 %v1613, %v1641
        %1643 = vmatmul.bf16.gmra.mxu0 %v594
        %v1644 = vpop.f32.mrf.mxu0
        %v1645 = vadd.f32 %v1616, %v1644
        %v1646 = vpop.f32.mrf.mxu0
        %v1647 = vadd.f32 %v1618, %v1646
        %1648 = vdwg.mxu0
        %1649 = vmatpush.bf16.msra.mxu0 %v1050
        %1650 = vmatpush.bf16.msra.mxu0 %v1042
        %1651 = vmatpush.bf16.msra.mxu0 %v1034
        %1652 = vmatpush.bf16.msra.mxu0 %v1026
        %1653 = vmatpush.bf16.msra.mxu0 %v1018
        %1654 = vmatpush.bf16.msra.mxu0 %v1010
        %1655 = vmatpush.bf16.msra.mxu0 %v1002
        %1656 = vmatpush.bf16.msra.mxu0 %v994
        %1657 = vmatmul.bf16.gmra.mxu0 %v587
        %v1658 = vpop.f32.mrf.mxu0
        %v1659 = vadd.f32 0.0, %v1658
        %v1660 = vpop.f32.mrf.mxu0
        %v1661 = vadd.f32 0.0, %v1660
        %1662 = vmatmul.bf16.gmra.mxu0 %v589
        %v1663 = vpop.f32.mrf.mxu0
        %v1664 = vadd.f32 0.0, %v1663
        %v1665 = vpop.f32.mrf.mxu0
        %v1666 = vadd.f32 0.0, %v1665
        %1667 = vmatmul.bf16.gmra.mxu0 %v591
        %v1668 = vpop.f32.mrf.mxu0
        %v1669 = vadd.f32 0.0, %v1668
        %v1670 = vpop.f32.mrf.mxu0
        %v1671 = vadd.f32 0.0, %v1670
        %1672 = vmatmul.bf16.gmra.mxu0 %v593
        %v1673 = vpop.f32.mrf.mxu0
        %v1674 = vadd.f32 0.0, %v1673
        %v1675 = vpop.f32.mrf.mxu0
        %v1676 = vadd.f32 0.0, %v1675
        %1677 = vdwg.mxu0
        %1678 = vmatpush.bf16.msra.mxu0 %v1114
        %1679 = vmatpush.bf16.msra.mxu0 %v1106
        %1680 = vmatpush.bf16.msra.mxu0 %v1098
        %1681 = vmatpush.bf16.msra.mxu0 %v1090
        %1682 = vmatpush.bf16.msra.mxu0 %v1082
        %1683 = vmatpush.bf16.msra.mxu0 %v1074
        %1684 = vmatpush.bf16.msra.mxu0 %v1066
        %1685 = vmatpush.bf16.msra.mxu0 %v1058
        %1686 = vmatmul.bf16.gmra.mxu0 %v588
        %v1687 = vpop.f32.mrf.mxu0
        %v1688 = vadd.f32 %v1659, %v1687
        %v1689 = vpop.f32.mrf.mxu0
        %v1690 = vadd.f32 %v1661, %v1689
        %1691 = vmatmul.bf16.gmra.mxu0 %v590
        %v1692 = vpop.f32.mrf.mxu0
        %v1693 = vadd.f32 %v1664, %v1692
        %v1694 = vpop.f32.mrf.mxu0
        %v1695 = vadd.f32 %v1666, %v1694
        %1696 = vmatmul.bf16.gmra.mxu0 %v592
        %v1697 = vpop.f32.mrf.mxu0
        %v1698 = vadd.f32 %v1669, %v1697
        %v1699 = vpop.f32.mrf.mxu0
        %v1700 = vadd.f32 %v1671, %v1699
        %1701 = vmatmul.bf16.gmra.mxu0 %v594
        %v1702 = vpop.f32.mrf.mxu0
        %v1703 = vadd.f32 %v1674, %v1702
        %v1704 = vpop.f32.mrf.mxu0
        %v1705 = vadd.f32 %v1676, %v1704
        %1706 = vdwg.mxu0
        %v1707 = vadd.f32 %v499, %v1282
        %v1708 = vadd.f32 %v500, %v1340
        %v1709 = vadd.f32 %v501, %v1398
        %v1710 = vadd.f32 %v502, %v1456
        %v1711 = vadd.f32 %v503, %v1514
        %v1712 = vadd.f32 %v504, %v1572
        %v1713 = vadd.f32 %v505, %v1630
        %v1714 = vadd.f32 %v506, %v1688
        %v1715 = vadd.f32 %v507, %v1284
        %v1716 = vadd.f32 %v508, %v1342
        %v1717 = vadd.f32 %v509, %v1400
        %v1718 = vadd.f32 %v510, %v1458
        %v1719 = vadd.f32 %v511, %v1516
        %v1720 = vadd.f32 %v512, %v1574
        %v1721 = vadd.f32 %v513, %v1632
        %v1722 = vadd.f32 %v514, %v1690
        %v1723 = vadd.f32 %v515, %v1287
        %v1724 = vadd.f32 %v516, %v1345
        %v1725 = vadd.f32 %v517, %v1403
        %v1726 = vadd.f32 %v518, %v1461
        %v1727 = vadd.f32 %v519, %v1519
        %v1728 = vadd.f32 %v520, %v1577
        %v1729 = vadd.f32 %v521, %v1635
        %v1730 = vadd.f32 %v522, %v1693
        %v1731 = vadd.f32 %v523, %v1289
        %v1732 = vadd.f32 %v524, %v1347
        %v1733 = vadd.f32 %v525, %v1405
        %v1734 = vadd.f32 %v526, %v1463
        %v1735 = vadd.f32 %v527, %v1521
        %v1736 = vadd.f32 %v528, %v1579
        %v1737 = vadd.f32 %v529, %v1637
        %v1738 = vadd.f32 %v530, %v1695
        %v1739 = vadd.f32 %v531, %v1292
        %v1740 = vadd.f32 %v532, %v1350
        %v1741 = vadd.f32 %v533, %v1408
        %v1742 = vadd.f32 %v534, %v1466
        %v1743 = vadd.f32 %v535, %v1524
        %v1744 = vadd.f32 %v536, %v1582
        %v1745 = vadd.f32 %v537, %v1640
        %v1746 = vadd.f32 %v538, %v1698
        %v1747 = vadd.f32 %v539, %v1294
        %v1748 = vadd.f32 %v540, %v1352
        %v1749 = vadd.f32 %v541, %v1410
        %v1750 = vadd.f32 %v542, %v1468
        %v1751 = vadd.f32 %v543, %v1526
        %v1752 = vadd.f32 %v544, %v1584
        %v1753 = vadd.f32 %v545, %v1642
        %v1754 = vadd.f32 %v546, %v1700
        %v1755 = vadd.f32 %v547, %v1297
        %v1756 = vadd.f32 %v548, %v1355
        %v1757 = vadd.f32 %v549, %v1413
        %v1758 = vadd.f32 %v550, %v1471
        %v1759 = vadd.f32 %v551, %v1529
        %v1760 = vadd.f32 %v552, %v1587
        %v1761 = vadd.f32 %v553, %v1645
        %v1762 = vadd.f32 %v554, %v1703
        %v1763 = vadd.f32 %v555, %v1299
        %v1764 = vadd.f32 %v556, %v1357
        %v1765 = vadd.f32 %v557, %v1415
        %v1766 = vadd.f32 %v558, %v1473
        %v1767 = vadd.f32 %v559, %v1531
        %v1768 = vadd.f32 %v560, %v1589
        %v1769 = vadd.f32 %v561, %v1647
        %v1770 = vadd.f32 %v562, %v1705
        %1771 = vst [vmem:[#allocation2] sm:$0xff] %v1707
        %1772 = vst [vmem:[#allocation2 + $0x8] sm:$0xff] %v1708
        %1773 = vst [vmem:[#allocation2 + $0x10] sm:$0xff] %v1709
        %1774 = vst [vmem:[#allocation2 + $0x18] sm:$0xff] %v1710
        %1775 = vst [vmem:[#allocation2 + $0x20] sm:$0xff] %v1711
        %1776 = vst [vmem:[#allocation2 + $0x28] sm:$0xff] %v1712
        %1777 = vst [vmem:[#allocation2 + $0x30] sm:$0xff] %v1713
        %1778 = vst [vmem:[#allocation2 + $0x38] sm:$0xff] %v1714
        %1779 = vst [vmem:[#allocation2 + $0x40] sm:$0xff] %v1715
        %1780 = vst [vmem:[#allocation2 + $0x48] sm:$0xff] %v1716
        %1781 = vst [vmem:[#allocation2 + $0x50] sm:$0xff] %v1717
        %1782 = vst [vmem:[#allocation2 + $0x58] sm:$0xff] %v1718
        %1783 = vst [vmem:[#allocation2 + $0x60] sm:$0xff] %v1719
        %1784 = vst [vmem:[#allocation2 + $0x68] sm:$0xff] %v1720
        %1785 = vst [vmem:[#allocation2 + $0x70] sm:$0xff] %v1721
        %1786 = vst [vmem:[#allocation2 + $0x78] sm:$0xff] %v1722
        %1787 = vst [vmem:[#allocation2 + $0x80] sm:$0xff] %v1723
        %1788 = vst [vmem:[#allocation2 + $0x88] sm:$0xff] %v1724
        %1789 = vst [vmem:[#allocation2 + $0x90] sm:$0xff] %v1725
        %1790 = vst [vmem:[#allocation2 + $0x98] sm:$0xff] %v1726
        %1791 = vst [vmem:[#allocation2 + $0xa0] sm:$0xff] %v1727
        %1792 = vst [vmem:[#allocation2 + $0xa8] sm:$0xff] %v1728
        %1793 = vst [vmem:[#allocation2 + $0xb0] sm:$0xff] %v1729
        %1794 = vst [vmem:[#allocation2 + $0xb8] sm:$0xff] %v1730
        %1795 = vst [vmem:[#allocation2 + $0xc0] sm:$0xff] %v1731
        %1796 = vst [vmem:[#allocation2 + $0xc8] sm:$0xff] %v1732
        %1797 = vst [vmem:[#allocation2 + $0xd0] sm:$0xff] %v1733
        %1798 = vst [vmem:[#allocation2 + $0xd8] sm:$0xff] %v1734
        %1799 = vst [vmem:[#allocation2 + $0xe0] sm:$0xff] %v1735
        %1800 = vst [vmem:[#allocation2 + $0xe8] sm:$0xff] %v1736
        %1801 = vst [vmem:[#allocation2 + $0xf0] sm:$0xff] %v1737
        %1802 = vst [vmem:[#allocation2 + $0xf8] sm:$0xff] %v1738
        %1803 = vst [vmem:[#allocation2 + $0x100] sm:$0xff] %v1739
        %1804 = vst [vmem:[#allocation2 + $0x108] sm:$0xff] %v1740
        %1805 = vst [vmem:[#allocation2 + $0x110] sm:$0xff] %v1741
        %1806 = vst [vmem:[#allocation2 + $0x118] sm:$0xff] %v1742
        %1807 = vst [vmem:[#allocation2 + $0x120] sm:$0xff] %v1743
        %1808 = vst [vmem:[#allocation2 + $0x128] sm:$0xff] %v1744
        %1809 = vst [vmem:[#allocation2 + $0x130] sm:$0xff] %v1745
        %1810 = vst [vmem:[#allocation2 + $0x138] sm:$0xff] %v1746
        %1811 = vst [vmem:[#allocation2 + $0x140] sm:$0xff] %v1747
        %1812 = vst [vmem:[#allocation2 + $0x148] sm:$0xff] %v1748
        %1813 = vst [vmem:[#allocation2 + $0x150] sm:$0xff] %v1749
        %1814 = vst [vmem:[#allocation2 + $0x158] sm:$0xff] %v1750
        %1815 = vst [vmem:[#allocation2 + $0x160] sm:$0xff] %v1751
        %1816 = vst [vmem:[#allocation2 + $0x168] sm:$0xff] %v1752
        %1817 = vst [vmem:[#allocation2 + $0x170] sm:$0xff] %v1753
        %1818 = vst [vmem:[#allocation2 + $0x178] sm:$0xff] %v1754
        %1819 = vst [vmem:[#allocation2 + $0x180] sm:$0xff] %v1755
        %1820 = vst [vmem:[#allocation2 + $0x188] sm:$0xff] %v1756
        %1821 = vst [vmem:[#allocation2 + $0x190] sm:$0xff] %v1757
        %1822 = vst [vmem:[#allocation2 + $0x198] sm:$0xff] %v1758
        %1823 = vst [vmem:[#allocation2 + $0x1a0] sm:$0xff] %v1759
        %1824 = vst [vmem:[#allocation2 + $0x1a8] sm:$0xff] %v1760
        %1825 = vst [vmem:[#allocation2 + $0x1b0] sm:$0xff] %v1761
        %1826 = vst [vmem:[#allocation2 + $0x1b8] sm:$0xff] %v1762
        %1827 = vst [vmem:[#allocation2 + $0x1c0] sm:$0xff] %v1763
        %1828 = vst [vmem:[#allocation2 + $0x1c8] sm:$0xff] %v1764
        %1829 = vst [vmem:[#allocation2 + $0x1d0] sm:$0xff] %v1765
        %1830 = vst [vmem:[#allocation2 + $0x1d8] sm:$0xff] %v1766
        %1831 = vst [vmem:[#allocation2 + $0x1e0] sm:$0xff] %v1767
        %1832 = vst [vmem:[#allocation2 + $0x1e8] sm:$0xff] %v1768
        %1833 = vst [vmem:[#allocation2 + $0x1f0] sm:$0xff] %v1769
        %1834 = vst [vmem:[#allocation2 + $0x1f8] sm:$0xff] %v1770
        // Predicated region
        $region45: #{video_decoder_forward.4} parent=31 // pred_check
          %p1835 = pneg %p292
        $region46: #{video_decoder_forward.4} parent=31 // pred_check_branch
          %1837 = sbr.rel (%p1835) target = $region48
        $region47: #{video_decoder_forward.4} parent=31 // pred_region
          %v1838 = vld [vmem:[#allocation2] sm:$0xff]
          %v1839 = vld [vmem:[#allocation2 + $0x8] sm:$0xff]
          %v1840 = vld [vmem:[#allocation2 + $0x10] sm:$0xff]
          %v1841 = vld [vmem:[#allocation2 + $0x18] sm:$0xff]
          %v1842 = vld [vmem:[#allocation2 + $0x20] sm:$0xff]
          %v1843 = vld [vmem:[#allocation2 + $0x28] sm:$0xff]
          %v1844 = vld [vmem:[#allocation2 + $0x30] sm:$0xff]
          %v1845 = vld [vmem:[#allocation2 + $0x38] sm:$0xff]
          %v1846 = vld [vmem:[#allocation2 + $0x40] sm:$0xff]
          %v1847 = vld [vmem:[#allocation2 + $0x48] sm:$0xff]
          %v1848 = vld [vmem:[#allocation2 + $0x50] sm:$0xff]
          %v1849 = vld [vmem:[#allocation2 + $0x58] sm:$0xff]
          %v1850 = vld [vmem:[#allocation2 + $0x60] sm:$0xff]
          %v1851 = vld [vmem:[#allocation2 + $0x68] sm:$0xff]
          %v1852 = vld [vmem:[#allocation2 + $0x70] sm:$0xff]
          %v1853 = vld [vmem:[#allocation2 + $0x78] sm:$0xff]
          %v1854 = vld [vmem:[#allocation2 + $0x80] sm:$0xff]
          %v1855 = vld [vmem:[#allocation2 + $0x88] sm:$0xff]
          %v1856 = vld [vmem:[#allocation2 + $0x90] sm:$0xff]
          %v1857 = vld [vmem:[#allocation2 + $0x98] sm:$0xff]
          %v1858 = vld [vmem:[#allocation2 + $0xa0] sm:$0xff]
          %v1859 = vld [vmem:[#allocation2 + $0xa8] sm:$0xff]
          %v1860 = vld [vmem:[#allocation2 + $0xb0] sm:$0xff]
          %v1861 = vld [vmem:[#allocation2 + $0xb8] sm:$0xff]
          %v1862 = vld [vmem:[#allocation2 + $0xc0] sm:$0xff]
          %v1863 = vld [vmem:[#allocation2 + $0xc8] sm:$0xff]
          %v1864 = vld [vmem:[#allocation2 + $0xd0] sm:$0xff]
          %v1865 = vld [vmem:[#allocation2 + $0xd8] sm:$0xff]
          %v1866 = vld [vmem:[#allocation2 + $0xe0] sm:$0xff]
          %v1867 = vld [vmem:[#allocation2 + $0xe8] sm:$0xff]
          %v1868 = vld [vmem:[#allocation2 + $0xf0] sm:$0xff]
          %v1869 = vld [vmem:[#allocation2 + $0xf8] sm:$0xff]
          %v1870 = vld [vmem:[#allocation2 + $0x100] sm:$0xff]
          %v1871 = vld [vmem:[#allocation2 + $0x108] sm:$0xff]
          %v1872 = vld [vmem:[#allocation2 + $0x110] sm:$0xff]
          %v1873 = vld [vmem:[#allocation2 + $0x118] sm:$0xff]
          %v1874 = vld [vmem:[#allocation2 + $0x120] sm:$0xff]
          %v1875 = vld [vmem:[#allocation2 + $0x128] sm:$0xff]
          %v1876 = vld [vmem:[#allocation2 + $0x130] sm:$0xff]
          %v1877 = vld [vmem:[#allocation2 + $0x138] sm:$0xff]
          %v1878 = vld [vmem:[#allocation2 + $0x140] sm:$0xff]
          %v1879 = vld [vmem:[#allocation2 + $0x148] sm:$0xff]
          %v1880 = vld [vmem:[#allocation2 + $0x150] sm:$0xff]
          %v1881 = vld [vmem:[#allocation2 + $0x158] sm:$0xff]
          %v1882 = vld [vmem:[#allocation2 + $0x160] sm:$0xff]
          %v1883 = vld [vmem:[#allocation2 + $0x168] sm:$0xff]
          %v1884 = vld [vmem:[#allocation2 + $0x170] sm:$0xff]
          %v1885 = vld [vmem:[#allocation2 + $0x178] sm:$0xff]
          %v1886 = vld [vmem:[#allocation2 + $0x180] sm:$0xff]
          %v1887 = vld [vmem:[#allocation2 + $0x188] sm:$0xff]
          %v1888 = vld [vmem:[#allocation2 + $0x190] sm:$0xff]
          %v1889 = vld [vmem:[#allocation2 + $0x198] sm:$0xff]
          %v1890 = vld [vmem:[#allocation2 + $0x1a0] sm:$0xff]
          %v1891 = vld [vmem:[#allocation2 + $0x1a8] sm:$0xff]
          %v1892 = vld [vmem:[#allocation2 + $0x1b0] sm:$0xff]
          %v1893 = vld [vmem:[#allocation2 + $0x1b8] sm:$0xff]
          %v1894 = vld [vmem:[#allocation2 + $0x1c0] sm:$0xff]
          %v1895 = vld [vmem:[#allocation2 + $0x1c8] sm:$0xff]
          %v1896 = vld [vmem:[#allocation2 + $0x1d0] sm:$0xff]
          %v1897 = vld [vmem:[#allocation2 + $0x1d8] sm:$0xff]
          %v1898 = vld [vmem:[#allocation2 + $0x1e0] sm:$0xff]
          %v1899 = vld [vmem:[#allocation2 + $0x1e8] sm:$0xff]
          %v1900 = vld [vmem:[#allocation2 + $0x1f0] sm:$0xff]
          %v1901 = vld [vmem:[#allocation2 + $0x1f8] sm:$0xff]
          %v1902 = vld [vmem:[#allocation5] sm:$0xff]
          %v1904 = vperm.slane %v1902, 0
          %v1905 = vperm.slane %v1902, 1
          %v1906 = vperm.slane %v1902, 2
          %v1907 = vperm.slane %v1902, 3
          %v1908 = vperm.slane %v1902, 4
          %v1909 = vperm.slane %v1902, 5
          %v1910 = vperm.slane %v1902, 6
          %v1911 = vperm.slane %v1902, 7
          %v1920 = vadd.f32 %v1838, %v1904
          %v1921 = vadd.f32 %v1839, %v1905
          %v1922 = vadd.f32 %v1840, %v1906
          %v1923 = vadd.f32 %v1841, %v1907
          %v1924 = vadd.f32 %v1842, %v1908
          %v1925 = vadd.f32 %v1843, %v1909
          %v1926 = vadd.f32 %v1844, %v1910
          %v1927 = vadd.f32 %v1845, %v1911
          %v1928 = vadd.f32 %v1846, %v1904
          %v1929 = vadd.f32 %v1847, %v1905
          %v1930 = vadd.f32 %v1848, %v1906
          %v1931 = vadd.f32 %v1849, %v1907
          %v1932 = vadd.f32 %v1850, %v1908
          %v1933 = vadd.f32 %v1851, %v1909
          %v1934 = vadd.f32 %v1852, %v1910
          %v1935 = vadd.f32 %v1853, %v1911
          %v1936 = vadd.f32 %v1854, %v1904
          %v1937 = vadd.f32 %v1855, %v1905
          %v1938 = vadd.f32 %v1856, %v1906
          %v1939 = vadd.f32 %v1857, %v1907
          %v1940 = vadd.f32 %v1858, %v1908
          %v1941 = vadd.f32 %v1859, %v1909
          %v1942 = vadd.f32 %v1860, %v1910
          %v1943 = vadd.f32 %v1861, %v1911
          %v1944 = vadd.f32 %v1862, %v1904
          %v1945 = vadd.f32 %v1863, %v1905
          %v1946 = vadd.f32 %v1864, %v1906
          %v1947 = vadd.f32 %v1865, %v1907
          %v1948 = vadd.f32 %v1866, %v1908
          %v1949 = vadd.f32 %v1867, %v1909
          %v1950 = vadd.f32 %v1868, %v1910
          %v1951 = vadd.f32 %v1869, %v1911
          %v1952 = vadd.f32 %v1870, %v1904
          %v1953 = vadd.f32 %v1871, %v1905
          %v1954 = vadd.f32 %v1872, %v1906
          %v1955 = vadd.f32 %v1873, %v1907
          %v1956 = vadd.f32 %v1874, %v1908
          %v1957 = vadd.f32 %v1875, %v1909
          %v1958 = vadd.f32 %v1876, %v1910
          %v1959 = vadd.f32 %v1877, %v1911
          %v1960 = vadd.f32 %v1878, %v1904
          %v1961 = vadd.f32 %v1879, %v1905
          %v1962 = vadd.f32 %v1880, %v1906
          %v1963 = vadd.f32 %v1881, %v1907
          %v1964 = vadd.f32 %v1882, %v1908
          %v1965 = vadd.f32 %v1883, %v1909
          %v1966 = vadd.f32 %v1884, %v1910
          %v1967 = vadd.f32 %v1885, %v1911
          %v1968 = vadd.f32 %v1886, %v1904
          %v1969 = vadd.f32 %v1887, %v1905
          %v1970 = vadd.f32 %v1888, %v1906
          %v1971 = vadd.f32 %v1889, %v1907
          %v1972 = vadd.f32 %v1890, %v1908
          %v1973 = vadd.f32 %v1891, %v1909
          %v1974 = vadd.f32 %v1892, %v1910
          %v1975 = vadd.f32 %v1893, %v1911
          %v1976 = vadd.f32 %v1894, %v1904
          %v1977 = vadd.f32 %v1895, %v1905
          %v1978 = vadd.f32 %v1896, %v1906
          %v1979 = vadd.f32 %v1897, %v1907
          %v1980 = vadd.f32 %v1898, %v1908
          %v1981 = vadd.f32 %v1899, %v1909
          %v1982 = vadd.f32 %v1900, %v1910
          %v1983 = vadd.f32 %v1901, %v1911
          %v1984 = vmax.f32 %v1920, 0.0
          %v1985 = vmax.f32 %v1921, 0.0
          %v1986 = vmax.f32 %v1922, 0.0
          %v1987 = vmax.f32 %v1923, 0.0
          %v1988 = vmax.f32 %v1924, 0.0
          %v1989 = vmax.f32 %v1925, 0.0
          %v1990 = vmax.f32 %v1926, 0.0
          %v1991 = vmax.f32 %v1927, 0.0
          %v1992 = vmax.f32 %v1928, 0.0
          %v1993 = vmax.f32 %v1929, 0.0
          %v1994 = vmax.f32 %v1930, 0.0
          %v1995 = vmax.f32 %v1931, 0.0
          %v1996 = vmax.f32 %v1932, 0.0
          %v1997 = vmax.f32 %v1933, 0.0
          %v1998 = vmax.f32 %v1934, 0.0
          %v1999 = vmax.f32 %v1935, 0.0
          %v2000 = vmax.f32 %v1936, 0.0
          %v2001 = vmax.f32 %v1937, 0.0
          %v2002 = vmax.f32 %v1938, 0.0
          %v2003 = vmax.f32 %v1939, 0.0
          %v2004 = vmax.f32 %v1940, 0.0
          %v2005 = vmax.f32 %v1941, 0.0
          %v2006 = vmax.f32 %v1942, 0.0
          %v2007 = vmax.f32 %v1943, 0.0
          %v2008 = vmax.f32 %v1944, 0.0
          %v2009 = vmax.f32 %v1945, 0.0
          %v2010 = vmax.f32 %v1946, 0.0
          %v2011 = vmax.f32 %v1947, 0.0
          %v2012 = vmax.f32 %v1948, 0.0
          %v2013 = vmax.f32 %v1949, 0.0
          %v2014 = vmax.f32 %v1950, 0.0
          %v2015 = vmax.f32 %v1951, 0.0
          %v2016 = vmax.f32 %v1952, 0.0
          %v2017 = vmax.f32 %v1953, 0.0
          %v2018 = vmax.f32 %v1954, 0.0
          %v2019 = vmax.f32 %v1955, 0.0
          %v2020 = vmax.f32 %v1956, 0.0
          %v2021 = vmax.f32 %v1957, 0.0
          %v2022 = vmax.f32 %v1958, 0.0
          %v2023 = vmax.f32 %v1959, 0.0
          %v2024 = vmax.f32 %v1960, 0.0
          %v2025 = vmax.f32 %v1961, 0.0
          %v2026 = vmax.f32 %v1962, 0.0
          %v2027 = vmax.f32 %v1963, 0.0
          %v2028 = vmax.f32 %v1964, 0.0
          %v2029 = vmax.f32 %v1965, 0.0
          %v2030 = vmax.f32 %v1966, 0.0
          %v2031 = vmax.f32 %v1967, 0.0
          %v2032 = vmax.f32 %v1968, 0.0
          %v2033 = vmax.f32 %v1969, 0.0
          %v2034 = vmax.f32 %v1970, 0.0
          %v2035 = vmax.f32 %v1971, 0.0
          %v2036 = vmax.f32 %v1972, 0.0
          %v2037 = vmax.f32 %v1973, 0.0
          %v2038 = vmax.f32 %v1974, 0.0
          %v2039 = vmax.f32 %v1975, 0.0
          %v2040 = vmax.f32 %v1976, 0.0
          %v2041 = vmax.f32 %v1977, 0.0
          %v2042 = vmax.f32 %v1978, 0.0
          %v2043 = vmax.f32 %v1979, 0.0
          %v2044 = vmax.f32 %v1980, 0.0
          %v2045 = vmax.f32 %v1981, 0.0
          %v2046 = vmax.f32 %v1982, 0.0
          %v2047 = vmax.f32 %v1983, 0.0
          %v2048 = vpack.c.bf16 %v1985, %v1984
          %v2049 = vpack.c.bf16 %v1987, %v1986
          %v2050 = vpack.c.bf16 %v1989, %v1988
          %v2051 = vpack.c.bf16 %v1991, %v1990
          %v2052 = vpack.c.bf16 %v1993, %v1992
          %v2053 = vpack.c.bf16 %v1995, %v1994
          %v2054 = vpack.c.bf16 %v1997, %v1996
          %v2055 = vpack.c.bf16 %v1999, %v1998
          %v2056 = vpack.c.bf16 %v2001, %v2000
          %v2057 = vpack.c.bf16 %v2003, %v2002
          %v2058 = vpack.c.bf16 %v2005, %v2004
          %v2059 = vpack.c.bf16 %v2007, %v2006
          %v2060 = vpack.c.bf16 %v2009, %v2008
          %v2061 = vpack.c.bf16 %v2011, %v2010
          %v2062 = vpack.c.bf16 %v2013, %v2012
          %v2063 = vpack.c.bf16 %v2015, %v2014
          %v2064 = vpack.c.bf16 %v2017, %v2016
          %v2065 = vpack.c.bf16 %v2019, %v2018
          %v2066 = vpack.c.bf16 %v2021, %v2020
          %v2067 = vpack.c.bf16 %v2023, %v2022
          %v2068 = vpack.c.bf16 %v2025, %v2024
          %v2069 = vpack.c.bf16 %v2027, %v2026
          %v2070 = vpack.c.bf16 %v2029, %v2028
          %v2071 = vpack.c.bf16 %v2031, %v2030
          %v2072 = vpack.c.bf16 %v2033, %v2032
          %v2073 = vpack.c.bf16 %v2035, %v2034
          %v2074 = vpack.c.bf16 %v2037, %v2036
          %v2075 = vpack.c.bf16 %v2039, %v2038
          %v2076 = vpack.c.bf16 %v2041, %v2040
          %v2077 = vpack.c.bf16 %v2043, %v2042
          %v2078 = vpack.c.bf16 %v2045, %v2044
          %v2079 = vpack.c.bf16 %v2047, %v2046
          %2080 = vst [vmem:[%s290] sm:$0xff] %v2048
          %2081 = vst [vmem:[%s290 + $0x8] sm:$0xff] %v2049
          %2082 = vst [vmem:[%s290 + $0x10] sm:$0xff] %v2050
          %2083 = vst [vmem:[%s290 + $0x18] sm:$0xff] %v2051
          %2084 = vst [vmem:[%s290 + $0x20] sm:$0xff] %v2052
          %2085 = vst [vmem:[%s290 + $0x28] sm:$0xff] %v2053
          %2086 = vst [vmem:[%s290 + $0x30] sm:$0xff] %v2054
          %2087 = vst [vmem:[%s290 + $0x38] sm:$0xff] %v2055
          %2088 = vst [vmem:[%s290 + $0x40] sm:$0xff] %v2056
          %2089 = vst [vmem:[%s290 + $0x48] sm:$0xff] %v2057
          %2090 = vst [vmem:[%s290 + $0x50] sm:$0xff] %v2058
          %2091 = vst [vmem:[%s290 + $0x58] sm:$0xff] %v2059
          %2092 = vst [vmem:[%s290 + $0x60] sm:$0xff] %v2060
          %2093 = vst [vmem:[%s290 + $0x68] sm:$0xff] %v2061
          %2094 = vst [vmem:[%s290 + $0x70] sm:$0xff] %v2062
          %2095 = vst [vmem:[%s290 + $0x78] sm:$0xff] %v2063
          %2096 = vst [vmem:[%s290 + $0x80] sm:$0xff] %v2064
          %2097 = vst [vmem:[%s290 + $0x88] sm:$0xff] %v2065
          %2098 = vst [vmem:[%s290 + $0x90] sm:$0xff] %v2066
          %2099 = vst [vmem:[%s290 + $0x98] sm:$0xff] %v2067
          %2100 = vst [vmem:[%s290 + $0xa0] sm:$0xff] %v2068
          %2101 = vst [vmem:[%s290 + $0xa8] sm:$0xff] %v2069
          %2102 = vst [vmem:[%s290 + $0xb0] sm:$0xff] %v2070
          %2103 = vst [vmem:[%s290 + $0xb8] sm:$0xff] %v2071
          %2104 = vst [vmem:[%s290 + $0xc0] sm:$0xff] %v2072
          %2105 = vst [vmem:[%s290 + $0xc8] sm:$0xff] %v2073
          %2106 = vst [vmem:[%s290 + $0xd0] sm:$0xff] %v2074
          %2107 = vst [vmem:[%s290 + $0xd8] sm:$0xff] %v2075
          %2108 = vst [vmem:[%s290 + $0xe0] sm:$0xff] %v2076
          %2109 = vst [vmem:[%s290 + $0xe8] sm:$0xff] %v2077
          %2110 = vst [vmem:[%s290 + $0xf0] sm:$0xff] %v2078
          %2111 = vst [vmem:[%s290 + $0xf8] sm:$0xff] %v2079
        $region48: #{video_decoder_forward.4} parent=31 // pred_fallthru
          _
        %s2112 = smul.u32 4, %s24
        %p2113 = scmp.lt.s32.totalorder %s22, 1
        %s2114 = scalar_select %p2113, %s22, 1
        %p2115 = scmp.lt.s32.totalorder %s23, 2
        %s2116 = scalar_select %p2115, %s23, 2
        %p2117 = scmp.lt.s32.totalorder %s2112, 3
        %s2118 = scalar_select %p2117, %s2112, 3
        %s2119 = smul.addr %s2118, 16
        %s2120 = smul.addr %s2116, 64
        %s2121 = sadd.s32 %s2119, %s2120
        %s2122 = smul.addr %s2114, 192
        %s2123 = sadd.s32 %s2121, %s2122
        %s2124 = smul.addr %s2123, 4
        %s2125 = scalar_lea.vmem %s3, %s2124
        // Predicated region
        $region49: #{video_decoder_forward.4} parent=31 // pred_check
          %p2126 = pneg %p138
        $region50: #{video_decoder_forward.4} parent=31 // pred_check_branch
          %2128 = sbr.rel (%p2126) target = $region52
        $region51: #{video_decoder_forward.4} parent=31 // pred_region
          %s2129 = smul.u32 4, %s24
        $region52: #{video_decoder_forward.4} parent=31 // pred_fallthru
          _
      $region32: #{video_decoder_forward.4} parent=5 // pred_fallthru
        _
      %p2130 = scmp.le.s32.totalorder 2, %s11
      // Predicated region
      $region53: #{video_decoder_forward.4} parent=5 // pred_check
        %p2131 = pneg %p2130
      $region54: #{video_decoder_forward.4} parent=5 // pred_check_branch
        %2133 = sbr.rel (%p2131) target = $region56
      $region55: #{video_decoder_forward.4} parent=5 // pred_region
        %s2134 = ssub.s32 %s11, 2
        // Predicated region
        $region57: #{video_decoder_forward.4} parent=55 // pred_check
          %p2135 = pneg %p144
        $region58: #{video_decoder_forward.4} parent=55 // pred_check_branch
          %2137 = sbr.rel (%p2135) target = $region60
        $region59: #{video_decoder_forward.4} parent=55 // pred_region
          %s2138 = smul.u32 4, %s28
          %p2139 = scmp.lt.s32.totalorder %s26, 1
          %s2140 = scalar_select %p2139, %s26, 1
          %p2141 = scmp.lt.s32.totalorder %s27, 2
          %s2142 = scalar_select %p2141, %s27, 2
          %p2143 = scmp.lt.s32.totalorder %s2138, 3
          %s2144 = scalar_select %p2143, %s2138, 3
          %s2145 = smul.addr %s2144, 16
          %s2146 = smul.addr %s2142, 64
          %s2147 = sadd.s32 %s2145, %s2146
          %s2148 = smul.addr %s2140, 192
          %s2149 = sadd.s32 %s2147, %s2148
          %s2150 = smul.addr %s2149, 4
          %s2151 = scalar_lea.vmem %s3, %s2150
        $region60: #{video_decoder_forward.4} parent=55 // pred_fallthru
          _
      $region56: #{video_decoder_forward.4} parent=5 // pred_fallthru
        _
    $region6: #{video_decoder_forward.4} parent=1 // loop_footer
      %s15 = sadd.s32 1, %s11
    $region7: #{video_decoder_forward.4} parent=1 // loop_footer_branch
      %10 = sbr.rel target = $region3
    $region8: #{video_decoder_forward.4} parent=1 // loop_exit
      _
    %2152 = vsyncpa [#allocation4], 1
    %s2153 = scalar_lea.sflag [#allocation4], 1
    %2154 = vsyncpa %s2153, 1
    %2155 = vsyncpa [#allocation6], 1

// kernel: video_decoder_forward.5
$region0: #{video_decoder_forward.5}
  #allocation0 [shape = 'u32[]', space=smem, size = 0x4, offset = 0x4, fixed_abs, tag = 'smem constant byte address 0x4 - core index']
  #allocation1 [shape = 'u32[72,128]{1,0:T(1,128)}', space=vmem, size = 0x9000, scoped, tag = 'internal scratch']
  #allocation2 [shape = 'f32[128,512]{1,0:T(8,128)}', space=vmem, size = 0x40000, scoped, tag = 'scratch operand']
  %s0 = inlined_call_operand.vmem [shape: bf16[2,7,8,24,512], index: 0, kind: input, shape index: {}]
  %s1 = inlined_call_operand.vmem [shape: bf16[8,512,512], index: 1, kind: input, shape index: {}]
  %s2 = inlined_call_operand.vmem [shape: f32[1,512], index: 2, kind: input, shape index: {}]
  %s3 = inlined_call_operand.vmem [shape: bf16[2,4,8,16,512], index: 3, kind: output, shape index: {}]
  %s4 = sld [smem:[#allocation0]]
  $region53: #{video_decoder_forward.5} parent=0
    _
  %s6 = ssub.s32 1, %s4
  %s7 = scalar_select 0, %s6, %s4
  loop: start=0, step=1, limit=34
  $region2: #{video_decoder_forward.5} parent=0 // loop_pre_header
    _
  $region3: #{video_decoder_forward.5} parent=0 // loop_header
    %s9 = sphi 0, %s13
    %p10 = scmp.ge.s32.totalorder %s9, 34
    %s16 = sphi 0, %s42
    %s17 = sphi 0, %s38
    %s18 = sphi 0, %s34
    %s19 = sphi 0, %s30
    %s20 = sphi 0, %s16
    %s21 = sphi 0, %s17
    %s22 = sphi 0, %s18
    %s23 = sphi 0, %s19
    %s24 = sphi 0, %s20
    %s25 = sphi 0, %s21
    %s26 = sphi 0, %s22
    %s27 = sphi 0, %s23
    %s51 = sphi 0, %s53
    %s54 = sphi 0, %s51
    %s55 = sphi 0, %s54
    %s71 = sphi 0, %s55
    %s75 = sphi 0, %s75
    %s77 = sphi 0, %s75
    %s78 = sphi 0, %s77
    %s92 = sphi 0, %s78
    %s96 = sphi 0, %s96
    %s98 = sphi 0, %s96
    %s99 = sphi 0, %s98
    %s113 = sphi 0, %s99
    %s123 = sphi 0, %s125
    %s126 = sphi 0, %s123
    %s127 = sphi 0, %s126
    %s143 = sphi 0, %s127
  $region4: #{video_decoder_forward.5} parent=0 // loop_header_branch
    %12 = sbr.rel (%p10) target = $region8
  $region5: #{video_decoder_forward.5} parent=0 // loop_body
    %s14 = ssub.s32 %s9, 1
    %s15 = ssub.s32 %s9, 2
    %s28 = sadd.s32 1, %s19
    %p29 = scmp.ge.s32.totalorder %s28, 4
    %s30 = scalar_select %p29, 0, %s28
    %s31 = sadd.s32 1, %s18
    %s32 = scalar_select %p29, %s31, %s18
    %p33 = scmp.ge.s32.totalorder %s32, 1
    %s34 = scalar_select %p33, 0, %s32
    %s35 = sadd.s32 1, %s17
    %s36 = scalar_select %p33, %s35, %s17
    %p37 = scmp.ge.s32.totalorder %s36, 4
    %s38 = scalar_select %p37, 0, %s36
    %s39 = sadd.s32 1, %s16
    %s40 = scalar_select %p37, %s39, %s16
    %p41 = scmp.ge.s32.totalorder %s40, 2
    %s42 = scalar_select %p41, 0, %s40
    %s43 = sadd.s32 %s17, %s19
    %s44 = sadd.s32 %s38, %s30
    %s45 = ssub.s32 %s16, %s42
    %s46 = ssub.s32 %s43, %s44
    %s47 = sor.u32 %s45, %s46
    %s48 = ssub.s32 %s18, %s34
    %s49 = sor.u32 %s47, %s48
    %p50 = scmp.eq.s32.totalorder %s49, 0
    %s52 = sadd.s32 %s51, 1
    %s53 = scalar_select %p50, %s51, %s52
    %p56 = pneg %p50
    %p57 = scmp.eq.s32.totalorder %s9, 31
    %p58 = por %p56, %p57
    %p59 = scmp.ne.s32.totalorder %s51, %s54
    %p60 = scmp.eq.s32.totalorder %s9, 0
    %p61 = por %p59, %p60
    %p62 = scmp.ne.s32.totalorder %s51, %s54
    %p63 = scmp.eq.s32.totalorder %s14, 31
    %p64 = por %p62, %p63
    %p65 = scmp.ne.s32.totalorder %s54, %s55
    %p66 = scmp.eq.s32.totalorder %s14, 0
    %p67 = por %p65, %p66
    %p68 = scmp.ne.s32.totalorder %s54, %s55
    %p69 = scmp.eq.s32.totalorder %s15, 31
    %p70 = por %p68, %p69
    %p72 = scmp.ne.s32.totalorder %s55, %s71
    %p73 = scmp.eq.s32.totalorder %s15, 0
    %p74 = por %p72, %p73
    %s76 = sadd.s32 %s75, 1
    %p79 = scmp.eq.s32.totalorder %s9, 31
    %p80 = scmp.ne.s32.totalorder %s75, %s77
    %p81 = scmp.eq.s32.totalorder %s9, 0
    %p82 = por %p80, %p81
    %p83 = scmp.ne.s32.totalorder %s75, %s77
    %p84 = scmp.eq.s32.totalorder %s14, 31
    %p85 = por %p83, %p84
    %p86 = scmp.ne.s32.totalorder %s77, %s78
    %p87 = scmp.eq.s32.totalorder %s14, 0
    %p88 = por %p86, %p87
    %p89 = scmp.ne.s32.totalorder %s77, %s78
    %p90 = scmp.eq.s32.totalorder %s15, 31
    %p91 = por %p89, %p90
    %p93 = scmp.ne.s32.totalorder %s78, %s92
    %p94 = scmp.eq.s32.totalorder %s15, 0
    %p95 = por %p93, %p94
    %s97 = sadd.s32 %s96, 1
    %p100 = scmp.eq.s32.totalorder %s9, 31
    %p101 = scmp.ne.s32.totalorder %s96, %s98
    %p102 = scmp.eq.s32.totalorder %s9, 0
    %p103 = por %p101, %p102
    %p104 = scmp.ne.s32.totalorder %s96, %s98
    %p105 = scmp.eq.s32.totalorder %s14, 31
    %p106 = por %p104, %p105
    %p107 = scmp.ne.s32.totalorder %s98, %s99
    %p108 = scmp.eq.s32.totalorder %s14, 0
    %p109 = por %p107, %p108
    %p110 = scmp.ne.s32.totalorder %s98, %s99
    %p111 = scmp.eq.s32.totalorder %s15, 31
    %p112 = por %p110, %p111
    %p114 = scmp.ne.s32.totalorder %s99, %s113
    %p115 = scmp.eq.s32.totalorder %s15, 0
    %p116 = por %p114, %p115
    %s117 = ssub.s32 %s16, %s42
    %s118 = ssub.s32 %s17, %s38
    %s119 = sor.u32 %s117, %s118
    %s120 = ssub.s32 %s18, %s34
    %s121 = sor.u32 %s119, %s120
    %p122 = scmp.eq.s32.totalorder %s121, 0
    %s124 = sadd.s32 %s123, 1
    %s125 = scalar_select %p122, %s123, %s124
    %p128 = pneg %p122
    %p129 = scmp.eq.s32.totalorder %s9, 31
    %p130 = por %p128, %p129
    %p131 = scmp.ne.s32.totalorder %s123, %s126
    %p132 = scmp.eq.s32.totalorder %s9, 0
    %p133 = por %p131, %p132
    %p134 = scmp.ne.s32.totalorder %s123, %s126
    %p135 = scmp.eq.s32.totalorder %s14, 31
    %p136 = por %p134, %p135
    %p137 = scmp.ne.s32.totalorder %s126, %s127
    %p138 = scmp.eq.s32.totalorder %s14, 0
    %p139 = por %p137, %p138
    %p140 = scmp.ne.s32.totalorder %s126, %s127
    %p141 = scmp.eq.s32.totalorder %s15, 31
    %p142 = por %p140, %p141
    %p144 = scmp.ne.s32.totalorder %s127, %s143
    %p145 = scmp.eq.s32.totalorder %s15, 0
    %p146 = por %p144, %p145
    %p147 = scmp.le.s32.totalorder 1, %s9
    %p148 = scmp.lt.s32.totalorder %s9, 33
    %p149 = pnand %p147, %p148
    %p150 = pneg %p149
    // Predicated region
    $region9: #{video_decoder_forward.5} parent=5 // pred_check
      _
    $region10: #{video_decoder_forward.5} parent=5 // pred_check_branch
      %152 = sbr.rel (%p149) target = $region12
    $region11: #{video_decoder_forward.5} parent=5 // pred_region
      %s153 = ssub.s32 %s9, 1
      // Predicated region
      $region13: #{video_decoder_forward.5} parent=11 // pred_check
        %p154 = pneg %p88
      $region14: #{video_decoder_forward.5} parent=11 // pred_check_branch
        %156 = sbr.rel (%p154) target = $region16
      $region15: #{video_decoder_forward.5} parent=11 // pred_region
        _
      $region16: #{video_decoder_forward.5} parent=11 // pred_fallthru
        _
      // Predicated region
      $region17: #{video_decoder_forward.5} parent=11 // pred_check
        %p157 = pneg %p109
      $region18: #{video_decoder_forward.5} parent=11 // pred_check_branch
        %159 = sbr.rel (%p157) target = $region20
      $region19: #{video_decoder_forward.5} parent=11 // pred_region
        _
      $region20: #{video_decoder_forward.5} parent=11 // pred_fallthru
        _
    $region12: #{video_decoder_forward.5} parent=5 // pred_fallthru
      _
    %p160 = scmp.lt.s32.totalorder %s9, 32
    // Predicated region
    $region21: #{video_decoder_forward.5} parent=5 // pred_check
      %p161 = pneg %p160
    $region22: #{video_decoder_forward.5} parent=5 // pred_check_branch
      %163 = sbr.rel (%p161) target = $region24
    $region23: #{video_decoder_forward.5} parent=5 // pred_region
      // Predicated region
      $region25: #{video_decoder_forward.5} parent=23 // pred_check
        %p164 = pneg %p61
      $region26: #{video_decoder_forward.5} parent=23 // pred_check_branch
        %166 = sbr.rel (%p164) target = $region28
      $region27: #{video_decoder_forward.5} parent=23 // pred_region
        %s167 = sadd.s32 %s17, %s19
        %s168 = smul.u32 8, %s18
        %p169 = scmp.lt.s32.totalorder %s16, 1
        %s170 = scalar_select %p169, %s16, 1
        %p171 = scmp.lt.s32.totalorder %s167, 6
        %s172 = scalar_select %p171, %s167, 6
        %p173 = scmp.lt.s32.totalorder %s168, 7
        %s174 = scalar_select %p173, %s168, 7
        %s175 = smul.addr %s174, 12
        %s176 = smul.addr %s172, 96
        %s177 = sadd.s32 %s175, %s176
        %s178 = smul.addr %s170, 672
        %s179 = sadd.s32 %s177, %s178
        %s180 = smul.addr %s179, 4
        %s181 = scalar_lea.vmem %s0, %s180
        %s182 = sadd.s32 %s17, %s19
        %s183 = smul.u32 8, %s18
      $region28: #{video_decoder_forward.5} parent=23 // pred_fallthru
        _
    $region24: #{video_decoder_forward.5} parent=5 // pred_fallthru
      _
    %p184 = scmp.le.s32.totalorder 1, %s9
    %p185 = scmp.lt.s32.totalorder %s9, 33
    %p186 = pnand %p184, %p185
    %p187 = pneg %p186
    // Predicated region
    $region29: #{video_decoder_forward.5} parent=5 // pred_check
      _
    $region30: #{video_decoder_forward.5} parent=5 // pred_check_branch
      %189 = sbr.rel (%p186) target = $region32
    $region31: #{video_decoder_forward.5} parent=5 // pred_region
      %s190 = ssub.s32 %s9, 1
      %s191 = sadd.s32 %s21, %s23
      %s192 = smul.u32 8, %s22
      %p193 = scmp.lt.s32.totalorder %s20, 1
      %s194 = scalar_select %p193, %s20, 1
      %p195 = scmp.lt.s32.totalorder %s191, 6
      %s196 = scalar_select %p195, %s191, 6
      %p197 = scmp.lt.s32.totalorder %s192, 7
      %s198 = scalar_select %p197, %s192, 7
      %s199 = smul.addr %s198, 12
      %s200 = smul.addr %s196, 96
      %s201 = sadd.s32 %s199, %s200
      %s202 = smul.addr %s194, 672
      %s203 = sadd.s32 %s201, %s202
      %s204 = smul.addr %s203, 4
      %s205 = scalar_lea.vmem %s0, %s204
      %p206 = pneg %p67
      %p207 = pneg %p64
      %p208 = pneg %p88
      %p209 = pneg %p85
      %p210 = pneg %p109
      %p211 = pneg %p106
      %p212 = pneg %p139
      %p213 = pneg %p136
      %s214 = smul.u32 8, %s22
      %p215 = scmp.lt.s32.totalorder %s20, 1
      %s216 = scalar_select %p215, %s20, 1
      %p217 = scmp.lt.s32.totalorder %s21, 3
      %s218 = scalar_select %p217, %s21, 3
      %p219 = scmp.lt.s32.totalorder %s214, 7
      %s220 = scalar_select %p219, %s214, 7
      %s221 = smul.addr %s220, 8
      %s222 = smul.addr %s218, 64
      %s223 = sadd.s32 %s221, %s222
      %s224 = smul.addr %s216, 256
      %s225 = sadd.s32 %s223, %s224
      %s226 = smul.addr %s225, 4
      %s227 = scalar_lea.vmem %s3, %s226
      %s228 = sadd.s32 %s21, %s23
      %s229 = smul.u32 8, %s22
      %p230 = scmp.lt.s32.totalorder %s20, 1
      %s231 = scalar_select %p230, %s20, 1
      %p232 = scmp.lt.s32.totalorder %s228, 6
      %s233 = scalar_select %p232, %s228, 6
      %p234 = scmp.lt.s32.totalorder %s229, 7
      %s235 = scalar_select %p234, %s229, 7
      %s236 = smul.addr %s235, 12
      %s237 = smul.addr %s233, 96
      %s238 = sadd.s32 %s236, %s237
      %s239 = smul.addr %s231, 672
      %s240 = sadd.s32 %s238, %s239
      %s241 = smul.addr %s240, 4
      %s242 = scalar_lea.vmem %s0, %s241
      %s243 = sadd.s32 %s21, %s23
      %s244 = smul.u32 8, %s22
      %s245 = smul.u32 8, %s22
      %p246 = scmp.lt.s32.totalorder %s20, 1
      %s247 = scalar_select %p246, %s20, 1
      %p248 = scmp.lt.s32.totalorder %s21, 3
      %s249 = scalar_select %p248, %s21, 3
      %p250 = scmp.lt.s32.totalorder %s245, 7
      %s251 = scalar_select %p250, %s245, 7
      %s252 = smul.addr %s251, 8
      %s253 = smul.addr %s249, 64
      %s254 = sadd.s32 %s252, %s253
      %s255 = smul.addr %s247, 256
      %s256 = sadd.s32 %s254, %s255
      %s257 = smul.addr %s256, 4
      %s258 = scalar_lea.vmem %s3, %s257
      %s259 = smul.u32 8, %s22
      %p260 = scmp.eq.s32.totalorder %s23, 0
      // Predicated region
      $region33: #{video_decoder_forward.5} parent=31 // pred_check
        %p261 = pneg %p260
      $region34: #{video_decoder_forward.5} parent=31 // pred_check_branch
        %263 = sbr.rel (%p261) target = $region36
      $region35: #{video_decoder_forward.5} parent=31 // pred_region
        %264 = vst [vmem:[#allocation2] sm:$0xff] 0.0
        %265 = vst [vmem:[#allocation2 + $0x8] sm:$0xff] 0.0
        %266 = vst [vmem:[#allocation2 + $0x10] sm:$0xff] 0.0
        %267 = vst [vmem:[#allocation2 + $0x18] sm:$0xff] 0.0
        %268 = vst [vmem:[#allocation2 + $0x20] sm:$0xff] 0.0
        %269 = vst [vmem:[#allocation2 + $0x28] sm:$0xff] 0.0
        %270 = vst [vmem:[#allocation2 + $0x30] sm:$0xff] 0.0
        %271 = vst [vmem:[#allocation2 + $0x38] sm:$0xff] 0.0
        %272 = vst [vmem:[#allocation2 + $0x40] sm:$0xff] 0.0
        %273 = vst [vmem:[#allocation2 + $0x48] sm:$0xff] 0.0
        %274 = vst [vmem:[#allocation2 + $0x50] sm:$0xff] 0.0
        %275 = vst [vmem:[#allocation2 + $0x58] sm:$0xff] 0.0
        %276 = vst [vmem:[#allocation2 + $0x60] sm:$0xff] 0.0
        %277 = vst [vmem:[#allocation2 + $0x68] sm:$0xff] 0.0
        %278 = vst [vmem:[#allocation2 + $0x70] sm:$0xff] 0.0
        %279 = vst [vmem:[#allocation2 + $0x78] sm:$0xff] 0.0
        %280 = vst [vmem:[#allocation2 + $0x80] sm:$0xff] 0.0
        %281 = vst [vmem:[#allocation2 + $0x88] sm:$0xff] 0.0
        %282 = vst [vmem:[#allocation2 + $0x90] sm:$0xff] 0.0
        %283 = vst [vmem:[#allocation2 + $0x98] sm:$0xff] 0.0
        %284 = vst [vmem:[#allocation2 + $0xa0] sm:$0xff] 0.0
        %285 = vst [vmem:[#allocation2 + $0xa8] sm:$0xff] 0.0
        %286 = vst [vmem:[#allocation2 + $0xb0] sm:$0xff] 0.0
        %287 = vst [vmem:[#allocation2 + $0xb8] sm:$0xff] 0.0
        %288 = vst [vmem:[#allocation2 + $0xc0] sm:$0xff] 0.0
        %289 = vst [vmem:[#allocation2 + $0xc8] sm:$0xff] 0.0
        %290 = vst [vmem:[#allocation2 + $0xd0] sm:$0xff] 0.0
        %291 = vst [vmem:[#allocation2 + $0xd8] sm:$0xff] 0.0
        %292 = vst [vmem:[#allocation2 + $0xe0] sm:$0xff] 0.0
        %293 = vst [vmem:[#allocation2 + $0xe8] sm:$0xff] 0.0
        %294 = vst [vmem:[#allocation2 + $0xf0] sm:$0xff] 0.0
        %295 = vst [vmem:[#allocation2 + $0xf8] sm:$0xff] 0.0
        %296 = vst [vmem:[#allocation2 + $0x100] sm:$0xff] 0.0
        %297 = vst [vmem:[#allocation2 + $0x108] sm:$0xff] 0.0
        %298 = vst [vmem:[#allocation2 + $0x110] sm:$0xff] 0.0
        %299 = vst [vmem:[#allocation2 + $0x118] sm:$0xff] 0.0
        %300 = vst [vmem:[#allocation2 + $0x120] sm:$0xff] 0.0
        %301 = vst [vmem:[#allocation2 + $0x128] sm:$0xff] 0.0
        %302 = vst [vmem:[#allocation2 + $0x130] sm:$0xff] 0.0
        %303 = vst [vmem:[#allocation2 + $0x138] sm:$0xff] 0.0
        %304 = vst [vmem:[#allocation2 + $0x140] sm:$0xff] 0.0
        %305 = vst [vmem:[#allocation2 + $0x148] sm:$0xff] 0.0
        %306 = vst [vmem:[#allocation2 + $0x150] sm:$0xff] 0.0
        %307 = vst [vmem:[#allocation2 + $0x158] sm:$0xff] 0.0
        %308 = vst [vmem:[#allocation2 + $0x160] sm:$0xff] 0.0
        %309 = vst [vmem:[#allocation2 + $0x168] sm:$0xff] 0.0
        %310 = vst [vmem:[#allocation2 + $0x170] sm:$0xff] 0.0
        %311 = vst [vmem:[#allocation2 + $0x178] sm:$0xff] 0.0
        %312 = vst [vmem:[#allocation2 + $0x180] sm:$0xff] 0.0
        %313 = vst [vmem:[#allocation2 + $0x188] sm:$0xff] 0.0
        %314 = vst [vmem:[#allocation2 + $0x190] sm:$0xff] 0.0
        %315 = vst [vmem:[#allocation2 + $0x198] sm:$0xff] 0.0
        %316 = vst [vmem:[#allocation2 + $0x1a0] sm:$0xff] 0.0
        %317 = vst [vmem:[#allocation2 + $0x1a8] sm:$0xff] 0.0
        %318 = vst [vmem:[#allocation2 + $0x1b0] sm:$0xff] 0.0
        %319 = vst [vmem:[#allocation2 + $0x1b8] sm:$0xff] 0.0
        %320 = vst [vmem:[#allocation2 + $0x1c0] sm:$0xff] 0.0
        %321 = vst [vmem:[#allocation2 + $0x1c8] sm:$0xff] 0.0
        %322 = vst [vmem:[#allocation2 + $0x1d0] sm:$0xff] 0.0
        %323 = vst [vmem:[#allocation2 + $0x1d8] sm:$0xff] 0.0
        %324 = vst [vmem:[#allocation2 + $0x1e0] sm:$0xff] 0.0
        %325 = vst [vmem:[#allocation2 + $0x1e8] sm:$0xff] 0.0
        %326 = vst [vmem:[#allocation2 + $0x1f0] sm:$0xff] 0.0
        %327 = vst [vmem:[#allocation2 + $0x1f8] sm:$0xff] 0.0
      $region36: #{video_decoder_forward.5} parent=31 // pred_fallthru
        _
      %v328 = vld [vmem:[%s242] sm:$0xff]
      %v329 = vld [vmem:[%s242 + $0x8] sm:$0xff]
      %v330 = vld [vmem:[%s242 + $0x10] sm:$0xff]
      %v331 = vld [vmem:[%s242 + $0x18] sm:$0xff]
      %v332 = vld [vmem:[%s242 + $0x30] sm:$0xff]
      %v333 = vld [vmem:[%s242 + $0x38] sm:$0xff]
      %v334 = vld [vmem:[%s242 + $0x40] sm:$0xff]
      %v335 = vld [vmem:[%s242 + $0x48] sm:$0xff]
      %v336 = vld [vmem:[%s242 + $0x60] sm:$0xff]
      %v337 = vld [vmem:[%s242 + $0x68] sm:$0xff]
      %v338 = vld [vmem:[%s242 + $0x70] sm:$0xff]
      %v339 = vld [vmem:[%s242 + $0x78] sm:$0xff]
      %v340 = vld [vmem:[%s242 + $0x90] sm:$0xff]
      %v341 = vld [vmem:[%s242 + $0x98] sm:$0xff]
      %v342 = vld [vmem:[%s242 + $0xa0] sm:$0xff]
      %v343 = vld [vmem:[%s242 + $0xa8] sm:$0xff]
      %v344 = vld [vmem:[%s242 + $0xc0] sm:$0xff]
      %v345 = vld [vmem:[%s242 + $0xc8] sm:$0xff]
      %v346 = vld [vmem:[%s242 + $0xd0] sm:$0xff]
      %v347 = vld [vmem:[%s242 + $0xd8] sm:$0xff]
      %v348 = vld [vmem:[%s242 + $0xf0] sm:$0xff]
      %v349 = vld [vmem:[%s242 + $0xf8] sm:$0xff]
      %v350 = vld [vmem:[%s242 + $0x100] sm:$0xff]
      %v351 = vld [vmem:[%s242 + $0x108] sm:$0xff]
      %v352 = vld [vmem:[%s242 + $0x120] sm:$0xff]
      %v353 = vld [vmem:[%s242 + $0x128] sm:$0xff]
      %v354 = vld [vmem:[%s242 + $0x130] sm:$0xff]
      %v355 = vld [vmem:[%s242 + $0x138] sm:$0xff]
      %v356 = vld [vmem:[%s242 + $0x150] sm:$0xff]
      %v357 = vld [vmem:[%s242 + $0x158] sm:$0xff]
      %v358 = vld [vmem:[%s242 + $0x160] sm:$0xff]
      %v359 = vld [vmem:[%s242 + $0x168] sm:$0xff]
      %s360 = smul.u32 %s23, 2
      %s361 = smul.u32 %s360, 256
      %s362 = smul.addr %s361, 4
      %s363 = scalar_lea.vmem %s1, %s362
      %v364 = vld [vmem:[%s363] sm:$0xff]
      %v365 = vld [vmem:[%s363 + $0x8] sm:$0xff]
      %v366 = vld [vmem:[%s363 + $0x10] sm:$0xff]
      %v367 = vld [vmem:[%s363 + $0x18] sm:$0xff]
      %v368 = vld [vmem:[%s363 + $0x20] sm:$0xff]
      %v369 = vld [vmem:[%s363 + $0x28] sm:$0xff]
      %v370 = vld [vmem:[%s363 + $0x30] sm:$0xff]
      %v371 = vld [vmem:[%s363 + $0x38] sm:$0xff]
      %v372 = vld [vmem:[%s363 + $0x40] sm:$0xff]
      %v373 = vld [vmem:[%s363 + $0x48] sm:$0xff]
      %v374 = vld [vmem:[%s363 + $0x50] sm:$0xff]
      %v375 = vld [vmem:[%s363 + $0x58] sm:$0xff]
      %v376 = vld [vmem:[%s363 + $0x60] sm:$0xff]
      %v377 = vld [vmem:[%s363 + $0x68] sm:$0xff]
      %v378 = vld [vmem:[%s363 + $0x70] sm:$0xff]
      %v379 = vld [vmem:[%s363 + $0x78] sm:$0xff]
      %v380 = vld [vmem:[%s363 + $0x80] sm:$0xff]
      %v381 = vld [vmem:[%s363 + $0x88] sm:$0xff]
      %v382 = vld [vmem:[%s363 + $0x90] sm:$0xff]
      %v383 = vld [vmem:[%s363 + $0x98] sm:$0xff]
      %v384 = vld [vmem:[%s363 + $0xa0] sm:$0xff]
      %v385 = vld [vmem:[%s363 + $0xa8] sm:$0xff]
      %v386 = vld [vmem:[%s363 + $0xb0] sm:$0xff]
      %v387 = vld [vmem:[%s363 + $0xb8] sm:$0xff]
      %v388 = vld [vmem:[%s363 + $0xc0] sm:$0xff]
      %v389 = vld [vmem:[%s363 + $0xc8] sm:$0xff]
      %v390 = vld [vmem:[%s363 + $0xd0] sm:$0xff]
      %v391 = vld [vmem:[%s363 + $0xd8] sm:$0xff]
      %v392 = vld [vmem:[%s363 + $0xe0] sm:$0xff]
      %v393 = vld [vmem:[%s363 + $0xe8] sm:$0xff]
      %v394 = vld [vmem:[%s363 + $0xf0] sm:$0xff]
      %v395 = vld [vmem:[%s363 + $0xf8] sm:$0xff]
      %v396 = vld [vmem:[%s363 + $0x100] sm:$0xff]
      %v397 = vld [vmem:[%s363 + $0x108] sm:$0xff]
      %v398 = vld [vmem:[%s363 + $0x110] sm:$0xff]
      %v399 = vld [vmem:[%s363 + $0x118] sm:$0xff]
      %v400 = vld [vmem:[%s363 + $0x120] sm:$0xff]
      %v401 = vld [vmem:[%s363 + $0x128] sm:$0xff]
      %v402 = vld [vmem:[%s363 + $0x130] sm:$0xff]
      %v403 = vld [vmem:[%s363 + $0x138] sm:$0xff]
      %v404 = vld [vmem:[%s363 + $0x140] sm:$0xff]
      %v405 = vld [vmem:[%s363 + $0x148] sm:$0xff]
      %v406 = vld [vmem:[%s363 + $0x150] sm:$0xff]
      %v407 = vld [vmem:[%s363 + $0x158] sm:$0xff]
      %v408 = vld [vmem:[%s363 + $0x160] sm:$0xff]
      %v409 = vld [vmem:[%s363 + $0x168] sm:$0xff]
      %v410 = vld [vmem:[%s363 + $0x170] sm:$0xff]
      %v411 = vld [vmem:[%s363 + $0x178] sm:$0xff]
      %v412 = vld [vmem:[%s363 + $0x180] sm:$0xff]
      %v413 = vld [vmem:[%s363 + $0x188] sm:$0xff]
      %v414 = vld [vmem:[%s363 + $0x190] sm:$0xff]
      %v415 = vld [vmem:[%s363 + $0x198] sm:$0xff]
      %v416 = vld [vmem:[%s363 + $0x1a0] sm:$0xff]
      %v417 = vld [vmem:[%s363 + $0x1a8] sm:$0xff]
      %v418 = vld [vmem:[%s363 + $0x1b0] sm:$0xff]
      %v419 = vld [vmem:[%s363 + $0x1b8] sm:$0xff]
      %v420 = vld [vmem:[%s363 + $0x1c0] sm:$0xff]
      %v421 = vld [vmem:[%s363 + $0x1c8] sm:$0xff]
      %v422 = vld [vmem:[%s363 + $0x1d0] sm:$0xff]
      %v423 = vld [vmem:[%s363 + $0x1d8] sm:$0xff]
      %v424 = vld [vmem:[%s363 + $0x1e0] sm:$0xff]
      %v425 = vld [vmem:[%s363 + $0x1e8] sm:$0xff]
      %v426 = vld [vmem:[%s363 + $0x1f0] sm:$0xff]
      %v427 = vld [vmem:[%s363 + $0x1f8] sm:$0xff]
      %v428 = vld [vmem:[%s363 + $0x200] sm:$0xff]
      %v429 = vld [vmem:[%s363 + $0x208] sm:$0xff]
      %v430 = vld [vmem:[%s363 + $0x210] sm:$0xff]
      %v431 = vld [vmem:[%s363 + $0x218] sm:$0xff]
      %v432 = vld [vmem:[%s363 + $0x220] sm:$0xff]
      %v433 = vld [vmem:[%s363 + $0x228] sm:$0xff]
      %v434 = vld [vmem:[%s363 + $0x230] sm:$0xff]
      %v435 = vld [vmem:[%s363 + $0x238] sm:$0xff]
      %v436 = vld [vmem:[%s363 + $0x240] sm:$0xff]
      %v437 = vld [vmem:[%s363 + $0x248] sm:$0xff]
      %v438 = vld [vmem:[%s363 + $0x250] sm:$0xff]
      %v439 = vld [vmem:[%s363 + $0x258] sm:$0xff]
      %v440 = vld [vmem:[%s363 + $0x260] sm:$0xff]
      %v441 = vld [vmem:[%s363 + $0x268] sm:$0xff]
      %v442 = vld [vmem:[%s363 + $0x270] sm:$0xff]
      %v443 = vld [vmem:[%s363 + $0x278] sm:$0xff]
      %v444 = vld [vmem:[%s363 + $0x280] sm:$0xff]
      %v445 = vld [vmem:[%s363 + $0x288] sm:$0xff]
      %v446 = vld [vmem:[%s363 + $0x290] sm:$0xff]
      %v447 = vld [vmem:[%s363 + $0x298] sm:$0xff]
      %v448 = vld [vmem:[%s363 + $0x2a0] sm:$0xff]
      %v449 = vld [vmem:[%s363 + $0x2a8] sm:$0xff]
      %v450 = vld [vmem:[%s363 + $0x2b0] sm:$0xff]
      %v451 = vld [vmem:[%s363 + $0x2b8] sm:$0xff]
      %v452 = vld [vmem:[%s363 + $0x2c0] sm:$0xff]
      %v453 = vld [vmem:[%s363 + $0x2c8] sm:$0xff]
      %v454 = vld [vmem:[%s363 + $0x2d0] sm:$0xff]
      %v455 = vld [vmem:[%s363 + $0x2d8] sm:$0xff]
      %v456 = vld [vmem:[%s363 + $0x2e0] sm:$0xff]
      %v457 = vld [vmem:[%s363 + $0x2e8] sm:$0xff]
      %v458 = vld [vmem:[%s363 + $0x2f0] sm:$0xff]
      %v459 = vld [vmem:[%s363 + $0x2f8] sm:$0xff]
      %v460 = vld [vmem:[%s363 + $0x300] sm:$0xff]
      %v461 = vld [vmem:[%s363 + $0x308] sm:$0xff]
      %v462 = vld [vmem:[%s363 + $0x310] sm:$0xff]
      %v463 = vld [vmem:[%s363 + $0x318] sm:$0xff]
      %v464 = vld [vmem:[%s363 + $0x320] sm:$0xff]
      %v465 = vld [vmem:[%s363 + $0x328] sm:$0xff]
      %v466 = vld [vmem:[%s363 + $0x330] sm:$0xff]
      %v467 = vld [vmem:[%s363 + $0x338] sm:$0xff]
      %v468 = vld [vmem:[%s363 + $0x340] sm:$0xff]
      %v469 = vld [vmem:[%s363 + $0x348] sm:$0xff]
      %v470 = vld [vmem:[%s363 + $0x350] sm:$0xff]
      %v471 = vld [vmem:[%s363 + $0x358] sm:$0xff]
      %v472 = vld [vmem:[%s363 + $0x360] sm:$0xff]
      %v473 = vld [vmem:[%s363 + $0x368] sm:$0xff]
      %v474 = vld [vmem:[%s363 + $0x370] sm:$0xff]
      %v475 = vld [vmem:[%s363 + $0x378] sm:$0xff]
      %v476 = vld [vmem:[%s363 + $0x380] sm:$0xff]
      %v477 = vld [vmem:[%s363 + $0x388] sm:$0xff]
      %v478 = vld [vmem:[%s363 + $0x390] sm:$0xff]
      %v479 = vld [vmem:[%s363 + $0x398] sm:$0xff]
      %v480 = vld [vmem:[%s363 + $0x3a0] sm:$0xff]
      %v481 = vld [vmem:[%s363 + $0x3a8] sm:$0xff]
      %v482 = vld [vmem:[%s363 + $0x3b0] sm:$0xff]
      %v483 = vld [vmem:[%s363 + $0x3b8] sm:$0xff]
      %v484 = vld [vmem:[%s363 + $0x3c0] sm:$0xff]
      %v485 = vld [vmem:[%s363 + $0x3c8] sm:$0xff]
      %v486 = vld [vmem:[%s363 + $0x3d0] sm:$0xff]
      %v487 = vld [vmem:[%s363 + $0x3d8] sm:$0xff]
      %v488 = vld [vmem:[%s363 + $0x3e0] sm:$0xff]
      %v489 = vld [vmem:[%s363 + $0x3e8] sm:$0xff]
      %v490 = vld [vmem:[%s363 + $0x3f0] sm:$0xff]
      %v491 = vld [vmem:[%s363 + $0x3f8] sm:$0xff]
      %v492 = vld [vmem:[#allocation2] sm:$0xff]
      %v493 = vld [vmem:[#allocation2 + $0x8] sm:$0xff]
      %v494 = vld [vmem:[#allocation2 + $0x10] sm:$0xff]
      %v495 = vld [vmem:[#allocation2 + $0x18] sm:$0xff]
      %v496 = vld [vmem:[#allocation2 + $0x20] sm:$0xff]
      %v497 = vld [vmem:[#allocation2 + $0x28] sm:$0xff]
      %v498 = vld [vmem:[#allocation2 + $0x30] sm:$0xff]
      %v499 = vld [vmem:[#allocation2 + $0x38] sm:$0xff]
      %v500 = vld [vmem:[#allocation2 + $0x40] sm:$0xff]
      %v501 = vld [vmem:[#allocation2 + $0x48] sm:$0xff]
      %v502 = vld [vmem:[#allocation2 + $0x50] sm:$0xff]
      %v503 = vld [vmem:[#allocation2 + $0x58] sm:$0xff]
      %v504 = vld [vmem:[#allocation2 + $0x60] sm:$0xff]
      %v505 = vld [vmem:[#allocation2 + $0x68] sm:$0xff]
      %v506 = vld [vmem:[#allocation2 + $0x70] sm:$0xff]
      %v507 = vld [vmem:[#allocation2 + $0x78] sm:$0xff]
      %v508 = vld [vmem:[#allocation2 + $0x80] sm:$0xff]
      %v509 = vld [vmem:[#allocation2 + $0x88] sm:$0xff]
      %v510 = vld [vmem:[#allocation2 + $0x90] sm:$0xff]
      %v511 = vld [vmem:[#allocation2 + $0x98] sm:$0xff]
      %v512 = vld [vmem:[#allocation2 + $0xa0] sm:$0xff]
      %v513 = vld [vmem:[#allocation2 + $0xa8] sm:$0xff]
      %v514 = vld [vmem:[#allocation2 + $0xb0] sm:$0xff]
      %v515 = vld [vmem:[#allocation2 + $0xb8] sm:$0xff]
      %v516 = vld [vmem:[#allocation2 + $0xc0] sm:$0xff]
      %v517 = vld [vmem:[#allocation2 + $0xc8] sm:$0xff]
      %v518 = vld [vmem:[#allocation2 + $0xd0] sm:$0xff]
      %v519 = vld [vmem:[#allocation2 + $0xd8] sm:$0xff]
      %v520 = vld [vmem:[#allocation2 + $0xe0] sm:$0xff]
      %v521 = vld [vmem:[#allocation2 + $0xe8] sm:$0xff]
      %v522 = vld [vmem:[#allocation2 + $0xf0] sm:$0xff]
      %v523 = vld [vmem:[#allocation2 + $0xf8] sm:$0xff]
      %v524 = vld [vmem:[#allocation2 + $0x100] sm:$0xff]
      %v525 = vld [vmem:[#allocation2 + $0x108] sm:$0xff]
      %v526 = vld [vmem:[#allocation2 + $0x110] sm:$0xff]
      %v527 = vld [vmem:[#allocation2 + $0x118] sm:$0xff]
      %v528 = vld [vmem:[#allocation2 + $0x120] sm:$0xff]
      %v529 = vld [vmem:[#allocation2 + $0x128] sm:$0xff]
      %v530 = vld [vmem:[#allocation2 + $0x130] sm:$0xff]
      %v531 = vld [vmem:[#allocation2 + $0x138] sm:$0xff]
      %v532 = vld [vmem:[#allocation2 + $0x140] sm:$0xff]
      %v533 = vld [vmem:[#allocation2 + $0x148] sm:$0xff]
      %v534 = vld [vmem:[#allocation2 + $0x150] sm:$0xff]
      %v535 = vld [vmem:[#allocation2 + $0x158] sm:$0xff]
      %v536 = vld [vmem:[#allocation2 + $0x160] sm:$0xff]
      %v537 = vld [vmem:[#allocation2 + $0x168] sm:$0xff]
      %v538 = vld [vmem:[#allocation2 + $0x170] sm:$0xff]
      %v539 = vld [vmem:[#allocation2 + $0x178] sm:$0xff]
      %v540 = vld [vmem:[#allocation2 + $0x180] sm:$0xff]
      %v541 = vld [vmem:[#allocation2 + $0x188] sm:$0xff]
      %v542 = vld [vmem:[#allocation2 + $0x190] sm:$0xff]
      %v543 = vld [vmem:[#allocation2 + $0x198] sm:$0xff]
      %v544 = vld [vmem:[#allocation2 + $0x1a0] sm:$0xff]
      %v545 = vld [vmem:[#allocation2 + $0x1a8] sm:$0xff]
      %v546 = vld [vmem:[#allocation2 + $0x1b0] sm:$0xff]
      %v547 = vld [vmem:[#allocation2 + $0x1b8] sm:$0xff]
      %v548 = vld [vmem:[#allocation2 + $0x1c0] sm:$0xff]
      %v549 = vld [vmem:[#allocation2 + $0x1c8] sm:$0xff]
      %v550 = vld [vmem:[#allocation2 + $0x1d0] sm:$0xff]
      %v551 = vld [vmem:[#allocation2 + $0x1d8] sm:$0xff]
      %v552 = vld [vmem:[#allocation2 + $0x1e0] sm:$0xff]
      %v553 = vld [vmem:[#allocation2 + $0x1e8] sm:$0xff]
      %v554 = vld [vmem:[#allocation2 + $0x1f0] sm:$0xff]
      %v555 = vld [vmem:[#allocation2 + $0x1f8] sm:$0xff]
      %v588 = vunpack.c.l.b16 %v328
      %v589 = vunpack.c.h.b16 %v328
      %v590 = vunpack.c.l.b16 %v329
      %v591 = vunpack.c.h.b16 %v329
      %v592 = vunpack.c.l.b16 %v330
      %v593 = vunpack.c.h.b16 %v330
      %v594 = vunpack.c.l.b16 %v331
      %v595 = vunpack.c.h.b16 %v331
      %v596 = vunpack.c.l.b16 %v332
      %v597 = vunpack.c.h.b16 %v332
      %v598 = vunpack.c.l.b16 %v333
      %v599 = vunpack.c.h.b16 %v333
      %v600 = vunpack.c.l.b16 %v334
      %v601 = vunpack.c.h.b16 %v334
      %v602 = vunpack.c.l.b16 %v335
      %v603 = vunpack.c.h.b16 %v335
      %v604 = vunpack.c.l.b16 %v336
      %v605 = vunpack.c.h.b16 %v336
      %v606 = vunpack.c.l.b16 %v337
      %v607 = vunpack.c.h.b16 %v337
      %v608 = vunpack.c.l.b16 %v338
      %v609 = vunpack.c.h.b16 %v338
      %v610 = vunpack.c.l.b16 %v339
      %v611 = vunpack.c.h.b16 %v339
      %v612 = vunpack.c.l.b16 %v340
      %v613 = vunpack.c.h.b16 %v340
      %v614 = vunpack.c.l.b16 %v341
      %v615 = vunpack.c.h.b16 %v341
      %v616 = vunpack.c.l.b16 %v342
      %v617 = vunpack.c.h.b16 %v342
      %v618 = vunpack.c.l.b16 %v343
      %v619 = vunpack.c.h.b16 %v343
      %v620 = vunpack.c.l.b16 %v344
      %v621 = vunpack.c.h.b16 %v344
      %v622 = vunpack.c.l.b16 %v345
      %v623 = vunpack.c.h.b16 %v345
      %v624 = vunpack.c.l.b16 %v346
      %v625 = vunpack.c.h.b16 %v346
      %v626 = vunpack.c.l.b16 %v347
      %v627 = vunpack.c.h.b16 %v347
      %v628 = vunpack.c.l.b16 %v348
      %v629 = vunpack.c.h.b16 %v348
      %v630 = vunpack.c.l.b16 %v349
      %v631 = vunpack.c.h.b16 %v349
      %v632 = vunpack.c.l.b16 %v350
      %v633 = vunpack.c.h.b16 %v350
      %v634 = vunpack.c.l.b16 %v351
      %v635 = vunpack.c.h.b16 %v351
      %v636 = vunpack.c.l.b16 %v352
      %v637 = vunpack.c.h.b16 %v352
      %v638 = vunpack.c.l.b16 %v353
      %v639 = vunpack.c.h.b16 %v353
      %v640 = vunpack.c.l.b16 %v354
      %v641 = vunpack.c.h.b16 %v354
      %v642 = vunpack.c.l.b16 %v355
      %v643 = vunpack.c.h.b16 %v355
      %v644 = vunpack.c.l.b16 %v356
      %v645 = vunpack.c.h.b16 %v356
      %v646 = vunpack.c.l.b16 %v357
      %v647 = vunpack.c.h.b16 %v357
      %v648 = vunpack.c.l.b16 %v358
      %v649 = vunpack.c.h.b16 %v358
      %v650 = vunpack.c.l.b16 %v359
      %v651 = vunpack.c.h.b16 %v359
      %v652 = vpack.c.b16 %v592, %v588
      %v653 = vpack.c.b16 %v593, %v589
      %v654 = vpack.c.b16 %v594, %v590
      %v655 = vpack.c.b16 %v595, %v591
      %v656 = vpack.c.b16 %v600, %v596
      %v657 = vpack.c.b16 %v601, %v597
      %v658 = vpack.c.b16 %v602, %v598
      %v659 = vpack.c.b16 %v603, %v599
      %v660 = vpack.c.b16 %v608, %v604
      %v661 = vpack.c.b16 %v609, %v605
      %v662 = vpack.c.b16 %v610, %v606
      %v663 = vpack.c.b16 %v611, %v607
      %v664 = vpack.c.b16 %v616, %v612
      %v665 = vpack.c.b16 %v617, %v613
      %v666 = vpack.c.b16 %v618, %v614
      %v667 = vpack.c.b16 %v619, %v615
      %v668 = vpack.c.b16 %v624, %v620
      %v669 = vpack.c.b16 %v625, %v621
      %v670 = vpack.c.b16 %v626, %v622
      %v671 = vpack.c.b16 %v627, %v623
      %v672 = vpack.c.b16 %v632, %v628
      %v673 = vpack.c.b16 %v633, %v629
      %v674 = vpack.c.b16 %v634, %v630
      %v675 = vpack.c.b16 %v635, %v631
      %v676 = vpack.c.b16 %v640, %v636
      %v677 = vpack.c.b16 %v641, %v637
      %v678 = vpack.c.b16 %v642, %v638
      %v679 = vpack.c.b16 %v643, %v639
      %v680 = vpack.c.b16 %v648, %v644
      %v681 = vpack.c.b16 %v649, %v645
      %v682 = vpack.c.b16 %v650, %v646
      %v683 = vpack.c.b16 %v651, %v647
      %v844 = vunpack.c.l.b16 %v364
      %v845 = vunpack.c.h.b16 %v364
      %v846 = vunpack.c.l.b16 %v365
      %v847 = vunpack.c.h.b16 %v365
      %v848 = vunpack.c.l.b16 %v366
      %v849 = vunpack.c.h.b16 %v366
      %v850 = vunpack.c.l.b16 %v367
      %v851 = vunpack.c.h.b16 %v367
      %v852 = vunpack.c.l.b16 %v368
      %v853 = vunpack.c.h.b16 %v368
      %v854 = vunpack.c.l.b16 %v369
      %v855 = vunpack.c.h.b16 %v369
      %v856 = vunpack.c.l.b16 %v370
      %v857 = vunpack.c.h.b16 %v370
      %v858 = vunpack.c.l.b16 %v371
      %v859 = vunpack.c.h.b16 %v371
      %v860 = vunpack.c.l.b16 %v372
      %v861 = vunpack.c.h.b16 %v372
      %v862 = vunpack.c.l.b16 %v373
      %v863 = vunpack.c.h.b16 %v373
      %v864 = vunpack.c.l.b16 %v374
      %v865 = vunpack.c.h.b16 %v374
      %v866 = vunpack.c.l.b16 %v375
      %v867 = vunpack.c.h.b16 %v375
      %v868 = vunpack.c.l.b16 %v376
      %v869 = vunpack.c.h.b16 %v376
      %v870 = vunpack.c.l.b16 %v377
      %v871 = vunpack.c.h.b16 %v377
      %v872 = vunpack.c.l.b16 %v378
      %v873 = vunpack.c.h.b16 %v378
      %v874 = vunpack.c.l.b16 %v379
      %v875 = vunpack.c.h.b16 %v379
      %v876 = vunpack.c.l.b16 %v380
      %v877 = vunpack.c.h.b16 %v380
      %v878 = vunpack.c.l.b16 %v381
      %v879 = vunpack.c.h.b16 %v381
      %v880 = vunpack.c.l.b16 %v382
      %v881 = vunpack.c.h.b16 %v382
      %v882 = vunpack.c.l.b16 %v383
      %v883 = vunpack.c.h.b16 %v383
      %v884 = vunpack.c.l.b16 %v384
      %v885 = vunpack.c.h.b16 %v384
      %v886 = vunpack.c.l.b16 %v385
      %v887 = vunpack.c.h.b16 %v385
      %v888 = vunpack.c.l.b16 %v386
      %v889 = vunpack.c.h.b16 %v386
      %v890 = vunpack.c.l.b16 %v387
      %v891 = vunpack.c.h.b16 %v387
      %v892 = vunpack.c.l.b16 %v388
      %v893 = vunpack.c.h.b16 %v388
      %v894 = vunpack.c.l.b16 %v389
      %v895 = vunpack.c.h.b16 %v389
      %v896 = vunpack.c.l.b16 %v390
      %v897 = vunpack.c.h.b16 %v390
      %v898 = vunpack.c.l.b16 %v391
      %v899 = vunpack.c.h.b16 %v391
      %v900 = vunpack.c.l.b16 %v392
      %v901 = vunpack.c.h.b16 %v392
      %v902 = vunpack.c.l.b16 %v393
      %v903 = vunpack.c.h.b16 %v393
      %v904 = vunpack.c.l.b16 %v394
      %v905 = vunpack.c.h.b16 %v394
      %v906 = vunpack.c.l.b16 %v395
      %v907 = vunpack.c.h.b16 %v395
      %v908 = vunpack.c.l.b16 %v396
      %v909 = vunpack.c.h.b16 %v396
      %v910 = vunpack.c.l.b16 %v397
      %v911 = vunpack.c.h.b16 %v397
      %v912 = vunpack.c.l.b16 %v398
      %v913 = vunpack.c.h.b16 %v398
      %v914 = vunpack.c.l.b16 %v399
      %v915 = vunpack.c.h.b16 %v399
      %v916 = vunpack.c.l.b16 %v400
      %v917 = vunpack.c.h.b16 %v400
      %v918 = vunpack.c.l.b16 %v401
      %v919 = vunpack.c.h.b16 %v401
      %v920 = vunpack.c.l.b16 %v402
      %v921 = vunpack.c.h.b16 %v402
      %v922 = vunpack.c.l.b16 %v403
      %v923 = vunpack.c.h.b16 %v403
      %v924 = vunpack.c.l.b16 %v404
      %v925 = vunpack.c.h.b16 %v404
      %v926 = vunpack.c.l.b16 %v405
      %v927 = vunpack.c.h.b16 %v405
      %v928 = vunpack.c.l.b16 %v406
      %v929 = vunpack.c.h.b16 %v406
      %v930 = vunpack.c.l.b16 %v407
      %v931 = vunpack.c.h.b16 %v407
      %v932 = vunpack.c.l.b16 %v408
      %v933 = vunpack.c.h.b16 %v408
      %v934 = vunpack.c.l.b16 %v409
      %v935 = vunpack.c.h.b16 %v409
      %v936 = vunpack.c.l.b16 %v410
      %v937 = vunpack.c.h.b16 %v410
      %v938 = vunpack.c.l.b16 %v411
      %v939 = vunpack.c.h.b16 %v411
      %v940 = vunpack.c.l.b16 %v412
      %v941 = vunpack.c.h.b16 %v412
      %v942 = vunpack.c.l.b16 %v413
      %v943 = vunpack.c.h.b16 %v413
      %v944 = vunpack.c.l.b16 %v414
      %v945 = vunpack.c.h.b16 %v414
      %v946 = vunpack.c.l.b16 %v415
      %v947 = vunpack.c.h.b16 %v415
      %v948 = vunpack.c.l.b16 %v416
      %v949 = vunpack.c.h.b16 %v416
      %v950 = vunpack.c.l.b16 %v417
      %v951 = vunpack.c.h.b16 %v417
      %v952 = vunpack.c.l.b16 %v418
      %v953 = vunpack.c.h.b16 %v418
      %v954 = vunpack.c.l.b16 %v419
      %v955 = vunpack.c.h.b16 %v419
      %v956 = vunpack.c.l.b16 %v420
      %v957 = vunpack.c.h.b16 %v420
      %v958 = vunpack.c.l.b16 %v421
      %v959 = vunpack.c.h.b16 %v421
      %v960 = vunpack.c.l.b16 %v422
      %v961 = vunpack.c.h.b16 %v422
      %v962 = vunpack.c.l.b16 %v423
      %v963 = vunpack.c.h.b16 %v423
      %v964 = vunpack.c.l.b16 %v424
      %v965 = vunpack.c.h.b16 %v424
      %v966 = vunpack.c.l.b16 %v425
      %v967 = vunpack.c.h.b16 %v425
      %v968 = vunpack.c.l.b16 %v426
      %v969 = vunpack.c.h.b16 %v426
      %v970 = vunpack.c.l.b16 %v427
      %v971 = vunpack.c.h.b16 %v427
      %v972 = vunpack.c.l.b16 %v428
      %v973 = vunpack.c.h.b16 %v428
      %v974 = vunpack.c.l.b16 %v429
      %v975 = vunpack.c.h.b16 %v429
      %v976 = vunpack.c.l.b16 %v430
      %v977 = vunpack.c.h.b16 %v430
      %v978 = vunpack.c.l.b16 %v431
      %v979 = vunpack.c.h.b16 %v431
      %v980 = vunpack.c.l.b16 %v432
      %v981 = vunpack.c.h.b16 %v432
      %v982 = vunpack.c.l.b16 %v433
      %v983 = vunpack.c.h.b16 %v433
      %v984 = vunpack.c.l.b16 %v434
      %v985 = vunpack.c.h.b16 %v434
      %v986 = vunpack.c.l.b16 %v435
      %v987 = vunpack.c.h.b16 %v435
      %v988 = vunpack.c.l.b16 %v436
      %v989 = vunpack.c.h.b16 %v436
      %v990 = vunpack.c.l.b16 %v437
      %v991 = vunpack.c.h.b16 %v437
      %v992 = vunpack.c.l.b16 %v438
      %v993 = vunpack.c.h.b16 %v438
      %v994 = vunpack.c.l.b16 %v439
      %v995 = vunpack.c.h.b16 %v439
      %v996 = vunpack.c.l.b16 %v440
      %v997 = vunpack.c.h.b16 %v440
      %v998 = vunpack.c.l.b16 %v441
      %v999 = vunpack.c.h.b16 %v441
      %v1000 = vunpack.c.l.b16 %v442
      %v1001 = vunpack.c.h.b16 %v442
      %v1002 = vunpack.c.l.b16 %v443
      %v1003 = vunpack.c.h.b16 %v443
      %v1004 = vunpack.c.l.b16 %v444
      %v1005 = vunpack.c.h.b16 %v444
      %v1006 = vunpack.c.l.b16 %v445
      %v1007 = vunpack.c.h.b16 %v445
      %v1008 = vunpack.c.l.b16 %v446
      %v1009 = vunpack.c.h.b16 %v446
      %v1010 = vunpack.c.l.b16 %v447
      %v1011 = vunpack.c.h.b16 %v447
      %v1012 = vunpack.c.l.b16 %v448
      %v1013 = vunpack.c.h.b16 %v448
      %v1014 = vunpack.c.l.b16 %v449
      %v1015 = vunpack.c.h.b16 %v449
      %v1016 = vunpack.c.l.b16 %v450
      %v1017 = vunpack.c.h.b16 %v450
      %v1018 = vunpack.c.l.b16 %v451
      %v1019 = vunpack.c.h.b16 %v451
      %v1020 = vunpack.c.l.b16 %v452
      %v1021 = vunpack.c.h.b16 %v452
      %v1022 = vunpack.c.l.b16 %v453
      %v1023 = vunpack.c.h.b16 %v453
      %v1024 = vunpack.c.l.b16 %v454
      %v1025 = vunpack.c.h.b16 %v454
      %v1026 = vunpack.c.l.b16 %v455
      %v1027 = vunpack.c.h.b16 %v455
      %v1028 = vunpack.c.l.b16 %v456
      %v1029 = vunpack.c.h.b16 %v456
      %v1030 = vunpack.c.l.b16 %v457
      %v1031 = vunpack.c.h.b16 %v457
      %v1032 = vunpack.c.l.b16 %v458
      %v1033 = vunpack.c.h.b16 %v458
      %v1034 = vunpack.c.l.b16 %v459
      %v1035 = vunpack.c.h.b16 %v459
      %v1036 = vunpack.c.l.b16 %v460
      %v1037 = vunpack.c.h.b16 %v460
      %v1038 = vunpack.c.l.b16 %v461
      %v1039 = vunpack.c.h.b16 %v461
      %v1040 = vunpack.c.l.b16 %v462
      %v1041 = vunpack.c.h.b16 %v462
      %v1042 = vunpack.c.l.b16 %v463
      %v1043 = vunpack.c.h.b16 %v463
      %v1044 = vunpack.c.l.b16 %v464
      %v1045 = vunpack.c.h.b16 %v464
      %v1046 = vunpack.c.l.b16 %v465
      %v1047 = vunpack.c.h.b16 %v465
      %v1048 = vunpack.c.l.b16 %v466
      %v1049 = vunpack.c.h.b16 %v466
      %v1050 = vunpack.c.l.b16 %v467
      %v1051 = vunpack.c.h.b16 %v467
      %v1052 = vunpack.c.l.b16 %v468
      %v1053 = vunpack.c.h.b16 %v468
      %v1054 = vunpack.c.l.b16 %v469
      %v1055 = vunpack.c.h.b16 %v469
      %v1056 = vunpack.c.l.b16 %v470
      %v1057 = vunpack.c.h.b16 %v470
      %v1058 = vunpack.c.l.b16 %v471
      %v1059 = vunpack.c.h.b16 %v471
      %v1060 = vunpack.c.l.b16 %v472
      %v1061 = vunpack.c.h.b16 %v472
      %v1062 = vunpack.c.l.b16 %v473
      %v1063 = vunpack.c.h.b16 %v473
      %v1064 = vunpack.c.l.b16 %v474
      %v1065 = vunpack.c.h.b16 %v474
      %v1066 = vunpack.c.l.b16 %v475
      %v1067 = vunpack.c.h.b16 %v475
      %v1068 = vunpack.c.l.b16 %v476
      %v1069 = vunpack.c.h.b16 %v476
      %v1070 = vunpack.c.l.b16 %v477
      %v1071 = vunpack.c.h.b16 %v477
      %v1072 = vunpack.c.l.b16 %v478
      %v1073 = vunpack.c.h.b16 %v478
      %v1074 = vunpack.c.l.b16 %v479
      %v1075 = vunpack.c.h.b16 %v479
      %v1076 = vunpack.c.l.b16 %v480
      %v1077 = vunpack.c.h.b16 %v480
      %v1078 = vunpack.c.l.b16 %v481
      %v1079 = vunpack.c.h.b16 %v481
      %v1080 = vunpack.c.l.b16 %v482
      %v1081 = vunpack.c.h.b16 %v482
      %v1082 = vunpack.c.l.b16 %v483
      %v1083 = vunpack.c.h.b16 %v483
      %v1084 = vunpack.c.l.b16 %v484
      %v1085 = vunpack.c.h.b16 %v484
      %v1086 = vunpack.c.l.b16 %v485
      %v1087 = vunpack.c.h.b16 %v485
      %v1088 = vunpack.c.l.b16 %v486
      %v1089 = vunpack.c.h.b16 %v486
      %v1090 = vunpack.c.l.b16 %v487
      %v1091 = vunpack.c.h.b16 %v487
      %v1092 = vunpack.c.l.b16 %v488
      %v1093 = vunpack.c.h.b16 %v488
      %v1094 = vunpack.c.l.b16 %v489
      %v1095 = vunpack.c.h.b16 %v489
      %v1096 = vunpack.c.l.b16 %v490
      %v1097 = vunpack.c.h.b16 %v490
      %v1098 = vunpack.c.l.b16 %v491
      %v1099 = vunpack.c.h.b16 %v491
      %v1100 = vpack.c.b16 %v848, %v844
      %v1101 = vpack.c.b16 %v849, %v845
      %v1102 = vpack.c.b16 %v850, %v846
      %v1103 = vpack.c.b16 %v851, %v847
      %v1104 = vpack.c.b16 %v856, %v852
      %v1105 = vpack.c.b16 %v857, %v853
      %v1106 = vpack.c.b16 %v858, %v854
      %v1107 = vpack.c.b16 %v859, %v855
      %v1108 = vpack.c.b16 %v864, %v860
      %v1109 = vpack.c.b16 %v865, %v861
      %v1110 = vpack.c.b16 %v866, %v862
      %v1111 = vpack.c.b16 %v867, %v863
      %v1112 = vpack.c.b16 %v872, %v868
      %v1113 = vpack.c.b16 %v873, %v869
      %v1114 = vpack.c.b16 %v874, %v870
      %v1115 = vpack.c.b16 %v875, %v871
      %v1116 = vpack.c.b16 %v880, %v876
      %v1117 = vpack.c.b16 %v881, %v877
      %v1118 = vpack.c.b16 %v882, %v878
      %v1119 = vpack.c.b16 %v883, %v879
      %v1120 = vpack.c.b16 %v888, %v884
      %v1121 = vpack.c.b16 %v889, %v885
      %v1122 = vpack.c.b16 %v890, %v886
      %v1123 = vpack.c.b16 %v891, %v887
      %v1124 = vpack.c.b16 %v896, %v892
      %v1125 = vpack.c.b16 %v897, %v893
      %v1126 = vpack.c.b16 %v898, %v894
      %v1127 = vpack.c.b16 %v899, %v895
      %v1128 = vpack.c.b16 %v904, %v900
      %v1129 = vpack.c.b16 %v905, %v901
      %v1130 = vpack.c.b16 %v906, %v902
      %v1131 = vpack.c.b16 %v907, %v903
      %v1132 = vpack.c.b16 %v912, %v908
      %v1133 = vpack.c.b16 %v913, %v909
      %v1134 = vpack.c.b16 %v914, %v910
      %v1135 = vpack.c.b16 %v915, %v911
      %v1136 = vpack.c.b16 %v920, %v916
      %v1137 = vpack.c.b16 %v921, %v917
      %v1138 = vpack.c.b16 %v922, %v918
      %v1139 = vpack.c.b16 %v923, %v919
      %v1140 = vpack.c.b16 %v928, %v924
      %v1141 = vpack.c.b16 %v929, %v925
      %v1142 = vpack.c.b16 %v930, %v926
      %v1143 = vpack.c.b16 %v931, %v927
      %v1144 = vpack.c.b16 %v936, %v932
      %v1145 = vpack.c.b16 %v937, %v933
      %v1146 = vpack.c.b16 %v938, %v934
      %v1147 = vpack.c.b16 %v939, %v935
      %v1148 = vpack.c.b16 %v944, %v940
      %v1149 = vpack.c.b16 %v945, %v941
      %v1150 = vpack.c.b16 %v946, %v942
      %v1151 = vpack.c.b16 %v947, %v943
      %v1152 = vpack.c.b16 %v952, %v948
      %v1153 = vpack.c.b16 %v953, %v949
      %v1154 = vpack.c.b16 %v954, %v950
      %v1155 = vpack.c.b16 %v955, %v951
      %v1156 = vpack.c.b16 %v960, %v956
      %v1157 = vpack.c.b16 %v961, %v957
      %v1158 = vpack.c.b16 %v962, %v958
      %v1159 = vpack.c.b16 %v963, %v959
      %v1160 = vpack.c.b16 %v968, %v964
      %v1161 = vpack.c.b16 %v969, %v965
      %v1162 = vpack.c.b16 %v970, %v966
      %v1163 = vpack.c.b16 %v971, %v967
      %v1164 = vpack.c.b16 %v976, %v972
      %v1165 = vpack.c.b16 %v977, %v973
      %v1166 = vpack.c.b16 %v978, %v974
      %v1167 = vpack.c.b16 %v979, %v975
      %v1168 = vpack.c.b16 %v984, %v980
      %v1169 = vpack.c.b16 %v985, %v981
      %v1170 = vpack.c.b16 %v986, %v982
      %v1171 = vpack.c.b16 %v987, %v983
      %v1172 = vpack.c.b16 %v992, %v988
      %v1173 = vpack.c.b16 %v993, %v989
      %v1174 = vpack.c.b16 %v994, %v990
      %v1175 = vpack.c.b16 %v995, %v991
      %v1176 = vpack.c.b16 %v1000, %v996
      %v1177 = vpack.c.b16 %v1001, %v997
      %v1178 = vpack.c.b16 %v1002, %v998
      %v1179 = vpack.c.b16 %v1003, %v999
      %v1180 = vpack.c.b16 %v1008, %v1004
      %v1181 = vpack.c.b16 %v1009, %v1005
      %v1182 = vpack.c.b16 %v1010, %v1006
      %v1183 = vpack.c.b16 %v1011, %v1007
      %v1184 = vpack.c.b16 %v1016, %v1012
      %v1185 = vpack.c.b16 %v1017, %v1013
      %v1186 = vpack.c.b16 %v1018, %v1014
      %v1187 = vpack.c.b16 %v1019, %v1015
      %v1188 = vpack.c.b16 %v1024, %v1020
      %v1189 = vpack.c.b16 %v1025, %v1021
      %v1190 = vpack.c.b16 %v1026, %v1022
      %v1191 = vpack.c.b16 %v1027, %v1023
      %v1192 = vpack.c.b16 %v1032, %v1028
      %v1193 = vpack.c.b16 %v1033, %v1029
      %v1194 = vpack.c.b16 %v1034, %v1030
      %v1195 = vpack.c.b16 %v1035, %v1031
      %v1196 = vpack.c.b16 %v1040, %v1036
      %v1197 = vpack.c.b16 %v1041, %v1037
      %v1198 = vpack.c.b16 %v1042, %v1038
      %v1199 = vpack.c.b16 %v1043, %v1039
      %v1200 = vpack.c.b16 %v1048, %v1044
      %v1201 = vpack.c.b16 %v1049, %v1045
      %v1202 = vpack.c.b16 %v1050, %v1046
      %v1203 = vpack.c.b16 %v1051, %v1047
      %v1204 = vpack.c.b16 %v1056, %v1052
      %v1205 = vpack.c.b16 %v1057, %v1053
      %v1206 = vpack.c.b16 %v1058, %v1054
      %v1207 = vpack.c.b16 %v1059, %v1055
      %v1208 = vpack.c.b16 %v1064, %v1060
      %v1209 = vpack.c.b16 %v1065, %v1061
      %v1210 = vpack.c.b16 %v1066, %v1062
      %v1211 = vpack.c.b16 %v1067, %v1063
      %v1212 = vpack.c.b16 %v1072, %v1068
      %v1213 = vpack.c.b16 %v1073, %v1069
      %v1214 = vpack.c.b16 %v1074, %v1070
      %v1215 = vpack.c.b16 %v1075, %v1071
      %v1216 = vpack.c.b16 %v1080, %v1076
      %v1217 = vpack.c.b16 %v1081, %v1077
      %v1218 = vpack.c.b16 %v1082, %v1078
      %v1219 = vpack.c.b16 %v1083, %v1079
      %v1220 = vpack.c.b16 %v1088, %v1084
      %v1221 = vpack.c.b16 %v1089, %v1085
      %v1222 = vpack.c.b16 %v1090, %v1086
      %v1223 = vpack.c.b16 %v1091, %v1087
      %v1224 = vpack.c.b16 %v1096, %v1092
      %v1225 = vpack.c.b16 %v1097, %v1093
      %v1226 = vpack.c.b16 %v1098, %v1094
      %v1227 = vpack.c.b16 %v1099, %v1095
      %1356 = vmatpush.bf16.msra.mxu0 %v1128
      %1357 = vmatpush.bf16.msra.mxu0 %v1124
      %1358 = vmatpush.bf16.msra.mxu0 %v1120
      %1359 = vmatpush.bf16.msra.mxu0 %v1116
      %1360 = vmatpush.bf16.msra.mxu0 %v1112
      %1361 = vmatpush.bf16.msra.mxu0 %v1108
      %1362 = vmatpush.bf16.msra.mxu0 %v1104
      %1363 = vmatpush.bf16.msra.mxu0 %v1100
      %1364 = vmatmul.bf16.gmra.mxu0 %v652
      %v1365 = vpop.f32.mrf.mxu0
      %v1366 = vadd.f32 0.0, %v1365
      %v1367 = vpop.f32.mrf.mxu0
      %v1368 = vadd.f32 0.0, %v1367
      %1369 = vmatmul.bf16.gmra.mxu0 %v656
      %v1370 = vpop.f32.mrf.mxu0
      %v1371 = vadd.f32 0.0, %v1370
      %v1372 = vpop.f32.mrf.mxu0
      %v1373 = vadd.f32 0.0, %v1372
      %1374 = vmatmul.bf16.gmra.mxu0 %v660
      %v1375 = vpop.f32.mrf.mxu0
      %v1376 = vadd.f32 0.0, %v1375
      %v1377 = vpop.f32.mrf.mxu0
      %v1378 = vadd.f32 0.0, %v1377
      %1379 = vmatmul.bf16.gmra.mxu0 %v664
      %v1380 = vpop.f32.mrf.mxu0
      %v1381 = vadd.f32 0.0, %v1380
      %v1382 = vpop.f32.mrf.mxu0
      %v1383 = vadd.f32 0.0, %v1382
      %1384 = vmatmul.bf16.gmra.mxu0 %v668
      %v1385 = vpop.f32.mrf.mxu0
      %v1386 = vadd.f32 0.0, %v1385
      %v1387 = vpop.f32.mrf.mxu0
      %v1388 = vadd.f32 0.0, %v1387
      %1389 = vmatmul.bf16.gmra.mxu0 %v672
      %v1390 = vpop.f32.mrf.mxu0
      %v1391 = vadd.f32 0.0, %v1390
      %v1392 = vpop.f32.mrf.mxu0
      %v1393 = vadd.f32 0.0, %v1392
      %1394 = vmatmul.bf16.gmra.mxu0 %v676
      %v1395 = vpop.f32.mrf.mxu0
      %v1396 = vadd.f32 0.0, %v1395
      %v1397 = vpop.f32.mrf.mxu0
      %v1398 = vadd.f32 0.0, %v1397
      %1399 = vmatmul.bf16.gmra.mxu0 %v680
      %v1400 = vpop.f32.mrf.mxu0
      %v1401 = vadd.f32 0.0, %v1400
      %v1402 = vpop.f32.mrf.mxu0
      %v1403 = vadd.f32 0.0, %v1402
      %1404 = vdwg.mxu0
      %1405 = vmatpush.bf16.msra.mxu0 %v1160
      %1406 = vmatpush.bf16.msra.mxu0 %v1156
      %1407 = vmatpush.bf16.msra.mxu0 %v1152
      %1408 = vmatpush.bf16.msra.mxu0 %v1148
      %1409 = vmatpush.bf16.msra.mxu0 %v1144
      %1410 = vmatpush.bf16.msra.mxu0 %v1140
      %1411 = vmatpush.bf16.msra.mxu0 %v1136
      %1412 = vmatpush.bf16.msra.mxu0 %v1132
      %1413 = vmatmul.bf16.gmra.mxu0 %v653
      %v1414 = vpop.f32.mrf.mxu0
      %v1415 = vadd.f32 %v1366, %v1414
      %v1416 = vpop.f32.mrf.mxu0
      %v1417 = vadd.f32 %v1368, %v1416
      %1418 = vmatmul.bf16.gmra.mxu0 %v657
      %v1419 = vpop.f32.mrf.mxu0
      %v1420 = vadd.f32 %v1371, %v1419
      %v1421 = vpop.f32.mrf.mxu0
      %v1422 = vadd.f32 %v1373, %v1421
      %1423 = vmatmul.bf16.gmra.mxu0 %v661
      %v1424 = vpop.f32.mrf.mxu0
      %v1425 = vadd.f32 %v1376, %v1424
      %v1426 = vpop.f32.mrf.mxu0
      %v1427 = vadd.f32 %v1378, %v1426
      %1428 = vmatmul.bf16.gmra.mxu0 %v665
      %v1429 = vpop.f32.mrf.mxu0
      %v1430 = vadd.f32 %v1381, %v1429
      %v1431 = vpop.f32.mrf.mxu0
      %v1432 = vadd.f32 %v1383, %v1431
      %1433 = vmatmul.bf16.gmra.mxu0 %v669
      %v1434 = vpop.f32.mrf.mxu0
      %v1435 = vadd.f32 %v1386, %v1434
      %v1436 = vpop.f32.mrf.mxu0
      %v1437 = vadd.f32 %v1388, %v1436
      %1438 = vmatmul.bf16.gmra.mxu0 %v673
      %v1439 = vpop.f32.mrf.mxu0
      %v1440 = vadd.f32 %v1391, %v1439
      %v1441 = vpop.f32.mrf.mxu0
      %v1442 = vadd.f32 %v1393, %v1441
      %1443 = vmatmul.bf16.gmra.mxu0 %v677
      %v1444 = vpop.f32.mrf.mxu0
      %v1445 = vadd.f32 %v1396, %v1444
      %v1446 = vpop.f32.mrf.mxu0
      %v1447 = vadd.f32 %v1398, %v1446
      %1448 = vmatmul.bf16.gmra.mxu0 %v681
      %v1449 = vpop.f32.mrf.mxu0
      %v1450 = vadd.f32 %v1401, %v1449
      %v1451 = vpop.f32.mrf.mxu0
      %v1452 = vadd.f32 %v1403, %v1451
      %1453 = vdwg.mxu0
      %1454 = vmatpush.bf16.msra.mxu0 %v1192
      %1455 = vmatpush.bf16.msra.mxu0 %v1188
      %1456 = vmatpush.bf16.msra.mxu0 %v1184
      %1457 = vmatpush.bf16.msra.mxu0 %v1180
      %1458 = vmatpush.bf16.msra.mxu0 %v1176
      %1459 = vmatpush.bf16.msra.mxu0 %v1172
      %1460 = vmatpush.bf16.msra.mxu0 %v1168
      %1461 = vmatpush.bf16.msra.mxu0 %v1164
      %1462 = vmatmul.bf16.gmra.mxu0 %v654
      %v1463 = vpop.f32.mrf.mxu0
      %v1464 = vadd.f32 %v1415, %v1463
      %v1465 = vpop.f32.mrf.mxu0
      %v1466 = vadd.f32 %v1417, %v1465
      %1467 = vmatmul.bf16.gmra.mxu0 %v658
      %v1468 = vpop.f32.mrf.mxu0
      %v1469 = vadd.f32 %v1420, %v1468
      %v1470 = vpop.f32.mrf.mxu0
      %v1471 = vadd.f32 %v1422, %v1470
      %1472 = vmatmul.bf16.gmra.mxu0 %v662
      %v1473 = vpop.f32.mrf.mxu0
      %v1474 = vadd.f32 %v1425, %v1473
      %v1475 = vpop.f32.mrf.mxu0
      %v1476 = vadd.f32 %v1427, %v1475
      %1477 = vmatmul.bf16.gmra.mxu0 %v666
      %v1478 = vpop.f32.mrf.mxu0
      %v1479 = vadd.f32 %v1430, %v1478
      %v1480 = vpop.f32.mrf.mxu0
      %v1481 = vadd.f32 %v1432, %v1480
      %1482 = vmatmul.bf16.gmra.mxu0 %v670
      %v1483 = vpop.f32.mrf.mxu0
      %v1484 = vadd.f32 %v1435, %v1483
      %v1485 = vpop.f32.mrf.mxu0
      %v1486 = vadd.f32 %v1437, %v1485
      %1487 = vmatmul.bf16.gmra.mxu0 %v674
      %v1488 = vpop.f32.mrf.mxu0
      %v1489 = vadd.f32 %v1440, %v1488
      %v1490 = vpop.f32.mrf.mxu0
      %v1491 = vadd.f32 %v1442, %v1490
      %1492 = vmatmul.bf16.gmra.mxu0 %v678
      %v1493 = vpop.f32.mrf.mxu0
      %v1494 = vadd.f32 %v1445, %v1493
      %v1495 = vpop.f32.mrf.mxu0
      %v1496 = vadd.f32 %v1447, %v1495
      %1497 = vmatmul.bf16.gmra.mxu0 %v682
      %v1498 = vpop.f32.mrf.mxu0
      %v1499 = vadd.f32 %v1450, %v1498
      %v1500 = vpop.f32.mrf.mxu0
      %v1501 = vadd.f32 %v1452, %v1500
      %1502 = vdwg.mxu0
      %1503 = vmatpush.bf16.msra.mxu0 %v1224
      %1504 = vmatpush.bf16.msra.mxu0 %v1220
      %1505 = vmatpush.bf16.msra.mxu0 %v1216
      %1506 = vmatpush.bf16.msra.mxu0 %v1212
      %1507 = vmatpush.bf16.msra.mxu0 %v1208
      %1508 = vmatpush.bf16.msra.mxu0 %v1204
      %1509 = vmatpush.bf16.msra.mxu0 %v1200
      %1510 = vmatpush.bf16.msra.mxu0 %v1196
      %1511 = vmatmul.bf16.gmra.mxu0 %v655
      %v1512 = vpop.f32.mrf.mxu0
      %v1513 = vadd.f32 %v1464, %v1512
      %v1514 = vpop.f32.mrf.mxu0
      %v1515 = vadd.f32 %v1466, %v1514
      %1516 = vmatmul.bf16.gmra.mxu0 %v659
      %v1517 = vpop.f32.mrf.mxu0
      %v1518 = vadd.f32 %v1469, %v1517
      %v1519 = vpop.f32.mrf.mxu0
      %v1520 = vadd.f32 %v1471, %v1519
      %1521 = vmatmul.bf16.gmra.mxu0 %v663
      %v1522 = vpop.f32.mrf.mxu0
      %v1523 = vadd.f32 %v1474, %v1522
      %v1524 = vpop.f32.mrf.mxu0
      %v1525 = vadd.f32 %v1476, %v1524
      %1526 = vmatmul.bf16.gmra.mxu0 %v667
      %v1527 = vpop.f32.mrf.mxu0
      %v1528 = vadd.f32 %v1479, %v1527
      %v1529 = vpop.f32.mrf.mxu0
      %v1530 = vadd.f32 %v1481, %v1529
      %1531 = vmatmul.bf16.gmra.mxu0 %v671
      %v1532 = vpop.f32.mrf.mxu0
      %v1533 = vadd.f32 %v1484, %v1532
      %v1534 = vpop.f32.mrf.mxu0
      %v1535 = vadd.f32 %v1486, %v1534
      %1536 = vmatmul.bf16.gmra.mxu0 %v675
      %v1537 = vpop.f32.mrf.mxu0
      %v1538 = vadd.f32 %v1489, %v1537
      %v1539 = vpop.f32.mrf.mxu0
      %v1540 = vadd.f32 %v1491, %v1539
      %1541 = vmatmul.bf16.gmra.mxu0 %v679
      %v1542 = vpop.f32.mrf.mxu0
      %v1543 = vadd.f32 %v1494, %v1542
      %v1544 = vpop.f32.mrf.mxu0
      %v1545 = vadd.f32 %v1496, %v1544
      %1546 = vmatmul.bf16.gmra.mxu0 %v683
      %v1547 = vpop.f32.mrf.mxu0
      %v1548 = vadd.f32 %v1499, %v1547
      %v1549 = vpop.f32.mrf.mxu0
      %v1550 = vadd.f32 %v1501, %v1549
      %1551 = vdwg.mxu0
      %1552 = vmatpush.bf16.msra.mxu0 %v1129
      %1553 = vmatpush.bf16.msra.mxu0 %v1125
      %1554 = vmatpush.bf16.msra.mxu0 %v1121
      %1555 = vmatpush.bf16.msra.mxu0 %v1117
      %1556 = vmatpush.bf16.msra.mxu0 %v1113
      %1557 = vmatpush.bf16.msra.mxu0 %v1109
      %1558 = vmatpush.bf16.msra.mxu0 %v1105
      %1559 = vmatpush.bf16.msra.mxu0 %v1101
      %1560 = vmatmul.bf16.gmra.mxu0 %v652
      %v1561 = vpop.f32.mrf.mxu0
      %v1562 = vadd.f32 0.0, %v1561
      %v1563 = vpop.f32.mrf.mxu0
      %v1564 = vadd.f32 0.0, %v1563
      %1565 = vmatmul.bf16.gmra.mxu0 %v656
      %v1566 = vpop.f32.mrf.mxu0
      %v1567 = vadd.f32 0.0, %v1566
      %v1568 = vpop.f32.mrf.mxu0
      %v1569 = vadd.f32 0.0, %v1568
      %1570 = vmatmul.bf16.gmra.mxu0 %v660
      %v1571 = vpop.f32.mrf.mxu0
      %v1572 = vadd.f32 0.0, %v1571
      %v1573 = vpop.f32.mrf.mxu0
      %v1574 = vadd.f32 0.0, %v1573
      %1575 = vmatmul.bf16.gmra.mxu0 %v664
      %v1576 = vpop.f32.mrf.mxu0
      %v1577 = vadd.f32 0.0, %v1576
      %v1578 = vpop.f32.mrf.mxu0
      %v1579 = vadd.f32 0.0, %v1578
      %1580 = vmatmul.bf16.gmra.mxu0 %v668
      %v1581 = vpop.f32.mrf.mxu0
      %v1582 = vadd.f32 0.0, %v1581
      %v1583 = vpop.f32.mrf.mxu0
      %v1584 = vadd.f32 0.0, %v1583
      %1585 = vmatmul.bf16.gmra.mxu0 %v672
      %v1586 = vpop.f32.mrf.mxu0
      %v1587 = vadd.f32 0.0, %v1586
      %v1588 = vpop.f32.mrf.mxu0
      %v1589 = vadd.f32 0.0, %v1588
      %1590 = vmatmul.bf16.gmra.mxu0 %v676
      %v1591 = vpop.f32.mrf.mxu0
      %v1592 = vadd.f32 0.0, %v1591
      %v1593 = vpop.f32.mrf.mxu0
      %v1594 = vadd.f32 0.0, %v1593
      %1595 = vmatmul.bf16.gmra.mxu0 %v680
      %v1596 = vpop.f32.mrf.mxu0
      %v1597 = vadd.f32 0.0, %v1596
      %v1598 = vpop.f32.mrf.mxu0
      %v1599 = vadd.f32 0.0, %v1598
      %1600 = vdwg.mxu0
      %1601 = vmatpush.bf16.msra.mxu0 %v1161
      %1602 = vmatpush.bf16.msra.mxu0 %v1157
      %1603 = vmatpush.bf16.msra.mxu0 %v1153
      %1604 = vmatpush.bf16.msra.mxu0 %v1149
      %1605 = vmatpush.bf16.msra.mxu0 %v1145
      %1606 = vmatpush.bf16.msra.mxu0 %v1141
      %1607 = vmatpush.bf16.msra.mxu0 %v1137
      %1608 = vmatpush.bf16.msra.mxu0 %v1133
      %1609 = vmatmul.bf16.gmra.mxu0 %v653
      %v1610 = vpop.f32.mrf.mxu0
      %v1611 = vadd.f32 %v1562, %v1610
      %v1612 = vpop.f32.mrf.mxu0
      %v1613 = vadd.f32 %v1564, %v1612
      %1614 = vmatmul.bf16.gmra.mxu0 %v657
      %v1615 = vpop.f32.mrf.mxu0
      %v1616 = vadd.f32 %v1567, %v1615
      %v1617 = vpop.f32.mrf.mxu0
      %v1618 = vadd.f32 %v1569, %v1617
      %1619 = vmatmul.bf16.gmra.mxu0 %v661
      %v1620 = vpop.f32.mrf.mxu0
      %v1621 = vadd.f32 %v1572, %v1620
      %v1622 = vpop.f32.mrf.mxu0
      %v1623 = vadd.f32 %v1574, %v1622
      %1624 = vmatmul.bf16.gmra.mxu0 %v665
      %v1625 = vpop.f32.mrf.mxu0
      %v1626 = vadd.f32 %v1577, %v1625
      %v1627 = vpop.f32.mrf.mxu0
      %v1628 = vadd.f32 %v1579, %v1627
      %1629 = vmatmul.bf16.gmra.mxu0 %v669
      %v1630 = vpop.f32.mrf.mxu0
      %v1631 = vadd.f32 %v1582, %v1630
      %v1632 = vpop.f32.mrf.mxu0
      %v1633 = vadd.f32 %v1584, %v1632
      %1634 = vmatmul.bf16.gmra.mxu0 %v673
      %v1635 = vpop.f32.mrf.mxu0
      %v1636 = vadd.f32 %v1587, %v1635
      %v1637 = vpop.f32.mrf.mxu0
      %v1638 = vadd.f32 %v1589, %v1637
      %1639 = vmatmul.bf16.gmra.mxu0 %v677
      %v1640 = vpop.f32.mrf.mxu0
      %v1641 = vadd.f32 %v1592, %v1640
      %v1642 = vpop.f32.mrf.mxu0
      %v1643 = vadd.f32 %v1594, %v1642
      %1644 = vmatmul.bf16.gmra.mxu0 %v681
      %v1645 = vpop.f32.mrf.mxu0
      %v1646 = vadd.f32 %v1597, %v1645
      %v1647 = vpop.f32.mrf.mxu0
      %v1648 = vadd.f32 %v1599, %v1647
      %1649 = vdwg.mxu0
      %1650 = vmatpush.bf16.msra.mxu0 %v1193
      %1651 = vmatpush.bf16.msra.mxu0 %v1189
      %1652 = vmatpush.bf16.msra.mxu0 %v1185
      %1653 = vmatpush.bf16.msra.mxu0 %v1181
      %1654 = vmatpush.bf16.msra.mxu0 %v1177
      %1655 = vmatpush.bf16.msra.mxu0 %v1173
      %1656 = vmatpush.bf16.msra.mxu0 %v1169
      %1657 = vmatpush.bf16.msra.mxu0 %v1165
      %1658 = vmatmul.bf16.gmra.mxu0 %v654
      %v1659 = vpop.f32.mrf.mxu0
      %v1660 = vadd.f32 %v1611, %v1659
      %v1661 = vpop.f32.mrf.mxu0
      %v1662 = vadd.f32 %v1613, %v1661
      %1663 = vmatmul.bf16.gmra.mxu0 %v658
      %v1664 = vpop.f32.mrf.mxu0
      %v1665 = vadd.f32 %v1616, %v1664
      %v1666 = vpop.f32.mrf.mxu0
      %v1667 = vadd.f32 %v1618, %v1666
      %1668 = vmatmul.bf16.gmra.mxu0 %v662
      %v1669 = vpop.f32.mrf.mxu0
      %v1670 = vadd.f32 %v1621, %v1669
      %v1671 = vpop.f32.mrf.mxu0
      %v1672 = vadd.f32 %v1623, %v1671
      %1673 = vmatmul.bf16.gmra.mxu0 %v666
      %v1674 = vpop.f32.mrf.mxu0
      %v1675 = vadd.f32 %v1626, %v1674
      %v1676 = vpop.f32.mrf.mxu0
      %v1677 = vadd.f32 %v1628, %v1676
      %1678 = vmatmul.bf16.gmra.mxu0 %v670
      %v1679 = vpop.f32.mrf.mxu0
      %v1680 = vadd.f32 %v1631, %v1679
      %v1681 = vpop.f32.mrf.mxu0
      %v1682 = vadd.f32 %v1633, %v1681
      %1683 = vmatmul.bf16.gmra.mxu0 %v674
      %v1684 = vpop.f32.mrf.mxu0
      %v1685 = vadd.f32 %v1636, %v1684
      %v1686 = vpop.f32.mrf.mxu0
      %v1687 = vadd.f32 %v1638, %v1686
      %1688 = vmatmul.bf16.gmra.mxu0 %v678
      %v1689 = vpop.f32.mrf.mxu0
      %v1690 = vadd.f32 %v1641, %v1689
      %v1691 = vpop.f32.mrf.mxu0
      %v1692 = vadd.f32 %v1643, %v1691
      %1693 = vmatmul.bf16.gmra.mxu0 %v682
      %v1694 = vpop.f32.mrf.mxu0
      %v1695 = vadd.f32 %v1646, %v1694
      %v1696 = vpop.f32.mrf.mxu0
      %v1697 = vadd.f32 %v1648, %v1696
      %1698 = vdwg.mxu0
      %1699 = vmatpush.bf16.msra.mxu0 %v1225
      %1700 = vmatpush.bf16.msra.mxu0 %v1221
      %1701 = vmatpush.bf16.msra.mxu0 %v1217
      %1702 = vmatpush.bf16.msra.mxu0 %v1213
      %1703 = vmatpush.bf16.msra.mxu0 %v1209
      %1704 = vmatpush.bf16.msra.mxu0 %v1205
      %1705 = vmatpush.bf16.msra.mxu0 %v1201
      %1706 = vmatpush.bf16.msra.mxu0 %v1197
      %1707 = vmatmul.bf16.gmra.mxu0 %v655
      %v1708 = vpop.f32.mrf.mxu0
      %v1709 = vadd.f32 %v1660, %v1708
      %v1710 = vpop.f32.mrf.mxu0
      %v1711 = vadd.f32 %v1662, %v1710
      %1712 = vmatmul.bf16.gmra.mxu0 %v659
      %v1713 = vpop.f32.mrf.mxu0
      %v1714 = vadd.f32 %v1665, %v1713
      %v1715 = vpop.f32.mrf.mxu0
      %v1716 = vadd.f32 %v1667, %v1715
      %1717 = vmatmul.bf16.gmra.mxu0 %v663
      %v1718 = vpop.f32.mrf.mxu0
      %v1719 = vadd.f32 %v1670, %v1718
      %v1720 = vpop.f32.mrf.mxu0
      %v1721 = vadd.f32 %v1672, %v1720
      %1722 = vmatmul.bf16.gmra.mxu0 %v667
      %v1723 = vpop.f32.mrf.mxu0
      %v1724 = vadd.f32 %v1675, %v1723
      %v1725 = vpop.f32.mrf.mxu0
      %v1726 = vadd.f32 %v1677, %v1725
      %1727 = vmatmul.bf16.gmra.mxu0 %v671
      %v1728 = vpop.f32.mrf.mxu0
      %v1729 = vadd.f32 %v1680, %v1728
      %v1730 = vpop.f32.mrf.mxu0
      %v1731 = vadd.f32 %v1682, %v1730
      %1732 = vmatmul.bf16.gmra.mxu0 %v675
      %v1733 = vpop.f32.mrf.mxu0
      %v1734 = vadd.f32 %v1685, %v1733
      %v1735 = vpop.f32.mrf.mxu0
      %v1736 = vadd.f32 %v1687, %v1735
      %1737 = vmatmul.bf16.gmra.mxu0 %v679
      %v1738 = vpop.f32.mrf.mxu0
      %v1739 = vadd.f32 %v1690, %v1738
      %v1740 = vpop.f32.mrf.mxu0
      %v1741 = vadd.f32 %v1692, %v1740
      %1742 = vmatmul.bf16.gmra.mxu0 %v683
      %v1743 = vpop.f32.mrf.mxu0
      %v1744 = vadd.f32 %v1695, %v1743
      %v1745 = vpop.f32.mrf.mxu0
      %v1746 = vadd.f32 %v1697, %v1745
      %1747 = vdwg.mxu0
      %1748 = vmatpush.bf16.msra.mxu0 %v1130
      %1749 = vmatpush.bf16.msra.mxu0 %v1126
      %1750 = vmatpush.bf16.msra.mxu0 %v1122
      %1751 = vmatpush.bf16.msra.mxu0 %v1118
      %1752 = vmatpush.bf16.msra.mxu0 %v1114
      %1753 = vmatpush.bf16.msra.mxu0 %v1110
      %1754 = vmatpush.bf16.msra.mxu0 %v1106
      %1755 = vmatpush.bf16.msra.mxu0 %v1102
      %1756 = vmatmul.bf16.gmra.mxu0 %v652
      %v1757 = vpop.f32.mrf.mxu0
      %v1758 = vadd.f32 0.0, %v1757
      %v1759 = vpop.f32.mrf.mxu0
      %v1760 = vadd.f32 0.0, %v1759
      %1761 = vmatmul.bf16.gmra.mxu0 %v656
      %v1762 = vpop.f32.mrf.mxu0
      %v1763 = vadd.f32 0.0, %v1762
      %v1764 = vpop.f32.mrf.mxu0
      %v1765 = vadd.f32 0.0, %v1764
      %1766 = vmatmul.bf16.gmra.mxu0 %v660
      %v1767 = vpop.f32.mrf.mxu0
      %v1768 = vadd.f32 0.0, %v1767
      %v1769 = vpop.f32.mrf.mxu0
      %v1770 = vadd.f32 0.0, %v1769
      %1771 = vmatmul.bf16.gmra.mxu0 %v664
      %v1772 = vpop.f32.mrf.mxu0
      %v1773 = vadd.f32 0.0, %v1772
      %v1774 = vpop.f32.mrf.mxu0
      %v1775 = vadd.f32 0.0, %v1774
      %1776 = vmatmul.bf16.gmra.mxu0 %v668
      %v1777 = vpop.f32.mrf.mxu0
      %v1778 = vadd.f32 0.0, %v1777
      %v1779 = vpop.f32.mrf.mxu0
      %v1780 = vadd.f32 0.0, %v1779
      %1781 = vmatmul.bf16.gmra.mxu0 %v672
      %v1782 = vpop.f32.mrf.mxu0
      %v1783 = vadd.f32 0.0, %v1782
      %v1784 = vpop.f32.mrf.mxu0
      %v1785 = vadd.f32 0.0, %v1784
      %1786 = vmatmul.bf16.gmra.mxu0 %v676
      %v1787 = vpop.f32.mrf.mxu0
      %v1788 = vadd.f32 0.0, %v1787
      %v1789 = vpop.f32.mrf.mxu0
      %v1790 = vadd.f32 0.0, %v1789
      %1791 = vmatmul.bf16.gmra.mxu0 %v680
      %v1792 = vpop.f32.mrf.mxu0
      %v1793 = vadd.f32 0.0, %v1792
      %v1794 = vpop.f32.mrf.mxu0
      %v1795 = vadd.f32 0.0, %v1794
      %1796 = vdwg.mxu0
      %1797 = vmatpush.bf16.msra.mxu0 %v1162
      %1798 = vmatpush.bf16.msra.mxu0 %v1158
      %1799 = vmatpush.bf16.msra.mxu0 %v1154
      %1800 = vmatpush.bf16.msra.mxu0 %v1150
      %1801 = vmatpush.bf16.msra.mxu0 %v1146
      %1802 = vmatpush.bf16.msra.mxu0 %v1142
      %1803 = vmatpush.bf16.msra.mxu0 %v1138
      %1804 = vmatpush.bf16.msra.mxu0 %v1134
      %1805 = vmatmul.bf16.gmra.mxu0 %v653
      %v1806 = vpop.f32.mrf.mxu0
      %v1807 = vadd.f32 %v1758, %v1806
      %v1808 = vpop.f32.mrf.mxu0
      %v1809 = vadd.f32 %v1760, %v1808
      %1810 = vmatmul.bf16.gmra.mxu0 %v657
      %v1811 = vpop.f32.mrf.mxu0
      %v1812 = vadd.f32 %v1763, %v1811
      %v1813 = vpop.f32.mrf.mxu0
      %v1814 = vadd.f32 %v1765, %v1813
      %1815 = vmatmul.bf16.gmra.mxu0 %v661
      %v1816 = vpop.f32.mrf.mxu0
      %v1817 = vadd.f32 %v1768, %v1816
      %v1818 = vpop.f32.mrf.mxu0
      %v1819 = vadd.f32 %v1770, %v1818
      %1820 = vmatmul.bf16.gmra.mxu0 %v665
      %v1821 = vpop.f32.mrf.mxu0
      %v1822 = vadd.f32 %v1773, %v1821
      %v1823 = vpop.f32.mrf.mxu0
      %v1824 = vadd.f32 %v1775, %v1823
      %1825 = vmatmul.bf16.gmra.mxu0 %v669
      %v1826 = vpop.f32.mrf.mxu0
      %v1827 = vadd.f32 %v1778, %v1826
      %v1828 = vpop.f32.mrf.mxu0
      %v1829 = vadd.f32 %v1780, %v1828
      %1830 = vmatmul.bf16.gmra.mxu0 %v673
      %v1831 = vpop.f32.mrf.mxu0
      %v1832 = vadd.f32 %v1783, %v1831
      %v1833 = vpop.f32.mrf.mxu0
      %v1834 = vadd.f32 %v1785, %v1833
      %1835 = vmatmul.bf16.gmra.mxu0 %v677
      %v1836 = vpop.f32.mrf.mxu0
      %v1837 = vadd.f32 %v1788, %v1836
      %v1838 = vpop.f32.mrf.mxu0
      %v1839 = vadd.f32 %v1790, %v1838
      %1840 = vmatmul.bf16.gmra.mxu0 %v681
      %v1841 = vpop.f32.mrf.mxu0
      %v1842 = vadd.f32 %v1793, %v1841
      %v1843 = vpop.f32.mrf.mxu0
      %v1844 = vadd.f32 %v1795, %v1843
      %1845 = vdwg.mxu0
      %1846 = vmatpush.bf16.msra.mxu0 %v1194
      %1847 = vmatpush.bf16.msra.mxu0 %v1190
      %1848 = vmatpush.bf16.msra.mxu0 %v1186
      %1849 = vmatpush.bf16.msra.mxu0 %v1182
      %1850 = vmatpush.bf16.msra.mxu0 %v1178
      %1851 = vmatpush.bf16.msra.mxu0 %v1174
      %1852 = vmatpush.bf16.msra.mxu0 %v1170
      %1853 = vmatpush.bf16.msra.mxu0 %v1166
      %1854 = vmatmul.bf16.gmra.mxu0 %v654
      %v1855 = vpop.f32.mrf.mxu0
      %v1856 = vadd.f32 %v1807, %v1855
      %v1857 = vpop.f32.mrf.mxu0
      %v1858 = vadd.f32 %v1809, %v1857
      %1859 = vmatmul.bf16.gmra.mxu0 %v658
      %v1860 = vpop.f32.mrf.mxu0
      %v1861 = vadd.f32 %v1812, %v1860
      %v1862 = vpop.f32.mrf.mxu0
      %v1863 = vadd.f32 %v1814, %v1862
      %1864 = vmatmul.bf16.gmra.mxu0 %v662
      %v1865 = vpop.f32.mrf.mxu0
      %v1866 = vadd.f32 %v1817, %v1865
      %v1867 = vpop.f32.mrf.mxu0
      %v1868 = vadd.f32 %v1819, %v1867
      %1869 = vmatmul.bf16.gmra.mxu0 %v666
      %v1870 = vpop.f32.mrf.mxu0
      %v1871 = vadd.f32 %v1822, %v1870
      %v1872 = vpop.f32.mrf.mxu0
      %v1873 = vadd.f32 %v1824, %v1872
      %1874 = vmatmul.bf16.gmra.mxu0 %v670
      %v1875 = vpop.f32.mrf.mxu0
      %v1876 = vadd.f32 %v1827, %v1875
      %v1877 = vpop.f32.mrf.mxu0
      %v1878 = vadd.f32 %v1829, %v1877
      %1879 = vmatmul.bf16.gmra.mxu0 %v674
      %v1880 = vpop.f32.mrf.mxu0
      %v1881 = vadd.f32 %v1832, %v1880
      %v1882 = vpop.f32.mrf.mxu0
      %v1883 = vadd.f32 %v1834, %v1882
      %1884 = vmatmul.bf16.gmra.mxu0 %v678
      %v1885 = vpop.f32.mrf.mxu0
      %v1886 = vadd.f32 %v1837, %v1885
      %v1887 = vpop.f32.mrf.mxu0
      %v1888 = vadd.f32 %v1839, %v1887
      %1889 = vmatmul.bf16.gmra.mxu0 %v682
      %v1890 = vpop.f32.mrf.mxu0
      %v1891 = vadd.f32 %v1842, %v1890
      %v1892 = vpop.f32.mrf.mxu0
      %v1893 = vadd.f32 %v1844, %v1892
      %1894 = vdwg.mxu0
      %1895 = vmatpush.bf16.msra.mxu0 %v1226
      %1896 = vmatpush.bf16.msra.mxu0 %v1222
      %1897 = vmatpush.bf16.msra.mxu0 %v1218
      %1898 = vmatpush.bf16.msra.mxu0 %v1214
      %1899 = vmatpush.bf16.msra.mxu0 %v1210
      %1900 = vmatpush.bf16.msra.mxu0 %v1206
      %1901 = vmatpush.bf16.msra.mxu0 %v1202
      %1902 = vmatpush.bf16.msra.mxu0 %v1198
      %1903 = vmatmul.bf16.gmra.mxu0 %v655
      %v1904 = vpop.f32.mrf.mxu0
      %v1905 = vadd.f32 %v1856, %v1904
      %v1906 = vpop.f32.mrf.mxu0
      %v1907 = vadd.f32 %v1858, %v1906
      %1908 = vmatmul.bf16.gmra.mxu0 %v659
      %v1909 = vpop.f32.mrf.mxu0
      %v1910 = vadd.f32 %v1861, %v1909
      %v1911 = vpop.f32.mrf.mxu0
      %v1912 = vadd.f32 %v1863, %v1911
      %1913 = vmatmul.bf16.gmra.mxu0 %v663
      %v1914 = vpop.f32.mrf.mxu0
      %v1915 = vadd.f32 %v1866, %v1914
      %v1916 = vpop.f32.mrf.mxu0
      %v1917 = vadd.f32 %v1868, %v1916
      %1918 = vmatmul.bf16.gmra.mxu0 %v667
      %v1919 = vpop.f32.mrf.mxu0
      %v1920 = vadd.f32 %v1871, %v1919
      %v1921 = vpop.f32.mrf.mxu0
      %v1922 = vadd.f32 %v1873, %v1921
      %1923 = vmatmul.bf16.gmra.mxu0 %v671
      %v1924 = vpop.f32.mrf.mxu0
      %v1925 = vadd.f32 %v1876, %v1924
      %v1926 = vpop.f32.mrf.mxu0
      %v1927 = vadd.f32 %v1878, %v1926
      %1928 = vmatmul.bf16.gmra.mxu0 %v675
      %v1929 = vpop.f32.mrf.mxu0
      %v1930 = vadd.f32 %v1881, %v1929
      %v1931 = vpop.f32.mrf.mxu0
      %v1932 = vadd.f32 %v1883, %v1931
      %1933 = vmatmul.bf16.gmra.mxu0 %v679
      %v1934 = vpop.f32.mrf.mxu0
      %v1935 = vadd.f32 %v1886, %v1934
      %v1936 = vpop.f32.mrf.mxu0
      %v1937 = vadd.f32 %v1888, %v1936
      %1938 = vmatmul.bf16.gmra.mxu0 %v683
      %v1939 = vpop.f32.mrf.mxu0
      %v1940 = vadd.f32 %v1891, %v1939
      %v1941 = vpop.f32.mrf.mxu0
      %v1942 = vadd.f32 %v1893, %v1941
      %1943 = vdwg.mxu0
      %1944 = vmatpush.bf16.msra.mxu0 %v1131
      %1945 = vmatpush.bf16.msra.mxu0 %v1127
      %1946 = vmatpush.bf16.msra.mxu0 %v1123
      %1947 = vmatpush.bf16.msra.mxu0 %v1119
      %1948 = vmatpush.bf16.msra.mxu0 %v1115
      %1949 = vmatpush.bf16.msra.mxu0 %v1111
      %1950 = vmatpush.bf16.msra.mxu0 %v1107
      %1951 = vmatpush.bf16.msra.mxu0 %v1103
      %1952 = vmatmul.bf16.gmra.mxu0 %v652
      %v1953 = vpop.f32.mrf.mxu0
      %v1954 = vadd.f32 0.0, %v1953
      %v1955 = vpop.f32.mrf.mxu0
      %v1956 = vadd.f32 0.0, %v1955
      %1957 = vmatmul.bf16.gmra.mxu0 %v656
      %v1958 = vpop.f32.mrf.mxu0
      %v1959 = vadd.f32 0.0, %v1958
      %v1960 = vpop.f32.mrf.mxu0
      %v1961 = vadd.f32 0.0, %v1960
      %1962 = vmatmul.bf16.gmra.mxu0 %v660
      %v1963 = vpop.f32.mrf.mxu0
      %v1964 = vadd.f32 0.0, %v1963
      %v1965 = vpop.f32.mrf.mxu0
      %v1966 = vadd.f32 0.0, %v1965
      %1967 = vmatmul.bf16.gmra.mxu0 %v664
      %v1968 = vpop.f32.mrf.mxu0
      %v1969 = vadd.f32 0.0, %v1968
      %v1970 = vpop.f32.mrf.mxu0
      %v1971 = vadd.f32 0.0, %v1970
      %1972 = vmatmul.bf16.gmra.mxu0 %v668
      %v1973 = vpop.f32.mrf.mxu0
      %v1974 = vadd.f32 0.0, %v1973
      %v1975 = vpop.f32.mrf.mxu0
      %v1976 = vadd.f32 0.0, %v1975
      %1977 = vmatmul.bf16.gmra.mxu0 %v672
      %v1978 = vpop.f32.mrf.mxu0
      %v1979 = vadd.f32 0.0, %v1978
      %v1980 = vpop.f32.mrf.mxu0
      %v1981 = vadd.f32 0.0, %v1980
      %1982 = vmatmul.bf16.gmra.mxu0 %v676
      %v1983 = vpop.f32.mrf.mxu0
      %v1984 = vadd.f32 0.0, %v1983
      %v1985 = vpop.f32.mrf.mxu0
      %v1986 = vadd.f32 0.0, %v1985
      %1987 = vmatmul.bf16.gmra.mxu0 %v680
      %v1988 = vpop.f32.mrf.mxu0
      %v1989 = vadd.f32 0.0, %v1988
      %v1990 = vpop.f32.mrf.mxu0
      %v1991 = vadd.f32 0.0, %v1990
      %1992 = vdwg.mxu0
      %1993 = vmatpush.bf16.msra.mxu0 %v1163
      %1994 = vmatpush.bf16.msra.mxu0 %v1159
      %1995 = vmatpush.bf16.msra.mxu0 %v1155
      %1996 = vmatpush.bf16.msra.mxu0 %v1151
      %1997 = vmatpush.bf16.msra.mxu0 %v1147
      %1998 = vmatpush.bf16.msra.mxu0 %v1143
      %1999 = vmatpush.bf16.msra.mxu0 %v1139
      %2000 = vmatpush.bf16.msra.mxu0 %v1135
      %2001 = vmatmul.bf16.gmra.mxu0 %v653
      %v2002 = vpop.f32.mrf.mxu0
      %v2003 = vadd.f32 %v1954, %v2002
      %v2004 = vpop.f32.mrf.mxu0
      %v2005 = vadd.f32 %v1956, %v2004
      %2006 = vmatmul.bf16.gmra.mxu0 %v657
      %v2007 = vpop.f32.mrf.mxu0
      %v2008 = vadd.f32 %v1959, %v2007
      %v2009 = vpop.f32.mrf.mxu0
      %v2010 = vadd.f32 %v1961, %v2009
      %2011 = vmatmul.bf16.gmra.mxu0 %v661
      %v2012 = vpop.f32.mrf.mxu0
      %v2013 = vadd.f32 %v1964, %v2012
      %v2014 = vpop.f32.mrf.mxu0
      %v2015 = vadd.f32 %v1966, %v2014
      %2016 = vmatmul.bf16.gmra.mxu0 %v665
      %v2017 = vpop.f32.mrf.mxu0
      %v2018 = vadd.f32 %v1969, %v2017
      %v2019 = vpop.f32.mrf.mxu0
      %v2020 = vadd.f32 %v1971, %v2019
      %2021 = vmatmul.bf16.gmra.mxu0 %v669
      %v2022 = vpop.f32.mrf.mxu0
      %v2023 = vadd.f32 %v1974, %v2022
      %v2024 = vpop.f32.mrf.mxu0
      %v2025 = vadd.f32 %v1976, %v2024
      %2026 = vmatmul.bf16.gmra.mxu0 %v673
      %v2027 = vpop.f32.mrf.mxu0
      %v2028 = vadd.f32 %v1979, %v2027
      %v2029 = vpop.f32.mrf.mxu0
      %v2030 = vadd.f32 %v1981, %v2029
      %2031 = vmatmul.bf16.gmra.mxu0 %v677
      %v2032 = vpop.f32.mrf.mxu0
      %v2033 = vadd.f32 %v1984, %v2032
      %v2034 = vpop.f32.mrf.mxu0
      %v2035 = vadd.f32 %v1986, %v2034
      %2036 = vmatmul.bf16.gmra.mxu0 %v681
      %v2037 = vpop.f32.mrf.mxu0
      %v2038 = vadd.f32 %v1989, %v2037
      %v2039 = vpop.f32.mrf.mxu0
      %v2040 = vadd.f32 %v1991, %v2039
      %2041 = vdwg.mxu0
      %2042 = vmatpush.bf16.msra.mxu0 %v1195
      %2043 = vmatpush.bf16.msra.mxu0 %v1191
      %2044 = vmatpush.bf16.msra.mxu0 %v1187
      %2045 = vmatpush.bf16.msra.mxu0 %v1183
      %2046 = vmatpush.bf16.msra.mxu0 %v1179
      %2047 = vmatpush.bf16.msra.mxu0 %v1175
      %2048 = vmatpush.bf16.msra.mxu0 %v1171
      %2049 = vmatpush.bf16.msra.mxu0 %v1167
      %2050 = vmatmul.bf16.gmra.mxu0 %v654
      %v2051 = vpop.f32.mrf.mxu0
      %v2052 = vadd.f32 %v2003, %v2051
      %v2053 = vpop.f32.mrf.mxu0
      %v2054 = vadd.f32 %v2005, %v2053
      %2055 = vmatmul.bf16.gmra.mxu0 %v658
      %v2056 = vpop.f32.mrf.mxu0
      %v2057 = vadd.f32 %v2008, %v2056
      %v2058 = vpop.f32.mrf.mxu0
      %v2059 = vadd.f32 %v2010, %v2058
      %2060 = vmatmul.bf16.gmra.mxu0 %v662
      %v2061 = vpop.f32.mrf.mxu0
      %v2062 = vadd.f32 %v2013, %v2061
      %v2063 = vpop.f32.mrf.mxu0
      %v2064 = vadd.f32 %v2015, %v2063
      %2065 = vmatmul.bf16.gmra.mxu0 %v666
      %v2066 = vpop.f32.mrf.mxu0
      %v2067 = vadd.f32 %v2018, %v2066
      %v2068 = vpop.f32.mrf.mxu0
      %v2069 = vadd.f32 %v2020, %v2068
      %2070 = vmatmul.bf16.gmra.mxu0 %v670
      %v2071 = vpop.f32.mrf.mxu0
      %v2072 = vadd.f32 %v2023, %v2071
      %v2073 = vpop.f32.mrf.mxu0
      %v2074 = vadd.f32 %v2025, %v2073
      %2075 = vmatmul.bf16.gmra.mxu0 %v674
      %v2076 = vpop.f32.mrf.mxu0
      %v2077 = vadd.f32 %v2028, %v2076
      %v2078 = vpop.f32.mrf.mxu0
      %v2079 = vadd.f32 %v2030, %v2078
      %2080 = vmatmul.bf16.gmra.mxu0 %v678
      %v2081 = vpop.f32.mrf.mxu0
      %v2082 = vadd.f32 %v2033, %v2081
      %v2083 = vpop.f32.mrf.mxu0
      %v2084 = vadd.f32 %v2035, %v2083
      %2085 = vmatmul.bf16.gmra.mxu0 %v682
      %v2086 = vpop.f32.mrf.mxu0
      %v2087 = vadd.f32 %v2038, %v2086
      %v2088 = vpop.f32.mrf.mxu0
      %v2089 = vadd.f32 %v2040, %v2088
      %2090 = vdwg.mxu0
      %2091 = vmatpush.bf16.msra.mxu0 %v1227
      %2092 = vmatpush.bf16.msra.mxu0 %v1223
      %2093 = vmatpush.bf16.msra.mxu0 %v1219
      %2094 = vmatpush.bf16.msra.mxu0 %v1215
      %2095 = vmatpush.bf16.msra.mxu0 %v1211
      %2096 = vmatpush.bf16.msra.mxu0 %v1207
      %2097 = vmatpush.bf16.msra.mxu0 %v1203
      %2098 = vmatpush.bf16.msra.mxu0 %v1199
      %2099 = vmatmul.bf16.gmra.mxu0 %v655
      %v2100 = vpop.f32.mrf.mxu0
      %v2101 = vadd.f32 %v2052, %v2100
      %v2102 = vpop.f32.mrf.mxu0
      %v2103 = vadd.f32 %v2054, %v2102
      %2104 = vmatmul.bf16.gmra.mxu0 %v659
      %v2105 = vpop.f32.mrf.mxu0
      %v2106 = vadd.f32 %v2057, %v2105
      %v2107 = vpop.f32.mrf.mxu0
      %v2108 = vadd.f32 %v2059, %v2107
      %2109 = vmatmul.bf16.gmra.mxu0 %v663
      %v2110 = vpop.f32.mrf.mxu0
      %v2111 = vadd.f32 %v2062, %v2110
      %v2112 = vpop.f32.mrf.mxu0
      %v2113 = vadd.f32 %v2064, %v2112
      %2114 = vmatmul.bf16.gmra.mxu0 %v667
      %v2115 = vpop.f32.mrf.mxu0
      %v2116 = vadd.f32 %v2067, %v2115
      %v2117 = vpop.f32.mrf.mxu0
      %v2118 = vadd.f32 %v2069, %v2117
      %2119 = vmatmul.bf16.gmra.mxu0 %v671
      %v2120 = vpop.f32.mrf.mxu0
      %v2121 = vadd.f32 %v2072, %v2120
      %v2122 = vpop.f32.mrf.mxu0
      %v2123 = vadd.f32 %v2074, %v2122
      %2124 = vmatmul.bf16.gmra.mxu0 %v675
      %v2125 = vpop.f32.mrf.mxu0
      %v2126 = vadd.f32 %v2077, %v2125
      %v2127 = vpop.f32.mrf.mxu0
      %v2128 = vadd.f32 %v2079, %v2127
      %2129 = vmatmul.bf16.gmra.mxu0 %v679
      %v2130 = vpop.f32.mrf.mxu0
      %v2131 = vadd.f32 %v2082, %v2130
      %v2132 = vpop.f32.mrf.mxu0
      %v2133 = vadd.f32 %v2084, %v2132
      %2134 = vmatmul.bf16.gmra.mxu0 %v683
      %v2135 = vpop.f32.mrf.mxu0
      %v2136 = vadd.f32 %v2087, %v2135
      %v2137 = vpop.f32.mrf.mxu0
      %v2138 = vadd.f32 %v2089, %v2137
      %2139 = vdwg.mxu0
      %v2140 = vadd.f32 %v492, %v1513
      %v2141 = vadd.f32 %v493, %v1709
      %v2142 = vadd.f32 %v494, %v1905
      %v2143 = vadd.f32 %v495, %v2101
      %v2144 = vadd.f32 %v496, %v1515
      %v2145 = vadd.f32 %v497, %v1711
      %v2146 = vadd.f32 %v498, %v1907
      %v2147 = vadd.f32 %v499, %v2103
      %v2148 = vadd.f32 %v500, %v1518
      %v2149 = vadd.f32 %v501, %v1714
      %v2150 = vadd.f32 %v502, %v1910
      %v2151 = vadd.f32 %v503, %v2106
      %v2152 = vadd.f32 %v504, %v1520
      %v2153 = vadd.f32 %v505, %v1716
      %v2154 = vadd.f32 %v506, %v1912
      %v2155 = vadd.f32 %v507, %v2108
      %v2156 = vadd.f32 %v508, %v1523
      %v2157 = vadd.f32 %v509, %v1719
      %v2158 = vadd.f32 %v510, %v1915
      %v2159 = vadd.f32 %v511, %v2111
      %v2160 = vadd.f32 %v512, %v1525
      %v2161 = vadd.f32 %v513, %v1721
      %v2162 = vadd.f32 %v514, %v1917
      %v2163 = vadd.f32 %v515, %v2113
      %v2164 = vadd.f32 %v516, %v1528
      %v2165 = vadd.f32 %v517, %v1724
      %v2166 = vadd.f32 %v518, %v1920
      %v2167 = vadd.f32 %v519, %v2116
      %v2168 = vadd.f32 %v520, %v1530
      %v2169 = vadd.f32 %v521, %v1726
      %v2170 = vadd.f32 %v522, %v1922
      %v2171 = vadd.f32 %v523, %v2118
      %v2172 = vadd.f32 %v524, %v1533
      %v2173 = vadd.f32 %v525, %v1729
      %v2174 = vadd.f32 %v526, %v1925
      %v2175 = vadd.f32 %v527, %v2121
      %v2176 = vadd.f32 %v528, %v1535
      %v2177 = vadd.f32 %v529, %v1731
      %v2178 = vadd.f32 %v530, %v1927
      %v2179 = vadd.f32 %v531, %v2123
      %v2180 = vadd.f32 %v532, %v1538
      %v2181 = vadd.f32 %v533, %v1734
      %v2182 = vadd.f32 %v534, %v1930
      %v2183 = vadd.f32 %v535, %v2126
      %v2184 = vadd.f32 %v536, %v1540
      %v2185 = vadd.f32 %v537, %v1736
      %v2186 = vadd.f32 %v538, %v1932
      %v2187 = vadd.f32 %v539, %v2128
      %v2188 = vadd.f32 %v540, %v1543
      %v2189 = vadd.f32 %v541, %v1739
      %v2190 = vadd.f32 %v542, %v1935
      %v2191 = vadd.f32 %v543, %v2131
      %v2192 = vadd.f32 %v544, %v1545
      %v2193 = vadd.f32 %v545, %v1741
      %v2194 = vadd.f32 %v546, %v1937
      %v2195 = vadd.f32 %v547, %v2133
      %v2196 = vadd.f32 %v548, %v1548
      %v2197 = vadd.f32 %v549, %v1744
      %v2198 = vadd.f32 %v550, %v1940
      %v2199 = vadd.f32 %v551, %v2136
      %v2200 = vadd.f32 %v552, %v1550
      %v2201 = vadd.f32 %v553, %v1746
      %v2202 = vadd.f32 %v554, %v1942
      %v2203 = vadd.f32 %v555, %v2138
      %2204 = vst [vmem:[#allocation2] sm:$0xff] %v2140
      %2205 = vst [vmem:[#allocation2 + $0x8] sm:$0xff] %v2141
      %2206 = vst [vmem:[#allocation2 + $0x10] sm:$0xff] %v2142
      %2207 = vst [vmem:[#allocation2 + $0x18] sm:$0xff] %v2143
      %2208 = vst [vmem:[#allocation2 + $0x20] sm:$0xff] %v2144
      %2209 = vst [vmem:[#allocation2 + $0x28] sm:$0xff] %v2145
      %2210 = vst [vmem:[#allocation2 + $0x30] sm:$0xff] %v2146
      %2211 = vst [vmem:[#allocation2 + $0x38] sm:$0xff] %v2147
      %2212 = vst [vmem:[#allocation2 + $0x40] sm:$0xff] %v2148
      %2213 = vst [vmem:[#allocation2 + $0x48] sm:$0xff] %v2149
      %2214 = vst [vmem:[#allocation2 + $0x50] sm:$0xff] %v2150
      %2215 = vst [vmem:[#allocation2 + $0x58] sm:$0xff] %v2151
      %2216 = vst [vmem:[#allocation2 + $0x60] sm:$0xff] %v2152
      %2217 = vst [vmem:[#allocation2 + $0x68] sm:$0xff] %v2153
      %2218 = vst [vmem:[#allocation2 + $0x70] sm:$0xff] %v2154
      %2219 = vst [vmem:[#allocation2 + $0x78] sm:$0xff] %v2155
      %2220 = vst [vmem:[#allocation2 + $0x80] sm:$0xff] %v2156
      %2221 = vst [vmem:[#allocation2 + $0x88] sm:$0xff] %v2157
      %2222 = vst [vmem:[#allocation2 + $0x90] sm:$0xff] %v2158
      %2223 = vst [vmem:[#allocation2 + $0x98] sm:$0xff] %v2159
      %2224 = vst [vmem:[#allocation2 + $0xa0] sm:$0xff] %v2160
      %2225 = vst [vmem:[#allocation2 + $0xa8] sm:$0xff] %v2161
      %2226 = vst [vmem:[#allocation2 + $0xb0] sm:$0xff] %v2162
      %2227 = vst [vmem:[#allocation2 + $0xb8] sm:$0xff] %v2163
      %2228 = vst [vmem:[#allocation2 + $0xc0] sm:$0xff] %v2164
      %2229 = vst [vmem:[#allocation2 + $0xc8] sm:$0xff] %v2165
      %2230 = vst [vmem:[#allocation2 + $0xd0] sm:$0xff] %v2166
      %2231 = vst [vmem:[#allocation2 + $0xd8] sm:$0xff] %v2167
      %2232 = vst [vmem:[#allocation2 + $0xe0] sm:$0xff] %v2168
      %2233 = vst [vmem:[#allocation2 + $0xe8] sm:$0xff] %v2169
      %2234 = vst [vmem:[#allocation2 + $0xf0] sm:$0xff] %v2170
      %2235 = vst [vmem:[#allocation2 + $0xf8] sm:$0xff] %v2171
      %2236 = vst [vmem:[#allocation2 + $0x100] sm:$0xff] %v2172
      %2237 = vst [vmem:[#allocation2 + $0x108] sm:$0xff] %v2173
      %2238 = vst [vmem:[#allocation2 + $0x110] sm:$0xff] %v2174
      %2239 = vst [vmem:[#allocation2 + $0x118] sm:$0xff] %v2175
      %2240 = vst [vmem:[#allocation2 + $0x120] sm:$0xff] %v2176
      %2241 = vst [vmem:[#allocation2 + $0x128] sm:$0xff] %v2177
      %2242 = vst [vmem:[#allocation2 + $0x130] sm:$0xff] %v2178
      %2243 = vst [vmem:[#allocation2 + $0x138] sm:$0xff] %v2179
      %2244 = vst [vmem:[#allocation2 + $0x140] sm:$0xff] %v2180
      %2245 = vst [vmem:[#allocation2 + $0x148] sm:$0xff] %v2181
      %2246 = vst [vmem:[#allocation2 + $0x150] sm:$0xff] %v2182
      %2247 = vst [vmem:[#allocation2 + $0x158] sm:$0xff] %v2183
      %2248 = vst [vmem:[#allocation2 + $0x160] sm:$0xff] %v2184
      %2249 = vst [vmem:[#allocation2 + $0x168] sm:$0xff] %v2185
      %2250 = vst [vmem:[#allocation2 + $0x170] sm:$0xff] %v2186
      %2251 = vst [vmem:[#allocation2 + $0x178] sm:$0xff] %v2187
      %2252 = vst [vmem:[#allocation2 + $0x180] sm:$0xff] %v2188
      %2253 = vst [vmem:[#allocation2 + $0x188] sm:$0xff] %v2189
      %2254 = vst [vmem:[#allocation2 + $0x190] sm:$0xff] %v2190
      %2255 = vst [vmem:[#allocation2 + $0x198] sm:$0xff] %v2191
      %2256 = vst [vmem:[#allocation2 + $0x1a0] sm:$0xff] %v2192
      %2257 = vst [vmem:[#allocation2 + $0x1a8] sm:$0xff] %v2193
      %2258 = vst [vmem:[#allocation2 + $0x1b0] sm:$0xff] %v2194
      %2259 = vst [vmem:[#allocation2 + $0x1b8] sm:$0xff] %v2195
      %2260 = vst [vmem:[#allocation2 + $0x1c0] sm:$0xff] %v2196
      %2261 = vst [vmem:[#allocation2 + $0x1c8] sm:$0xff] %v2197
      %2262 = vst [vmem:[#allocation2 + $0x1d0] sm:$0xff] %v2198
      %2263 = vst [vmem:[#allocation2 + $0x1d8] sm:$0xff] %v2199
      %2264 = vst [vmem:[#allocation2 + $0x1e0] sm:$0xff] %v2200
      %2265 = vst [vmem:[#allocation2 + $0x1e8] sm:$0xff] %v2201
      %2266 = vst [vmem:[#allocation2 + $0x1f0] sm:$0xff] %v2202
      %2267 = vst [vmem:[#allocation2 + $0x1f8] sm:$0xff] %v2203
      %v2268 = vld [vmem:[%s242] sm:$0xff]
      %v2269 = vld [vmem:[%s242 + $0x8] sm:$0xff]
      %v2270 = vld [vmem:[%s242 + $0x10] sm:$0xff]
      %v2271 = vld [vmem:[%s242 + $0x18] sm:$0xff]
      %v2272 = vld [vmem:[%s242 + $0x20] sm:$0x11]
      %v2273 = vld [vmem:[%s242 + $0x28] sm:$0x11]
      %v2274 = vld [vmem:[%s242 + $0x30] sm:$0xff]
      %v2275 = vld [vmem:[%s242 + $0x38] sm:$0xff]
      %v2276 = vld [vmem:[%s242 + $0x40] sm:$0xff]
      %v2277 = vld [vmem:[%s242 + $0x48] sm:$0xff]
      %v2278 = vld [vmem:[%s242 + $0x50] sm:$0x11]
      %v2279 = vld [vmem:[%s242 + $0x58] sm:$0x11]
      %v2280 = vld [vmem:[%s242 + $0x60] sm:$0xff]
      %v2281 = vld [vmem:[%s242 + $0x68] sm:$0xff]
      %v2282 = vld [vmem:[%s242 + $0x70] sm:$0xff]
      %v2283 = vld [vmem:[%s242 + $0x78] sm:$0xff]
      %v2284 = vld [vmem:[%s242 + $0x80] sm:$0x11]
      %v2285 = vld [vmem:[%s242 + $0x88] sm:$0x11]
      %v2286 = vld [vmem:[%s242 + $0x90] sm:$0xff]
      %v2287 = vld [vmem:[%s242 + $0x98] sm:$0xff]
      %v2288 = vld [vmem:[%s242 + $0xa0] sm:$0xff]
      %v2289 = vld [vmem:[%s242 + $0xa8] sm:$0xff]
      %v2290 = vld [vmem:[%s242 + $0xb0] sm:$0x11]
      %v2291 = vld [vmem:[%s242 + $0xb8] sm:$0x11]
      %v2292 = vld [vmem:[%s242 + $0xc0] sm:$0xff]
      %v2293 = vld [vmem:[%s242 + $0xc8] sm:$0xff]
      %v2294 = vld [vmem:[%s242 + $0xd0] sm:$0xff]
      %v2295 = vld [vmem:[%s242 + $0xd8] sm:$0xff]
      %v2296 = vld [vmem:[%s242 + $0xe0] sm:$0x11]
      %v2297 = vld [vmem:[%s242 + $0xe8] sm:$0x11]
      %v2298 = vld [vmem:[%s242 + $0xf0] sm:$0xff]
      %v2299 = vld [vmem:[%s242 + $0xf8] sm:$0xff]
      %v2300 = vld [vmem:[%s242 + $0x100] sm:$0xff]
      %v2301 = vld [vmem:[%s242 + $0x108] sm:$0xff]
      %v2302 = vld [vmem:[%s242 + $0x110] sm:$0x11]
      %v2303 = vld [vmem:[%s242 + $0x118] sm:$0x11]
      %v2304 = vld [vmem:[%s242 + $0x120] sm:$0xff]
      %v2305 = vld [vmem:[%s242 + $0x128] sm:$0xff]
      %v2306 = vld [vmem:[%s242 + $0x130] sm:$0xff]
      %v2307 = vld [vmem:[%s242 + $0x138] sm:$0xff]
      %v2308 = vld [vmem:[%s242 + $0x140] sm:$0x11]
      %v2309 = vld [vmem:[%s242 + $0x148] sm:$0x11]
      %v2310 = vld [vmem:[%s242 + $0x150] sm:$0xff]
      %v2311 = vld [vmem:[%s242 + $0x158] sm:$0xff]
      %v2312 = vld [vmem:[%s242 + $0x160] sm:$0xff]
      %v2313 = vld [vmem:[%s242 + $0x168] sm:$0xff]
      %v2314 = vld [vmem:[%s242 + $0x170] sm:$0x11]
      %v2315 = vld [vmem:[%s242 + $0x178] sm:$0x11]
      %vm2316 = vsmask.f32 3328
      %vm2317 = vsmask.f32 7440
      %vm2318 = vmor %vm2316, %vm2317
      %v2320 = vshrl.u32 %v2268, 16
      %v2322 = vrot.slane %v2320, 4
      %v2323 = vshll.u32 %v2268, 16
      %v2325 = vrot.slane %v2323, 5
      %v2326 = vor.u32 %v2322, %v2325
      %v2327 = vrot.slane %v2326, 4
      %v2329 = vshll.u32 %v2270, 16
      %v2331 = vrot.slane %v2329, 5
      %v2332 = vsel %vm2318, %v2327, %v2331
      %v2334 = vshrl.u32 %v2269, 16
      %v2336 = vrot.slane %v2334, 4
      %v2337 = vshll.u32 %v2269, 16
      %v2339 = vrot.slane %v2337, 5
      %v2340 = vor.u32 %v2336, %v2339
      %v2341 = vrot.slane %v2340, 4
      %v2343 = vshll.u32 %v2271, 16
      %v2345 = vrot.slane %v2343, 5
      %v2346 = vsel %vm2318, %v2341, %v2345
      %v2347 = vshrl.u32 %v2270, 16
      %v2349 = vrot.slane %v2347, 4
      %v2350 = vor.u32 %v2349, %v2331
      %v2351 = vrot.slane %v2350, 4
      %v2353 = vshll.u32 %v2272, 16
      %v2355 = vrot.slane %v2353, 5
      %v2356 = vsel %vm2318, %v2351, %v2355
      %v2357 = vshrl.u32 %v2271, 16
      %v2359 = vrot.slane %v2357, 4
      %v2360 = vor.u32 %v2359, %v2345
      %v2361 = vrot.slane %v2360, 4
      %v2363 = vshll.u32 %v2273, 16
      %v2365 = vrot.slane %v2363, 5
      %v2366 = vsel %vm2318, %v2361, %v2365
      %v2368 = vshrl.u32 %v2274, 16
      %v2370 = vrot.slane %v2368, 4
      %v2371 = vshll.u32 %v2274, 16
      %v2373 = vrot.slane %v2371, 5
      %v2374 = vor.u32 %v2370, %v2373
      %v2375 = vrot.slane %v2374, 4
      %v2377 = vshll.u32 %v2276, 16
      %v2379 = vrot.slane %v2377, 5
      %v2380 = vsel %vm2318, %v2375, %v2379
      %v2382 = vshrl.u32 %v2275, 16
      %v2384 = vrot.slane %v2382, 4
      %v2385 = vshll.u32 %v2275, 16
      %v2387 = vrot.slane %v2385, 5
      %v2388 = vor.u32 %v2384, %v2387
      %v2389 = vrot.slane %v2388, 4
      %v2391 = vshll.u32 %v2277, 16
      %v2393 = vrot.slane %v2391, 5
      %v2394 = vsel %vm2318, %v2389, %v2393
      %v2395 = vshrl.u32 %v2276, 16
      %v2397 = vrot.slane %v2395, 4
      %v2398 = vor.u32 %v2397, %v2379
      %v2399 = vrot.slane %v2398, 4
      %v2401 = vshll.u32 %v2278, 16
      %v2403 = vrot.slane %v2401, 5
      %v2404 = vsel %vm2318, %v2399, %v2403
      %v2405 = vshrl.u32 %v2277, 16
      %v2407 = vrot.slane %v2405, 4
      %v2408 = vor.u32 %v2407, %v2393
      %v2409 = vrot.slane %v2408, 4
      %v2411 = vshll.u32 %v2279, 16
      %v2413 = vrot.slane %v2411, 5
      %v2414 = vsel %vm2318, %v2409, %v2413
      %v2416 = vshrl.u32 %v2280, 16
      %v2418 = vrot.slane %v2416, 4
      %v2419 = vshll.u32 %v2280, 16
      %v2421 = vrot.slane %v2419, 5
      %v2422 = vor.u32 %v2418, %v2421
      %v2423 = vrot.slane %v2422, 4
      %v2425 = vshll.u32 %v2282, 16
      %v2427 = vrot.slane %v2425, 5
      %v2428 = vsel %vm2318, %v2423, %v2427
      %v2430 = vshrl.u32 %v2281, 16
      %v2432 = vrot.slane %v2430, 4
      %v2433 = vshll.u32 %v2281, 16
      %v2435 = vrot.slane %v2433, 5
      %v2436 = vor.u32 %v2432, %v2435
      %v2437 = vrot.slane %v2436, 4
      %v2439 = vshll.u32 %v2283, 16
      %v2441 = vrot.slane %v2439, 5
      %v2442 = vsel %vm2318, %v2437, %v2441
      %v2443 = vshrl.u32 %v2282, 16
      %v2445 = vrot.slane %v2443, 4
      %v2446 = vor.u32 %v2445, %v2427
      %v2447 = vrot.slane %v2446, 4
      %v2449 = vshll.u32 %v2284, 16
      %v2451 = vrot.slane %v2449, 5
      %v2452 = vsel %vm2318, %v2447, %v2451
      %v2453 = vshrl.u32 %v2283, 16
      %v2455 = vrot.slane %v2453, 4
      %v2456 = vor.u32 %v2455, %v2441
      %v2457 = vrot.slane %v2456, 4
      %v2459 = vshll.u32 %v2285, 16
      %v2461 = vrot.slane %v2459, 5
      %v2462 = vsel %vm2318, %v2457, %v2461
      %v2464 = vshrl.u32 %v2286, 16
      %v2466 = vrot.slane %v2464, 4
      %v2467 = vshll.u32 %v2286, 16
      %v2469 = vrot.slane %v2467, 5
      %v2470 = vor.u32 %v2466, %v2469
      %v2471 = vrot.slane %v2470, 4
      %v2473 = vshll.u32 %v2288, 16
      %v2475 = vrot.slane %v2473, 5
      %v2476 = vsel %vm2318, %v2471, %v2475
      %v2478 = vshrl.u32 %v2287, 16
      %v2480 = vrot.slane %v2478, 4
      %v2481 = vshll.u32 %v2287, 16
      %v2483 = vrot.slane %v2481, 5
      %v2484 = vor.u32 %v2480, %v2483
      %v2485 = vrot.slane %v2484, 4
      %v2487 = vshll.u32 %v2289, 16
      %v2489 = vrot.slane %v2487, 5
      %v2490 = vsel %vm2318, %v2485, %v2489
      %v2491 = vshrl.u32 %v2288, 16
      %v2493 = vrot.slane %v2491, 4
      %v2494 = vor.u32 %v2493, %v2475
      %v2495 = vrot.slane %v2494, 4
      %v2497 = vshll.u32 %v2290, 16
      %v2499 = vrot.slane %v2497, 5
      %v2500 = vsel %vm2318, %v2495, %v2499
      %v2501 = vshrl.u32 %v2289, 16
      %v2503 = vrot.slane %v2501, 4
      %v2504 = vor.u32 %v2503, %v2489
      %v2505 = vrot.slane %v2504, 4
      %v2507 = vshll.u32 %v2291, 16
      %v2509 = vrot.slane %v2507, 5
      %v2510 = vsel %vm2318, %v2505, %v2509
      %v2512 = vshrl.u32 %v2292, 16
      %v2514 = vrot.slane %v2512, 4
      %v2515 = vshll.u32 %v2292, 16
      %v2517 = vrot.slane %v2515, 5
      %v2518 = vor.u32 %v2514, %v2517
      %v2519 = vrot.slane %v2518, 4
      %v2521 = vshll.u32 %v2294, 16
      %v2523 = vrot.slane %v2521, 5
      %v2524 = vsel %vm2318, %v2519, %v2523
      %v2526 = vshrl.u32 %v2293, 16
      %v2528 = vrot.slane %v2526, 4
      %v2529 = vshll.u32 %v2293, 16
      %v2531 = vrot.slane %v2529, 5
      %v2532 = vor.u32 %v2528, %v2531
      %v2533 = vrot.slane %v2532, 4
      %v2535 = vshll.u32 %v2295, 16
      %v2537 = vrot.slane %v2535, 5
      %v2538 = vsel %vm2318, %v2533, %v2537
      %v2539 = vshrl.u32 %v2294, 16
      %v2541 = vrot.slane %v2539, 4
      %v2542 = vor.u32 %v2541, %v2523
      %v2543 = vrot.slane %v2542, 4
      %v2545 = vshll.u32 %v2296, 16
      %v2547 = vrot.slane %v2545, 5
      %v2548 = vsel %vm2318, %v2543, %v2547
      %v2549 = vshrl.u32 %v2295, 16
      %v2551 = vrot.slane %v2549, 4
      %v2552 = vor.u32 %v2551, %v2537
      %v2553 = vrot.slane %v2552, 4
      %v2555 = vshll.u32 %v2297, 16
      %v2557 = vrot.slane %v2555, 5
      %v2558 = vsel %vm2318, %v2553, %v2557
      %v2560 = vshrl.u32 %v2298, 16
      %v2562 = vrot.slane %v2560, 4
      %v2563 = vshll.u32 %v2298, 16
      %v2565 = vrot.slane %v2563, 5
      %v2566 = vor.u32 %v2562, %v2565
      %v2567 = vrot.slane %v2566, 4
      %v2569 = vshll.u32 %v2300, 16
      %v2571 = vrot.slane %v2569, 5
      %v2572 = vsel %vm2318, %v2567, %v2571
      %v2574 = vshrl.u32 %v2299, 16
      %v2576 = vrot.slane %v2574, 4
      %v2577 = vshll.u32 %v2299, 16
      %v2579 = vrot.slane %v2577, 5
      %v2580 = vor.u32 %v2576, %v2579
      %v2581 = vrot.slane %v2580, 4
      %v2583 = vshll.u32 %v2301, 16
      %v2585 = vrot.slane %v2583, 5
      %v2586 = vsel %vm2318, %v2581, %v2585
      %v2587 = vshrl.u32 %v2300, 16
      %v2589 = vrot.slane %v2587, 4
      %v2590 = vor.u32 %v2589, %v2571
      %v2591 = vrot.slane %v2590, 4
      %v2593 = vshll.u32 %v2302, 16
      %v2595 = vrot.slane %v2593, 5
      %v2596 = vsel %vm2318, %v2591, %v2595
      %v2597 = vshrl.u32 %v2301, 16
      %v2599 = vrot.slane %v2597, 4
      %v2600 = vor.u32 %v2599, %v2585
      %v2601 = vrot.slane %v2600, 4
      %v2603 = vshll.u32 %v2303, 16
      %v2605 = vrot.slane %v2603, 5
      %v2606 = vsel %vm2318, %v2601, %v2605
      %v2608 = vshrl.u32 %v2304, 16
      %v2610 = vrot.slane %v2608, 4
      %v2611 = vshll.u32 %v2304, 16
      %v2613 = vrot.slane %v2611, 5
      %v2614 = vor.u32 %v2610, %v2613
      %v2615 = vrot.slane %v2614, 4
      %v2617 = vshll.u32 %v2306, 16
      %v2619 = vrot.slane %v2617, 5
      %v2620 = vsel %vm2318, %v2615, %v2619
      %v2622 = vshrl.u32 %v2305, 16
      %v2624 = vrot.slane %v2622, 4
      %v2625 = vshll.u32 %v2305, 16
      %v2627 = vrot.slane %v2625, 5
      %v2628 = vor.u32 %v2624, %v2627
      %v2629 = vrot.slane %v2628, 4
      %v2631 = vshll.u32 %v2307, 16
      %v2633 = vrot.slane %v2631, 5
      %v2634 = vsel %vm2318, %v2629, %v2633
      %v2635 = vshrl.u32 %v2306, 16
      %v2637 = vrot.slane %v2635, 4
      %v2638 = vor.u32 %v2637, %v2619
      %v2639 = vrot.slane %v2638, 4
      %v2641 = vshll.u32 %v2308, 16
      %v2643 = vrot.slane %v2641, 5
      %v2644 = vsel %vm2318, %v2639, %v2643
      %v2645 = vshrl.u32 %v2307, 16
      %v2647 = vrot.slane %v2645, 4
      %v2648 = vor.u32 %v2647, %v2633
      %v2649 = vrot.slane %v2648, 4
      %v2651 = vshll.u32 %v2309, 16
      %v2653 = vrot.slane %v2651, 5
      %v2654 = vsel %vm2318, %v2649, %v2653
      %v2656 = vshrl.u32 %v2310, 16
      %v2658 = vrot.slane %v2656, 4
      %v2659 = vshll.u32 %v2310, 16
      %v2661 = vrot.slane %v2659, 5
      %v2662 = vor.u32 %v2658, %v2661
      %v2663 = vrot.slane %v2662, 4
      %v2665 = vshll.u32 %v2312, 16
      %v2667 = vrot.slane %v2665, 5
      %v2668 = vsel %vm2318, %v2663, %v2667
      %v2670 = vshrl.u32 %v2311, 16
      %v2672 = vrot.slane %v2670, 4
      %v2673 = vshll.u32 %v2311, 16
      %v2675 = vrot.slane %v2673, 5
      %v2676 = vor.u32 %v2672, %v2675
      %v2677 = vrot.slane %v2676, 4
      %v2679 = vshll.u32 %v2313, 16
      %v2681 = vrot.slane %v2679, 5
      %v2682 = vsel %vm2318, %v2677, %v2681
      %v2683 = vshrl.u32 %v2312, 16
      %v2685 = vrot.slane %v2683, 4
      %v2686 = vor.u32 %v2685, %v2667
      %v2687 = vrot.slane %v2686, 4
      %v2689 = vshll.u32 %v2314, 16
      %v2691 = vrot.slane %v2689, 5
      %v2692 = vsel %vm2318, %v2687, %v2691
      %v2693 = vshrl.u32 %v2313, 16
      %v2695 = vrot.slane %v2693, 4
      %v2696 = vor.u32 %v2695, %v2681
      %v2697 = vrot.slane %v2696, 4
      %v2699 = vshll.u32 %v2315, 16
      %v2701 = vrot.slane %v2699, 5
      %v2702 = vsel %vm2318, %v2697, %v2701
      %s2703 = sadd.s32 %s360, 1
      %s2704 = smul.u32 %s2703, 256
      %s2705 = smul.addr %s2704, 4
      %s2706 = scalar_lea.vmem %s1, %s2705
      %v2707 = vld [vmem:[%s2706] sm:$0xff]
      %v2708 = vld [vmem:[%s2706 + $0x8] sm:$0xff]
      %v2709 = vld [vmem:[%s2706 + $0x10] sm:$0xff]
      %v2710 = vld [vmem:[%s2706 + $0x18] sm:$0xff]
      %v2711 = vld [vmem:[%s2706 + $0x20] sm:$0xff]
      %v2712 = vld [vmem:[%s2706 + $0x28] sm:$0xff]
      %v2713 = vld [vmem:[%s2706 + $0x30] sm:$0xff]
      %v2714 = vld [vmem:[%s2706 + $0x38] sm:$0xff]
      %v2715 = vld [vmem:[%s2706 + $0x40] sm:$0xff]
      %v2716 = vld [vmem:[%s2706 + $0x48] sm:$0xff]
      %v2717 = vld [vmem:[%s2706 + $0x50] sm:$0xff]
      %v2718 = vld [vmem:[%s2706 + $0x58] sm:$0xff]
      %v2719 = vld [vmem:[%s2706 + $0x60] sm:$0xff]
      %v2720 = vld [vmem:[%s2706 + $0x68] sm:$0xff]
      %v2721 = vld [vmem:[%s2706 + $0x70] sm:$0xff]
      %v2722 = vld [vmem:[%s2706 + $0x78] sm:$0xff]
      %v2723 = vld [vmem:[%s2706 + $0x80] sm:$0xff]
      %v2724 = vld [vmem:[%s2706 + $0x88] sm:$0xff]
      %v2725 = vld [vmem:[%s2706 + $0x90] sm:$0xff]
      %v2726 = vld [vmem:[%s2706 + $0x98] sm:$0xff]
      %v2727 = vld [vmem:[%s2706 + $0xa0] sm:$0xff]
      %v2728 = vld [vmem:[%s2706 + $0xa8] sm:$0xff]
      %v2729 = vld [vmem:[%s2706 + $0xb0] sm:$0xff]
      %v2730 = vld [vmem:[%s2706 + $0xb8] sm:$0xff]
      %v2731 = vld [vmem:[%s2706 + $0xc0] sm:$0xff]
      %v2732 = vld [vmem:[%s2706 + $0xc8] sm:$0xff]
      %v2733 = vld [vmem:[%s2706 + $0xd0] sm:$0xff]
      %v2734 = vld [vmem:[%s2706 + $0xd8] sm:$0xff]
      %v2735 = vld [vmem:[%s2706 + $0xe0] sm:$0xff]
      %v2736 = vld [vmem:[%s2706 + $0xe8] sm:$0xff]
      %v2737 = vld [vmem:[%s2706 + $0xf0] sm:$0xff]
      %v2738 = vld [vmem:[%s2706 + $0xf8] sm:$0xff]
      %v2739 = vld [vmem:[%s2706 + $0x100] sm:$0xff]
      %v2740 = vld [vmem:[%s2706 + $0x108] sm:$0xff]
      %v2741 = vld [vmem:[%s2706 + $0x110] sm:$0xff]
      %v2742 = vld [vmem:[%s2706 + $0x118] sm:$0xff]
      %v2743 = vld [vmem:[%s2706 + $0x120] sm:$0xff]
      %v2744 = vld [vmem:[%s2706 + $0x128] sm:$0xff]
      %v2745 = vld [vmem:[%s2706 + $0x130] sm:$0xff]
      %v2746 = vld [vmem:[%s2706 + $0x138] sm:$0xff]
      %v2747 = vld [vmem:[%s2706 + $0x140] sm:$0xff]
      %v2748 = vld [vmem:[%s2706 + $0x148] sm:$0xff]
      %v2749 = vld [vmem:[%s2706 + $0x150] sm:$0xff]
      %v2750 = vld [vmem:[%s2706 + $0x158] sm:$0xff]
      %v2751 = vld [vmem:[%s2706 + $0x160] sm:$0xff]
      %v2752 = vld [vmem:[%s2706 + $0x168] sm:$0xff]
      %v2753 = vld [vmem:[%s2706 + $0x170] sm:$0xff]
      %v2754 = vld [vmem:[%s2706 + $0x178] sm:$0xff]
      %v2755 = vld [vmem:[%s2706 + $0x180] sm:$0xff]
      %v2756 = vld [vmem:[%s2706 + $0x188] sm:$0xff]
      %v2757 = vld [vmem:[%s2706 + $0x190] sm:$0xff]
      %v2758 = vld [vmem:[%s2706 + $0x198] sm:$0xff]
      %v2759 = vld [vmem:[%s2706 + $0x1a0] sm:$0xff]
      %v2760 = vld [vmem:[%s2706 + $0x1a8] sm:$0xff]
      %v2761 = vld [vmem:[%s2706 + $0x1b0] sm:$0xff]
      %v2762 = vld [vmem:[%s2706 + $0x1b8] sm:$0xff]
      %v2763 = vld [vmem:[%s2706 + $0x1c0] sm:$0xff]
      %v2764 = vld [vmem:[%s2706 + $0x1c8] sm:$0xff]
      %v2765 = vld [vmem:[%s2706 + $0x1d0] sm:$0xff]
      %v2766 = vld [vmem:[%s2706 + $0x1d8] sm:$0xff]
      %v2767 = vld [vmem:[%s2706 + $0x1e0] sm:$0xff]
      %v2768 = vld [vmem:[%s2706 + $0x1e8] sm:$0xff]
      %v2769 = vld [vmem:[%s2706 + $0x1f0] sm:$0xff]
      %v2770 = vld [vmem:[%s2706 + $0x1f8] sm:$0xff]
      %v2771 = vld [vmem:[%s2706 + $0x200] sm:$0xff]
      %v2772 = vld [vmem:[%s2706 + $0x208] sm:$0xff]
      %v2773 = vld [vmem:[%s2706 + $0x210] sm:$0xff]
      %v2774 = vld [vmem:[%s2706 + $0x218] sm:$0xff]
      %v2775 = vld [vmem:[%s2706 + $0x220] sm:$0xff]
      %v2776 = vld [vmem:[%s2706 + $0x228] sm:$0xff]
      %v2777 = vld [vmem:[%s2706 + $0x230] sm:$0xff]
      %v2778 = vld [vmem:[%s2706 + $0x238] sm:$0xff]
      %v2779 = vld [vmem:[%s2706 + $0x240] sm:$0xff]
      %v2780 = vld [vmem:[%s2706 + $0x248] sm:$0xff]
      %v2781 = vld [vmem:[%s2706 + $0x250] sm:$0xff]
      %v2782 = vld [vmem:[%s2706 + $0x258] sm:$0xff]
      %v2783 = vld [vmem:[%s2706 + $0x260] sm:$0xff]
      %v2784 = vld [vmem:[%s2706 + $0x268] sm:$0xff]
      %v2785 = vld [vmem:[%s2706 + $0x270] sm:$0xff]
      %v2786 = vld [vmem:[%s2706 + $0x278] sm:$0xff]
      %v2787 = vld [vmem:[%s2706 + $0x280] sm:$0xff]
      %v2788 = vld [vmem:[%s2706 + $0x288] sm:$0xff]
      %v2789 = vld [vmem:[%s2706 + $0x290] sm:$0xff]
      %v2790 = vld [vmem:[%s2706 + $0x298] sm:$0xff]
      %v2791 = vld [vmem:[%s2706 + $0x2a0] sm:$0xff]
      %v2792 = vld [vmem:[%s2706 + $0x2a8] sm:$0xff]
      %v2793 = vld [vmem:[%s2706 + $0x2b0] sm:$0xff]
      %v2794 = vld [vmem:[%s2706 + $0x2b8] sm:$0xff]
      %v2795 = vld [vmem:[%s2706 + $0x2c0] sm:$0xff]
      %v2796 = vld [vmem:[%s2706 + $0x2c8] sm:$0xff]
      %v2797 = vld [vmem:[%s2706 + $0x2d0] sm:$0xff]
      %v2798 = vld [vmem:[%s2706 + $0x2d8] sm:$0xff]
      %v2799 = vld [vmem:[%s2706 + $0x2e0] sm:$0xff]
      %v2800 = vld [vmem:[%s2706 + $0x2e8] sm:$0xff]
      %v2801 = vld [vmem:[%s2706 + $0x2f0] sm:$0xff]
      %v2802 = vld [vmem:[%s2706 + $0x2f8] sm:$0xff]
      %v2803 = vld [vmem:[%s2706 + $0x300] sm:$0xff]
      %v2804 = vld [vmem:[%s2706 + $0x308] sm:$0xff]
      %v2805 = vld [vmem:[%s2706 + $0x310] sm:$0xff]
      %v2806 = vld [vmem:[%s2706 + $0x318] sm:$0xff]
      %v2807 = vld [vmem:[%s2706 + $0x320] sm:$0xff]
      %v2808 = vld [vmem:[%s2706 + $0x328] sm:$0xff]
      %v2809 = vld [vmem:[%s2706 + $0x330] sm:$0xff]
      %v2810 = vld [vmem:[%s2706 + $0x338] sm:$0xff]
      %v2811 = vld [vmem:[%s2706 + $0x340] sm:$0xff]
      %v2812 = vld [vmem:[%s2706 + $0x348] sm:$0xff]
      %v2813 = vld [vmem:[%s2706 + $0x350] sm:$0xff]
      %v2814 = vld [vmem:[%s2706 + $0x358] sm:$0xff]
      %v2815 = vld [vmem:[%s2706 + $0x360] sm:$0xff]
      %v2816 = vld [vmem:[%s2706 + $0x368] sm:$0xff]
      %v2817 = vld [vmem:[%s2706 + $0x370] sm:$0xff]
      %v2818 = vld [vmem:[%s2706 + $0x378] sm:$0xff]
      %v2819 = vld [vmem:[%s2706 + $0x380] sm:$0xff]
      %v2820 = vld [vmem:[%s2706 + $0x388] sm:$0xff]
      %v2821 = vld [vmem:[%s2706 + $0x390] sm:$0xff]
      %v2822 = vld [vmem:[%s2706 + $0x398] sm:$0xff]
      %v2823 = vld [vmem:[%s2706 + $0x3a0] sm:$0xff]
      %v2824 = vld [vmem:[%s2706 + $0x3a8] sm:$0xff]
      %v2825 = vld [vmem:[%s2706 + $0x3b0] sm:$0xff]
      %v2826 = vld [vmem:[%s2706 + $0x3b8] sm:$0xff]
      %v2827 = vld [vmem:[%s2706 + $0x3c0] sm:$0xff]
      %v2828 = vld [vmem:[%s2706 + $0x3c8] sm:$0xff]
      %v2829 = vld [vmem:[%s2706 + $0x3d0] sm:$0xff]
      %v2830 = vld [vmem:[%s2706 + $0x3d8] sm:$0xff]
      %v2831 = vld [vmem:[%s2706 + $0x3e0] sm:$0xff]
      %v2832 = vld [vmem:[%s2706 + $0x3e8] sm:$0xff]
      %v2833 = vld [vmem:[%s2706 + $0x3f0] sm:$0xff]
      %v2834 = vld [vmem:[%s2706 + $0x3f8] sm:$0xff]
      %v2835 = vld [vmem:[#allocation2] sm:$0xff]
      %v2836 = vld [vmem:[#allocation2 + $0x8] sm:$0xff]
      %v2837 = vld [vmem:[#allocation2 + $0x10] sm:$0xff]
      %v2838 = vld [vmem:[#allocation2 + $0x18] sm:$0xff]
      %v2839 = vld [vmem:[#allocation2 + $0x20] sm:$0xff]
      %v2840 = vld [vmem:[#allocation2 + $0x28] sm:$0xff]
      %v2841 = vld [vmem:[#allocation2 + $0x30] sm:$0xff]
      %v2842 = vld [vmem:[#allocation2 + $0x38] sm:$0xff]
      %v2843 = vld [vmem:[#allocation2 + $0x40] sm:$0xff]
      %v2844 = vld [vmem:[#allocation2 + $0x48] sm:$0xff]
      %v2845 = vld [vmem:[#allocation2 + $0x50] sm:$0xff]
      %v2846 = vld [vmem:[#allocation2 + $0x58] sm:$0xff]
      %v2847 = vld [vmem:[#allocation2 + $0x60] sm:$0xff]
      %v2848 = vld [vmem:[#allocation2 + $0x68] sm:$0xff]
      %v2849 = vld [vmem:[#allocation2 + $0x70] sm:$0xff]
      %v2850 = vld [vmem:[#allocation2 + $0x78] sm:$0xff]
      %v2851 = vld [vmem:[#allocation2 + $0x80] sm:$0xff]
      %v2852 = vld [vmem:[#allocation2 + $0x88] sm:$0xff]
      %v2853 = vld [vmem:[#allocation2 + $0x90] sm:$0xff]
      %v2854 = vld [vmem:[#allocation2 + $0x98] sm:$0xff]
      %v2855 = vld [vmem:[#allocation2 + $0xa0] sm:$0xff]
      %v2856 = vld [vmem:[#allocation2 + $0xa8] sm:$0xff]
      %v2857 = vld [vmem:[#allocation2 + $0xb0] sm:$0xff]
      %v2858 = vld [vmem:[#allocation2 + $0xb8] sm:$0xff]
      %v2859 = vld [vmem:[#allocation2 + $0xc0] sm:$0xff]
      %v2860 = vld [vmem:[#allocation2 + $0xc8] sm:$0xff]
      %v2861 = vld [vmem:[#allocation2 + $0xd0] sm:$0xff]
      %v2862 = vld [vmem:[#allocation2 + $0xd8] sm:$0xff]
      %v2863 = vld [vmem:[#allocation2 + $0xe0] sm:$0xff]
      %v2864 = vld [vmem:[#allocation2 + $0xe8] sm:$0xff]
      %v2865 = vld [vmem:[#allocation2 + $0xf0] sm:$0xff]
      %v2866 = vld [vmem:[#allocation2 + $0xf8] sm:$0xff]
      %v2867 = vld [vmem:[#allocation2 + $0x100] sm:$0xff]
      %v2868 = vld [vmem:[#allocation2 + $0x108] sm:$0xff]
      %v2869 = vld [vmem:[#allocation2 + $0x110] sm:$0xff]
      %v2870 = vld [vmem:[#allocation2 + $0x118] sm:$0xff]
      %v2871 = vld [vmem:[#allocation2 + $0x120] sm:$0xff]
      %v2872 = vld [vmem:[#allocation2 + $0x128] sm:$0xff]
      %v2873 = vld [vmem:[#allocation2 + $0x130] sm:$0xff]
      %v2874 = vld [vmem:[#allocation2 + $0x138] sm:$0xff]
      %v2875 = vld [vmem:[#allocation2 + $0x140] sm:$0xff]
      %v2876 = vld [vmem:[#allocation2 + $0x148] sm:$0xff]
      %v2877 = vld [vmem:[#allocation2 + $0x150] sm:$0xff]
      %v2878 = vld [vmem:[#allocation2 + $0x158] sm:$0xff]
      %v2879 = vld [vmem:[#allocation2 + $0x160] sm:$0xff]
      %v2880 = vld [vmem:[#allocation2 + $0x168] sm:$0xff]
      %v2881 = vld [vmem:[#allocation2 + $0x170] sm:$0xff]
      %v2882 = vld [vmem:[#allocation2 + $0x178] sm:$0xff]
      %v2883 = vld [vmem:[#allocation2 + $0x180] sm:$0xff]
      %v2884 = vld [vmem:[#allocation2 + $0x188] sm:$0xff]
      %v2885 = vld [vmem:[#allocation2 + $0x190] sm:$0xff]
      %v2886 = vld [vmem:[#allocation2 + $0x198] sm:$0xff]
      %v2887 = vld [vmem:[#allocation2 + $0x1a0] sm:$0xff]
      %v2888 = vld [vmem:[#allocation2 + $0x1a8] sm:$0xff]
      %v2889 = vld [vmem:[#allocation2 + $0x1b0] sm:$0xff]
      %v2890 = vld [vmem:[#allocation2 + $0x1b8] sm:$0xff]
      %v2891 = vld [vmem:[#allocation2 + $0x1c0] sm:$0xff]
      %v2892 = vld [vmem:[#allocation2 + $0x1c8] sm:$0xff]
      %v2893 = vld [vmem:[#allocation2 + $0x1d0] sm:$0xff]
      %v2894 = vld [vmem:[#allocation2 + $0x1d8] sm:$0xff]
      %v2895 = vld [vmem:[#allocation2 + $0x1e0] sm:$0xff]
      %v2896 = vld [vmem:[#allocation2 + $0x1e8] sm:$0xff]
      %v2897 = vld [vmem:[#allocation2 + $0x1f0] sm:$0xff]
      %v2898 = vld [vmem:[#allocation2 + $0x1f8] sm:$0xff]
      %v2899 = vunpack.c.l.b16 %v2332
      %v2900 = vunpack.c.h.b16 %v2332
      %v2901 = vunpack.c.l.b16 %v2346
      %v2902 = vunpack.c.h.b16 %v2346
      %v2903 = vunpack.c.l.b16 %v2356
      %v2904 = vunpack.c.h.b16 %v2356
      %v2905 = vunpack.c.l.b16 %v2366
      %v2906 = vunpack.c.h.b16 %v2366
      %v2907 = vunpack.c.l.b16 %v2380
      %v2908 = vunpack.c.h.b16 %v2380
      %v2909 = vunpack.c.l.b16 %v2394
      %v2910 = vunpack.c.h.b16 %v2394
      %v2911 = vunpack.c.l.b16 %v2404
      %v2912 = vunpack.c.h.b16 %v2404
      %v2913 = vunpack.c.l.b16 %v2414
      %v2914 = vunpack.c.h.b16 %v2414
      %v2915 = vunpack.c.l.b16 %v2428
      %v2916 = vunpack.c.h.b16 %v2428
      %v2917 = vunpack.c.l.b16 %v2442
      %v2918 = vunpack.c.h.b16 %v2442
      %v2919 = vunpack.c.l.b16 %v2452
      %v2920 = vunpack.c.h.b16 %v2452
      %v2921 = vunpack.c.l.b16 %v2462
      %v2922 = vunpack.c.h.b16 %v2462
      %v2923 = vunpack.c.l.b16 %v2476
      %v2924 = vunpack.c.h.b16 %v2476
      %v2925 = vunpack.c.l.b16 %v2490
      %v2926 = vunpack.c.h.b16 %v2490
      %v2927 = vunpack.c.l.b16 %v2500
      %v2928 = vunpack.c.h.b16 %v2500
      %v2929 = vunpack.c.l.b16 %v2510
      %v2930 = vunpack.c.h.b16 %v2510
      %v2931 = vunpack.c.l.b16 %v2524
      %v2932 = vunpack.c.h.b16 %v2524
      %v2933 = vunpack.c.l.b16 %v2538
      %v2934 = vunpack.c.h.b16 %v2538
      %v2935 = vunpack.c.l.b16 %v2548
      %v2936 = vunpack.c.h.b16 %v2548
      %v2937 = vunpack.c.l.b16 %v2558
      %v2938 = vunpack.c.h.b16 %v2558
      %v2939 = vunpack.c.l.b16 %v2572
      %v2940 = vunpack.c.h.b16 %v2572
      %v2941 = vunpack.c.l.b16 %v2586
      %v2942 = vunpack.c.h.b16 %v2586
      %v2943 = vunpack.c.l.b16 %v2596
      %v2944 = vunpack.c.h.b16 %v2596
      %v2945 = vunpack.c.l.b16 %v2606
      %v2946 = vunpack.c.h.b16 %v2606
      %v2947 = vunpack.c.l.b16 %v2620
      %v2948 = vunpack.c.h.b16 %v2620
      %v2949 = vunpack.c.l.b16 %v2634
      %v2950 = vunpack.c.h.b16 %v2634
      %v2951 = vunpack.c.l.b16 %v2644
      %v2952 = vunpack.c.h.b16 %v2644
      %v2953 = vunpack.c.l.b16 %v2654
      %v2954 = vunpack.c.h.b16 %v2654
      %v2955 = vunpack.c.l.b16 %v2668
      %v2956 = vunpack.c.h.b16 %v2668
      %v2957 = vunpack.c.l.b16 %v2682
      %v2958 = vunpack.c.h.b16 %v2682
      %v2959 = vunpack.c.l.b16 %v2692
      %v2960 = vunpack.c.h.b16 %v2692
      %v2961 = vunpack.c.l.b16 %v2702
      %v2962 = vunpack.c.h.b16 %v2702
      %v2963 = vpack.c.b16 %v2903, %v2899
      %v2964 = vpack.c.b16 %v2904, %v2900
      %v2965 = vpack.c.b16 %v2905, %v2901
      %v2966 = vpack.c.b16 %v2906, %v2902
      %v2967 = vpack.c.b16 %v2911, %v2907
      %v2968 = vpack.c.b16 %v2912, %v2908
      %v2969 = vpack.c.b16 %v2913, %v2909
      %v2970 = vpack.c.b16 %v2914, %v2910
      %v2971 = vpack.c.b16 %v2919, %v2915
      %v2972 = vpack.c.b16 %v2920, %v2916
      %v2973 = vpack.c.b16 %v2921, %v2917
      %v2974 = vpack.c.b16 %v2922, %v2918
      %v2975 = vpack.c.b16 %v2927, %v2923
      %v2976 = vpack.c.b16 %v2928, %v2924
      %v2977 = vpack.c.b16 %v2929, %v2925
      %v2978 = vpack.c.b16 %v2930, %v2926
      %v2979 = vpack.c.b16 %v2935, %v2931
      %v2980 = vpack.c.b16 %v2936, %v2932
      %v2981 = vpack.c.b16 %v2937, %v2933
      %v2982 = vpack.c.b16 %v2938, %v2934
      %v2983 = vpack.c.b16 %v2943, %v2939
      %v2984 = vpack.c.b16 %v2944, %v2940
      %v2985 = vpack.c.b16 %v2945, %v2941
      %v2986 = vpack.c.b16 %v2946, %v2942
      %v2987 = vpack.c.b16 %v2951, %v2947
      %v2988 = vpack.c.b16 %v2952, %v2948
      %v2989 = vpack.c.b16 %v2953, %v2949
      %v2990 = vpack.c.b16 %v2954, %v2950
      %v2991 = vpack.c.b16 %v2959, %v2955
      %v2992 = vpack.c.b16 %v2960, %v2956
      %v2993 = vpack.c.b16 %v2961, %v2957
      %v2994 = vpack.c.b16 %v2962, %v2958
      %v3155 = vunpack.c.l.b16 %v2707
      %v3156 = vunpack.c.h.b16 %v2707
      %v3157 = vunpack.c.l.b16 %v2708
      %v3158 = vunpack.c.h.b16 %v2708
      %v3159 = vunpack.c.l.b16 %v2709
      %v3160 = vunpack.c.h.b16 %v2709
      %v3161 = vunpack.c.l.b16 %v2710
      %v3162 = vunpack.c.h.b16 %v2710
      %v3163 = vunpack.c.l.b16 %v2711
      %v3164 = vunpack.c.h.b16 %v2711
      %v3165 = vunpack.c.l.b16 %v2712
      %v3166 = vunpack.c.h.b16 %v2712
      %v3167 = vunpack.c.l.b16 %v2713
      %v3168 = vunpack.c.h.b16 %v2713
      %v3169 = vunpack.c.l.b16 %v2714
      %v3170 = vunpack.c.h.b16 %v2714
      %v3171 = vunpack.c.l.b16 %v2715
      %v3172 = vunpack.c.h.b16 %v2715
      %v3173 = vunpack.c.l.b16 %v2716
      %v3174 = vunpack.c.h.b16 %v2716
      %v3175 = vunpack.c.l.b16 %v2717
      %v3176 = vunpack.c.h.b16 %v2717
      %v3177 = vunpack.c.l.b16 %v2718
      %v3178 = vunpack.c.h.b16 %v2718
      %v3179 = vunpack.c.l.b16 %v2719
      %v3180 = vunpack.c.h.b16 %v2719
      %v3181 = vunpack.c.l.b16 %v2720
      %v3182 = vunpack.c.h.b16 %v2720
      %v3183 = vunpack.c.l.b16 %v2721
      %v3184 = vunpack.c.h.b16 %v2721
      %v3185 = vunpack.c.l.b16 %v2722
      %v3186 = vunpack.c.h.b16 %v2722
      %v3187 = vunpack.c.l.b16 %v2723
      %v3188 = vunpack.c.h.b16 %v2723
      %v3189 = vunpack.c.l.b16 %v2724
      %v3190 = vunpack.c.h.b16 %v2724
      %v3191 = vunpack.c.l.b16 %v2725
      %v3192 = vunpack.c.h.b16 %v2725
      %v3193 = vunpack.c.l.b16 %v2726
      %v3194 = vunpack.c.h.b16 %v2726
      %v3195 = vunpack.c.l.b16 %v2727
      %v3196 = vunpack.c.h.b16 %v2727
      %v3197 = vunpack.c.l.b16 %v2728
      %v3198 = vunpack.c.h.b16 %v2728
      %v3199 = vunpack.c.l.b16 %v2729
      %v3200 = vunpack.c.h.b16 %v2729
      %v3201 = vunpack.c.l.b16 %v2730
      %v3202 = vunpack.c.h.b16 %v2730
      %v3203 = vunpack.c.l.b16 %v2731
      %v3204 = vunpack.c.h.b16 %v2731
      %v3205 = vunpack.c.l.b16 %v2732
      %v3206 = vunpack.c.h.b16 %v2732
      %v3207 = vunpack.c.l.b16 %v2733
      %v3208 = vunpack.c.h.b16 %v2733
      %v3209 = vunpack.c.l.b16 %v2734
      %v3210 = vunpack.c.h.b16 %v2734
      %v3211 = vunpack.c.l.b16 %v2735
      %v3212 = vunpack.c.h.b16 %v2735
      %v3213 = vunpack.c.l.b16 %v2736
      %v3214 = vunpack.c.h.b16 %v2736
      %v3215 = vunpack.c.l.b16 %v2737
      %v3216 = vunpack.c.h.b16 %v2737
      %v3217 = vunpack.c.l.b16 %v2738
      %v3218 = vunpack.c.h.b16 %v2738
      %v3219 = vunpack.c.l.b16 %v2739
      %v3220 = vunpack.c.h.b16 %v2739
      %v3221 = vunpack.c.l.b16 %v2740
      %v3222 = vunpack.c.h.b16 %v2740
      %v3223 = vunpack.c.l.b16 %v2741
      %v3224 = vunpack.c.h.b16 %v2741
      %v3225 = vunpack.c.l.b16 %v2742
      %v3226 = vunpack.c.h.b16 %v2742
      %v3227 = vunpack.c.l.b16 %v2743
      %v3228 = vunpack.c.h.b16 %v2743
      %v3229 = vunpack.c.l.b16 %v2744
      %v3230 = vunpack.c.h.b16 %v2744
      %v3231 = vunpack.c.l.b16 %v2745
      %v3232 = vunpack.c.h.b16 %v2745
      %v3233 = vunpack.c.l.b16 %v2746
      %v3234 = vunpack.c.h.b16 %v2746
      %v3235 = vunpack.c.l.b16 %v2747
      %v3236 = vunpack.c.h.b16 %v2747
      %v3237 = vunpack.c.l.b16 %v2748
      %v3238 = vunpack.c.h.b16 %v2748
      %v3239 = vunpack.c.l.b16 %v2749
      %v3240 = vunpack.c.h.b16 %v2749
      %v3241 = vunpack.c.l.b16 %v2750
      %v3242 = vunpack.c.h.b16 %v2750
      %v3243 = vunpack.c.l.b16 %v2751
      %v3244 = vunpack.c.h.b16 %v2751
      %v3245 = vunpack.c.l.b16 %v2752
      %v3246 = vunpack.c.h.b16 %v2752
      %v3247 = vunpack.c.l.b16 %v2753
      %v3248 = vunpack.c.h.b16 %v2753
      %v3249 = vunpack.c.l.b16 %v2754
      %v3250 = vunpack.c.h.b16 %v2754
      %v3251 = vunpack.c.l.b16 %v2755
      %v3252 = vunpack.c.h.b16 %v2755
      %v3253 = vunpack.c.l.b16 %v2756
      %v3254 = vunpack.c.h.b16 %v2756
      %v3255 = vunpack.c.l.b16 %v2757
      %v3256 = vunpack.c.h.b16 %v2757
      %v3257 = vunpack.c.l.b16 %v2758
      %v3258 = vunpack.c.h.b16 %v2758
      %v3259 = vunpack.c.l.b16 %v2759
      %v3260 = vunpack.c.h.b16 %v2759
      %v3261 = vunpack.c.l.b16 %v2760
      %v3262 = vunpack.c.h.b16 %v2760
      %v3263 = vunpack.c.l.b16 %v2761
      %v3264 = vunpack.c.h.b16 %v2761
      %v3265 = vunpack.c.l.b16 %v2762
      %v3266 = vunpack.c.h.b16 %v2762
      %v3267 = vunpack.c.l.b16 %v2763
      %v3268 = vunpack.c.h.b16 %v2763
      %v3269 = vunpack.c.l.b16 %v2764
      %v3270 = vunpack.c.h.b16 %v2764
      %v3271 = vunpack.c.l.b16 %v2765
      %v3272 = vunpack.c.h.b16 %v2765
      %v3273 = vunpack.c.l.b16 %v2766
      %v3274 = vunpack.c.h.b16 %v2766
      %v3275 = vunpack.c.l.b16 %v2767
      %v3276 = vunpack.c.h.b16 %v2767
      %v3277 = vunpack.c.l.b16 %v2768
      %v3278 = vunpack.c.h.b16 %v2768
      %v3279 = vunpack.c.l.b16 %v2769
      %v3280 = vunpack.c.h.b16 %v2769
      %v3281 = vunpack.c.l.b16 %v2770
      %v3282 = vunpack.c.h.b16 %v2770
      %v3283 = vunpack.c.l.b16 %v2771
      %v3284 = vunpack.c.h.b16 %v2771
      %v3285 = vunpack.c.l.b16 %v2772
      %v3286 = vunpack.c.h.b16 %v2772
      %v3287 = vunpack.c.l.b16 %v2773
      %v3288 = vunpack.c.h.b16 %v2773
      %v3289 = vunpack.c.l.b16 %v2774
      %v3290 = vunpack.c.h.b16 %v2774
      %v3291 = vunpack.c.l.b16 %v2775
      %v3292 = vunpack.c.h.b16 %v2775
      %v3293 = vunpack.c.l.b16 %v2776
      %v3294 = vunpack.c.h.b16 %v2776
      %v3295 = vunpack.c.l.b16 %v2777
      %v3296 = vunpack.c.h.b16 %v2777
      %v3297 = vunpack.c.l.b16 %v2778
      %v3298 = vunpack.c.h.b16 %v2778
      %v3299 = vunpack.c.l.b16 %v2779
      %v3300 = vunpack.c.h.b16 %v2779
      %v3301 = vunpack.c.l.b16 %v2780
      %v3302 = vunpack.c.h.b16 %v2780
      %v3303 = vunpack.c.l.b16 %v2781
      %v3304 = vunpack.c.h.b16 %v2781
      %v3305 = vunpack.c.l.b16 %v2782
      %v3306 = vunpack.c.h.b16 %v2782
      %v3307 = vunpack.c.l.b16 %v2783
      %v3308 = vunpack.c.h.b16 %v2783
      %v3309 = vunpack.c.l.b16 %v2784
      %v3310 = vunpack.c.h.b16 %v2784
      %v3311 = vunpack.c.l.b16 %v2785
      %v3312 = vunpack.c.h.b16 %v2785
      %v3313 = vunpack.c.l.b16 %v2786
      %v3314 = vunpack.c.h.b16 %v2786
      %v3315 = vunpack.c.l.b16 %v2787
      %v3316 = vunpack.c.h.b16 %v2787
      %v3317 = vunpack.c.l.b16 %v2788
      %v3318 = vunpack.c.h.b16 %v2788
      %v3319 = vunpack.c.l.b16 %v2789
      %v3320 = vunpack.c.h.b16 %v2789
      %v3321 = vunpack.c.l.b16 %v2790
      %v3322 = vunpack.c.h.b16 %v2790
      %v3323 = vunpack.c.l.b16 %v2791
      %v3324 = vunpack.c.h.b16 %v2791
      %v3325 = vunpack.c.l.b16 %v2792
      %v3326 = vunpack.c.h.b16 %v2792
      %v3327 = vunpack.c.l.b16 %v2793
      %v3328 = vunpack.c.h.b16 %v2793
      %v3329 = vunpack.c.l.b16 %v2794
      %v3330 = vunpack.c.h.b16 %v2794
      %v3331 = vunpack.c.l.b16 %v2795
      %v3332 = vunpack.c.h.b16 %v2795
      %v3333 = vunpack.c.l.b16 %v2796
      %v3334 = vunpack.c.h.b16 %v2796
      %v3335 = vunpack.c.l.b16 %v2797
      %v3336 = vunpack.c.h.b16 %v2797
      %v3337 = vunpack.c.l.b16 %v2798
      %v3338 = vunpack.c.h.b16 %v2798
      %v3339 = vunpack.c.l.b16 %v2799
      %v3340 = vunpack.c.h.b16 %v2799
      %v3341 = vunpack.c.l.b16 %v2800
      %v3342 = vunpack.c.h.b16 %v2800
      %v3343 = vunpack.c.l.b16 %v2801
      %v3344 = vunpack.c.h.b16 %v2801
      %v3345 = vunpack.c.l.b16 %v2802
      %v3346 = vunpack.c.h.b16 %v2802
      %v3347 = vunpack.c.l.b16 %v2803
      %v3348 = vunpack.c.h.b16 %v2803
      %v3349 = vunpack.c.l.b16 %v2804
      %v3350 = vunpack.c.h.b16 %v2804
      %v3351 = vunpack.c.l.b16 %v2805
      %v3352 = vunpack.c.h.b16 %v2805
      %v3353 = vunpack.c.l.b16 %v2806
      %v3354 = vunpack.c.h.b16 %v2806
      %v3355 = vunpack.c.l.b16 %v2807
      %v3356 = vunpack.c.h.b16 %v2807
      %v3357 = vunpack.c.l.b16 %v2808
      %v3358 = vunpack.c.h.b16 %v2808
      %v3359 = vunpack.c.l.b16 %v2809
      %v3360 = vunpack.c.h.b16 %v2809
      %v3361 = vunpack.c.l.b16 %v2810
      %v3362 = vunpack.c.h.b16 %v2810
      %v3363 = vunpack.c.l.b16 %v2811
      %v3364 = vunpack.c.h.b16 %v2811
      %v3365 = vunpack.c.l.b16 %v2812
      %v3366 = vunpack.c.h.b16 %v2812
      %v3367 = vunpack.c.l.b16 %v2813
      %v3368 = vunpack.c.h.b16 %v2813
      %v3369 = vunpack.c.l.b16 %v2814
      %v3370 = vunpack.c.h.b16 %v2814
      %v3371 = vunpack.c.l.b16 %v2815
      %v3372 = vunpack.c.h.b16 %v2815
      %v3373 = vunpack.c.l.b16 %v2816
      %v3374 = vunpack.c.h.b16 %v2816
      %v3375 = vunpack.c.l.b16 %v2817
      %v3376 = vunpack.c.h.b16 %v2817
      %v3377 = vunpack.c.l.b16 %v2818
      %v3378 = vunpack.c.h.b16 %v2818
      %v3379 = vunpack.c.l.b16 %v2819
      %v3380 = vunpack.c.h.b16 %v2819
      %v3381 = vunpack.c.l.b16 %v2820
      %v3382 = vunpack.c.h.b16 %v2820
      %v3383 = vunpack.c.l.b16 %v2821
      %v3384 = vunpack.c.h.b16 %v2821
      %v3385 = vunpack.c.l.b16 %v2822
      %v3386 = vunpack.c.h.b16 %v2822
      %v3387 = vunpack.c.l.b16 %v2823
      %v3388 = vunpack.c.h.b16 %v2823
      %v3389 = vunpack.c.l.b16 %v2824
      %v3390 = vunpack.c.h.b16 %v2824
      %v3391 = vunpack.c.l.b16 %v2825
      %v3392 = vunpack.c.h.b16 %v2825
      %v3393 = vunpack.c.l.b16 %v2826
      %v3394 = vunpack.c.h.b16 %v2826
      %v3395 = vunpack.c.l.b16 %v2827
      %v3396 = vunpack.c.h.b16 %v2827
      %v3397 = vunpack.c.l.b16 %v2828
      %v3398 = vunpack.c.h.b16 %v2828
      %v3399 = vunpack.c.l.b16 %v2829
      %v3400 = vunpack.c.h.b16 %v2829
      %v3401 = vunpack.c.l.b16 %v2830
      %v3402 = vunpack.c.h.b16 %v2830
      %v3403 = vunpack.c.l.b16 %v2831
      %v3404 = vunpack.c.h.b16 %v2831
      %v3405 = vunpack.c.l.b16 %v2832
      %v3406 = vunpack.c.h.b16 %v2832
      %v3407 = vunpack.c.l.b16 %v2833
      %v3408 = vunpack.c.h.b16 %v2833
      %v3409 = vunpack.c.l.b16 %v2834
      %v3410 = vunpack.c.h.b16 %v2834
      %v3411 = vpack.c.b16 %v3159, %v3155
      %v3412 = vpack.c.b16 %v3160, %v3156
      %v3413 = vpack.c.b16 %v3161, %v3157
      %v3414 = vpack.c.b16 %v3162, %v3158
      %v3415 = vpack.c.b16 %v3167, %v3163
      %v3416 = vpack.c.b16 %v3168, %v3164
      %v3417 = vpack.c.b16 %v3169, %v3165
      %v3418 = vpack.c.b16 %v3170, %v3166
      %v3419 = vpack.c.b16 %v3175, %v3171
      %v3420 = vpack.c.b16 %v3176, %v3172
      %v3421 = vpack.c.b16 %v3177, %v3173
      %v3422 = vpack.c.b16 %v3178, %v3174
      %v3423 = vpack.c.b16 %v3183, %v3179
      %v3424 = vpack.c.b16 %v3184, %v3180
      %v3425 = vpack.c.b16 %v3185, %v3181
      %v3426 = vpack.c.b16 %v3186, %v3182
      %v3427 = vpack.c.b16 %v3191, %v3187
      %v3428 = vpack.c.b16 %v3192, %v3188
      %v3429 = vpack.c.b16 %v3193, %v3189
      %v3430 = vpack.c.b16 %v3194, %v3190
      %v3431 = vpack.c.b16 %v3199, %v3195
      %v3432 = vpack.c.b16 %v3200, %v3196
      %v3433 = vpack.c.b16 %v3201, %v3197
      %v3434 = vpack.c.b16 %v3202, %v3198
      %v3435 = vpack.c.b16 %v3207, %v3203
      %v3436 = vpack.c.b16 %v3208, %v3204
      %v3437 = vpack.c.b16 %v3209, %v3205
      %v3438 = vpack.c.b16 %v3210, %v3206
      %v3439 = vpack.c.b16 %v3215, %v3211
      %v3440 = vpack.c.b16 %v3216, %v3212
      %v3441 = vpack.c.b16 %v3217, %v3213
      %v3442 = vpack.c.b16 %v3218, %v3214
      %v3443 = vpack.c.b16 %v3223, %v3219
      %v3444 = vpack.c.b16 %v3224, %v3220
      %v3445 = vpack.c.b16 %v3225, %v3221
      %v3446 = vpack.c.b16 %v3226, %v3222
      %v3447 = vpack.c.b16 %v3231, %v3227
      %v3448 = vpack.c.b16 %v3232, %v3228
      %v3449 = vpack.c.b16 %v3233, %v3229
      %v3450 = vpack.c.b16 %v3234, %v3230
      %v3451 = vpack.c.b16 %v3239, %v3235
      %v3452 = vpack.c.b16 %v3240, %v3236
      %v3453 = vpack.c.b16 %v3241, %v3237
      %v3454 = vpack.c.b16 %v3242, %v3238
      %v3455 = vpack.c.b16 %v3247, %v3243
      %v3456 = vpack.c.b16 %v3248, %v3244
      %v3457 = vpack.c.b16 %v3249, %v3245
      %v3458 = vpack.c.b16 %v3250, %v3246
      %v3459 = vpack.c.b16 %v3255, %v3251
      %v3460 = vpack.c.b16 %v3256, %v3252
      %v3461 = vpack.c.b16 %v3257, %v3253
      %v3462 = vpack.c.b16 %v3258, %v3254
      %v3463 = vpack.c.b16 %v3263, %v3259
      %v3464 = vpack.c.b16 %v3264, %v3260
      %v3465 = vpack.c.b16 %v3265, %v3261
      %v3466 = vpack.c.b16 %v3266, %v3262
      %v3467 = vpack.c.b16 %v3271, %v3267
      %v3468 = vpack.c.b16 %v3272, %v3268
      %v3469 = vpack.c.b16 %v3273, %v3269
      %v3470 = vpack.c.b16 %v3274, %v3270
      %v3471 = vpack.c.b16 %v3279, %v3275
      %v3472 = vpack.c.b16 %v3280, %v3276
      %v3473 = vpack.c.b16 %v3281, %v3277
      %v3474 = vpack.c.b16 %v3282, %v3278
      %v3475 = vpack.c.b16 %v3287, %v3283
      %v3476 = vpack.c.b16 %v3288, %v3284
      %v3477 = vpack.c.b16 %v3289, %v3285
      %v3478 = vpack.c.b16 %v3290, %v3286
      %v3479 = vpack.c.b16 %v3295, %v3291
      %v3480 = vpack.c.b16 %v3296, %v3292
      %v3481 = vpack.c.b16 %v3297, %v3293
      %v3482 = vpack.c.b16 %v3298, %v3294
      %v3483 = vpack.c.b16 %v3303, %v3299
      %v3484 = vpack.c.b16 %v3304, %v3300
      %v3485 = vpack.c.b16 %v3305, %v3301
      %v3486 = vpack.c.b16 %v3306, %v3302
      %v3487 = vpack.c.b16 %v3311, %v3307
      %v3488 = vpack.c.b16 %v3312, %v3308
      %v3489 = vpack.c.b16 %v3313, %v3309
      %v3490 = vpack.c.b16 %v3314, %v3310
      %v3491 = vpack.c.b16 %v3319, %v3315
      %v3492 = vpack.c.b16 %v3320, %v3316
      %v3493 = vpack.c.b16 %v3321, %v3317
      %v3494 = vpack.c.b16 %v3322, %v3318
      %v3495 = vpack.c.b16 %v3327, %v3323
      %v3496 = vpack.c.b16 %v3328, %v3324
      %v3497 = vpack.c.b16 %v3329, %v3325
      %v3498 = vpack.c.b16 %v3330, %v3326
      %v3499 = vpack.c.b16 %v3335, %v3331
      %v3500 = vpack.c.b16 %v3336, %v3332
      %v3501 = vpack.c.b16 %v3337, %v3333
      %v3502 = vpack.c.b16 %v3338, %v3334
      %v3503 = vpack.c.b16 %v3343, %v3339
      %v3504 = vpack.c.b16 %v3344, %v3340
      %v3505 = vpack.c.b16 %v3345, %v3341
      %v3506 = vpack.c.b16 %v3346, %v3342
      %v3507 = vpack.c.b16 %v3351, %v3347
      %v3508 = vpack.c.b16 %v3352, %v3348
      %v3509 = vpack.c.b16 %v3353, %v3349
      %v3510 = vpack.c.b16 %v3354, %v3350
      %v3511 = vpack.c.b16 %v3359, %v3355
      %v3512 = vpack.c.b16 %v3360, %v3356
      %v3513 = vpack.c.b16 %v3361, %v3357
      %v3514 = vpack.c.b16 %v3362, %v3358
      %v3515 = vpack.c.b16 %v3367, %v3363
      %v3516 = vpack.c.b16 %v3368, %v3364
      %v3517 = vpack.c.b16 %v3369, %v3365
      %v3518 = vpack.c.b16 %v3370, %v3366
      %v3519 = vpack.c.b16 %v3375, %v3371
      %v3520 = vpack.c.b16 %v3376, %v3372
      %v3521 = vpack.c.b16 %v3377, %v3373
      %v3522 = vpack.c.b16 %v3378, %v3374
      %v3523 = vpack.c.b16 %v3383, %v3379
      %v3524 = vpack.c.b16 %v3384, %v3380
      %v3525 = vpack.c.b16 %v3385, %v3381
      %v3526 = vpack.c.b16 %v3386, %v3382
      %v3527 = vpack.c.b16 %v3391, %v3387
      %v3528 = vpack.c.b16 %v3392, %v3388
      %v3529 = vpack.c.b16 %v3393, %v3389
      %v3530 = vpack.c.b16 %v3394, %v3390
      %v3531 = vpack.c.b16 %v3399, %v3395
      %v3532 = vpack.c.b16 %v3400, %v3396
      %v3533 = vpack.c.b16 %v3401, %v3397
      %v3534 = vpack.c.b16 %v3402, %v3398
      %v3535 = vpack.c.b16 %v3407, %v3403
      %v3536 = vpack.c.b16 %v3408, %v3404
      %v3537 = vpack.c.b16 %v3409, %v3405
      %v3538 = vpack.c.b16 %v3410, %v3406
      %3667 = vmatpush.bf16.msra.mxu0 %v3439
      %3668 = vmatpush.bf16.msra.mxu0 %v3435
      %3669 = vmatpush.bf16.msra.mxu0 %v3431
      %3670 = vmatpush.bf16.msra.mxu0 %v3427
      %3671 = vmatpush.bf16.msra.mxu0 %v3423
      %3672 = vmatpush.bf16.msra.mxu0 %v3419
      %3673 = vmatpush.bf16.msra.mxu0 %v3415
      %3674 = vmatpush.bf16.msra.mxu0 %v3411
      %3675 = vmatmul.bf16.gmra.mxu0 %v2963
      %v3676 = vpop.f32.mrf.mxu0
      %v3677 = vadd.f32 0.0, %v3676
      %v3678 = vpop.f32.mrf.mxu0
      %v3679 = vadd.f32 0.0, %v3678
      %3680 = vmatmul.bf16.gmra.mxu0 %v2967
      %v3681 = vpop.f32.mrf.mxu0
      %v3682 = vadd.f32 0.0, %v3681
      %v3683 = vpop.f32.mrf.mxu0
      %v3684 = vadd.f32 0.0, %v3683
      %3685 = vmatmul.bf16.gmra.mxu0 %v2971
      %v3686 = vpop.f32.mrf.mxu0
      %v3687 = vadd.f32 0.0, %v3686
      %v3688 = vpop.f32.mrf.mxu0
      %v3689 = vadd.f32 0.0, %v3688
      %3690 = vmatmul.bf16.gmra.mxu0 %v2975
      %v3691 = vpop.f32.mrf.mxu0
      %v3692 = vadd.f32 0.0, %v3691
      %v3693 = vpop.f32.mrf.mxu0
      %v3694 = vadd.f32 0.0, %v3693
      %3695 = vmatmul.bf16.gmra.mxu0 %v2979
      %v3696 = vpop.f32.mrf.mxu0
      %v3697 = vadd.f32 0.0, %v3696
      %v3698 = vpop.f32.mrf.mxu0
      %v3699 = vadd.f32 0.0, %v3698
      %3700 = vmatmul.bf16.gmra.mxu0 %v2983
      %v3701 = vpop.f32.mrf.mxu0
      %v3702 = vadd.f32 0.0, %v3701
      %v3703 = vpop.f32.mrf.mxu0
      %v3704 = vadd.f32 0.0, %v3703
      %3705 = vmatmul.bf16.gmra.mxu0 %v2987
      %v3706 = vpop.f32.mrf.mxu0
      %v3707 = vadd.f32 0.0, %v3706
      %v3708 = vpop.f32.mrf.mxu0
      %v3709 = vadd.f32 0.0, %v3708
      %3710 = vmatmul.bf16.gmra.mxu0 %v2991
      %v3711 = vpop.f32.mrf.mxu0
      %v3712 = vadd.f32 0.0, %v3711
      %v3713 = vpop.f32.mrf.mxu0
      %v3714 = vadd.f32 0.0, %v3713
      %3715 = vdwg.mxu0
      %3716 = vmatpush.bf16.msra.mxu0 %v3471
      %3717 = vmatpush.bf16.msra.mxu0 %v3467
      %3718 = vmatpush.bf16.msra.mxu0 %v3463
      %3719 = vmatpush.bf16.msra.mxu0 %v3459
      %3720 = vmatpush.bf16.msra.mxu0 %v3455
      %3721 = vmatpush.bf16.msra.mxu0 %v3451
      %3722 = vmatpush.bf16.msra.mxu0 %v3447
      %3723 = vmatpush.bf16.msra.mxu0 %v3443
      %3724 = vmatmul.bf16.gmra.mxu0 %v2964
      %v3725 = vpop.f32.mrf.mxu0
      %v3726 = vadd.f32 %v3677, %v3725
      %v3727 = vpop.f32.mrf.mxu0
      %v3728 = vadd.f32 %v3679, %v3727
      %3729 = vmatmul.bf16.gmra.mxu0 %v2968
      %v3730 = vpop.f32.mrf.mxu0
      %v3731 = vadd.f32 %v3682, %v3730
      %v3732 = vpop.f32.mrf.mxu0
      %v3733 = vadd.f32 %v3684, %v3732
      %3734 = vmatmul.bf16.gmra.mxu0 %v2972
      %v3735 = vpop.f32.mrf.mxu0
      %v3736 = vadd.f32 %v3687, %v3735
      %v3737 = vpop.f32.mrf.mxu0
      %v3738 = vadd.f32 %v3689, %v3737
      %3739 = vmatmul.bf16.gmra.mxu0 %v2976
      %v3740 = vpop.f32.mrf.mxu0
      %v3741 = vadd.f32 %v3692, %v3740
      %v3742 = vpop.f32.mrf.mxu0
      %v3743 = vadd.f32 %v3694, %v3742
      %3744 = vmatmul.bf16.gmra.mxu0 %v2980
      %v3745 = vpop.f32.mrf.mxu0
      %v3746 = vadd.f32 %v3697, %v3745
      %v3747 = vpop.f32.mrf.mxu0
      %v3748 = vadd.f32 %v3699, %v3747
      %3749 = vmatmul.bf16.gmra.mxu0 %v2984
      %v3750 = vpop.f32.mrf.mxu0
      %v3751 = vadd.f32 %v3702, %v3750
      %v3752 = vpop.f32.mrf.mxu0
      %v3753 = vadd.f32 %v3704, %v3752
      %3754 = vmatmul.bf16.gmra.mxu0 %v2988
      %v3755 = vpop.f32.mrf.mxu0
      %v3756 = vadd.f32 %v3707, %v3755
      %v3757 = vpop.f32.mrf.mxu0
      %v3758 = vadd.f32 %v3709, %v3757
      %3759 = vmatmul.bf16.gmra.mxu0 %v2992
      %v3760 = vpop.f32.mrf.mxu0
      %v3761 = vadd.f32 %v3712, %v3760
      %v3762 = vpop.f32.mrf.mxu0
      %v3763 = vadd.f32 %v3714, %v3762
      %3764 = vdwg.mxu0
      %3765 = vmatpush.bf16.msra.mxu0 %v3503
      %3766 = vmatpush.bf16.msra.mxu0 %v3499
      %3767 = vmatpush.bf16.msra.mxu0 %v3495
      %3768 = vmatpush.bf16.msra.mxu0 %v3491
      %3769 = vmatpush.bf16.msra.mxu0 %v3487
      %3770 = vmatpush.bf16.msra.mxu0 %v3483
      %3771 = vmatpush.bf16.msra.mxu0 %v3479
      %3772 = vmatpush.bf16.msra.mxu0 %v3475
      %3773 = vmatmul.bf16.gmra.mxu0 %v2965
      %v3774 = vpop.f32.mrf.mxu0
      %v3775 = vadd.f32 %v3726, %v3774
      %v3776 = vpop.f32.mrf.mxu0
      %v3777 = vadd.f32 %v3728, %v3776
      %3778 = vmatmul.bf16.gmra.mxu0 %v2969
      %v3779 = vpop.f32.mrf.mxu0
      %v3780 = vadd.f32 %v3731, %v3779
      %v3781 = vpop.f32.mrf.mxu0
      %v3782 = vadd.f32 %v3733, %v3781
      %3783 = vmatmul.bf16.gmra.mxu0 %v2973
      %v3784 = vpop.f32.mrf.mxu0
      %v3785 = vadd.f32 %v3736, %v3784
      %v3786 = vpop.f32.mrf.mxu0
      %v3787 = vadd.f32 %v3738, %v3786
      %3788 = vmatmul.bf16.gmra.mxu0 %v2977
      %v3789 = vpop.f32.mrf.mxu0
      %v3790 = vadd.f32 %v3741, %v3789
      %v3791 = vpop.f32.mrf.mxu0
      %v3792 = vadd.f32 %v3743, %v3791
      %3793 = vmatmul.bf16.gmra.mxu0 %v2981
      %v3794 = vpop.f32.mrf.mxu0
      %v3795 = vadd.f32 %v3746, %v3794
      %v3796 = vpop.f32.mrf.mxu0
      %v3797 = vadd.f32 %v3748, %v3796
      %3798 = vmatmul.bf16.gmra.mxu0 %v2985
      %v3799 = vpop.f32.mrf.mxu0
      %v3800 = vadd.f32 %v3751, %v3799
      %v3801 = vpop.f32.mrf.mxu0
      %v3802 = vadd.f32 %v3753, %v3801
      %3803 = vmatmul.bf16.gmra.mxu0 %v2989
      %v3804 = vpop.f32.mrf.mxu0
      %v3805 = vadd.f32 %v3756, %v3804
      %v3806 = vpop.f32.mrf.mxu0
      %v3807 = vadd.f32 %v3758, %v3806
      %3808 = vmatmul.bf16.gmra.mxu0 %v2993
      %v3809 = vpop.f32.mrf.mxu0
      %v3810 = vadd.f32 %v3761, %v3809
      %v3811 = vpop.f32.mrf.mxu0
      %v3812 = vadd.f32 %v3763, %v3811
      %3813 = vdwg.mxu0
      %3814 = vmatpush.bf16.msra.mxu0 %v3535
      %3815 = vmatpush.bf16.msra.mxu0 %v3531
      %3816 = vmatpush.bf16.msra.mxu0 %v3527
      %3817 = vmatpush.bf16.msra.mxu0 %v3523
      %3818 = vmatpush.bf16.msra.mxu0 %v3519
      %3819 = vmatpush.bf16.msra.mxu0 %v3515
      %3820 = vmatpush.bf16.msra.mxu0 %v3511
      %3821 = vmatpush.bf16.msra.mxu0 %v3507
      %3822 = vmatmul.bf16.gmra.mxu0 %v2966
      %v3823 = vpop.f32.mrf.mxu0
      %v3824 = vadd.f32 %v3775, %v3823
      %v3825 = vpop.f32.mrf.mxu0
      %v3826 = vadd.f32 %v3777, %v3825
      %3827 = vmatmul.bf16.gmra.mxu0 %v2970
      %v3828 = vpop.f32.mrf.mxu0
      %v3829 = vadd.f32 %v3780, %v3828
      %v3830 = vpop.f32.mrf.mxu0
      %v3831 = vadd.f32 %v3782, %v3830
      %3832 = vmatmul.bf16.gmra.mxu0 %v2974
      %v3833 = vpop.f32.mrf.mxu0
      %v3834 = vadd.f32 %v3785, %v3833
      %v3835 = vpop.f32.mrf.mxu0
      %v3836 = vadd.f32 %v3787, %v3835
      %3837 = vmatmul.bf16.gmra.mxu0 %v2978
      %v3838 = vpop.f32.mrf.mxu0
      %v3839 = vadd.f32 %v3790, %v3838
      %v3840 = vpop.f32.mrf.mxu0
      %v3841 = vadd.f32 %v3792, %v3840
      %3842 = vmatmul.bf16.gmra.mxu0 %v2982
      %v3843 = vpop.f32.mrf.mxu0
      %v3844 = vadd.f32 %v3795, %v3843
      %v3845 = vpop.f32.mrf.mxu0
      %v3846 = vadd.f32 %v3797, %v3845
      %3847 = vmatmul.bf16.gmra.mxu0 %v2986
      %v3848 = vpop.f32.mrf.mxu0
      %v3849 = vadd.f32 %v3800, %v3848
      %v3850 = vpop.f32.mrf.mxu0
      %v3851 = vadd.f32 %v3802, %v3850
      %3852 = vmatmul.bf16.gmra.mxu0 %v2990
      %v3853 = vpop.f32.mrf.mxu0
      %v3854 = vadd.f32 %v3805, %v3853
      %v3855 = vpop.f32.mrf.mxu0
      %v3856 = vadd.f32 %v3807, %v3855
      %3857 = vmatmul.bf16.gmra.mxu0 %v2994
      %v3858 = vpop.f32.mrf.mxu0
      %v3859 = vadd.f32 %v3810, %v3858
      %v3860 = vpop.f32.mrf.mxu0
      %v3861 = vadd.f32 %v3812, %v3860
      %3862 = vdwg.mxu0
      %3863 = vmatpush.bf16.msra.mxu0 %v3440
      %3864 = vmatpush.bf16.msra.mxu0 %v3436
      %3865 = vmatpush.bf16.msra.mxu0 %v3432
      %3866 = vmatpush.bf16.msra.mxu0 %v3428
      %3867 = vmatpush.bf16.msra.mxu0 %v3424
      %3868 = vmatpush.bf16.msra.mxu0 %v3420
      %3869 = vmatpush.bf16.msra.mxu0 %v3416
      %3870 = vmatpush.bf16.msra.mxu0 %v3412
      %3871 = vmatmul.bf16.gmra.mxu0 %v2963
      %v3872 = vpop.f32.mrf.mxu0
      %v3873 = vadd.f32 0.0, %v3872
      %v3874 = vpop.f32.mrf.mxu0
      %v3875 = vadd.f32 0.0, %v3874
      %3876 = vmatmul.bf16.gmra.mxu0 %v2967
      %v3877 = vpop.f32.mrf.mxu0
      %v3878 = vadd.f32 0.0, %v3877
      %v3879 = vpop.f32.mrf.mxu0
      %v3880 = vadd.f32 0.0, %v3879
      %3881 = vmatmul.bf16.gmra.mxu0 %v2971
      %v3882 = vpop.f32.mrf.mxu0
      %v3883 = vadd.f32 0.0, %v3882
      %v3884 = vpop.f32.mrf.mxu0
      %v3885 = vadd.f32 0.0, %v3884
      %3886 = vmatmul.bf16.gmra.mxu0 %v2975
      %v3887 = vpop.f32.mrf.mxu0
      %v3888 = vadd.f32 0.0, %v3887
      %v3889 = vpop.f32.mrf.mxu0
      %v3890 = vadd.f32 0.0, %v3889
      %3891 = vmatmul.bf16.gmra.mxu0 %v2979
      %v3892 = vpop.f32.mrf.mxu0
      %v3893 = vadd.f32 0.0, %v3892
      %v3894 = vpop.f32.mrf.mxu0
      %v3895 = vadd.f32 0.0, %v3894
      %3896 = vmatmul.bf16.gmra.mxu0 %v2983
      %v3897 = vpop.f32.mrf.mxu0
      %v3898 = vadd.f32 0.0, %v3897
      %v3899 = vpop.f32.mrf.mxu0
      %v3900 = vadd.f32 0.0, %v3899
      %3901 = vmatmul.bf16.gmra.mxu0 %v2987
      %v3902 = vpop.f32.mrf.mxu0
      %v3903 = vadd.f32 0.0, %v3902
      %v3904 = vpop.f32.mrf.mxu0
      %v3905 = vadd.f32 0.0, %v3904
      %3906 = vmatmul.bf16.gmra.mxu0 %v2991
      %v3907 = vpop.f32.mrf.mxu0
      %v3908 = vadd.f32 0.0, %v3907
      %v3909 = vpop.f32.mrf.mxu0
      %v3910 = vadd.f32 0.0, %v3909
      %3911 = vdwg.mxu0
      %3912 = vmatpush.bf16.msra.mxu0 %v3472
      %3913 = vmatpush.bf16.msra.mxu0 %v3468
      %3914 = vmatpush.bf16.msra.mxu0 %v3464
      %3915 = vmatpush.bf16.msra.mxu0 %v3460
      %3916 = vmatpush.bf16.msra.mxu0 %v3456
      %3917 = vmatpush.bf16.msra.mxu0 %v3452
      %3918 = vmatpush.bf16.msra.mxu0 %v3448
      %3919 = vmatpush.bf16.msra.mxu0 %v3444
      %3920 = vmatmul.bf16.gmra.mxu0 %v2964
      %v3921 = vpop.f32.mrf.mxu0
      %v3922 = vadd.f32 %v3873, %v3921
      %v3923 = vpop.f32.mrf.mxu0
      %v3924 = vadd.f32 %v3875, %v3923
      %3925 = vmatmul.bf16.gmra.mxu0 %v2968
      %v3926 = vpop.f32.mrf.mxu0
      %v3927 = vadd.f32 %v3878, %v3926
      %v3928 = vpop.f32.mrf.mxu0
      %v3929 = vadd.f32 %v3880, %v3928
      %3930 = vmatmul.bf16.gmra.mxu0 %v2972
      %v3931 = vpop.f32.mrf.mxu0
      %v3932 = vadd.f32 %v3883, %v3931
      %v3933 = vpop.f32.mrf.mxu0
      %v3934 = vadd.f32 %v3885, %v3933
      %3935 = vmatmul.bf16.gmra.mxu0 %v2976
      %v3936 = vpop.f32.mrf.mxu0
      %v3937 = vadd.f32 %v3888, %v3936
      %v3938 = vpop.f32.mrf.mxu0
      %v3939 = vadd.f32 %v3890, %v3938
      %3940 = vmatmul.bf16.gmra.mxu0 %v2980
      %v3941 = vpop.f32.mrf.mxu0
      %v3942 = vadd.f32 %v3893, %v3941
      %v3943 = vpop.f32.mrf.mxu0
      %v3944 = vadd.f32 %v3895, %v3943
      %3945 = vmatmul.bf16.gmra.mxu0 %v2984
      %v3946 = vpop.f32.mrf.mxu0
      %v3947 = vadd.f32 %v3898, %v3946
      %v3948 = vpop.f32.mrf.mxu0
      %v3949 = vadd.f32 %v3900, %v3948
      %3950 = vmatmul.bf16.gmra.mxu0 %v2988
      %v3951 = vpop.f32.mrf.mxu0
      %v3952 = vadd.f32 %v3903, %v3951
      %v3953 = vpop.f32.mrf.mxu0
      %v3954 = vadd.f32 %v3905, %v3953
      %3955 = vmatmul.bf16.gmra.mxu0 %v2992
      %v3956 = vpop.f32.mrf.mxu0
      %v3957 = vadd.f32 %v3908, %v3956
      %v3958 = vpop.f32.mrf.mxu0
      %v3959 = vadd.f32 %v3910, %v3958
      %3960 = vdwg.mxu0
      %3961 = vmatpush.bf16.msra.mxu0 %v3504
      %3962 = vmatpush.bf16.msra.mxu0 %v3500
      %3963 = vmatpush.bf16.msra.mxu0 %v3496
      %3964 = vmatpush.bf16.msra.mxu0 %v3492
      %3965 = vmatpush.bf16.msra.mxu0 %v3488
      %3966 = vmatpush.bf16.msra.mxu0 %v3484
      %3967 = vmatpush.bf16.msra.mxu0 %v3480
      %3968 = vmatpush.bf16.msra.mxu0 %v3476
      %3969 = vmatmul.bf16.gmra.mxu0 %v2965
      %v3970 = vpop.f32.mrf.mxu0
      %v3971 = vadd.f32 %v3922, %v3970
      %v3972 = vpop.f32.mrf.mxu0
      %v3973 = vadd.f32 %v3924, %v3972
      %3974 = vmatmul.bf16.gmra.mxu0 %v2969
      %v3975 = vpop.f32.mrf.mxu0
      %v3976 = vadd.f32 %v3927, %v3975
      %v3977 = vpop.f32.mrf.mxu0
      %v3978 = vadd.f32 %v3929, %v3977
      %3979 = vmatmul.bf16.gmra.mxu0 %v2973
      %v3980 = vpop.f32.mrf.mxu0
      %v3981 = vadd.f32 %v3932, %v3980
      %v3982 = vpop.f32.mrf.mxu0
      %v3983 = vadd.f32 %v3934, %v3982
      %3984 = vmatmul.bf16.gmra.mxu0 %v2977
      %v3985 = vpop.f32.mrf.mxu0
      %v3986 = vadd.f32 %v3937, %v3985
      %v3987 = vpop.f32.mrf.mxu0
      %v3988 = vadd.f32 %v3939, %v3987
      %3989 = vmatmul.bf16.gmra.mxu0 %v2981
      %v3990 = vpop.f32.mrf.mxu0
      %v3991 = vadd.f32 %v3942, %v3990
      %v3992 = vpop.f32.mrf.mxu0
      %v3993 = vadd.f32 %v3944, %v3992
      %3994 = vmatmul.bf16.gmra.mxu0 %v2985
      %v3995 = vpop.f32.mrf.mxu0
      %v3996 = vadd.f32 %v3947, %v3995
      %v3997 = vpop.f32.mrf.mxu0
      %v3998 = vadd.f32 %v3949, %v3997
      %3999 = vmatmul.bf16.gmra.mxu0 %v2989
      %v4000 = vpop.f32.mrf.mxu0
      %v4001 = vadd.f32 %v3952, %v4000
      %v4002 = vpop.f32.mrf.mxu0
      %v4003 = vadd.f32 %v3954, %v4002
      %4004 = vmatmul.bf16.gmra.mxu0 %v2993
      %v4005 = vpop.f32.mrf.mxu0
      %v4006 = vadd.f32 %v3957, %v4005
      %v4007 = vpop.f32.mrf.mxu0
      %v4008 = vadd.f32 %v3959, %v4007
      %4009 = vdwg.mxu0
      %4010 = vmatpush.bf16.msra.mxu0 %v3536
      %4011 = vmatpush.bf16.msra.mxu0 %v3532
      %4012 = vmatpush.bf16.msra.mxu0 %v3528
      %4013 = vmatpush.bf16.msra.mxu0 %v3524
      %4014 = vmatpush.bf16.msra.mxu0 %v3520
      %4015 = vmatpush.bf16.msra.mxu0 %v3516
      %4016 = vmatpush.bf16.msra.mxu0 %v3512
      %4017 = vmatpush.bf16.msra.mxu0 %v3508
      %4018 = vmatmul.bf16.gmra.mxu0 %v2966
      %v4019 = vpop.f32.mrf.mxu0
      %v4020 = vadd.f32 %v3971, %v4019
      %v4021 = vpop.f32.mrf.mxu0
      %v4022 = vadd.f32 %v3973, %v4021
      %4023 = vmatmul.bf16.gmra.mxu0 %v2970
      %v4024 = vpop.f32.mrf.mxu0
      %v4025 = vadd.f32 %v3976, %v4024
      %v4026 = vpop.f32.mrf.mxu0
      %v4027 = vadd.f32 %v3978, %v4026
      %4028 = vmatmul.bf16.gmra.mxu0 %v2974
      %v4029 = vpop.f32.mrf.mxu0
      %v4030 = vadd.f32 %v3981, %v4029
      %v4031 = vpop.f32.mrf.mxu0
      %v4032 = vadd.f32 %v3983, %v4031
      %4033 = vmatmul.bf16.gmra.mxu0 %v2978
      %v4034 = vpop.f32.mrf.mxu0
      %v4035 = vadd.f32 %v3986, %v4034
      %v4036 = vpop.f32.mrf.mxu0
      %v4037 = vadd.f32 %v3988, %v4036
      %4038 = vmatmul.bf16.gmra.mxu0 %v2982
      %v4039 = vpop.f32.mrf.mxu0
      %v4040 = vadd.f32 %v3991, %v4039
      %v4041 = vpop.f32.mrf.mxu0
      %v4042 = vadd.f32 %v3993, %v4041
      %4043 = vmatmul.bf16.gmra.mxu0 %v2986
      %v4044 = vpop.f32.mrf.mxu0
      %v4045 = vadd.f32 %v3996, %v4044
      %v4046 = vpop.f32.mrf.mxu0
      %v4047 = vadd.f32 %v3998, %v4046
      %4048 = vmatmul.bf16.gmra.mxu0 %v2990
      %v4049 = vpop.f32.mrf.mxu0
      %v4050 = vadd.f32 %v4001, %v4049
      %v4051 = vpop.f32.mrf.mxu0
      %v4052 = vadd.f32 %v4003, %v4051
      %4053 = vmatmul.bf16.gmra.mxu0 %v2994
      %v4054 = vpop.f32.mrf.mxu0
      %v4055 = vadd.f32 %v4006, %v4054
      %v4056 = vpop.f32.mrf.mxu0
      %v4057 = vadd.f32 %v4008, %v4056
      %4058 = vdwg.mxu0
      %4059 = vmatpush.bf16.msra.mxu0 %v3441
      %4060 = vmatpush.bf16.msra.mxu0 %v3437
      %4061 = vmatpush.bf16.msra.mxu0 %v3433
      %4062 = vmatpush.bf16.msra.mxu0 %v3429
      %4063 = vmatpush.bf16.msra.mxu0 %v3425
      %4064 = vmatpush.bf16.msra.mxu0 %v3421
      %4065 = vmatpush.bf16.msra.mxu0 %v3417
      %4066 = vmatpush.bf16.msra.mxu0 %v3413
      %4067 = vmatmul.bf16.gmra.mxu0 %v2963
      %v4068 = vpop.f32.mrf.mxu0
      %v4069 = vadd.f32 0.0, %v4068
      %v4070 = vpop.f32.mrf.mxu0
      %v4071 = vadd.f32 0.0, %v4070
      %4072 = vmatmul.bf16.gmra.mxu0 %v2967
      %v4073 = vpop.f32.mrf.mxu0
      %v4074 = vadd.f32 0.0, %v4073
      %v4075 = vpop.f32.mrf.mxu0
      %v4076 = vadd.f32 0.0, %v4075
      %4077 = vmatmul.bf16.gmra.mxu0 %v2971
      %v4078 = vpop.f32.mrf.mxu0
      %v4079 = vadd.f32 0.0, %v4078
      %v4080 = vpop.f32.mrf.mxu0
      %v4081 = vadd.f32 0.0, %v4080
      %4082 = vmatmul.bf16.gmra.mxu0 %v2975
      %v4083 = vpop.f32.mrf.mxu0
      %v4084 = vadd.f32 0.0, %v4083
      %v4085 = vpop.f32.mrf.mxu0
      %v4086 = vadd.f32 0.0, %v4085
      %4087 = vmatmul.bf16.gmra.mxu0 %v2979
      %v4088 = vpop.f32.mrf.mxu0
      %v4089 = vadd.f32 0.0, %v4088
      %v4090 = vpop.f32.mrf.mxu0
      %v4091 = vadd.f32 0.0, %v4090
      %4092 = vmatmul.bf16.gmra.mxu0 %v2983
      %v4093 = vpop.f32.mrf.mxu0
      %v4094 = vadd.f32 0.0, %v4093
      %v4095 = vpop.f32.mrf.mxu0
      %v4096 = vadd.f32 0.0, %v4095
      %4097 = vmatmul.bf16.gmra.mxu0 %v2987
      %v4098 = vpop.f32.mrf.mxu0
      %v4099 = vadd.f32 0.0, %v4098
      %v4100 = vpop.f32.mrf.mxu0
      %v4101 = vadd.f32 0.0, %v4100
      %4102 = vmatmul.bf16.gmra.mxu0 %v2991
      %v4103 = vpop.f32.mrf.mxu0
      %v4104 = vadd.f32 0.0, %v4103
      %v4105 = vpop.f32.mrf.mxu0
      %v4106 = vadd.f32 0.0, %v4105
      %4107 = vdwg.mxu0
      %4108 = vmatpush.bf16.msra.mxu0 %v3473
      %4109 = vmatpush.bf16.msra.mxu0 %v3469
      %4110 = vmatpush.bf16.msra.mxu0 %v3465
      %4111 = vmatpush.bf16.msra.mxu0 %v3461
      %4112 = vmatpush.bf16.msra.mxu0 %v3457
      %4113 = vmatpush.bf16.msra.mxu0 %v3453
      %4114 = vmatpush.bf16.msra.mxu0 %v3449
      %4115 = vmatpush.bf16.msra.mxu0 %v3445
      %4116 = vmatmul.bf16.gmra.mxu0 %v2964
      %v4117 = vpop.f32.mrf.mxu0
      %v4118 = vadd.f32 %v4069, %v4117
      %v4119 = vpop.f32.mrf.mxu0
      %v4120 = vadd.f32 %v4071, %v4119
      %4121 = vmatmul.bf16.gmra.mxu0 %v2968
      %v4122 = vpop.f32.mrf.mxu0
      %v4123 = vadd.f32 %v4074, %v4122
      %v4124 = vpop.f32.mrf.mxu0
      %v4125 = vadd.f32 %v4076, %v4124
      %4126 = vmatmul.bf16.gmra.mxu0 %v2972
      %v4127 = vpop.f32.mrf.mxu0
      %v4128 = vadd.f32 %v4079, %v4127
      %v4129 = vpop.f32.mrf.mxu0
      %v4130 = vadd.f32 %v4081, %v4129
      %4131 = vmatmul.bf16.gmra.mxu0 %v2976
      %v4132 = vpop.f32.mrf.mxu0
      %v4133 = vadd.f32 %v4084, %v4132
      %v4134 = vpop.f32.mrf.mxu0
      %v4135 = vadd.f32 %v4086, %v4134
      %4136 = vmatmul.bf16.gmra.mxu0 %v2980
      %v4137 = vpop.f32.mrf.mxu0
      %v4138 = vadd.f32 %v4089, %v4137
      %v4139 = vpop.f32.mrf.mxu0
      %v4140 = vadd.f32 %v4091, %v4139
      %4141 = vmatmul.bf16.gmra.mxu0 %v2984
      %v4142 = vpop.f32.mrf.mxu0
      %v4143 = vadd.f32 %v4094, %v4142
      %v4144 = vpop.f32.mrf.mxu0
      %v4145 = vadd.f32 %v4096, %v4144
      %4146 = vmatmul.bf16.gmra.mxu0 %v2988
      %v4147 = vpop.f32.mrf.mxu0
      %v4148 = vadd.f32 %v4099, %v4147
      %v4149 = vpop.f32.mrf.mxu0
      %v4150 = vadd.f32 %v4101, %v4149
      %4151 = vmatmul.bf16.gmra.mxu0 %v2992
      %v4152 = vpop.f32.mrf.mxu0
      %v4153 = vadd.f32 %v4104, %v4152
      %v4154 = vpop.f32.mrf.mxu0
      %v4155 = vadd.f32 %v4106, %v4154
      %4156 = vdwg.mxu0
      %4157 = vmatpush.bf16.msra.mxu0 %v3505
      %4158 = vmatpush.bf16.msra.mxu0 %v3501
      %4159 = vmatpush.bf16.msra.mxu0 %v3497
      %4160 = vmatpush.bf16.msra.mxu0 %v3493
      %4161 = vmatpush.bf16.msra.mxu0 %v3489
      %4162 = vmatpush.bf16.msra.mxu0 %v3485
      %4163 = vmatpush.bf16.msra.mxu0 %v3481
      %4164 = vmatpush.bf16.msra.mxu0 %v3477
      %4165 = vmatmul.bf16.gmra.mxu0 %v2965
      %v4166 = vpop.f32.mrf.mxu0
      %v4167 = vadd.f32 %v4118, %v4166
      %v4168 = vpop.f32.mrf.mxu0
      %v4169 = vadd.f32 %v4120, %v4168
      %4170 = vmatmul.bf16.gmra.mxu0 %v2969
      %v4171 = vpop.f32.mrf.mxu0
      %v4172 = vadd.f32 %v4123, %v4171
      %v4173 = vpop.f32.mrf.mxu0
      %v4174 = vadd.f32 %v4125, %v4173
      %4175 = vmatmul.bf16.gmra.mxu0 %v2973
      %v4176 = vpop.f32.mrf.mxu0
      %v4177 = vadd.f32 %v4128, %v4176
      %v4178 = vpop.f32.mrf.mxu0
      %v4179 = vadd.f32 %v4130, %v4178
      %4180 = vmatmul.bf16.gmra.mxu0 %v2977
      %v4181 = vpop.f32.mrf.mxu0
      %v4182 = vadd.f32 %v4133, %v4181
      %v4183 = vpop.f32.mrf.mxu0
      %v4184 = vadd.f32 %v4135, %v4183
      %4185 = vmatmul.bf16.gmra.mxu0 %v2981
      %v4186 = vpop.f32.mrf.mxu0
      %v4187 = vadd.f32 %v4138, %v4186
      %v4188 = vpop.f32.mrf.mxu0
      %v4189 = vadd.f32 %v4140, %v4188
      %4190 = vmatmul.bf16.gmra.mxu0 %v2985
      %v4191 = vpop.f32.mrf.mxu0
      %v4192 = vadd.f32 %v4143, %v4191
      %v4193 = vpop.f32.mrf.mxu0
      %v4194 = vadd.f32 %v4145, %v4193
      %4195 = vmatmul.bf16.gmra.mxu0 %v2989
      %v4196 = vpop.f32.mrf.mxu0
      %v4197 = vadd.f32 %v4148, %v4196
      %v4198 = vpop.f32.mrf.mxu0
      %v4199 = vadd.f32 %v4150, %v4198
      %4200 = vmatmul.bf16.gmra.mxu0 %v2993
      %v4201 = vpop.f32.mrf.mxu0
      %v4202 = vadd.f32 %v4153, %v4201
      %v4203 = vpop.f32.mrf.mxu0
      %v4204 = vadd.f32 %v4155, %v4203
      %4205 = vdwg.mxu0
      %4206 = vmatpush.bf16.msra.mxu0 %v3537
      %4207 = vmatpush.bf16.msra.mxu0 %v3533
      %4208 = vmatpush.bf16.msra.mxu0 %v3529
      %4209 = vmatpush.bf16.msra.mxu0 %v3525
      %4210 = vmatpush.bf16.msra.mxu0 %v3521
      %4211 = vmatpush.bf16.msra.mxu0 %v3517
      %4212 = vmatpush.bf16.msra.mxu0 %v3513
      %4213 = vmatpush.bf16.msra.mxu0 %v3509
      %4214 = vmatmul.bf16.gmra.mxu0 %v2966
      %v4215 = vpop.f32.mrf.mxu0
      %v4216 = vadd.f32 %v4167, %v4215
      %v4217 = vpop.f32.mrf.mxu0
      %v4218 = vadd.f32 %v4169, %v4217
      %4219 = vmatmul.bf16.gmra.mxu0 %v2970
      %v4220 = vpop.f32.mrf.mxu0
      %v4221 = vadd.f32 %v4172, %v4220
      %v4222 = vpop.f32.mrf.mxu0
      %v4223 = vadd.f32 %v4174, %v4222
      %4224 = vmatmul.bf16.gmra.mxu0 %v2974
      %v4225 = vpop.f32.mrf.mxu0
      %v4226 = vadd.f32 %v4177, %v4225
      %v4227 = vpop.f32.mrf.mxu0
      %v4228 = vadd.f32 %v4179, %v4227
      %4229 = vmatmul.bf16.gmra.mxu0 %v2978
      %v4230 = vpop.f32.mrf.mxu0
      %v4231 = vadd.f32 %v4182, %v4230
      %v4232 = vpop.f32.mrf.mxu0
      %v4233 = vadd.f32 %v4184, %v4232
      %4234 = vmatmul.bf16.gmra.mxu0 %v2982
      %v4235 = vpop.f32.mrf.mxu0
      %v4236 = vadd.f32 %v4187, %v4235
      %v4237 = vpop.f32.mrf.mxu0
      %v4238 = vadd.f32 %v4189, %v4237
      %4239 = vmatmul.bf16.gmra.mxu0 %v2986
      %v4240 = vpop.f32.mrf.mxu0
      %v4241 = vadd.f32 %v4192, %v4240
      %v4242 = vpop.f32.mrf.mxu0
      %v4243 = vadd.f32 %v4194, %v4242
      %4244 = vmatmul.bf16.gmra.mxu0 %v2990
      %v4245 = vpop.f32.mrf.mxu0
      %v4246 = vadd.f32 %v4197, %v4245
      %v4247 = vpop.f32.mrf.mxu0
      %v4248 = vadd.f32 %v4199, %v4247
      %4249 = vmatmul.bf16.gmra.mxu0 %v2994
      %v4250 = vpop.f32.mrf.mxu0
      %v4251 = vadd.f32 %v4202, %v4250
      %v4252 = vpop.f32.mrf.mxu0
      %v4253 = vadd.f32 %v4204, %v4252
      %4254 = vdwg.mxu0
      %4255 = vmatpush.bf16.msra.mxu0 %v3442
      %4256 = vmatpush.bf16.msra.mxu0 %v3438
      %4257 = vmatpush.bf16.msra.mxu0 %v3434
      %4258 = vmatpush.bf16.msra.mxu0 %v3430
      %4259 = vmatpush.bf16.msra.mxu0 %v3426
      %4260 = vmatpush.bf16.msra.mxu0 %v3422
      %4261 = vmatpush.bf16.msra.mxu0 %v3418
      %4262 = vmatpush.bf16.msra.mxu0 %v3414
      %4263 = vmatmul.bf16.gmra.mxu0 %v2963
      %v4264 = vpop.f32.mrf.mxu0
      %v4265 = vadd.f32 0.0, %v4264
      %v4266 = vpop.f32.mrf.mxu0
      %v4267 = vadd.f32 0.0, %v4266
      %4268 = vmatmul.bf16.gmra.mxu0 %v2967
      %v4269 = vpop.f32.mrf.mxu0
      %v4270 = vadd.f32 0.0, %v4269
      %v4271 = vpop.f32.mrf.mxu0
      %v4272 = vadd.f32 0.0, %v4271
      %4273 = vmatmul.bf16.gmra.mxu0 %v2971
      %v4274 = vpop.f32.mrf.mxu0
      %v4275 = vadd.f32 0.0, %v4274
      %v4276 = vpop.f32.mrf.mxu0
      %v4277 = vadd.f32 0.0, %v4276
      %4278 = vmatmul.bf16.gmra.mxu0 %v2975
      %v4279 = vpop.f32.mrf.mxu0
      %v4280 = vadd.f32 0.0, %v4279
      %v4281 = vpop.f32.mrf.mxu0
      %v4282 = vadd.f32 0.0, %v4281
      %4283 = vmatmul.bf16.gmra.mxu0 %v2979
      %v4284 = vpop.f32.mrf.mxu0
      %v4285 = vadd.f32 0.0, %v4284
      %v4286 = vpop.f32.mrf.mxu0
      %v4287 = vadd.f32 0.0, %v4286
      %4288 = vmatmul.bf16.gmra.mxu0 %v2983
      %v4289 = vpop.f32.mrf.mxu0
      %v4290 = vadd.f32 0.0, %v4289
      %v4291 = vpop.f32.mrf.mxu0
      %v4292 = vadd.f32 0.0, %v4291
      %4293 = vmatmul.bf16.gmra.mxu0 %v2987
      %v4294 = vpop.f32.mrf.mxu0
      %v4295 = vadd.f32 0.0, %v4294
      %v4296 = vpop.f32.mrf.mxu0
      %v4297 = vadd.f32 0.0, %v4296
      %4298 = vmatmul.bf16.gmra.mxu0 %v2991
      %v4299 = vpop.f32.mrf.mxu0
      %v4300 = vadd.f32 0.0, %v4299
      %v4301 = vpop.f32.mrf.mxu0
      %v4302 = vadd.f32 0.0, %v4301
      %4303 = vdwg.mxu0
      %4304 = vmatpush.bf16.msra.mxu0 %v3474
      %4305 = vmatpush.bf16.msra.mxu0 %v3470
      %4306 = vmatpush.bf16.msra.mxu0 %v3466
      %4307 = vmatpush.bf16.msra.mxu0 %v3462
      %4308 = vmatpush.bf16.msra.mxu0 %v3458
      %4309 = vmatpush.bf16.msra.mxu0 %v3454
      %4310 = vmatpush.bf16.msra.mxu0 %v3450
      %4311 = vmatpush.bf16.msra.mxu0 %v3446
      %4312 = vmatmul.bf16.gmra.mxu0 %v2964
      %v4313 = vpop.f32.mrf.mxu0
      %v4314 = vadd.f32 %v4265, %v4313
      %v4315 = vpop.f32.mrf.mxu0
      %v4316 = vadd.f32 %v4267, %v4315
      %4317 = vmatmul.bf16.gmra.mxu0 %v2968
      %v4318 = vpop.f32.mrf.mxu0
      %v4319 = vadd.f32 %v4270, %v4318
      %v4320 = vpop.f32.mrf.mxu0
      %v4321 = vadd.f32 %v4272, %v4320
      %4322 = vmatmul.bf16.gmra.mxu0 %v2972
      %v4323 = vpop.f32.mrf.mxu0
      %v4324 = vadd.f32 %v4275, %v4323
      %v4325 = vpop.f32.mrf.mxu0
      %v4326 = vadd.f32 %v4277, %v4325
      %4327 = vmatmul.bf16.gmra.mxu0 %v2976
      %v4328 = vpop.f32.mrf.mxu0
      %v4329 = vadd.f32 %v4280, %v4328
      %v4330 = vpop.f32.mrf.mxu0
      %v4331 = vadd.f32 %v4282, %v4330
      %4332 = vmatmul.bf16.gmra.mxu0 %v2980
      %v4333 = vpop.f32.mrf.mxu0
      %v4334 = vadd.f32 %v4285, %v4333
      %v4335 = vpop.f32.mrf.mxu0
      %v4336 = vadd.f32 %v4287, %v4335
      %4337 = vmatmul.bf16.gmra.mxu0 %v2984
      %v4338 = vpop.f32.mrf.mxu0
      %v4339 = vadd.f32 %v4290, %v4338
      %v4340 = vpop.f32.mrf.mxu0
      %v4341 = vadd.f32 %v4292, %v4340
      %4342 = vmatmul.bf16.gmra.mxu0 %v2988
      %v4343 = vpop.f32.mrf.mxu0
      %v4344 = vadd.f32 %v4295, %v4343
      %v4345 = vpop.f32.mrf.mxu0
      %v4346 = vadd.f32 %v4297, %v4345
      %4347 = vmatmul.bf16.gmra.mxu0 %v2992
      %v4348 = vpop.f32.mrf.mxu0
      %v4349 = vadd.f32 %v4300, %v4348
      %v4350 = vpop.f32.mrf.mxu0
      %v4351 = vadd.f32 %v4302, %v4350
      %4352 = vdwg.mxu0
      %4353 = vmatpush.bf16.msra.mxu0 %v3506
      %4354 = vmatpush.bf16.msra.mxu0 %v3502
      %4355 = vmatpush.bf16.msra.mxu0 %v3498
      %4356 = vmatpush.bf16.msra.mxu0 %v3494
      %4357 = vmatpush.bf16.msra.mxu0 %v3490
      %4358 = vmatpush.bf16.msra.mxu0 %v3486
      %4359 = vmatpush.bf16.msra.mxu0 %v3482
      %4360 = vmatpush.bf16.msra.mxu0 %v3478
      %4361 = vmatmul.bf16.gmra.mxu0 %v2965
      %v4362 = vpop.f32.mrf.mxu0
      %v4363 = vadd.f32 %v4314, %v4362
      %v4364 = vpop.f32.mrf.mxu0
      %v4365 = vadd.f32 %v4316, %v4364
      %4366 = vmatmul.bf16.gmra.mxu0 %v2969
      %v4367 = vpop.f32.mrf.mxu0
      %v4368 = vadd.f32 %v4319, %v4367
      %v4369 = vpop.f32.mrf.mxu0
      %v4370 = vadd.f32 %v4321, %v4369
      %4371 = vmatmul.bf16.gmra.mxu0 %v2973
      %v4372 = vpop.f32.mrf.mxu0
      %v4373 = vadd.f32 %v4324, %v4372
      %v4374 = vpop.f32.mrf.mxu0
      %v4375 = vadd.f32 %v4326, %v4374
      %4376 = vmatmul.bf16.gmra.mxu0 %v2977
      %v4377 = vpop.f32.mrf.mxu0
      %v4378 = vadd.f32 %v4329, %v4377
      %v4379 = vpop.f32.mrf.mxu0
      %v4380 = vadd.f32 %v4331, %v4379
      %4381 = vmatmul.bf16.gmra.mxu0 %v2981
      %v4382 = vpop.f32.mrf.mxu0
      %v4383 = vadd.f32 %v4334, %v4382
      %v4384 = vpop.f32.mrf.mxu0
      %v4385 = vadd.f32 %v4336, %v4384
      %4386 = vmatmul.bf16.gmra.mxu0 %v2985
      %v4387 = vpop.f32.mrf.mxu0
      %v4388 = vadd.f32 %v4339, %v4387
      %v4389 = vpop.f32.mrf.mxu0
      %v4390 = vadd.f32 %v4341, %v4389
      %4391 = vmatmul.bf16.gmra.mxu0 %v2989
      %v4392 = vpop.f32.mrf.mxu0
      %v4393 = vadd.f32 %v4344, %v4392
      %v4394 = vpop.f32.mrf.mxu0
      %v4395 = vadd.f32 %v4346, %v4394
      %4396 = vmatmul.bf16.gmra.mxu0 %v2993
      %v4397 = vpop.f32.mrf.mxu0
      %v4398 = vadd.f32 %v4349, %v4397
      %v4399 = vpop.f32.mrf.mxu0
      %v4400 = vadd.f32 %v4351, %v4399
      %4401 = vdwg.mxu0
      %4402 = vmatpush.bf16.msra.mxu0 %v3538
      %4403 = vmatpush.bf16.msra.mxu0 %v3534
      %4404 = vmatpush.bf16.msra.mxu0 %v3530
      %4405 = vmatpush.bf16.msra.mxu0 %v3526
      %4406 = vmatpush.bf16.msra.mxu0 %v3522
      %4407 = vmatpush.bf16.msra.mxu0 %v3518
      %4408 = vmatpush.bf16.msra.mxu0 %v3514
      %4409 = vmatpush.bf16.msra.mxu0 %v3510
      %4410 = vmatmul.bf16.gmra.mxu0 %v2966
      %v4411 = vpop.f32.mrf.mxu0
      %v4412 = vadd.f32 %v4363, %v4411
      %v4413 = vpop.f32.mrf.mxu0
      %v4414 = vadd.f32 %v4365, %v4413
      %4415 = vmatmul.bf16.gmra.mxu0 %v2970
      %v4416 = vpop.f32.mrf.mxu0
      %v4417 = vadd.f32 %v4368, %v4416
      %v4418 = vpop.f32.mrf.mxu0
      %v4419 = vadd.f32 %v4370, %v4418
      %4420 = vmatmul.bf16.gmra.mxu0 %v2974
      %v4421 = vpop.f32.mrf.mxu0
      %v4422 = vadd.f32 %v4373, %v4421
      %v4423 = vpop.f32.mrf.mxu0
      %v4424 = vadd.f32 %v4375, %v4423
      %4425 = vmatmul.bf16.gmra.mxu0 %v2978
      %v4426 = vpop.f32.mrf.mxu0
      %v4427 = vadd.f32 %v4378, %v4426
      %v4428 = vpop.f32.mrf.mxu0
      %v4429 = vadd.f32 %v4380, %v4428
      %4430 = vmatmul.bf16.gmra.mxu0 %v2982
      %v4431 = vpop.f32.mrf.mxu0
      %v4432 = vadd.f32 %v4383, %v4431
      %v4433 = vpop.f32.mrf.mxu0
      %v4434 = vadd.f32 %v4385, %v4433
      %4435 = vmatmul.bf16.gmra.mxu0 %v2986
      %v4436 = vpop.f32.mrf.mxu0
      %v4437 = vadd.f32 %v4388, %v4436
      %v4438 = vpop.f32.mrf.mxu0
      %v4439 = vadd.f32 %v4390, %v4438
      %4440 = vmatmul.bf16.gmra.mxu0 %v2990
      %v4441 = vpop.f32.mrf.mxu0
      %v4442 = vadd.f32 %v4393, %v4441
      %v4443 = vpop.f32.mrf.mxu0
      %v4444 = vadd.f32 %v4395, %v4443
      %4445 = vmatmul.bf16.gmra.mxu0 %v2994
      %v4446 = vpop.f32.mrf.mxu0
      %v4447 = vadd.f32 %v4398, %v4446
      %v4448 = vpop.f32.mrf.mxu0
      %v4449 = vadd.f32 %v4400, %v4448
      %4450 = vdwg.mxu0
      %v4451 = vadd.f32 %v2835, %v3824
      %v4452 = vadd.f32 %v2836, %v4020
      %v4453 = vadd.f32 %v2837, %v4216
      %v4454 = vadd.f32 %v2838, %v4412
      %v4455 = vadd.f32 %v2839, %v3826
      %v4456 = vadd.f32 %v2840, %v4022
      %v4457 = vadd.f32 %v2841, %v4218
      %v4458 = vadd.f32 %v2842, %v4414
      %v4459 = vadd.f32 %v2843, %v3829
      %v4460 = vadd.f32 %v2844, %v4025
      %v4461 = vadd.f32 %v2845, %v4221
      %v4462 = vadd.f32 %v2846, %v4417
      %v4463 = vadd.f32 %v2847, %v3831
      %v4464 = vadd.f32 %v2848, %v4027
      %v4465 = vadd.f32 %v2849, %v4223
      %v4466 = vadd.f32 %v2850, %v4419
      %v4467 = vadd.f32 %v2851, %v3834
      %v4468 = vadd.f32 %v2852, %v4030
      %v4469 = vadd.f32 %v2853, %v4226
      %v4470 = vadd.f32 %v2854, %v4422
      %v4471 = vadd.f32 %v2855, %v3836
      %v4472 = vadd.f32 %v2856, %v4032
      %v4473 = vadd.f32 %v2857, %v4228
      %v4474 = vadd.f32 %v2858, %v4424
      %v4475 = vadd.f32 %v2859, %v3839
      %v4476 = vadd.f32 %v2860, %v4035
      %v4477 = vadd.f32 %v2861, %v4231
      %v4478 = vadd.f32 %v2862, %v4427
      %v4479 = vadd.f32 %v2863, %v3841
      %v4480 = vadd.f32 %v2864, %v4037
      %v4481 = vadd.f32 %v2865, %v4233
      %v4482 = vadd.f32 %v2866, %v4429
      %v4483 = vadd.f32 %v2867, %v3844
      %v4484 = vadd.f32 %v2868, %v4040
      %v4485 = vadd.f32 %v2869, %v4236
      %v4486 = vadd.f32 %v2870, %v4432
      %v4487 = vadd.f32 %v2871, %v3846
      %v4488 = vadd.f32 %v2872, %v4042
      %v4489 = vadd.f32 %v2873, %v4238
      %v4490 = vadd.f32 %v2874, %v4434
      %v4491 = vadd.f32 %v2875, %v3849
      %v4492 = vadd.f32 %v2876, %v4045
      %v4493 = vadd.f32 %v2877, %v4241
      %v4494 = vadd.f32 %v2878, %v4437
      %v4495 = vadd.f32 %v2879, %v3851
      %v4496 = vadd.f32 %v2880, %v4047
      %v4497 = vadd.f32 %v2881, %v4243
      %v4498 = vadd.f32 %v2882, %v4439
      %v4499 = vadd.f32 %v2883, %v3854
      %v4500 = vadd.f32 %v2884, %v4050
      %v4501 = vadd.f32 %v2885, %v4246
      %v4502 = vadd.f32 %v2886, %v4442
      %v4503 = vadd.f32 %v2887, %v3856
      %v4504 = vadd.f32 %v2888, %v4052
      %v4505 = vadd.f32 %v2889, %v4248
      %v4506 = vadd.f32 %v2890, %v4444
      %v4507 = vadd.f32 %v2891, %v3859
      %v4508 = vadd.f32 %v2892, %v4055
      %v4509 = vadd.f32 %v2893, %v4251
      %v4510 = vadd.f32 %v2894, %v4447
      %v4511 = vadd.f32 %v2895, %v3861
      %v4512 = vadd.f32 %v2896, %v4057
      %v4513 = vadd.f32 %v2897, %v4253
      %v4514 = vadd.f32 %v2898, %v4449
      %4515 = vst [vmem:[#allocation2] sm:$0xff] %v4451
      %4516 = vst [vmem:[#allocation2 + $0x8] sm:$0xff] %v4452
      %4517 = vst [vmem:[#allocation2 + $0x10] sm:$0xff] %v4453
      %4518 = vst [vmem:[#allocation2 + $0x18] sm:$0xff] %v4454
      %4519 = vst [vmem:[#allocation2 + $0x20] sm:$0xff] %v4455
      %4520 = vst [vmem:[#allocation2 + $0x28] sm:$0xff] %v4456
      %4521 = vst [vmem:[#allocation2 + $0x30] sm:$0xff] %v4457
      %4522 = vst [vmem:[#allocation2 + $0x38] sm:$0xff] %v4458
      %4523 = vst [vmem:[#allocation2 + $0x40] sm:$0xff] %v4459
      %4524 = vst [vmem:[#allocation2 + $0x48] sm:$0xff] %v4460
      %4525 = vst [vmem:[#allocation2 + $0x50] sm:$0xff] %v4461
      %4526 = vst [vmem:[#allocation2 + $0x58] sm:$0xff] %v4462
      %4527 = vst [vmem:[#allocation2 + $0x60] sm:$0xff] %v4463
      %4528 = vst [vmem:[#allocation2 + $0x68] sm:$0xff] %v4464
      %4529 = vst [vmem:[#allocation2 + $0x70] sm:$0xff] %v4465
      %4530 = vst [vmem:[#allocation2 + $0x78] sm:$0xff] %v4466
      %4531 = vst [vmem:[#allocation2 + $0x80] sm:$0xff] %v4467
      %4532 = vst [vmem:[#allocation2 + $0x88] sm:$0xff] %v4468
      %4533 = vst [vmem:[#allocation2 + $0x90] sm:$0xff] %v4469
      %4534 = vst [vmem:[#allocation2 + $0x98] sm:$0xff] %v4470
      %4535 = vst [vmem:[#allocation2 + $0xa0] sm:$0xff] %v4471
      %4536 = vst [vmem:[#allocation2 + $0xa8] sm:$0xff] %v4472
      %4537 = vst [vmem:[#allocation2 + $0xb0] sm:$0xff] %v4473
      %4538 = vst [vmem:[#allocation2 + $0xb8] sm:$0xff] %v4474
      %4539 = vst [vmem:[#allocation2 + $0xc0] sm:$0xff] %v4475
      %4540 = vst [vmem:[#allocation2 + $0xc8] sm:$0xff] %v4476
      %4541 = vst [vmem:[#allocation2 + $0xd0] sm:$0xff] %v4477
      %4542 = vst [vmem:[#allocation2 + $0xd8] sm:$0xff] %v4478
      %4543 = vst [vmem:[#allocation2 + $0xe0] sm:$0xff] %v4479
      %4544 = vst [vmem:[#allocation2 + $0xe8] sm:$0xff] %v4480
      %4545 = vst [vmem:[#allocation2 + $0xf0] sm:$0xff] %v4481
      %4546 = vst [vmem:[#allocation2 + $0xf8] sm:$0xff] %v4482
      %4547 = vst [vmem:[#allocation2 + $0x100] sm:$0xff] %v4483
      %4548 = vst [vmem:[#allocation2 + $0x108] sm:$0xff] %v4484
      %4549 = vst [vmem:[#allocation2 + $0x110] sm:$0xff] %v4485
      %4550 = vst [vmem:[#allocation2 + $0x118] sm:$0xff] %v4486
      %4551 = vst [vmem:[#allocation2 + $0x120] sm:$0xff] %v4487
      %4552 = vst [vmem:[#allocation2 + $0x128] sm:$0xff] %v4488
      %4553 = vst [vmem:[#allocation2 + $0x130] sm:$0xff] %v4489
      %4554 = vst [vmem:[#allocation2 + $0x138] sm:$0xff] %v4490
      %4555 = vst [vmem:[#allocation2 + $0x140] sm:$0xff] %v4491
      %4556 = vst [vmem:[#allocation2 + $0x148] sm:$0xff] %v4492
      %4557 = vst [vmem:[#allocation2 + $0x150] sm:$0xff] %v4493
      %4558 = vst [vmem:[#allocation2 + $0x158] sm:$0xff] %v4494
      %4559 = vst [vmem:[#allocation2 + $0x160] sm:$0xff] %v4495
      %4560 = vst [vmem:[#allocation2 + $0x168] sm:$0xff] %v4496
      %4561 = vst [vmem:[#allocation2 + $0x170] sm:$0xff] %v4497
      %4562 = vst [vmem:[#allocation2 + $0x178] sm:$0xff] %v4498
      %4563 = vst [vmem:[#allocation2 + $0x180] sm:$0xff] %v4499
      %4564 = vst [vmem:[#allocation2 + $0x188] sm:$0xff] %v4500
      %4565 = vst [vmem:[#allocation2 + $0x190] sm:$0xff] %v4501
      %4566 = vst [vmem:[#allocation2 + $0x198] sm:$0xff] %v4502
      %4567 = vst [vmem:[#allocation2 + $0x1a0] sm:$0xff] %v4503
      %4568 = vst [vmem:[#allocation2 + $0x1a8] sm:$0xff] %v4504
      %4569 = vst [vmem:[#allocation2 + $0x1b0] sm:$0xff] %v4505
      %4570 = vst [vmem:[#allocation2 + $0x1b8] sm:$0xff] %v4506
      %4571 = vst [vmem:[#allocation2 + $0x1c0] sm:$0xff] %v4507
      %4572 = vst [vmem:[#allocation2 + $0x1c8] sm:$0xff] %v4508
      %4573 = vst [vmem:[#allocation2 + $0x1d0] sm:$0xff] %v4509
      %4574 = vst [vmem:[#allocation2 + $0x1d8] sm:$0xff] %v4510
      %4575 = vst [vmem:[#allocation2 + $0x1e0] sm:$0xff] %v4511
      %4576 = vst [vmem:[#allocation2 + $0x1e8] sm:$0xff] %v4512
      %4577 = vst [vmem:[#allocation2 + $0x1f0] sm:$0xff] %v4513
      %4578 = vst [vmem:[#allocation2 + $0x1f8] sm:$0xff] %v4514
      %p4579 = scmp.eq.s32.totalorder %s23, 3
      // Predicated region
      $region37: #{video_decoder_forward.5} parent=31 // pred_check
        %p4580 = pneg %p4579
      $region38: #{video_decoder_forward.5} parent=31 // pred_check_branch
        %4582 = sbr.rel (%p4580) target = $region40
      $region39: #{video_decoder_forward.5} parent=31 // pred_region
        %v4583 = vld [vmem:[#allocation2] sm:$0xff]
        %v4584 = vld [vmem:[#allocation2 + $0x8] sm:$0xff]
        %v4585 = vld [vmem:[#allocation2 + $0x10] sm:$0xff]
        %v4586 = vld [vmem:[#allocation2 + $0x18] sm:$0xff]
        %v4587 = vld [vmem:[#allocation2 + $0x20] sm:$0xff]
        %v4588 = vld [vmem:[#allocation2 + $0x28] sm:$0xff]
        %v4589 = vld [vmem:[#allocation2 + $0x30] sm:$0xff]
        %v4590 = vld [vmem:[#allocation2 + $0x38] sm:$0xff]
        %v4591 = vld [vmem:[#allocation2 + $0x40] sm:$0xff]
        %v4592 = vld [vmem:[#allocation2 + $0x48] sm:$0xff]
        %v4593 = vld [vmem:[#allocation2 + $0x50] sm:$0xff]
        %v4594 = vld [vmem:[#allocation2 + $0x58] sm:$0xff]
        %v4595 = vld [vmem:[#allocation2 + $0x60] sm:$0xff]
        %v4596 = vld [vmem:[#allocation2 + $0x68] sm:$0xff]
        %v4597 = vld [vmem:[#allocation2 + $0x70] sm:$0xff]
        %v4598 = vld [vmem:[#allocation2 + $0x78] sm:$0xff]
        %v4599 = vld [vmem:[#allocation2 + $0x80] sm:$0xff]
        %v4600 = vld [vmem:[#allocation2 + $0x88] sm:$0xff]
        %v4601 = vld [vmem:[#allocation2 + $0x90] sm:$0xff]
        %v4602 = vld [vmem:[#allocation2 + $0x98] sm:$0xff]
        %v4603 = vld [vmem:[#allocation2 + $0xa0] sm:$0xff]
        %v4604 = vld [vmem:[#allocation2 + $0xa8] sm:$0xff]
        %v4605 = vld [vmem:[#allocation2 + $0xb0] sm:$0xff]
        %v4606 = vld [vmem:[#allocation2 + $0xb8] sm:$0xff]
        %v4607 = vld [vmem:[#allocation2 + $0xc0] sm:$0xff]
        %v4608 = vld [vmem:[#allocation2 + $0xc8] sm:$0xff]
        %v4609 = vld [vmem:[#allocation2 + $0xd0] sm:$0xff]
        %v4610 = vld [vmem:[#allocation2 + $0xd8] sm:$0xff]
        %v4611 = vld [vmem:[#allocation2 + $0xe0] sm:$0xff]
        %v4612 = vld [vmem:[#allocation2 + $0xe8] sm:$0xff]
        %v4613 = vld [vmem:[#allocation2 + $0xf0] sm:$0xff]
        %v4614 = vld [vmem:[#allocation2 + $0xf8] sm:$0xff]
        %v4615 = vld [vmem:[#allocation2 + $0x100] sm:$0xff]
        %v4616 = vld [vmem:[#allocation2 + $0x108] sm:$0xff]
        %v4617 = vld [vmem:[#allocation2 + $0x110] sm:$0xff]
        %v4618 = vld [vmem:[#allocation2 + $0x118] sm:$0xff]
        %v4619 = vld [vmem:[#allocation2 + $0x120] sm:$0xff]
        %v4620 = vld [vmem:[#allocation2 + $0x128] sm:$0xff]
        %v4621 = vld [vmem:[#allocation2 + $0x130] sm:$0xff]
        %v4622 = vld [vmem:[#allocation2 + $0x138] sm:$0xff]
        %v4623 = vld [vmem:[#allocation2 + $0x140] sm:$0xff]
        %v4624 = vld [vmem:[#allocation2 + $0x148] sm:$0xff]
        %v4625 = vld [vmem:[#allocation2 + $0x150] sm:$0xff]
        %v4626 = vld [vmem:[#allocation2 + $0x158] sm:$0xff]
        %v4627 = vld [vmem:[#allocation2 + $0x160] sm:$0xff]
        %v4628 = vld [vmem:[#allocation2 + $0x168] sm:$0xff]
        %v4629 = vld [vmem:[#allocation2 + $0x170] sm:$0xff]
        %v4630 = vld [vmem:[#allocation2 + $0x178] sm:$0xff]
        %v4631 = vld [vmem:[#allocation2 + $0x180] sm:$0xff]
        %v4632 = vld [vmem:[#allocation2 + $0x188] sm:$0xff]
        %v4633 = vld [vmem:[#allocation2 + $0x190] sm:$0xff]
        %v4634 = vld [vmem:[#allocation2 + $0x198] sm:$0xff]
        %v4635 = vld [vmem:[#allocation2 + $0x1a0] sm:$0xff]
        %v4636 = vld [vmem:[#allocation2 + $0x1a8] sm:$0xff]
        %v4637 = vld [vmem:[#allocation2 + $0x1b0] sm:$0xff]
        %v4638 = vld [vmem:[#allocation2 + $0x1b8] sm:$0xff]
        %v4639 = vld [vmem:[#allocation2 + $0x1c0] sm:$0xff]
        %v4640 = vld [vmem:[#allocation2 + $0x1c8] sm:$0xff]
        %v4641 = vld [vmem:[#allocation2 + $0x1d0] sm:$0xff]
        %v4642 = vld [vmem:[#allocation2 + $0x1d8] sm:$0xff]
        %v4643 = vld [vmem:[#allocation2 + $0x1e0] sm:$0xff]
        %v4644 = vld [vmem:[#allocation2 + $0x1e8] sm:$0xff]
        %v4645 = vld [vmem:[#allocation2 + $0x1f0] sm:$0xff]
        %v4646 = vld [vmem:[#allocation2 + $0x1f8] sm:$0xff]
        %v4647 = vld [vmem:[%s2] sm:$0xf]
        %v4649 = vperm.slane %v4647, 0
        %v4650 = vperm.slane %v4647, 1
        %v4651 = vperm.slane %v4647, 2
        %v4652 = vperm.slane %v4647, 3
        %v4657 = vadd.f32 %v4583, %v4649
        %v4658 = vadd.f32 %v4584, %v4650
        %v4659 = vadd.f32 %v4585, %v4651
        %v4660 = vadd.f32 %v4586, %v4652
        %v4661 = vadd.f32 %v4587, %v4649
        %v4662 = vadd.f32 %v4588, %v4650
        %v4663 = vadd.f32 %v4589, %v4651
        %v4664 = vadd.f32 %v4590, %v4652
        %v4665 = vadd.f32 %v4591, %v4649
        %v4666 = vadd.f32 %v4592, %v4650
        %v4667 = vadd.f32 %v4593, %v4651
        %v4668 = vadd.f32 %v4594, %v4652
        %v4669 = vadd.f32 %v4595, %v4649
        %v4670 = vadd.f32 %v4596, %v4650
        %v4671 = vadd.f32 %v4597, %v4651
        %v4672 = vadd.f32 %v4598, %v4652
        %v4673 = vadd.f32 %v4599, %v4649
        %v4674 = vadd.f32 %v4600, %v4650
        %v4675 = vadd.f32 %v4601, %v4651
        %v4676 = vadd.f32 %v4602, %v4652
        %v4677 = vadd.f32 %v4603, %v4649
        %v4678 = vadd.f32 %v4604, %v4650
        %v4679 = vadd.f32 %v4605, %v4651
        %v4680 = vadd.f32 %v4606, %v4652
        %v4681 = vadd.f32 %v4607, %v4649
        %v4682 = vadd.f32 %v4608, %v4650
        %v4683 = vadd.f32 %v4609, %v4651
        %v4684 = vadd.f32 %v4610, %v4652
        %v4685 = vadd.f32 %v4611, %v4649
        %v4686 = vadd.f32 %v4612, %v4650
        %v4687 = vadd.f32 %v4613, %v4651
        %v4688 = vadd.f32 %v4614, %v4652
        %v4689 = vadd.f32 %v4615, %v4649
        %v4690 = vadd.f32 %v4616, %v4650
        %v4691 = vadd.f32 %v4617, %v4651
        %v4692 = vadd.f32 %v4618, %v4652
        %v4693 = vadd.f32 %v4619, %v4649
        %v4694 = vadd.f32 %v4620, %v4650
        %v4695 = vadd.f32 %v4621, %v4651
        %v4696 = vadd.f32 %v4622, %v4652
        %v4697 = vadd.f32 %v4623, %v4649
        %v4698 = vadd.f32 %v4624, %v4650
        %v4699 = vadd.f32 %v4625, %v4651
        %v4700 = vadd.f32 %v4626, %v4652
        %v4701 = vadd.f32 %v4627, %v4649
        %v4702 = vadd.f32 %v4628, %v4650
        %v4703 = vadd.f32 %v4629, %v4651
        %v4704 = vadd.f32 %v4630, %v4652
        %v4705 = vadd.f32 %v4631, %v4649
        %v4706 = vadd.f32 %v4632, %v4650
        %v4707 = vadd.f32 %v4633, %v4651
        %v4708 = vadd.f32 %v4634, %v4652
        %v4709 = vadd.f32 %v4635, %v4649
        %v4710 = vadd.f32 %v4636, %v4650
        %v4711 = vadd.f32 %v4637, %v4651
        %v4712 = vadd.f32 %v4638, %v4652
        %v4713 = vadd.f32 %v4639, %v4649
        %v4714 = vadd.f32 %v4640, %v4650
        %v4715 = vadd.f32 %v4641, %v4651
        %v4716 = vadd.f32 %v4642, %v4652
        %v4717 = vadd.f32 %v4643, %v4649
        %v4718 = vadd.f32 %v4644, %v4650
        %v4719 = vadd.f32 %v4645, %v4651
        %v4720 = vadd.f32 %v4646, %v4652
        %v4721 = vmax.f32 %v4657, 0.0
        %v4722 = vmax.f32 %v4658, 0.0
        %v4723 = vmax.f32 %v4659, 0.0
        %v4724 = vmax.f32 %v4660, 0.0
        %v4725 = vmax.f32 %v4661, 0.0
        %v4726 = vmax.f32 %v4662, 0.0
        %v4727 = vmax.f32 %v4663, 0.0
        %v4728 = vmax.f32 %v4664, 0.0
        %v4729 = vmax.f32 %v4665, 0.0
        %v4730 = vmax.f32 %v4666, 0.0
        %v4731 = vmax.f32 %v4667, 0.0
        %v4732 = vmax.f32 %v4668, 0.0
        %v4733 = vmax.f32 %v4669, 0.0
        %v4734 = vmax.f32 %v4670, 0.0
        %v4735 = vmax.f32 %v4671, 0.0
        %v4736 = vmax.f32 %v4672, 0.0
        %v4737 = vmax.f32 %v4673, 0.0
        %v4738 = vmax.f32 %v4674, 0.0
        %v4739 = vmax.f32 %v4675, 0.0
        %v4740 = vmax.f32 %v4676, 0.0
        %v4741 = vmax.f32 %v4677, 0.0
        %v4742 = vmax.f32 %v4678, 0.0
        %v4743 = vmax.f32 %v4679, 0.0
        %v4744 = vmax.f32 %v4680, 0.0
        %v4745 = vmax.f32 %v4681, 0.0
        %v4746 = vmax.f32 %v4682, 0.0
        %v4747 = vmax.f32 %v4683, 0.0
        %v4748 = vmax.f32 %v4684, 0.0
        %v4749 = vmax.f32 %v4685, 0.0
        %v4750 = vmax.f32 %v4686, 0.0
        %v4751 = vmax.f32 %v4687, 0.0
        %v4752 = vmax.f32 %v4688, 0.0
        %v4753 = vmax.f32 %v4689, 0.0
        %v4754 = vmax.f32 %v4690, 0.0
        %v4755 = vmax.f32 %v4691, 0.0
        %v4756 = vmax.f32 %v4692, 0.0
        %v4757 = vmax.f32 %v4693, 0.0
        %v4758 = vmax.f32 %v4694, 0.0
        %v4759 = vmax.f32 %v4695, 0.0
        %v4760 = vmax.f32 %v4696, 0.0
        %v4761 = vmax.f32 %v4697, 0.0
        %v4762 = vmax.f32 %v4698, 0.0
        %v4763 = vmax.f32 %v4699, 0.0
        %v4764 = vmax.f32 %v4700, 0.0
        %v4765 = vmax.f32 %v4701, 0.0
        %v4766 = vmax.f32 %v4702, 0.0
        %v4767 = vmax.f32 %v4703, 0.0
        %v4768 = vmax.f32 %v4704, 0.0
        %v4769 = vmax.f32 %v4705, 0.0
        %v4770 = vmax.f32 %v4706, 0.0
        %v4771 = vmax.f32 %v4707, 0.0
        %v4772 = vmax.f32 %v4708, 0.0
        %v4773 = vmax.f32 %v4709, 0.0
        %v4774 = vmax.f32 %v4710, 0.0
        %v4775 = vmax.f32 %v4711, 0.0
        %v4776 = vmax.f32 %v4712, 0.0
        %v4777 = vmax.f32 %v4713, 0.0
        %v4778 = vmax.f32 %v4714, 0.0
        %v4779 = vmax.f32 %v4715, 0.0
        %v4780 = vmax.f32 %v4716, 0.0
        %v4781 = vmax.f32 %v4717, 0.0
        %v4782 = vmax.f32 %v4718, 0.0
        %v4783 = vmax.f32 %v4719, 0.0
        %v4784 = vmax.f32 %v4720, 0.0
        %v4785 = vpack.c.bf16 %v4722, %v4721
        %v4786 = vpack.c.bf16 %v4724, %v4723
        %v4787 = vpack.c.bf16 %v4726, %v4725
        %v4788 = vpack.c.bf16 %v4728, %v4727
        %v4789 = vpack.c.bf16 %v4730, %v4729
        %v4790 = vpack.c.bf16 %v4732, %v4731
        %v4791 = vpack.c.bf16 %v4734, %v4733
        %v4792 = vpack.c.bf16 %v4736, %v4735
        %v4793 = vpack.c.bf16 %v4738, %v4737
        %v4794 = vpack.c.bf16 %v4740, %v4739
        %v4795 = vpack.c.bf16 %v4742, %v4741
        %v4796 = vpack.c.bf16 %v4744, %v4743
        %v4797 = vpack.c.bf16 %v4746, %v4745
        %v4798 = vpack.c.bf16 %v4748, %v4747
        %v4799 = vpack.c.bf16 %v4750, %v4749
        %v4800 = vpack.c.bf16 %v4752, %v4751
        %v4801 = vpack.c.bf16 %v4754, %v4753
        %v4802 = vpack.c.bf16 %v4756, %v4755
        %v4803 = vpack.c.bf16 %v4758, %v4757
        %v4804 = vpack.c.bf16 %v4760, %v4759
        %v4805 = vpack.c.bf16 %v4762, %v4761
        %v4806 = vpack.c.bf16 %v4764, %v4763
        %v4807 = vpack.c.bf16 %v4766, %v4765
        %v4808 = vpack.c.bf16 %v4768, %v4767
        %v4809 = vpack.c.bf16 %v4770, %v4769
        %v4810 = vpack.c.bf16 %v4772, %v4771
        %v4811 = vpack.c.bf16 %v4774, %v4773
        %v4812 = vpack.c.bf16 %v4776, %v4775
        %v4813 = vpack.c.bf16 %v4778, %v4777
        %v4814 = vpack.c.bf16 %v4780, %v4779
        %v4815 = vpack.c.bf16 %v4782, %v4781
        %v4816 = vpack.c.bf16 %v4784, %v4783
        %4817 = vst [vmem:[%s258] sm:$0xff] %v4785
        %4818 = vst [vmem:[%s258 + $0x8] sm:$0xff] %v4786
        %4819 = vst [vmem:[%s258 + $0x10] sm:$0xff] %v4787
        %4820 = vst [vmem:[%s258 + $0x18] sm:$0xff] %v4788
        %4821 = vst [vmem:[%s258 + $0x20] sm:$0xff] %v4789
        %4822 = vst [vmem:[%s258 + $0x28] sm:$0xff] %v4790
        %4823 = vst [vmem:[%s258 + $0x30] sm:$0xff] %v4791
        %4824 = vst [vmem:[%s258 + $0x38] sm:$0xff] %v4792
        %4825 = vst [vmem:[%s258 + $0x40] sm:$0xff] %v4793
        %4826 = vst [vmem:[%s258 + $0x48] sm:$0xff] %v4794
        %4827 = vst [vmem:[%s258 + $0x50] sm:$0xff] %v4795
        %4828 = vst [vmem:[%s258 + $0x58] sm:$0xff] %v4796
        %4829 = vst [vmem:[%s258 + $0x60] sm:$0xff] %v4797
        %4830 = vst [vmem:[%s258 + $0x68] sm:$0xff] %v4798
        %4831 = vst [vmem:[%s258 + $0x70] sm:$0xff] %v4799
        %4832 = vst [vmem:[%s258 + $0x78] sm:$0xff] %v4800
        %4833 = vst [vmem:[%s258 + $0x80] sm:$0xff] %v4801
        %4834 = vst [vmem:[%s258 + $0x88] sm:$0xff] %v4802
        %4835 = vst [vmem:[%s258 + $0x90] sm:$0xff] %v4803
        %4836 = vst [vmem:[%s258 + $0x98] sm:$0xff] %v4804
        %4837 = vst [vmem:[%s258 + $0xa0] sm:$0xff] %v4805
        %4838 = vst [vmem:[%s258 + $0xa8] sm:$0xff] %v4806
        %4839 = vst [vmem:[%s258 + $0xb0] sm:$0xff] %v4807
        %4840 = vst [vmem:[%s258 + $0xb8] sm:$0xff] %v4808
        %4841 = vst [vmem:[%s258 + $0xc0] sm:$0xff] %v4809
        %4842 = vst [vmem:[%s258 + $0xc8] sm:$0xff] %v4810
        %4843 = vst [vmem:[%s258 + $0xd0] sm:$0xff] %v4811
        %4844 = vst [vmem:[%s258 + $0xd8] sm:$0xff] %v4812
        %4845 = vst [vmem:[%s258 + $0xe0] sm:$0xff] %v4813
        %4846 = vst [vmem:[%s258 + $0xe8] sm:$0xff] %v4814
        %4847 = vst [vmem:[%s258 + $0xf0] sm:$0xff] %v4815
        %4848 = vst [vmem:[%s258 + $0xf8] sm:$0xff] %v4816
      $region40: #{video_decoder_forward.5} parent=31 // pred_fallthru
        _
      %s4849 = smul.u32 8, %s22
      %p4850 = scmp.lt.s32.totalorder %s20, 1
      %s4851 = scalar_select %p4850, %s20, 1
      %p4852 = scmp.lt.s32.totalorder %s21, 3
      %s4853 = scalar_select %p4852, %s21, 3
      %p4854 = scmp.lt.s32.totalorder %s4849, 7
      %s4855 = scalar_select %p4854, %s4849, 7
      %s4856 = smul.addr %s4855, 8
      %s4857 = smul.addr %s4853, 64
      %s4858 = sadd.s32 %s4856, %s4857
      %s4859 = smul.addr %s4851, 256
      %s4860 = sadd.s32 %s4858, %s4859
      %s4861 = smul.addr %s4860, 4
      %s4862 = scalar_lea.vmem %s3, %s4861
      // Predicated region
      $region41: #{video_decoder_forward.5} parent=31 // pred_check
        %p4863 = pneg %p136
      $region42: #{video_decoder_forward.5} parent=31 // pred_check_branch
        %4865 = sbr.rel (%p4863) target = $region44
      $region43: #{video_decoder_forward.5} parent=31 // pred_region
        %s4866 = smul.u32 8, %s22
      $region44: #{video_decoder_forward.5} parent=31 // pred_fallthru
        _
    $region32: #{video_decoder_forward.5} parent=5 // pred_fallthru
      _
    %p4867 = scmp.le.s32.totalorder 2, %s9
    // Predicated region
    $region45: #{video_decoder_forward.5} parent=5 // pred_check
      %p4868 = pneg %p4867
    $region46: #{video_decoder_forward.5} parent=5 // pred_check_branch
      %4870 = sbr.rel (%p4868) target = $region48
    $region47: #{video_decoder_forward.5} parent=5 // pred_region
      %s4871 = ssub.s32 %s9, 2
      // Predicated region
      $region49: #{video_decoder_forward.5} parent=47 // pred_check
        %p4872 = pneg %p142
      $region50: #{video_decoder_forward.5} parent=47 // pred_check_branch
        %4874 = sbr.rel (%p4872) target = $region52
      $region51: #{video_decoder_forward.5} parent=47 // pred_region
        %s4875 = smul.u32 8, %s26
        %p4876 = scmp.lt.s32.totalorder %s24, 1
        %s4877 = scalar_select %p4876, %s24, 1
        %p4878 = scmp.lt.s32.totalorder %s25, 3
        %s4879 = scalar_select %p4878, %s25, 3
        %p4880 = scmp.lt.s32.totalorder %s4875, 7
        %s4881 = scalar_select %p4880, %s4875, 7
        %s4882 = smul.addr %s4881, 8
        %s4883 = smul.addr %s4879, 64
        %s4884 = sadd.s32 %s4882, %s4883
        %s4885 = smul.addr %s4877, 256
        %s4886 = sadd.s32 %s4884, %s4885
        %s4887 = smul.addr %s4886, 4
        %s4888 = scalar_lea.vmem %s3, %s4887
      $region52: #{video_decoder_forward.5} parent=47 // pred_fallthru
        _
    $region48: #{video_decoder_forward.5} parent=5 // pred_fallthru
      _
  $region6: #{video_decoder_forward.5} parent=0 // loop_footer
    %s13 = sadd.s32 1, %s9
  $region7: #{video_decoder_forward.5} parent=0 // loop_footer_branch
    %8 = sbr.rel target = $region3
  $region8: #{video_decoder_forward.5} parent=0 // loop_exit
    _

// kernel: video_decoder_forward.6
$region0: #{video_decoder_forward.6}
  #allocation0 [shape = 'u32[]', space=smem, size = 0x4, offset = 0x4, fixed_abs, tag = 'smem constant byte address 0x4 - core index']
  #allocation1 [shape = 'u32[72,128]{1,0:T(1,128)}', space=vmem, size = 0x9000, scoped, tag = 'internal scratch']
  #allocation2 [shape = 'f32[256,256]{1,0:T(8,128)}', space=vmem, size = 0x40000, scoped, tag = 'scratch operand']
  %s0 = inlined_call_operand.vmem [shape: bf16[2,8,16,24,256], index: 0, kind: input, shape index: {}]
  %s1 = inlined_call_operand.vmem [shape: bf16[8,256,256], index: 1, kind: input, shape index: {}]
  %s2 = inlined_call_operand.vmem [shape: f32[1,256], index: 2, kind: input, shape index: {}]
  %s3 = inlined_call_operand.vmem [shape: bf16[2,5,16,16,256], index: 3, kind: output, shape index: {}]
  %s4 = sld [smem:[#allocation0]]
  $region53: #{video_decoder_forward.6} parent=0
    _
  %s6 = ssub.s32 1, %s4
  %s7 = scalar_select 0, %s6, %s4
  loop: start=0, step=1, limit=42
  $region2: #{video_decoder_forward.6} parent=0 // loop_pre_header
    _
  $region3: #{video_decoder_forward.6} parent=0 // loop_header
    %s9 = sphi 0, %s13
    %p10 = scmp.ge.s32.totalorder %s9, 42
    %s16 = sphi 0, %s42
    %s17 = sphi 0, %s38
    %s18 = sphi 0, %s34
    %s19 = sphi 0, %s30
    %s20 = sphi 0, %s16
    %s21 = sphi 0, %s17
    %s22 = sphi 0, %s18
    %s23 = sphi 0, %s19
    %s24 = sphi 0, %s20
    %s25 = sphi 0, %s21
    %s26 = sphi 0, %s22
    %s27 = sphi 0, %s23
    %s51 = sphi 0, %s53
    %s54 = sphi 0, %s51
    %s55 = sphi 0, %s54
    %s71 = sphi 0, %s55
    %s75 = sphi 0, %s75
    %s77 = sphi 0, %s75
    %s78 = sphi 0, %s77
    %s92 = sphi 0, %s78
    %s96 = sphi 0, %s96
    %s98 = sphi 0, %s96
    %s99 = sphi 0, %s98
    %s113 = sphi 0, %s99
    %s123 = sphi 0, %s125
    %s126 = sphi 0, %s123
    %s127 = sphi 0, %s126
    %s143 = sphi 0, %s127
  $region4: #{video_decoder_forward.6} parent=0 // loop_header_branch
    %12 = sbr.rel (%p10) target = $region8
  $region5: #{video_decoder_forward.6} parent=0 // loop_body
    %s14 = ssub.s32 %s9, 1
    %s15 = ssub.s32 %s9, 2
    %s28 = sadd.s32 1, %s19
    %p29 = scmp.ge.s32.totalorder %s28, 4
    %s30 = scalar_select %p29, 0, %s28
    %s31 = sadd.s32 1, %s18
    %s32 = scalar_select %p29, %s31, %s18
    %p33 = scmp.ge.s32.totalorder %s32, 1
    %s34 = scalar_select %p33, 0, %s32
    %s35 = sadd.s32 1, %s17
    %s36 = scalar_select %p33, %s35, %s17
    %p37 = scmp.ge.s32.totalorder %s36, 5
    %s38 = scalar_select %p37, 0, %s36
    %s39 = sadd.s32 1, %s16
    %s40 = scalar_select %p37, %s39, %s16
    %p41 = scmp.ge.s32.totalorder %s40, 2
    %s42 = scalar_select %p41, 0, %s40
    %s43 = sadd.s32 %s17, %s19
    %s44 = sadd.s32 %s38, %s30
    %s45 = ssub.s32 %s16, %s42
    %s46 = ssub.s32 %s43, %s44
    %s47 = sor.u32 %s45, %s46
    %s48 = ssub.s32 %s18, %s34
    %s49 = sor.u32 %s47, %s48
    %p50 = scmp.eq.s32.totalorder %s49, 0
    %s52 = sadd.s32 %s51, 1
    %s53 = scalar_select %p50, %s51, %s52
    %p56 = pneg %p50
    %p57 = scmp.eq.s32.totalorder %s9, 39
    %p58 = por %p56, %p57
    %p59 = scmp.ne.s32.totalorder %s51, %s54
    %p60 = scmp.eq.s32.totalorder %s9, 0
    %p61 = por %p59, %p60
    %p62 = scmp.ne.s32.totalorder %s51, %s54
    %p63 = scmp.eq.s32.totalorder %s14, 39
    %p64 = por %p62, %p63
    %p65 = scmp.ne.s32.totalorder %s54, %s55
    %p66 = scmp.eq.s32.totalorder %s14, 0
    %p67 = por %p65, %p66
    %p68 = scmp.ne.s32.totalorder %s54, %s55
    %p69 = scmp.eq.s32.totalorder %s15, 39
    %p70 = por %p68, %p69
    %p72 = scmp.ne.s32.totalorder %s55, %s71
    %p73 = scmp.eq.s32.totalorder %s15, 0
    %p74 = por %p72, %p73
    %s76 = sadd.s32 %s75, 1
    %p79 = scmp.eq.s32.totalorder %s9, 39
    %p80 = scmp.ne.s32.totalorder %s75, %s77
    %p81 = scmp.eq.s32.totalorder %s9, 0
    %p82 = por %p80, %p81
    %p83 = scmp.ne.s32.totalorder %s75, %s77
    %p84 = scmp.eq.s32.totalorder %s14, 39
    %p85 = por %p83, %p84
    %p86 = scmp.ne.s32.totalorder %s77, %s78
    %p87 = scmp.eq.s32.totalorder %s14, 0
    %p88 = por %p86, %p87
    %p89 = scmp.ne.s32.totalorder %s77, %s78
    %p90 = scmp.eq.s32.totalorder %s15, 39
    %p91 = por %p89, %p90
    %p93 = scmp.ne.s32.totalorder %s78, %s92
    %p94 = scmp.eq.s32.totalorder %s15, 0
    %p95 = por %p93, %p94
    %s97 = sadd.s32 %s96, 1
    %p100 = scmp.eq.s32.totalorder %s9, 39
    %p101 = scmp.ne.s32.totalorder %s96, %s98
    %p102 = scmp.eq.s32.totalorder %s9, 0
    %p103 = por %p101, %p102
    %p104 = scmp.ne.s32.totalorder %s96, %s98
    %p105 = scmp.eq.s32.totalorder %s14, 39
    %p106 = por %p104, %p105
    %p107 = scmp.ne.s32.totalorder %s98, %s99
    %p108 = scmp.eq.s32.totalorder %s14, 0
    %p109 = por %p107, %p108
    %p110 = scmp.ne.s32.totalorder %s98, %s99
    %p111 = scmp.eq.s32.totalorder %s15, 39
    %p112 = por %p110, %p111
    %p114 = scmp.ne.s32.totalorder %s99, %s113
    %p115 = scmp.eq.s32.totalorder %s15, 0
    %p116 = por %p114, %p115
    %s117 = ssub.s32 %s16, %s42
    %s118 = ssub.s32 %s17, %s38
    %s119 = sor.u32 %s117, %s118
    %s120 = ssub.s32 %s18, %s34
    %s121 = sor.u32 %s119, %s120
    %p122 = scmp.eq.s32.totalorder %s121, 0
    %s124 = sadd.s32 %s123, 1
    %s125 = scalar_select %p122, %s123, %s124
    %p128 = pneg %p122
    %p129 = scmp.eq.s32.totalorder %s9, 39
    %p130 = por %p128, %p129
    %p131 = scmp.ne.s32.totalorder %s123, %s126
    %p132 = scmp.eq.s32.totalorder %s9, 0
    %p133 = por %p131, %p132
    %p134 = scmp.ne.s32.totalorder %s123, %s126
    %p135 = scmp.eq.s32.totalorder %s14, 39
    %p136 = por %p134, %p135
    %p137 = scmp.ne.s32.totalorder %s126, %s127
    %p138 = scmp.eq.s32.totalorder %s14, 0
    %p139 = por %p137, %p138
    %p140 = scmp.ne.s32.totalorder %s126, %s127
    %p141 = scmp.eq.s32.totalorder %s15, 39
    %p142 = por %p140, %p141
    %p144 = scmp.ne.s32.totalorder %s127, %s143
    %p145 = scmp.eq.s32.totalorder %s15, 0
    %p146 = por %p144, %p145
    %p147 = scmp.le.s32.totalorder 1, %s9
    %p148 = scmp.lt.s32.totalorder %s9, 41
    %p149 = pnand %p147, %p148
    %p150 = pneg %p149
    // Predicated region
    $region9: #{video_decoder_forward.6} parent=5 // pred_check
      _
    $region10: #{video_decoder_forward.6} parent=5 // pred_check_branch
      %152 = sbr.rel (%p149) target = $region12
    $region11: #{video_decoder_forward.6} parent=5 // pred_region
      %s153 = ssub.s32 %s9, 1
      // Predicated region
      $region13: #{video_decoder_forward.6} parent=11 // pred_check
        %p154 = pneg %p88
      $region14: #{video_decoder_forward.6} parent=11 // pred_check_branch
        %156 = sbr.rel (%p154) target = $region16
      $region15: #{video_decoder_forward.6} parent=11 // pred_region
        _
      $region16: #{video_decoder_forward.6} parent=11 // pred_fallthru
        _
      // Predicated region
      $region17: #{video_decoder_forward.6} parent=11 // pred_check
        %p157 = pneg %p109
      $region18: #{video_decoder_forward.6} parent=11 // pred_check_branch
        %159 = sbr.rel (%p157) target = $region20
      $region19: #{video_decoder_forward.6} parent=11 // pred_region
        _
      $region20: #{video_decoder_forward.6} parent=11 // pred_fallthru
        _
    $region12: #{video_decoder_forward.6} parent=5 // pred_fallthru
      _
    %p160 = scmp.lt.s32.totalorder %s9, 40
    // Predicated region
    $region21: #{video_decoder_forward.6} parent=5 // pred_check
      %p161 = pneg %p160
    $region22: #{video_decoder_forward.6} parent=5 // pred_check_branch
      %163 = sbr.rel (%p161) target = $region24
    $region23: #{video_decoder_forward.6} parent=5 // pred_region
      // Predicated region
      $region25: #{video_decoder_forward.6} parent=23 // pred_check
        %p164 = pneg %p61
      $region26: #{video_decoder_forward.6} parent=23 // pred_check_branch
        %166 = sbr.rel (%p164) target = $region28
      $region27: #{video_decoder_forward.6} parent=23 // pred_region
        %s167 = sadd.s32 %s17, %s19
        %s168 = smul.u32 16, %s18
        %p169 = scmp.lt.s32.totalorder %s16, 1
        %s170 = scalar_select %p169, %s16, 1
        %p171 = scmp.lt.s32.totalorder %s167, 7
        %s172 = scalar_select %p171, %s167, 7
        %p173 = scmp.lt.s32.totalorder %s168, 15
        %s174 = scalar_select %p173, %s168, 15
        %s175 = smul.addr %s174, 6
        %s176 = smul.addr %s172, 96
        %s177 = sadd.s32 %s175, %s176
        %s178 = smul.addr %s170, 768
        %s179 = sadd.s32 %s177, %s178
        %s180 = smul.addr %s179, 4
        %s181 = scalar_lea.vmem %s0, %s180
        %s182 = sadd.s32 %s17, %s19
        %s183 = smul.u32 16, %s18
      $region28: #{video_decoder_forward.6} parent=23 // pred_fallthru
        _
    $region24: #{video_decoder_forward.6} parent=5 // pred_fallthru
      _
    %p184 = scmp.le.s32.totalorder 1, %s9
    %p185 = scmp.lt.s32.totalorder %s9, 41
    %p186 = pnand %p184, %p185
    %p187 = pneg %p186
    // Predicated region
    $region29: #{video_decoder_forward.6} parent=5 // pred_check
      _
    $region30: #{video_decoder_forward.6} parent=5 // pred_check_branch
      %189 = sbr.rel (%p186) target = $region32
    $region31: #{video_decoder_forward.6} parent=5 // pred_region
      %s190 = ssub.s32 %s9, 1
      %s191 = sadd.s32 %s21, %s23
      %s192 = smul.u32 16, %s22
      %p193 = scmp.lt.s32.totalorder %s20, 1
      %s194 = scalar_select %p193, %s20, 1
      %p195 = scmp.lt.s32.totalorder %s191, 7
      %s196 = scalar_select %p195, %s191, 7
      %p197 = scmp.lt.s32.totalorder %s192, 15
      %s198 = scalar_select %p197, %s192, 15
      %s199 = smul.addr %s198, 6
      %s200 = smul.addr %s196, 96
      %s201 = sadd.s32 %s199, %s200
      %s202 = smul.addr %s194, 768
      %s203 = sadd.s32 %s201, %s202
      %s204 = smul.addr %s203, 4
      %s205 = scalar_lea.vmem %s0, %s204
      %p206 = pneg %p67
      %p207 = pneg %p64
      %p208 = pneg %p88
      %p209 = pneg %p85
      %p210 = pneg %p109
      %p211 = pneg %p106
      %p212 = pneg %p139
      %p213 = pneg %p136
      %s214 = smul.u32 16, %s22
      %p215 = scmp.lt.s32.totalorder %s20, 1
      %s216 = scalar_select %p215, %s20, 1
      %p217 = scmp.lt.s32.totalorder %s21, 4
      %s218 = scalar_select %p217, %s21, 4
      %p219 = scmp.lt.s32.totalorder %s214, 15
      %s220 = scalar_select %p219, %s214, 15
      %s221 = smul.addr %s220, 4
      %s222 = smul.addr %s218, 64
      %s223 = sadd.s32 %s221, %s222
      %s224 = smul.addr %s216, 320
      %s225 = sadd.s32 %s223, %s224
      %s226 = smul.addr %s225, 4
      %s227 = scalar_lea.vmem %s3, %s226
      %s228 = sadd.s32 %s21, %s23
      %s229 = smul.u32 16, %s22
      %p230 = scmp.lt.s32.totalorder %s20, 1
      %s231 = scalar_select %p230, %s20, 1
      %p232 = scmp.lt.s32.totalorder %s228, 7
      %s233 = scalar_select %p232, %s228, 7
      %p234 = scmp.lt.s32.totalorder %s229, 15
      %s235 = scalar_select %p234, %s229, 15
      %s236 = smul.addr %s235, 6
      %s237 = smul.addr %s233, 96
      %s238 = sadd.s32 %s236, %s237
      %s239 = smul.addr %s231, 768
      %s240 = sadd.s32 %s238, %s239
      %s241 = smul.addr %s240, 4
      %s242 = scalar_lea.vmem %s0, %s241
      %s243 = sadd.s32 %s21, %s23
      %s244 = smul.u32 16, %s22
      %s245 = smul.u32 16, %s22
      %p246 = scmp.lt.s32.totalorder %s20, 1
      %s247 = scalar_select %p246, %s20, 1
      %p248 = scmp.lt.s32.totalorder %s21, 4
      %s249 = scalar_select %p248, %s21, 4
      %p250 = scmp.lt.s32.totalorder %s245, 15
      %s251 = scalar_select %p250, %s245, 15
      %s252 = smul.addr %s251, 4
      %s253 = smul.addr %s249, 64
      %s254 = sadd.s32 %s252, %s253
      %s255 = smul.addr %s247, 320
      %s256 = sadd.s32 %s254, %s255
      %s257 = smul.addr %s256, 4
      %s258 = scalar_lea.vmem %s3, %s257
      %s259 = smul.u32 16, %s22
      %p260 = scmp.eq.s32.totalorder %s23, 0
      // Predicated region
      $region33: #{video_decoder_forward.6} parent=31 // pred_check
        %p261 = pneg %p260
      $region34: #{video_decoder_forward.6} parent=31 // pred_check_branch
        %263 = sbr.rel (%p261) target = $region36
      $region35: #{video_decoder_forward.6} parent=31 // pred_region
        %264 = vst [vmem:[#allocation2] sm:$0xff] 0.0
        %265 = vst [vmem:[#allocation2 + $0x8] sm:$0xff] 0.0
        %266 = vst [vmem:[#allocation2 + $0x10] sm:$0xff] 0.0
        %267 = vst [vmem:[#allocation2 + $0x18] sm:$0xff] 0.0
        %268 = vst [vmem:[#allocation2 + $0x20] sm:$0xff] 0.0
        %269 = vst [vmem:[#allocation2 + $0x28] sm:$0xff] 0.0
        %270 = vst [vmem:[#allocation2 + $0x30] sm:$0xff] 0.0
        %271 = vst [vmem:[#allocation2 + $0x38] sm:$0xff] 0.0
        %272 = vst [vmem:[#allocation2 + $0x40] sm:$0xff] 0.0
        %273 = vst [vmem:[#allocation2 + $0x48] sm:$0xff] 0.0
        %274 = vst [vmem:[#allocation2 + $0x50] sm:$0xff] 0.0
        %275 = vst [vmem:[#allocation2 + $0x58] sm:$0xff] 0.0
        %276 = vst [vmem:[#allocation2 + $0x60] sm:$0xff] 0.0
        %277 = vst [vmem:[#allocation2 + $0x68] sm:$0xff] 0.0
        %278 = vst [vmem:[#allocation2 + $0x70] sm:$0xff] 0.0
        %279 = vst [vmem:[#allocation2 + $0x78] sm:$0xff] 0.0
        %280 = vst [vmem:[#allocation2 + $0x80] sm:$0xff] 0.0
        %281 = vst [vmem:[#allocation2 + $0x88] sm:$0xff] 0.0
        %282 = vst [vmem:[#allocation2 + $0x90] sm:$0xff] 0.0
        %283 = vst [vmem:[#allocation2 + $0x98] sm:$0xff] 0.0
        %284 = vst [vmem:[#allocation2 + $0xa0] sm:$0xff] 0.0
        %285 = vst [vmem:[#allocation2 + $0xa8] sm:$0xff] 0.0
        %286 = vst [vmem:[#allocation2 + $0xb0] sm:$0xff] 0.0
        %287 = vst [vmem:[#allocation2 + $0xb8] sm:$0xff] 0.0
        %288 = vst [vmem:[#allocation2 + $0xc0] sm:$0xff] 0.0
        %289 = vst [vmem:[#allocation2 + $0xc8] sm:$0xff] 0.0
        %290 = vst [vmem:[#allocation2 + $0xd0] sm:$0xff] 0.0
        %291 = vst [vmem:[#allocation2 + $0xd8] sm:$0xff] 0.0
        %292 = vst [vmem:[#allocation2 + $0xe0] sm:$0xff] 0.0
        %293 = vst [vmem:[#allocation2 + $0xe8] sm:$0xff] 0.0
        %294 = vst [vmem:[#allocation2 + $0xf0] sm:$0xff] 0.0
        %295 = vst [vmem:[#allocation2 + $0xf8] sm:$0xff] 0.0
        %296 = vst [vmem:[#allocation2 + $0x100] sm:$0xff] 0.0
        %297 = vst [vmem:[#allocation2 + $0x108] sm:$0xff] 0.0
        %298 = vst [vmem:[#allocation2 + $0x110] sm:$0xff] 0.0
        %299 = vst [vmem:[#allocation2 + $0x118] sm:$0xff] 0.0
        %300 = vst [vmem:[#allocation2 + $0x120] sm:$0xff] 0.0
        %301 = vst [vmem:[#allocation2 + $0x128] sm:$0xff] 0.0
        %302 = vst [vmem:[#allocation2 + $0x130] sm:$0xff] 0.0
        %303 = vst [vmem:[#allocation2 + $0x138] sm:$0xff] 0.0
        %304 = vst [vmem:[#allocation2 + $0x140] sm:$0xff] 0.0
        %305 = vst [vmem:[#allocation2 + $0x148] sm:$0xff] 0.0
        %306 = vst [vmem:[#allocation2 + $0x150] sm:$0xff] 0.0
        %307 = vst [vmem:[#allocation2 + $0x158] sm:$0xff] 0.0
        %308 = vst [vmem:[#allocation2 + $0x160] sm:$0xff] 0.0
        %309 = vst [vmem:[#allocation2 + $0x168] sm:$0xff] 0.0
        %310 = vst [vmem:[#allocation2 + $0x170] sm:$0xff] 0.0
        %311 = vst [vmem:[#allocation2 + $0x178] sm:$0xff] 0.0
        %312 = vst [vmem:[#allocation2 + $0x180] sm:$0xff] 0.0
        %313 = vst [vmem:[#allocation2 + $0x188] sm:$0xff] 0.0
        %314 = vst [vmem:[#allocation2 + $0x190] sm:$0xff] 0.0
        %315 = vst [vmem:[#allocation2 + $0x198] sm:$0xff] 0.0
        %316 = vst [vmem:[#allocation2 + $0x1a0] sm:$0xff] 0.0
        %317 = vst [vmem:[#allocation2 + $0x1a8] sm:$0xff] 0.0
        %318 = vst [vmem:[#allocation2 + $0x1b0] sm:$0xff] 0.0
        %319 = vst [vmem:[#allocation2 + $0x1b8] sm:$0xff] 0.0
        %320 = vst [vmem:[#allocation2 + $0x1c0] sm:$0xff] 0.0
        %321 = vst [vmem:[#allocation2 + $0x1c8] sm:$0xff] 0.0
        %322 = vst [vmem:[#allocation2 + $0x1d0] sm:$0xff] 0.0
        %323 = vst [vmem:[#allocation2 + $0x1d8] sm:$0xff] 0.0
        %324 = vst [vmem:[#allocation2 + $0x1e0] sm:$0xff] 0.0
        %325 = vst [vmem:[#allocation2 + $0x1e8] sm:$0xff] 0.0
        %326 = vst [vmem:[#allocation2 + $0x1f0] sm:$0xff] 0.0
        %327 = vst [vmem:[#allocation2 + $0x1f8] sm:$0xff] 0.0
      $region36: #{video_decoder_forward.6} parent=31 // pred_fallthru
        _
      %v328 = vld [vmem:[%s242] sm:$0xff]
      %v329 = vld [vmem:[%s242 + $0x8] sm:$0xff]
      %v330 = vld [vmem:[%s242 + $0x18] sm:$0xff]
      %v331 = vld [vmem:[%s242 + $0x20] sm:$0xff]
      %v332 = vld [vmem:[%s242 + $0x30] sm:$0xff]
      %v333 = vld [vmem:[%s242 + $0x38] sm:$0xff]
      %v334 = vld [vmem:[%s242 + $0x48] sm:$0xff]
      %v335 = vld [vmem:[%s242 + $0x50] sm:$0xff]
      %v336 = vld [vmem:[%s242 + $0x60] sm:$0xff]
      %v337 = vld [vmem:[%s242 + $0x68] sm:$0xff]
      %v338 = vld [vmem:[%s242 + $0x78] sm:$0xff]
      %v339 = vld [vmem:[%s242 + $0x80] sm:$0xff]
      %v340 = vld [vmem:[%s242 + $0x90] sm:$0xff]
      %v341 = vld [vmem:[%s242 + $0x98] sm:$0xff]
      %v342 = vld [vmem:[%s242 + $0xa8] sm:$0xff]
      %v343 = vld [vmem:[%s242 + $0xb0] sm:$0xff]
      %v344 = vld [vmem:[%s242 + $0xc0] sm:$0xff]
      %v345 = vld [vmem:[%s242 + $0xc8] sm:$0xff]
      %v346 = vld [vmem:[%s242 + $0xd8] sm:$0xff]
      %v347 = vld [vmem:[%s242 + $0xe0] sm:$0xff]
      %v348 = vld [vmem:[%s242 + $0xf0] sm:$0xff]
      %v349 = vld [vmem:[%s242 + $0xf8] sm:$0xff]
      %v350 = vld [vmem:[%s242 + $0x108] sm:$0xff]
      %v351 = vld [vmem:[%s242 + $0x110] sm:$0xff]
      %v352 = vld [vmem:[%s242 + $0x120] sm:$0xff]
      %v353 = vld [vmem:[%s242 + $0x128] sm:$0xff]
      %v354 = vld [vmem:[%s242 + $0x138] sm:$0xff]
      %v355 = vld [vmem:[%s242 + $0x140] sm:$0xff]
      %v356 = vld [vmem:[%s242 + $0x150] sm:$0xff]
      %v357 = vld [vmem:[%s242 + $0x158] sm:$0xff]
      %v358 = vld [vmem:[%s242 + $0x168] sm:$0xff]
      %v359 = vld [vmem:[%s242 + $0x170] sm:$0xff]
      %s360 = smul.u32 %s23, 2
      %s361 = smul.u32 %s360, 64
      %s362 = smul.addr %s361, 4
      %s363 = scalar_lea.vmem %s1, %s362
      %v364 = vld [vmem:[%s363] sm:$0xff]
      %v365 = vld [vmem:[%s363 + $0x8] sm:$0xff]
      %v366 = vld [vmem:[%s363 + $0x10] sm:$0xff]
      %v367 = vld [vmem:[%s363 + $0x18] sm:$0xff]
      %v368 = vld [vmem:[%s363 + $0x20] sm:$0xff]
      %v369 = vld [vmem:[%s363 + $0x28] sm:$0xff]
      %v370 = vld [vmem:[%s363 + $0x30] sm:$0xff]
      %v371 = vld [vmem:[%s363 + $0x38] sm:$0xff]
      %v372 = vld [vmem:[%s363 + $0x40] sm:$0xff]
      %v373 = vld [vmem:[%s363 + $0x48] sm:$0xff]
      %v374 = vld [vmem:[%s363 + $0x50] sm:$0xff]
      %v375 = vld [vmem:[%s363 + $0x58] sm:$0xff]
      %v376 = vld [vmem:[%s363 + $0x60] sm:$0xff]
      %v377 = vld [vmem:[%s363 + $0x68] sm:$0xff]
      %v378 = vld [vmem:[%s363 + $0x70] sm:$0xff]
      %v379 = vld [vmem:[%s363 + $0x78] sm:$0xff]
      %v380 = vld [vmem:[%s363 + $0x80] sm:$0xff]
      %v381 = vld [vmem:[%s363 + $0x88] sm:$0xff]
      %v382 = vld [vmem:[%s363 + $0x90] sm:$0xff]
      %v383 = vld [vmem:[%s363 + $0x98] sm:$0xff]
      %v384 = vld [vmem:[%s363 + $0xa0] sm:$0xff]
      %v385 = vld [vmem:[%s363 + $0xa8] sm:$0xff]
      %v386 = vld [vmem:[%s363 + $0xb0] sm:$0xff]
      %v387 = vld [vmem:[%s363 + $0xb8] sm:$0xff]
      %v388 = vld [vmem:[%s363 + $0xc0] sm:$0xff]
      %v389 = vld [vmem:[%s363 + $0xc8] sm:$0xff]
      %v390 = vld [vmem:[%s363 + $0xd0] sm:$0xff]
      %v391 = vld [vmem:[%s363 + $0xd8] sm:$0xff]
      %v392 = vld [vmem:[%s363 + $0xe0] sm:$0xff]
      %v393 = vld [vmem:[%s363 + $0xe8] sm:$0xff]
      %v394 = vld [vmem:[%s363 + $0xf0] sm:$0xff]
      %v395 = vld [vmem:[%s363 + $0xf8] sm:$0xff]
      %v396 = vld [vmem:[#allocation2] sm:$0xff]
      %v397 = vld [vmem:[#allocation2 + $0x8] sm:$0xff]
      %v398 = vld [vmem:[#allocation2 + $0x10] sm:$0xff]
      %v399 = vld [vmem:[#allocation2 + $0x18] sm:$0xff]
      %v400 = vld [vmem:[#allocation2 + $0x20] sm:$0xff]
      %v401 = vld [vmem:[#allocation2 + $0x28] sm:$0xff]
      %v402 = vld [vmem:[#allocation2 + $0x30] sm:$0xff]
      %v403 = vld [vmem:[#allocation2 + $0x38] sm:$0xff]
      %v404 = vld [vmem:[#allocation2 + $0x40] sm:$0xff]
      %v405 = vld [vmem:[#allocation2 + $0x48] sm:$0xff]
      %v406 = vld [vmem:[#allocation2 + $0x50] sm:$0xff]
      %v407 = vld [vmem:[#allocation2 + $0x58] sm:$0xff]
      %v408 = vld [vmem:[#allocation2 + $0x60] sm:$0xff]
      %v409 = vld [vmem:[#allocation2 + $0x68] sm:$0xff]
      %v410 = vld [vmem:[#allocation2 + $0x70] sm:$0xff]
      %v411 = vld [vmem:[#allocation2 + $0x78] sm:$0xff]
      %v412 = vld [vmem:[#allocation2 + $0x80] sm:$0xff]
      %v413 = vld [vmem:[#allocation2 + $0x88] sm:$0xff]
      %v414 = vld [vmem:[#allocation2 + $0x90] sm:$0xff]
      %v415 = vld [vmem:[#allocation2 + $0x98] sm:$0xff]
      %v416 = vld [vmem:[#allocation2 + $0xa0] sm:$0xff]
      %v417 = vld [vmem:[#allocation2 + $0xa8] sm:$0xff]
      %v418 = vld [vmem:[#allocation2 + $0xb0] sm:$0xff]
      %v419 = vld [vmem:[#allocation2 + $0xb8] sm:$0xff]
      %v420 = vld [vmem:[#allocation2 + $0xc0] sm:$0xff]
      %v421 = vld [vmem:[#allocation2 + $0xc8] sm:$0xff]
      %v422 = vld [vmem:[#allocation2 + $0xd0] sm:$0xff]
      %v423 = vld [vmem:[#allocation2 + $0xd8] sm:$0xff]
      %v424 = vld [vmem:[#allocation2 + $0xe0] sm:$0xff]
      %v425 = vld [vmem:[#allocation2 + $0xe8] sm:$0xff]
      %v426 = vld [vmem:[#allocation2 + $0xf0] sm:$0xff]
      %v427 = vld [vmem:[#allocation2 + $0xf8] sm:$0xff]
      %v428 = vld [vmem:[#allocation2 + $0x100] sm:$0xff]
      %v429 = vld [vmem:[#allocation2 + $0x108] sm:$0xff]
      %v430 = vld [vmem:[#allocation2 + $0x110] sm:$0xff]
      %v431 = vld [vmem:[#allocation2 + $0x118] sm:$0xff]
      %v432 = vld [vmem:[#allocation2 + $0x120] sm:$0xff]
      %v433 = vld [vmem:[#allocation2 + $0x128] sm:$0xff]
      %v434 = vld [vmem:[#allocation2 + $0x130] sm:$0xff]
      %v435 = vld [vmem:[#allocation2 + $0x138] sm:$0xff]
      %v436 = vld [vmem:[#allocation2 + $0x140] sm:$0xff]
      %v437 = vld [vmem:[#allocation2 + $0x148] sm:$0xff]
      %v438 = vld [vmem:[#allocation2 + $0x150] sm:$0xff]
      %v439 = vld [vmem:[#allocation2 + $0x158] sm:$0xff]
      %v440 = vld [vmem:[#allocation2 + $0x160] sm:$0xff]
      %v441 = vld [vmem:[#allocation2 + $0x168] sm:$0xff]
      %v442 = vld [vmem:[#allocation2 + $0x170] sm:$0xff]
      %v443 = vld [vmem:[#allocation2 + $0x178] sm:$0xff]
      %v444 = vld [vmem:[#allocation2 + $0x180] sm:$0xff]
      %v445 = vld [vmem:[#allocation2 + $0x188] sm:$0xff]
      %v446 = vld [vmem:[#allocation2 + $0x190] sm:$0xff]
      %v447 = vld [vmem:[#allocation2 + $0x198] sm:$0xff]
      %v448 = vld [vmem:[#allocation2 + $0x1a0] sm:$0xff]
      %v449 = vld [vmem:[#allocation2 + $0x1a8] sm:$0xff]
      %v450 = vld [vmem:[#allocation2 + $0x1b0] sm:$0xff]
      %v451 = vld [vmem:[#allocation2 + $0x1b8] sm:$0xff]
      %v452 = vld [vmem:[#allocation2 + $0x1c0] sm:$0xff]
      %v453 = vld [vmem:[#allocation2 + $0x1c8] sm:$0xff]
      %v454 = vld [vmem:[#allocation2 + $0x1d0] sm:$0xff]
      %v455 = vld [vmem:[#allocation2 + $0x1d8] sm:$0xff]
      %v456 = vld [vmem:[#allocation2 + $0x1e0] sm:$0xff]
      %v457 = vld [vmem:[#allocation2 + $0x1e8] sm:$0xff]
      %v458 = vld [vmem:[#allocation2 + $0x1f0] sm:$0xff]
      %v459 = vld [vmem:[#allocation2 + $0x1f8] sm:$0xff]
      %v492 = vunpack.c.l.b16 %v328
      %v493 = vunpack.c.h.b16 %v328
      %v494 = vunpack.c.l.b16 %v329
      %v495 = vunpack.c.h.b16 %v329
      %v496 = vunpack.c.l.b16 %v330
      %v497 = vunpack.c.h.b16 %v330
      %v498 = vunpack.c.l.b16 %v331
      %v499 = vunpack.c.h.b16 %v331
      %v500 = vunpack.c.l.b16 %v332
      %v501 = vunpack.c.h.b16 %v332
      %v502 = vunpack.c.l.b16 %v333
      %v503 = vunpack.c.h.b16 %v333
      %v504 = vunpack.c.l.b16 %v334
      %v505 = vunpack.c.h.b16 %v334
      %v506 = vunpack.c.l.b16 %v335
      %v507 = vunpack.c.h.b16 %v335
      %v508 = vunpack.c.l.b16 %v336
      %v509 = vunpack.c.h.b16 %v336
      %v510 = vunpack.c.l.b16 %v337
      %v511 = vunpack.c.h.b16 %v337
      %v512 = vunpack.c.l.b16 %v338
      %v513 = vunpack.c.h.b16 %v338
      %v514 = vunpack.c.l.b16 %v339
      %v515 = vunpack.c.h.b16 %v339
      %v516 = vunpack.c.l.b16 %v340
      %v517 = vunpack.c.h.b16 %v340
      %v518 = vunpack.c.l.b16 %v341
      %v519 = vunpack.c.h.b16 %v341
      %v520 = vunpack.c.l.b16 %v342
      %v521 = vunpack.c.h.b16 %v342
      %v522 = vunpack.c.l.b16 %v343
      %v523 = vunpack.c.h.b16 %v343
      %v524 = vunpack.c.l.b16 %v344
      %v525 = vunpack.c.h.b16 %v344
      %v526 = vunpack.c.l.b16 %v345
      %v527 = vunpack.c.h.b16 %v345
      %v528 = vunpack.c.l.b16 %v346
      %v529 = vunpack.c.h.b16 %v346
      %v530 = vunpack.c.l.b16 %v347
      %v531 = vunpack.c.h.b16 %v347
      %v532 = vunpack.c.l.b16 %v348
      %v533 = vunpack.c.h.b16 %v348
      %v534 = vunpack.c.l.b16 %v349
      %v535 = vunpack.c.h.b16 %v349
      %v536 = vunpack.c.l.b16 %v350
      %v537 = vunpack.c.h.b16 %v350
      %v538 = vunpack.c.l.b16 %v351
      %v539 = vunpack.c.h.b16 %v351
      %v540 = vunpack.c.l.b16 %v352
      %v541 = vunpack.c.h.b16 %v352
      %v542 = vunpack.c.l.b16 %v353
      %v543 = vunpack.c.h.b16 %v353
      %v544 = vunpack.c.l.b16 %v354
      %v545 = vunpack.c.h.b16 %v354
      %v546 = vunpack.c.l.b16 %v355
      %v547 = vunpack.c.h.b16 %v355
      %v548 = vunpack.c.l.b16 %v356
      %v549 = vunpack.c.h.b16 %v356
      %v550 = vunpack.c.l.b16 %v357
      %v551 = vunpack.c.h.b16 %v357
      %v552 = vunpack.c.l.b16 %v358
      %v553 = vunpack.c.h.b16 %v358
      %v554 = vunpack.c.l.b16 %v359
      %v555 = vunpack.c.h.b16 %v359
      %v556 = vpack.c.b16 %v494, %v492
      %v557 = vpack.c.b16 %v495, %v493
      %v558 = vpack.c.b16 %v498, %v496
      %v559 = vpack.c.b16 %v499, %v497
      %v560 = vpack.c.b16 %v502, %v500
      %v561 = vpack.c.b16 %v503, %v501
      %v562 = vpack.c.b16 %v506, %v504
      %v563 = vpack.c.b16 %v507, %v505
      %v564 = vpack.c.b16 %v510, %v508
      %v565 = vpack.c.b16 %v511, %v509
      %v566 = vpack.c.b16 %v514, %v512
      %v567 = vpack.c.b16 %v515, %v513
      %v568 = vpack.c.b16 %v518, %v516
      %v569 = vpack.c.b16 %v519, %v517
      %v570 = vpack.c.b16 %v522, %v520
      %v571 = vpack.c.b16 %v523, %v521
      %v572 = vpack.c.b16 %v526, %v524
      %v573 = vpack.c.b16 %v527, %v525
      %v574 = vpack.c.b16 %v530, %v528
      %v575 = vpack.c.b16 %v531, %v529
      %v576 = vpack.c.b16 %v534, %v532
      %v577 = vpack.c.b16 %v535, %v533
      %v578 = vpack.c.b16 %v538, %v536
      %v579 = vpack.c.b16 %v539, %v537
      %v580 = vpack.c.b16 %v542, %v540
      %v581 = vpack.c.b16 %v543, %v541
      %v582 = vpack.c.b16 %v546, %v544
      %v583 = vpack.c.b16 %v547, %v545
      %v584 = vpack.c.b16 %v550, %v548
      %v585 = vpack.c.b16 %v551, %v549
      %v586 = vpack.c.b16 %v554, %v552
      %v587 = vpack.c.b16 %v555, %v553
      %v652 = vunpack.c.l.b16 %v364
      %v653 = vunpack.c.h.b16 %v364
      %v654 = vunpack.c.l.b16 %v365
      %v655 = vunpack.c.h.b16 %v365
      %v656 = vunpack.c.l.b16 %v366
      %v657 = vunpack.c.h.b16 %v366
      %v658 = vunpack.c.l.b16 %v367
      %v659 = vunpack.c.h.b16 %v367
      %v660 = vunpack.c.l.b16 %v368
      %v661 = vunpack.c.h.b16 %v368
      %v662 = vunpack.c.l.b16 %v369
      %v663 = vunpack.c.h.b16 %v369
      %v664 = vunpack.c.l.b16 %v370
      %v665 = vunpack.c.h.b16 %v370
      %v666 = vunpack.c.l.b16 %v371
      %v667 = vunpack.c.h.b16 %v371
      %v668 = vunpack.c.l.b16 %v372
      %v669 = vunpack.c.h.b16 %v372
      %v670 = vunpack.c.l.b16 %v373
      %v671 = vunpack.c.h.b16 %v373
      %v672 = vunpack.c.l.b16 %v374
      %v673 = vunpack.c.h.b16 %v374
      %v674 = vunpack.c.l.b16 %v375
      %v675 = vunpack.c.h.b16 %v375
      %v676 = vunpack.c.l.b16 %v376
      %v677 = vunpack.c.h.b16 %v376
      %v678 = vunpack.c.l.b16 %v377
      %v679 = vunpack.c.h.b16 %v377
      %v680 = vunpack.c.l.b16 %v378
      %v681 = vunpack.c.h.b16 %v378
      %v682 = vunpack.c.l.b16 %v379
      %v683 = vunpack.c.h.b16 %v379
      %v684 = vunpack.c.l.b16 %v380
      %v685 = vunpack.c.h.b16 %v380
      %v686 = vunpack.c.l.b16 %v381
      %v687 = vunpack.c.h.b16 %v381
      %v688 = vunpack.c.l.b16 %v382
      %v689 = vunpack.c.h.b16 %v382
      %v690 = vunpack.c.l.b16 %v383
      %v691 = vunpack.c.h.b16 %v383
      %v692 = vunpack.c.l.b16 %v384
      %v693 = vunpack.c.h.b16 %v384
      %v694 = vunpack.c.l.b16 %v385
      %v695 = vunpack.c.h.b16 %v385
      %v696 = vunpack.c.l.b16 %v386
      %v697 = vunpack.c.h.b16 %v386
      %v698 = vunpack.c.l.b16 %v387
      %v699 = vunpack.c.h.b16 %v387
      %v700 = vunpack.c.l.b16 %v388
      %v701 = vunpack.c.h.b16 %v388
      %v702 = vunpack.c.l.b16 %v389
      %v703 = vunpack.c.h.b16 %v389
      %v704 = vunpack.c.l.b16 %v390
      %v705 = vunpack.c.h.b16 %v390
      %v706 = vunpack.c.l.b16 %v391
      %v707 = vunpack.c.h.b16 %v391
      %v708 = vunpack.c.l.b16 %v392
      %v709 = vunpack.c.h.b16 %v392
      %v710 = vunpack.c.l.b16 %v393
      %v711 = vunpack.c.h.b16 %v393
      %v712 = vunpack.c.l.b16 %v394
      %v713 = vunpack.c.h.b16 %v394
      %v714 = vunpack.c.l.b16 %v395
      %v715 = vunpack.c.h.b16 %v395
      %v716 = vpack.c.b16 %v654, %v652
      %v717 = vpack.c.b16 %v655, %v653
      %v718 = vpack.c.b16 %v658, %v656
      %v719 = vpack.c.b16 %v659, %v657
      %v720 = vpack.c.b16 %v662, %v660
      %v721 = vpack.c.b16 %v663, %v661
      %v722 = vpack.c.b16 %v666, %v664
      %v723 = vpack.c.b16 %v667, %v665
      %v724 = vpack.c.b16 %v670, %v668
      %v725 = vpack.c.b16 %v671, %v669
      %v726 = vpack.c.b16 %v674, %v672
      %v727 = vpack.c.b16 %v675, %v673
      %v728 = vpack.c.b16 %v678, %v676
      %v729 = vpack.c.b16 %v679, %v677
      %v730 = vpack.c.b16 %v682, %v680
      %v731 = vpack.c.b16 %v683, %v681
      %v732 = vpack.c.b16 %v686, %v684
      %v733 = vpack.c.b16 %v687, %v685
      %v734 = vpack.c.b16 %v690, %v688
      %v735 = vpack.c.b16 %v691, %v689
      %v736 = vpack.c.b16 %v694, %v692
      %v737 = vpack.c.b16 %v695, %v693
      %v738 = vpack.c.b16 %v698, %v696
      %v739 = vpack.c.b16 %v699, %v697
      %v740 = vpack.c.b16 %v702, %v700
      %v741 = vpack.c.b16 %v703, %v701
      %v742 = vpack.c.b16 %v706, %v704
      %v743 = vpack.c.b16 %v707, %v705
      %v744 = vpack.c.b16 %v710, %v708
      %v745 = vpack.c.b16 %v711, %v709
      %v746 = vpack.c.b16 %v714, %v712
      %v747 = vpack.c.b16 %v715, %v713
      %780 = vmatpush.bf16.msra.mxu0 %v730
      %781 = vmatpush.bf16.msra.mxu0 %v728
      %782 = vmatpush.bf16.msra.mxu0 %v726
      %783 = vmatpush.bf16.msra.mxu0 %v724
      %784 = vmatpush.bf16.msra.mxu0 %v722
      %785 = vmatpush.bf16.msra.mxu0 %v720
      %786 = vmatpush.bf16.msra.mxu0 %v718
      %787 = vmatpush.bf16.msra.mxu0 %v716
      %788 = vmatmul.bf16.gmra.mxu0 %v556
      %v789 = vpop.f32.mrf.mxu0
      %v790 = vadd.f32 0.0, %v789
      %v791 = vpop.f32.mrf.mxu0
      %v792 = vadd.f32 0.0, %v791
      %793 = vmatmul.bf16.gmra.mxu0 %v558
      %v794 = vpop.f32.mrf.mxu0
      %v795 = vadd.f32 0.0, %v794
      %v796 = vpop.f32.mrf.mxu0
      %v797 = vadd.f32 0.0, %v796
      %798 = vmatmul.bf16.gmra.mxu0 %v560
      %v799 = vpop.f32.mrf.mxu0
      %v800 = vadd.f32 0.0, %v799
      %v801 = vpop.f32.mrf.mxu0
      %v802 = vadd.f32 0.0, %v801
      %803 = vmatmul.bf16.gmra.mxu0 %v562
      %v804 = vpop.f32.mrf.mxu0
      %v805 = vadd.f32 0.0, %v804
      %v806 = vpop.f32.mrf.mxu0
      %v807 = vadd.f32 0.0, %v806
      %808 = vmatmul.bf16.gmra.mxu0 %v564
      %v809 = vpop.f32.mrf.mxu0
      %v810 = vadd.f32 0.0, %v809
      %v811 = vpop.f32.mrf.mxu0
      %v812 = vadd.f32 0.0, %v811
      %813 = vmatmul.bf16.gmra.mxu0 %v566
      %v814 = vpop.f32.mrf.mxu0
      %v815 = vadd.f32 0.0, %v814
      %v816 = vpop.f32.mrf.mxu0
      %v817 = vadd.f32 0.0, %v816
      %818 = vmatmul.bf16.gmra.mxu0 %v568
      %v819 = vpop.f32.mrf.mxu0
      %v820 = vadd.f32 0.0, %v819
      %v821 = vpop.f32.mrf.mxu0
      %v822 = vadd.f32 0.0, %v821
      %823 = vmatmul.bf16.gmra.mxu0 %v570
      %v824 = vpop.f32.mrf.mxu0
      %v825 = vadd.f32 0.0, %v824
      %v826 = vpop.f32.mrf.mxu0
      %v827 = vadd.f32 0.0, %v826
      %828 = vmatmul.bf16.gmra.mxu0 %v572
      %v829 = vpop.f32.mrf.mxu0
      %v830 = vadd.f32 0.0, %v829
      %v831 = vpop.f32.mrf.mxu0
      %v832 = vadd.f32 0.0, %v831
      %833 = vmatmul.bf16.gmra.mxu0 %v574
      %v834 = vpop.f32.mrf.mxu0
      %v835 = vadd.f32 0.0, %v834
      %v836 = vpop.f32.mrf.mxu0
      %v837 = vadd.f32 0.0, %v836
      %838 = vmatmul.bf16.gmra.mxu0 %v576
      %v839 = vpop.f32.mrf.mxu0
      %v840 = vadd.f32 0.0, %v839
      %v841 = vpop.f32.mrf.mxu0
      %v842 = vadd.f32 0.0, %v841
      %843 = vmatmul.bf16.gmra.mxu0 %v578
      %v844 = vpop.f32.mrf.mxu0
      %v845 = vadd.f32 0.0, %v844
      %v846 = vpop.f32.mrf.mxu0
      %v847 = vadd.f32 0.0, %v846
      %848 = vmatmul.bf16.gmra.mxu0 %v580
      %v849 = vpop.f32.mrf.mxu0
      %v850 = vadd.f32 0.0, %v849
      %v851 = vpop.f32.mrf.mxu0
      %v852 = vadd.f32 0.0, %v851
      %853 = vmatmul.bf16.gmra.mxu0 %v582
      %v854 = vpop.f32.mrf.mxu0
      %v855 = vadd.f32 0.0, %v854
      %v856 = vpop.f32.mrf.mxu0
      %v857 = vadd.f32 0.0, %v856
      %858 = vmatmul.bf16.gmra.mxu0 %v584
      %v859 = vpop.f32.mrf.mxu0
      %v860 = vadd.f32 0.0, %v859
      %v861 = vpop.f32.mrf.mxu0
      %v862 = vadd.f32 0.0, %v861
      %863 = vmatmul.bf16.gmra.mxu0 %v586
      %v864 = vpop.f32.mrf.mxu0
      %v865 = vadd.f32 0.0, %v864
      %v866 = vpop.f32.mrf.mxu0
      %v867 = vadd.f32 0.0, %v866
      %868 = vdwg.mxu0
      %869 = vmatpush.bf16.msra.mxu0 %v746
      %870 = vmatpush.bf16.msra.mxu0 %v744
      %871 = vmatpush.bf16.msra.mxu0 %v742
      %872 = vmatpush.bf16.msra.mxu0 %v740
      %873 = vmatpush.bf16.msra.mxu0 %v738
      %874 = vmatpush.bf16.msra.mxu0 %v736
      %875 = vmatpush.bf16.msra.mxu0 %v734
      %876 = vmatpush.bf16.msra.mxu0 %v732
      %877 = vmatmul.bf16.gmra.mxu0 %v557
      %v878 = vpop.f32.mrf.mxu0
      %v879 = vadd.f32 %v790, %v878
      %v880 = vpop.f32.mrf.mxu0
      %v881 = vadd.f32 %v792, %v880
      %882 = vmatmul.bf16.gmra.mxu0 %v559
      %v883 = vpop.f32.mrf.mxu0
      %v884 = vadd.f32 %v795, %v883
      %v885 = vpop.f32.mrf.mxu0
      %v886 = vadd.f32 %v797, %v885
      %887 = vmatmul.bf16.gmra.mxu0 %v561
      %v888 = vpop.f32.mrf.mxu0
      %v889 = vadd.f32 %v800, %v888
      %v890 = vpop.f32.mrf.mxu0
      %v891 = vadd.f32 %v802, %v890
      %892 = vmatmul.bf16.gmra.mxu0 %v563
      %v893 = vpop.f32.mrf.mxu0
      %v894 = vadd.f32 %v805, %v893
      %v895 = vpop.f32.mrf.mxu0
      %v896 = vadd.f32 %v807, %v895
      %897 = vmatmul.bf16.gmra.mxu0 %v565
      %v898 = vpop.f32.mrf.mxu0
      %v899 = vadd.f32 %v810, %v898
      %v900 = vpop.f32.mrf.mxu0
      %v901 = vadd.f32 %v812, %v900
      %902 = vmatmul.bf16.gmra.mxu0 %v567
      %v903 = vpop.f32.mrf.mxu0
      %v904 = vadd.f32 %v815, %v903
      %v905 = vpop.f32.mrf.mxu0
      %v906 = vadd.f32 %v817, %v905
      %907 = vmatmul.bf16.gmra.mxu0 %v569
      %v908 = vpop.f32.mrf.mxu0
      %v909 = vadd.f32 %v820, %v908
      %v910 = vpop.f32.mrf.mxu0
      %v911 = vadd.f32 %v822, %v910
      %912 = vmatmul.bf16.gmra.mxu0 %v571
      %v913 = vpop.f32.mrf.mxu0
      %v914 = vadd.f32 %v825, %v913
      %v915 = vpop.f32.mrf.mxu0
      %v916 = vadd.f32 %v827, %v915
      %917 = vmatmul.bf16.gmra.mxu0 %v573
      %v918 = vpop.f32.mrf.mxu0
      %v919 = vadd.f32 %v830, %v918
      %v920 = vpop.f32.mrf.mxu0
      %v921 = vadd.f32 %v832, %v920
      %922 = vmatmul.bf16.gmra.mxu0 %v575
      %v923 = vpop.f32.mrf.mxu0
      %v924 = vadd.f32 %v835, %v923
      %v925 = vpop.f32.mrf.mxu0
      %v926 = vadd.f32 %v837, %v925
      %927 = vmatmul.bf16.gmra.mxu0 %v577
      %v928 = vpop.f32.mrf.mxu0
      %v929 = vadd.f32 %v840, %v928
      %v930 = vpop.f32.mrf.mxu0
      %v931 = vadd.f32 %v842, %v930
      %932 = vmatmul.bf16.gmra.mxu0 %v579
      %v933 = vpop.f32.mrf.mxu0
      %v934 = vadd.f32 %v845, %v933
      %v935 = vpop.f32.mrf.mxu0
      %v936 = vadd.f32 %v847, %v935
      %937 = vmatmul.bf16.gmra.mxu0 %v581
      %v938 = vpop.f32.mrf.mxu0
      %v939 = vadd.f32 %v850, %v938
      %v940 = vpop.f32.mrf.mxu0
      %v941 = vadd.f32 %v852, %v940
      %942 = vmatmul.bf16.gmra.mxu0 %v583
      %v943 = vpop.f32.mrf.mxu0
      %v944 = vadd.f32 %v855, %v943
      %v945 = vpop.f32.mrf.mxu0
      %v946 = vadd.f32 %v857, %v945
      %947 = vmatmul.bf16.gmra.mxu0 %v585
      %v948 = vpop.f32.mrf.mxu0
      %v949 = vadd.f32 %v860, %v948
      %v950 = vpop.f32.mrf.mxu0
      %v951 = vadd.f32 %v862, %v950
      %952 = vmatmul.bf16.gmra.mxu0 %v587
      %v953 = vpop.f32.mrf.mxu0
      %v954 = vadd.f32 %v865, %v953
      %v955 = vpop.f32.mrf.mxu0
      %v956 = vadd.f32 %v867, %v955
      %957 = vdwg.mxu0
      %958 = vmatpush.bf16.msra.mxu0 %v731
      %959 = vmatpush.bf16.msra.mxu0 %v729
      %960 = vmatpush.bf16.msra.mxu0 %v727
      %961 = vmatpush.bf16.msra.mxu0 %v725
      %962 = vmatpush.bf16.msra.mxu0 %v723
      %963 = vmatpush.bf16.msra.mxu0 %v721
      %964 = vmatpush.bf16.msra.mxu0 %v719
      %965 = vmatpush.bf16.msra.mxu0 %v717
      %966 = vmatmul.bf16.gmra.mxu0 %v556
      %v967 = vpop.f32.mrf.mxu0
      %v968 = vadd.f32 0.0, %v967
      %v969 = vpop.f32.mrf.mxu0
      %v970 = vadd.f32 0.0, %v969
      %971 = vmatmul.bf16.gmra.mxu0 %v558
      %v972 = vpop.f32.mrf.mxu0
      %v973 = vadd.f32 0.0, %v972
      %v974 = vpop.f32.mrf.mxu0
      %v975 = vadd.f32 0.0, %v974
      %976 = vmatmul.bf16.gmra.mxu0 %v560
      %v977 = vpop.f32.mrf.mxu0
      %v978 = vadd.f32 0.0, %v977
      %v979 = vpop.f32.mrf.mxu0
      %v980 = vadd.f32 0.0, %v979
      %981 = vmatmul.bf16.gmra.mxu0 %v562
      %v982 = vpop.f32.mrf.mxu0
      %v983 = vadd.f32 0.0, %v982
      %v984 = vpop.f32.mrf.mxu0
      %v985 = vadd.f32 0.0, %v984
      %986 = vmatmul.bf16.gmra.mxu0 %v564
      %v987 = vpop.f32.mrf.mxu0
      %v988 = vadd.f32 0.0, %v987
      %v989 = vpop.f32.mrf.mxu0
      %v990 = vadd.f32 0.0, %v989
      %991 = vmatmul.bf16.gmra.mxu0 %v566
      %v992 = vpop.f32.mrf.mxu0
      %v993 = vadd.f32 0.0, %v992
      %v994 = vpop.f32.mrf.mxu0
      %v995 = vadd.f32 0.0, %v994
      %996 = vmatmul.bf16.gmra.mxu0 %v568
      %v997 = vpop.f32.mrf.mxu0
      %v998 = vadd.f32 0.0, %v997
      %v999 = vpop.f32.mrf.mxu0
      %v1000 = vadd.f32 0.0, %v999
      %1001 = vmatmul.bf16.gmra.mxu0 %v570
      %v1002 = vpop.f32.mrf.mxu0
      %v1003 = vadd.f32 0.0, %v1002
      %v1004 = vpop.f32.mrf.mxu0
      %v1005 = vadd.f32 0.0, %v1004
      %1006 = vmatmul.bf16.gmra.mxu0 %v572
      %v1007 = vpop.f32.mrf.mxu0
      %v1008 = vadd.f32 0.0, %v1007
      %v1009 = vpop.f32.mrf.mxu0
      %v1010 = vadd.f32 0.0, %v1009
      %1011 = vmatmul.bf16.gmra.mxu0 %v574
      %v1012 = vpop.f32.mrf.mxu0
      %v1013 = vadd.f32 0.0, %v1012
      %v1014 = vpop.f32.mrf.mxu0
      %v1015 = vadd.f32 0.0, %v1014
      %1016 = vmatmul.bf16.gmra.mxu0 %v576
      %v1017 = vpop.f32.mrf.mxu0
      %v1018 = vadd.f32 0.0, %v1017
      %v1019 = vpop.f32.mrf.mxu0
      %v1020 = vadd.f32 0.0, %v1019
      %1021 = vmatmul.bf16.gmra.mxu0 %v578
      %v1022 = vpop.f32.mrf.mxu0
      %v1023 = vadd.f32 0.0, %v1022
      %v1024 = vpop.f32.mrf.mxu0
      %v1025 = vadd.f32 0.0, %v1024
      %1026 = vmatmul.bf16.gmra.mxu0 %v580
      %v1027 = vpop.f32.mrf.mxu0
      %v1028 = vadd.f32 0.0, %v1027
      %v1029 = vpop.f32.mrf.mxu0
      %v1030 = vadd.f32 0.0, %v1029
      %1031 = vmatmul.bf16.gmra.mxu0 %v582
      %v1032 = vpop.f32.mrf.mxu0
      %v1033 = vadd.f32 0.0, %v1032
      %v1034 = vpop.f32.mrf.mxu0
      %v1035 = vadd.f32 0.0, %v1034
      %1036 = vmatmul.bf16.gmra.mxu0 %v584
      %v1037 = vpop.f32.mrf.mxu0
      %v1038 = vadd.f32 0.0, %v1037
      %v1039 = vpop.f32.mrf.mxu0
      %v1040 = vadd.f32 0.0, %v1039
      %1041 = vmatmul.bf16.gmra.mxu0 %v586
      %v1042 = vpop.f32.mrf.mxu0
      %v1043 = vadd.f32 0.0, %v1042
      %v1044 = vpop.f32.mrf.mxu0
      %v1045 = vadd.f32 0.0, %v1044
      %1046 = vdwg.mxu0
      %1047 = vmatpush.bf16.msra.mxu0 %v747
      %1048 = vmatpush.bf16.msra.mxu0 %v745
      %1049 = vmatpush.bf16.msra.mxu0 %v743
      %1050 = vmatpush.bf16.msra.mxu0 %v741
      %1051 = vmatpush.bf16.msra.mxu0 %v739
      %1052 = vmatpush.bf16.msra.mxu0 %v737
      %1053 = vmatpush.bf16.msra.mxu0 %v735
      %1054 = vmatpush.bf16.msra.mxu0 %v733
      %1055 = vmatmul.bf16.gmra.mxu0 %v557
      %v1056 = vpop.f32.mrf.mxu0
      %v1057 = vadd.f32 %v968, %v1056
      %v1058 = vpop.f32.mrf.mxu0
      %v1059 = vadd.f32 %v970, %v1058
      %1060 = vmatmul.bf16.gmra.mxu0 %v559
      %v1061 = vpop.f32.mrf.mxu0
      %v1062 = vadd.f32 %v973, %v1061
      %v1063 = vpop.f32.mrf.mxu0
      %v1064 = vadd.f32 %v975, %v1063
      %1065 = vmatmul.bf16.gmra.mxu0 %v561
      %v1066 = vpop.f32.mrf.mxu0
      %v1067 = vadd.f32 %v978, %v1066
      %v1068 = vpop.f32.mrf.mxu0
      %v1069 = vadd.f32 %v980, %v1068
      %1070 = vmatmul.bf16.gmra.mxu0 %v563
      %v1071 = vpop.f32.mrf.mxu0
      %v1072 = vadd.f32 %v983, %v1071
      %v1073 = vpop.f32.mrf.mxu0
      %v1074 = vadd.f32 %v985, %v1073
      %1075 = vmatmul.bf16.gmra.mxu0 %v565
      %v1076 = vpop.f32.mrf.mxu0
      %v1077 = vadd.f32 %v988, %v1076
      %v1078 = vpop.f32.mrf.mxu0
      %v1079 = vadd.f32 %v990, %v1078
      %1080 = vmatmul.bf16.gmra.mxu0 %v567
      %v1081 = vpop.f32.mrf.mxu0
      %v1082 = vadd.f32 %v993, %v1081
      %v1083 = vpop.f32.mrf.mxu0
      %v1084 = vadd.f32 %v995, %v1083
      %1085 = vmatmul.bf16.gmra.mxu0 %v569
      %v1086 = vpop.f32.mrf.mxu0
      %v1087 = vadd.f32 %v998, %v1086
      %v1088 = vpop.f32.mrf.mxu0
      %v1089 = vadd.f32 %v1000, %v1088
      %1090 = vmatmul.bf16.gmra.mxu0 %v571
      %v1091 = vpop.f32.mrf.mxu0
      %v1092 = vadd.f32 %v1003, %v1091
      %v1093 = vpop.f32.mrf.mxu0
      %v1094 = vadd.f32 %v1005, %v1093
      %1095 = vmatmul.bf16.gmra.mxu0 %v573
      %v1096 = vpop.f32.mrf.mxu0
      %v1097 = vadd.f32 %v1008, %v1096
      %v1098 = vpop.f32.mrf.mxu0
      %v1099 = vadd.f32 %v1010, %v1098
      %1100 = vmatmul.bf16.gmra.mxu0 %v575
      %v1101 = vpop.f32.mrf.mxu0
      %v1102 = vadd.f32 %v1013, %v1101
      %v1103 = vpop.f32.mrf.mxu0
      %v1104 = vadd.f32 %v1015, %v1103
      %1105 = vmatmul.bf16.gmra.mxu0 %v577
      %v1106 = vpop.f32.mrf.mxu0
      %v1107 = vadd.f32 %v1018, %v1106
      %v1108 = vpop.f32.mrf.mxu0
      %v1109 = vadd.f32 %v1020, %v1108
      %1110 = vmatmul.bf16.gmra.mxu0 %v579
      %v1111 = vpop.f32.mrf.mxu0
      %v1112 = vadd.f32 %v1023, %v1111
      %v1113 = vpop.f32.mrf.mxu0
      %v1114 = vadd.f32 %v1025, %v1113
      %1115 = vmatmul.bf16.gmra.mxu0 %v581
      %v1116 = vpop.f32.mrf.mxu0
      %v1117 = vadd.f32 %v1028, %v1116
      %v1118 = vpop.f32.mrf.mxu0
      %v1119 = vadd.f32 %v1030, %v1118
      %1120 = vmatmul.bf16.gmra.mxu0 %v583
      %v1121 = vpop.f32.mrf.mxu0
      %v1122 = vadd.f32 %v1033, %v1121
      %v1123 = vpop.f32.mrf.mxu0
      %v1124 = vadd.f32 %v1035, %v1123
      %1125 = vmatmul.bf16.gmra.mxu0 %v585
      %v1126 = vpop.f32.mrf.mxu0
      %v1127 = vadd.f32 %v1038, %v1126
      %v1128 = vpop.f32.mrf.mxu0
      %v1129 = vadd.f32 %v1040, %v1128
      %1130 = vmatmul.bf16.gmra.mxu0 %v587
      %v1131 = vpop.f32.mrf.mxu0
      %v1132 = vadd.f32 %v1043, %v1131
      %v1133 = vpop.f32.mrf.mxu0
      %v1134 = vadd.f32 %v1045, %v1133
      %1135 = vdwg.mxu0
      %v1136 = vadd.f32 %v396, %v879
      %v1137 = vadd.f32 %v397, %v1057
      %v1138 = vadd.f32 %v398, %v881
      %v1139 = vadd.f32 %v399, %v1059
      %v1140 = vadd.f32 %v400, %v884
      %v1141 = vadd.f32 %v401, %v1062
      %v1142 = vadd.f32 %v402, %v886
      %v1143 = vadd.f32 %v403, %v1064
      %v1144 = vadd.f32 %v404, %v889
      %v1145 = vadd.f32 %v405, %v1067
      %v1146 = vadd.f32 %v406, %v891
      %v1147 = vadd.f32 %v407, %v1069
      %v1148 = vadd.f32 %v408, %v894
      %v1149 = vadd.f32 %v409, %v1072
      %v1150 = vadd.f32 %v410, %v896
      %v1151 = vadd.f32 %v411, %v1074
      %v1152 = vadd.f32 %v412, %v899
      %v1153 = vadd.f32 %v413, %v1077
      %v1154 = vadd.f32 %v414, %v901
      %v1155 = vadd.f32 %v415, %v1079
      %v1156 = vadd.f32 %v416, %v904
      %v1157 = vadd.f32 %v417, %v1082
      %v1158 = vadd.f32 %v418, %v906
      %v1159 = vadd.f32 %v419, %v1084
      %v1160 = vadd.f32 %v420, %v909
      %v1161 = vadd.f32 %v421, %v1087
      %v1162 = vadd.f32 %v422, %v911
      %v1163 = vadd.f32 %v423, %v1089
      %v1164 = vadd.f32 %v424, %v914
      %v1165 = vadd.f32 %v425, %v1092
      %v1166 = vadd.f32 %v426, %v916
      %v1167 = vadd.f32 %v427, %v1094
      %v1168 = vadd.f32 %v428, %v919
      %v1169 = vadd.f32 %v429, %v1097
      %v1170 = vadd.f32 %v430, %v921
      %v1171 = vadd.f32 %v431, %v1099
      %v1172 = vadd.f32 %v432, %v924
      %v1173 = vadd.f32 %v433, %v1102
      %v1174 = vadd.f32 %v434, %v926
      %v1175 = vadd.f32 %v435, %v1104
      %v1176 = vadd.f32 %v436, %v929
      %v1177 = vadd.f32 %v437, %v1107
      %v1178 = vadd.f32 %v438, %v931
      %v1179 = vadd.f32 %v439, %v1109
      %v1180 = vadd.f32 %v440, %v934
      %v1181 = vadd.f32 %v441, %v1112
      %v1182 = vadd.f32 %v442, %v936
      %v1183 = vadd.f32 %v443, %v1114
      %v1184 = vadd.f32 %v444, %v939
      %v1185 = vadd.f32 %v445, %v1117
      %v1186 = vadd.f32 %v446, %v941
      %v1187 = vadd.f32 %v447, %v1119
      %v1188 = vadd.f32 %v448, %v944
      %v1189 = vadd.f32 %v449, %v1122
      %v1190 = vadd.f32 %v450, %v946
      %v1191 = vadd.f32 %v451, %v1124
      %v1192 = vadd.f32 %v452, %v949
      %v1193 = vadd.f32 %v453, %v1127
      %v1194 = vadd.f32 %v454, %v951
      %v1195 = vadd.f32 %v455, %v1129
      %v1196 = vadd.f32 %v456, %v954
      %v1197 = vadd.f32 %v457, %v1132
      %v1198 = vadd.f32 %v458, %v956
      %v1199 = vadd.f32 %v459, %v1134
      %1200 = vst [vmem:[#allocation2] sm:$0xff] %v1136
      %1201 = vst [vmem:[#allocation2 + $0x8] sm:$0xff] %v1137
      %1202 = vst [vmem:[#allocation2 + $0x10] sm:$0xff] %v1138
      %1203 = vst [vmem:[#allocation2 + $0x18] sm:$0xff] %v1139
      %1204 = vst [vmem:[#allocation2 + $0x20] sm:$0xff] %v1140
      %1205 = vst [vmem:[#allocation2 + $0x28] sm:$0xff] %v1141
      %1206 = vst [vmem:[#allocation2 + $0x30] sm:$0xff] %v1142
      %1207 = vst [vmem:[#allocation2 + $0x38] sm:$0xff] %v1143
      %1208 = vst [vmem:[#allocation2 + $0x40] sm:$0xff] %v1144
      %1209 = vst [vmem:[#allocation2 + $0x48] sm:$0xff] %v1145
      %1210 = vst [vmem:[#allocation2 + $0x50] sm:$0xff] %v1146
      %1211 = vst [vmem:[#allocation2 + $0x58] sm:$0xff] %v1147
      %1212 = vst [vmem:[#allocation2 + $0x60] sm:$0xff] %v1148
      %1213 = vst [vmem:[#allocation2 + $0x68] sm:$0xff] %v1149
      %1214 = vst [vmem:[#allocation2 + $0x70] sm:$0xff] %v1150
      %1215 = vst [vmem:[#allocation2 + $0x78] sm:$0xff] %v1151
      %1216 = vst [vmem:[#allocation2 + $0x80] sm:$0xff] %v1152
      %1217 = vst [vmem:[#allocation2 + $0x88] sm:$0xff] %v1153
      %1218 = vst [vmem:[#allocation2 + $0x90] sm:$0xff] %v1154
      %1219 = vst [vmem:[#allocation2 + $0x98] sm:$0xff] %v1155
      %1220 = vst [vmem:[#allocation2 + $0xa0] sm:$0xff] %v1156
      %1221 = vst [vmem:[#allocation2 + $0xa8] sm:$0xff] %v1157
      %1222 = vst [vmem:[#allocation2 + $0xb0] sm:$0xff] %v1158
      %1223 = vst [vmem:[#allocation2 + $0xb8] sm:$0xff] %v1159
      %1224 = vst [vmem:[#allocation2 + $0xc0] sm:$0xff] %v1160
      %1225 = vst [vmem:[#allocation2 + $0xc8] sm:$0xff] %v1161
      %1226 = vst [vmem:[#allocation2 + $0xd0] sm:$0xff] %v1162
      %1227 = vst [vmem:[#allocation2 + $0xd8] sm:$0xff] %v1163
      %1228 = vst [vmem:[#allocation2 + $0xe0] sm:$0xff] %v1164
      %1229 = vst [vmem:[#allocation2 + $0xe8] sm:$0xff] %v1165
      %1230 = vst [vmem:[#allocation2 + $0xf0] sm:$0xff] %v1166
      %1231 = vst [vmem:[#allocation2 + $0xf8] sm:$0xff] %v1167
      %1232 = vst [vmem:[#allocation2 + $0x100] sm:$0xff] %v1168
      %1233 = vst [vmem:[#allocation2 + $0x108] sm:$0xff] %v1169
      %1234 = vst [vmem:[#allocation2 + $0x110] sm:$0xff] %v1170
      %1235 = vst [vmem:[#allocation2 + $0x118] sm:$0xff] %v1171
      %1236 = vst [vmem:[#allocation2 + $0x120] sm:$0xff] %v1172
      %1237 = vst [vmem:[#allocation2 + $0x128] sm:$0xff] %v1173
      %1238 = vst [vmem:[#allocation2 + $0x130] sm:$0xff] %v1174
      %1239 = vst [vmem:[#allocation2 + $0x138] sm:$0xff] %v1175
      %1240 = vst [vmem:[#allocation2 + $0x140] sm:$0xff] %v1176
      %1241 = vst [vmem:[#allocation2 + $0x148] sm:$0xff] %v1177
      %1242 = vst [vmem:[#allocation2 + $0x150] sm:$0xff] %v1178
      %1243 = vst [vmem:[#allocation2 + $0x158] sm:$0xff] %v1179
      %1244 = vst [vmem:[#allocation2 + $0x160] sm:$0xff] %v1180
      %1245 = vst [vmem:[#allocation2 + $0x168] sm:$0xff] %v1181
      %1246 = vst [vmem:[#allocation2 + $0x170] sm:$0xff] %v1182
      %1247 = vst [vmem:[#allocation2 + $0x178] sm:$0xff] %v1183
      %1248 = vst [vmem:[#allocation2 + $0x180] sm:$0xff] %v1184
      %1249 = vst [vmem:[#allocation2 + $0x188] sm:$0xff] %v1185
      %1250 = vst [vmem:[#allocation2 + $0x190] sm:$0xff] %v1186
      %1251 = vst [vmem:[#allocation2 + $0x198] sm:$0xff] %v1187
      %1252 = vst [vmem:[#allocation2 + $0x1a0] sm:$0xff] %v1188
      %1253 = vst [vmem:[#allocation2 + $0x1a8] sm:$0xff] %v1189
      %1254 = vst [vmem:[#allocation2 + $0x1b0] sm:$0xff] %v1190
      %1255 = vst [vmem:[#allocation2 + $0x1b8] sm:$0xff] %v1191
      %1256 = vst [vmem:[#allocation2 + $0x1c0] sm:$0xff] %v1192
      %1257 = vst [vmem:[#allocation2 + $0x1c8] sm:$0xff] %v1193
      %1258 = vst [vmem:[#allocation2 + $0x1d0] sm:$0xff] %v1194
      %1259 = vst [vmem:[#allocation2 + $0x1d8] sm:$0xff] %v1195
      %1260 = vst [vmem:[#allocation2 + $0x1e0] sm:$0xff] %v1196
      %1261 = vst [vmem:[#allocation2 + $0x1e8] sm:$0xff] %v1197
      %1262 = vst [vmem:[#allocation2 + $0x1f0] sm:$0xff] %v1198
      %1263 = vst [vmem:[#allocation2 + $0x1f8] sm:$0xff] %v1199
      %v1264 = vld [vmem:[%s242] sm:$0xff]
      %v1265 = vld [vmem:[%s242 + $0x8] sm:$0xff]
      %v1266 = vld [vmem:[%s242 + $0x10] sm:$0x11]
      %v1267 = vld [vmem:[%s242 + $0x18] sm:$0xff]
      %v1268 = vld [vmem:[%s242 + $0x20] sm:$0xff]
      %v1269 = vld [vmem:[%s242 + $0x28] sm:$0x11]
      %v1270 = vld [vmem:[%s242 + $0x30] sm:$0xff]
      %v1271 = vld [vmem:[%s242 + $0x38] sm:$0xff]
      %v1272 = vld [vmem:[%s242 + $0x40] sm:$0x11]
      %v1273 = vld [vmem:[%s242 + $0x48] sm:$0xff]
      %v1274 = vld [vmem:[%s242 + $0x50] sm:$0xff]
      %v1275 = vld [vmem:[%s242 + $0x58] sm:$0x11]
      %v1276 = vld [vmem:[%s242 + $0x60] sm:$0xff]
      %v1277 = vld [vmem:[%s242 + $0x68] sm:$0xff]
      %v1278 = vld [vmem:[%s242 + $0x70] sm:$0x11]
      %v1279 = vld [vmem:[%s242 + $0x78] sm:$0xff]
      %v1280 = vld [vmem:[%s242 + $0x80] sm:$0xff]
      %v1281 = vld [vmem:[%s242 + $0x88] sm:$0x11]
      %v1282 = vld [vmem:[%s242 + $0x90] sm:$0xff]
      %v1283 = vld [vmem:[%s242 + $0x98] sm:$0xff]
      %v1284 = vld [vmem:[%s242 + $0xa0] sm:$0x11]
      %v1285 = vld [vmem:[%s242 + $0xa8] sm:$0xff]
      %v1286 = vld [vmem:[%s242 + $0xb0] sm:$0xff]
      %v1287 = vld [vmem:[%s242 + $0xb8] sm:$0x11]
      %v1288 = vld [vmem:[%s242 + $0xc0] sm:$0xff]
      %v1289 = vld [vmem:[%s242 + $0xc8] sm:$0xff]
      %v1290 = vld [vmem:[%s242 + $0xd0] sm:$0x11]
      %v1291 = vld [vmem:[%s242 + $0xd8] sm:$0xff]
      %v1292 = vld [vmem:[%s242 + $0xe0] sm:$0xff]
      %v1293 = vld [vmem:[%s242 + $0xe8] sm:$0x11]
      %v1294 = vld [vmem:[%s242 + $0xf0] sm:$0xff]
      %v1295 = vld [vmem:[%s242 + $0xf8] sm:$0xff]
      %v1296 = vld [vmem:[%s242 + $0x100] sm:$0x11]
      %v1297 = vld [vmem:[%s242 + $0x108] sm:$0xff]
      %v1298 = vld [vmem:[%s242 + $0x110] sm:$0xff]
      %v1299 = vld [vmem:[%s242 + $0x118] sm:$0x11]
      %v1300 = vld [vmem:[%s242 + $0x120] sm:$0xff]
      %v1301 = vld [vmem:[%s242 + $0x128] sm:$0xff]
      %v1302 = vld [vmem:[%s242 + $0x130] sm:$0x11]
      %v1303 = vld [vmem:[%s242 + $0x138] sm:$0xff]
      %v1304 = vld [vmem:[%s242 + $0x140] sm:$0xff]
      %v1305 = vld [vmem:[%s242 + $0x148] sm:$0x11]
      %v1306 = vld [vmem:[%s242 + $0x150] sm:$0xff]
      %v1307 = vld [vmem:[%s242 + $0x158] sm:$0xff]
      %v1308 = vld [vmem:[%s242 + $0x160] sm:$0x11]
      %v1309 = vld [vmem:[%s242 + $0x168] sm:$0xff]
      %v1310 = vld [vmem:[%s242 + $0x170] sm:$0xff]
      %v1311 = vld [vmem:[%s242 + $0x178] sm:$0x11]
      %vm1312 = vsmask.f32 3328
      %vm1313 = vsmask.f32 7440
      %vm1314 = vmor %vm1312, %vm1313
      %v1316 = vshrl.u32 %v1264, 16
      %v1318 = vrot.slane %v1316, 4
      %v1319 = vshll.u32 %v1264, 16
      %v1321 = vrot.slane %v1319, 5
      %v1322 = vor.u32 %v1318, %v1321
      %v1323 = vrot.slane %v1322, 4
      %v1325 = vshll.u32 %v1265, 16
      %v1327 = vrot.slane %v1325, 5
      %v1328 = vsel %vm1314, %v1323, %v1327
      %v1329 = vshrl.u32 %v1265, 16
      %v1331 = vrot.slane %v1329, 4
      %v1332 = vor.u32 %v1331, %v1327
      %v1333 = vrot.slane %v1332, 4
      %v1335 = vshll.u32 %v1266, 16
      %v1337 = vrot.slane %v1335, 5
      %v1338 = vsel %vm1314, %v1333, %v1337
      %v1340 = vshrl.u32 %v1267, 16
      %v1342 = vrot.slane %v1340, 4
      %v1343 = vshll.u32 %v1267, 16
      %v1345 = vrot.slane %v1343, 5
      %v1346 = vor.u32 %v1342, %v1345
      %v1347 = vrot.slane %v1346, 4
      %v1349 = vshll.u32 %v1268, 16
      %v1351 = vrot.slane %v1349, 5
      %v1352 = vsel %vm1314, %v1347, %v1351
      %v1353 = vshrl.u32 %v1268, 16
      %v1355 = vrot.slane %v1353, 4
      %v1356 = vor.u32 %v1355, %v1351
      %v1357 = vrot.slane %v1356, 4
      %v1359 = vshll.u32 %v1269, 16
      %v1361 = vrot.slane %v1359, 5
      %v1362 = vsel %vm1314, %v1357, %v1361
      %v1364 = vshrl.u32 %v1270, 16
      %v1366 = vrot.slane %v1364, 4
      %v1367 = vshll.u32 %v1270, 16
      %v1369 = vrot.slane %v1367, 5
      %v1370 = vor.u32 %v1366, %v1369
      %v1371 = vrot.slane %v1370, 4
      %v1373 = vshll.u32 %v1271, 16
      %v1375 = vrot.slane %v1373, 5
      %v1376 = vsel %vm1314, %v1371, %v1375
      %v1377 = vshrl.u32 %v1271, 16
      %v1379 = vrot.slane %v1377, 4
      %v1380 = vor.u32 %v1379, %v1375
      %v1381 = vrot.slane %v1380, 4
      %v1383 = vshll.u32 %v1272, 16
      %v1385 = vrot.slane %v1383, 5
      %v1386 = vsel %vm1314, %v1381, %v1385
      %v1388 = vshrl.u32 %v1273, 16
      %v1390 = vrot.slane %v1388, 4
      %v1391 = vshll.u32 %v1273, 16
      %v1393 = vrot.slane %v1391, 5
      %v1394 = vor.u32 %v1390, %v1393
      %v1395 = vrot.slane %v1394, 4
      %v1397 = vshll.u32 %v1274, 16
      %v1399 = vrot.slane %v1397, 5
      %v1400 = vsel %vm1314, %v1395, %v1399
      %v1401 = vshrl.u32 %v1274, 16
      %v1403 = vrot.slane %v1401, 4
      %v1404 = vor.u32 %v1403, %v1399
      %v1405 = vrot.slane %v1404, 4
      %v1407 = vshll.u32 %v1275, 16
      %v1409 = vrot.slane %v1407, 5
      %v1410 = vsel %vm1314, %v1405, %v1409
      %v1412 = vshrl.u32 %v1276, 16
      %v1414 = vrot.slane %v1412, 4
      %v1415 = vshll.u32 %v1276, 16
      %v1417 = vrot.slane %v1415, 5
      %v1418 = vor.u32 %v1414, %v1417
      %v1419 = vrot.slane %v1418, 4
      %v1421 = vshll.u32 %v1277, 16
      %v1423 = vrot.slane %v1421, 5
      %v1424 = vsel %vm1314, %v1419, %v1423
      %v1425 = vshrl.u32 %v1277, 16
      %v1427 = vrot.slane %v1425, 4
      %v1428 = vor.u32 %v1427, %v1423
      %v1429 = vrot.slane %v1428, 4
      %v1431 = vshll.u32 %v1278, 16
      %v1433 = vrot.slane %v1431, 5
      %v1434 = vsel %vm1314, %v1429, %v1433
      %v1436 = vshrl.u32 %v1279, 16
      %v1438 = vrot.slane %v1436, 4
      %v1439 = vshll.u32 %v1279, 16
      %v1441 = vrot.slane %v1439, 5
      %v1442 = vor.u32 %v1438, %v1441
      %v1443 = vrot.slane %v1442, 4
      %v1445 = vshll.u32 %v1280, 16
      %v1447 = vrot.slane %v1445, 5
      %v1448 = vsel %vm1314, %v1443, %v1447
      %v1449 = vshrl.u32 %v1280, 16
      %v1451 = vrot.slane %v1449, 4
      %v1452 = vor.u32 %v1451, %v1447
      %v1453 = vrot.slane %v1452, 4
      %v1455 = vshll.u32 %v1281, 16
      %v1457 = vrot.slane %v1455, 5
      %v1458 = vsel %vm1314, %v1453, %v1457
      %v1460 = vshrl.u32 %v1282, 16
      %v1462 = vrot.slane %v1460, 4
      %v1463 = vshll.u32 %v1282, 16
      %v1465 = vrot.slane %v1463, 5
      %v1466 = vor.u32 %v1462, %v1465
      %v1467 = vrot.slane %v1466, 4
      %v1469 = vshll.u32 %v1283, 16
      %v1471 = vrot.slane %v1469, 5
      %v1472 = vsel %vm1314, %v1467, %v1471
      %v1473 = vshrl.u32 %v1283, 16
      %v1475 = vrot.slane %v1473, 4
      %v1476 = vor.u32 %v1475, %v1471
      %v1477 = vrot.slane %v1476, 4
      %v1479 = vshll.u32 %v1284, 16
      %v1481 = vrot.slane %v1479, 5
      %v1482 = vsel %vm1314, %v1477, %v1481
      %v1484 = vshrl.u32 %v1285, 16
      %v1486 = vrot.slane %v1484, 4
      %v1487 = vshll.u32 %v1285, 16
      %v1489 = vrot.slane %v1487, 5
      %v1490 = vor.u32 %v1486, %v1489
      %v1491 = vrot.slane %v1490, 4
      %v1493 = vshll.u32 %v1286, 16
      %v1495 = vrot.slane %v1493, 5
      %v1496 = vsel %vm1314, %v1491, %v1495
      %v1497 = vshrl.u32 %v1286, 16
      %v1499 = vrot.slane %v1497, 4
      %v1500 = vor.u32 %v1499, %v1495
      %v1501 = vrot.slane %v1500, 4
      %v1503 = vshll.u32 %v1287, 16
      %v1505 = vrot.slane %v1503, 5
      %v1506 = vsel %vm1314, %v1501, %v1505
      %v1508 = vshrl.u32 %v1288, 16
      %v1510 = vrot.slane %v1508, 4
      %v1511 = vshll.u32 %v1288, 16
      %v1513 = vrot.slane %v1511, 5
      %v1514 = vor.u32 %v1510, %v1513
      %v1515 = vrot.slane %v1514, 4
      %v1517 = vshll.u32 %v1289, 16
      %v1519 = vrot.slane %v1517, 5
      %v1520 = vsel %vm1314, %v1515, %v1519
      %v1521 = vshrl.u32 %v1289, 16
      %v1523 = vrot.slane %v1521, 4
      %v1524 = vor.u32 %v1523, %v1519
      %v1525 = vrot.slane %v1524, 4
      %v1527 = vshll.u32 %v1290, 16
      %v1529 = vrot.slane %v1527, 5
      %v1530 = vsel %vm1314, %v1525, %v1529
      %v1532 = vshrl.u32 %v1291, 16
      %v1534 = vrot.slane %v1532, 4
      %v1535 = vshll.u32 %v1291, 16
      %v1537 = vrot.slane %v1535, 5
      %v1538 = vor.u32 %v1534, %v1537
      %v1539 = vrot.slane %v1538, 4
      %v1541 = vshll.u32 %v1292, 16
      %v1543 = vrot.slane %v1541, 5
      %v1544 = vsel %vm1314, %v1539, %v1543
      %v1545 = vshrl.u32 %v1292, 16
      %v1547 = vrot.slane %v1545, 4
      %v1548 = vor.u32 %v1547, %v1543
      %v1549 = vrot.slane %v1548, 4
      %v1551 = vshll.u32 %v1293, 16
      %v1553 = vrot.slane %v1551, 5
      %v1554 = vsel %vm1314, %v1549, %v1553
      %v1556 = vshrl.u32 %v1294, 16
      %v1558 = vrot.slane %v1556, 4
      %v1559 = vshll.u32 %v1294, 16
      %v1561 = vrot.slane %v1559, 5
      %v1562 = vor.u32 %v1558, %v1561
      %v1563 = vrot.slane %v1562, 4
      %v1565 = vshll.u32 %v1295, 16
      %v1567 = vrot.slane %v1565, 5
      %v1568 = vsel %vm1314, %v1563, %v1567
      %v1569 = vshrl.u32 %v1295, 16
      %v1571 = vrot.slane %v1569, 4
      %v1572 = vor.u32 %v1571, %v1567
      %v1573 = vrot.slane %v1572, 4
      %v1575 = vshll.u32 %v1296, 16
      %v1577 = vrot.slane %v1575, 5
      %v1578 = vsel %vm1314, %v1573, %v1577
      %v1580 = vshrl.u32 %v1297, 16
      %v1582 = vrot.slane %v1580, 4
      %v1583 = vshll.u32 %v1297, 16
      %v1585 = vrot.slane %v1583, 5
      %v1586 = vor.u32 %v1582, %v1585
      %v1587 = vrot.slane %v1586, 4
      %v1589 = vshll.u32 %v1298, 16
      %v1591 = vrot.slane %v1589, 5
      %v1592 = vsel %vm1314, %v1587, %v1591
      %v1593 = vshrl.u32 %v1298, 16
      %v1595 = vrot.slane %v1593, 4
      %v1596 = vor.u32 %v1595, %v1591
      %v1597 = vrot.slane %v1596, 4
      %v1599 = vshll.u32 %v1299, 16
      %v1601 = vrot.slane %v1599, 5
      %v1602 = vsel %vm1314, %v1597, %v1601
      %v1604 = vshrl.u32 %v1300, 16
      %v1606 = vrot.slane %v1604, 4
      %v1607 = vshll.u32 %v1300, 16
      %v1609 = vrot.slane %v1607, 5
      %v1610 = vor.u32 %v1606, %v1609
      %v1611 = vrot.slane %v1610, 4
      %v1613 = vshll.u32 %v1301, 16
      %v1615 = vrot.slane %v1613, 5
      %v1616 = vsel %vm1314, %v1611, %v1615
      %v1617 = vshrl.u32 %v1301, 16
      %v1619 = vrot.slane %v1617, 4
      %v1620 = vor.u32 %v1619, %v1615
      %v1621 = vrot.slane %v1620, 4
      %v1623 = vshll.u32 %v1302, 16
      %v1625 = vrot.slane %v1623, 5
      %v1626 = vsel %vm1314, %v1621, %v1625
      %v1628 = vshrl.u32 %v1303, 16
      %v1630 = vrot.slane %v1628, 4
      %v1631 = vshll.u32 %v1303, 16
      %v1633 = vrot.slane %v1631, 5
      %v1634 = vor.u32 %v1630, %v1633
      %v1635 = vrot.slane %v1634, 4
      %v1637 = vshll.u32 %v1304, 16
      %v1639 = vrot.slane %v1637, 5
      %v1640 = vsel %vm1314, %v1635, %v1639
      %v1641 = vshrl.u32 %v1304, 16
      %v1643 = vrot.slane %v1641, 4
      %v1644 = vor.u32 %v1643, %v1639
      %v1645 = vrot.slane %v1644, 4
      %v1647 = vshll.u32 %v1305, 16
      %v1649 = vrot.slane %v1647, 5
      %v1650 = vsel %vm1314, %v1645, %v1649
      %v1652 = vshrl.u32 %v1306, 16
      %v1654 = vrot.slane %v1652, 4
      %v1655 = vshll.u32 %v1306, 16
      %v1657 = vrot.slane %v1655, 5
      %v1658 = vor.u32 %v1654, %v1657
      %v1659 = vrot.slane %v1658, 4
      %v1661 = vshll.u32 %v1307, 16
      %v1663 = vrot.slane %v1661, 5
      %v1664 = vsel %vm1314, %v1659, %v1663
      %v1665 = vshrl.u32 %v1307, 16
      %v1667 = vrot.slane %v1665, 4
      %v1668 = vor.u32 %v1667, %v1663
      %v1669 = vrot.slane %v1668, 4
      %v1671 = vshll.u32 %v1308, 16
      %v1673 = vrot.slane %v1671, 5
      %v1674 = vsel %vm1314, %v1669, %v1673
      %v1676 = vshrl.u32 %v1309, 16
      %v1678 = vrot.slane %v1676, 4
      %v1679 = vshll.u32 %v1309, 16
      %v1681 = vrot.slane %v1679, 5
      %v1682 = vor.u32 %v1678, %v1681
      %v1683 = vrot.slane %v1682, 4
      %v1685 = vshll.u32 %v1310, 16
      %v1687 = vrot.slane %v1685, 5
      %v1688 = vsel %vm1314, %v1683, %v1687
      %v1689 = vshrl.u32 %v1310, 16
      %v1691 = vrot.slane %v1689, 4
      %v1692 = vor.u32 %v1691, %v1687
      %v1693 = vrot.slane %v1692, 4
      %v1695 = vshll.u32 %v1311, 16
      %v1697 = vrot.slane %v1695, 5
      %v1698 = vsel %vm1314, %v1693, %v1697
      %s1699 = sadd.s32 %s360, 1
      %s1700 = smul.u32 %s1699, 64
      %s1701 = smul.addr %s1700, 4
      %s1702 = scalar_lea.vmem %s1, %s1701
      %v1703 = vld [vmem:[%s1702] sm:$0xff]
      %v1704 = vld [vmem:[%s1702 + $0x8] sm:$0xff]
      %v1705 = vld [vmem:[%s1702 + $0x10] sm:$0xff]
      %v1706 = vld [vmem:[%s1702 + $0x18] sm:$0xff]
      %v1707 = vld [vmem:[%s1702 + $0x20] sm:$0xff]
      %v1708 = vld [vmem:[%s1702 + $0x28] sm:$0xff]
      %v1709 = vld [vmem:[%s1702 + $0x30] sm:$0xff]
      %v1710 = vld [vmem:[%s1702 + $0x38] sm:$0xff]
      %v1711 = vld [vmem:[%s1702 + $0x40] sm:$0xff]
      %v1712 = vld [vmem:[%s1702 + $0x48] sm:$0xff]
      %v1713 = vld [vmem:[%s1702 + $0x50] sm:$0xff]
      %v1714 = vld [vmem:[%s1702 + $0x58] sm:$0xff]
      %v1715 = vld [vmem:[%s1702 + $0x60] sm:$0xff]
      %v1716 = vld [vmem:[%s1702 + $0x68] sm:$0xff]
      %v1717 = vld [vmem:[%s1702 + $0x70] sm:$0xff]
      %v1718 = vld [vmem:[%s1702 + $0x78] sm:$0xff]
      %v1719 = vld [vmem:[%s1702 + $0x80] sm:$0xff]
      %v1720 = vld [vmem:[%s1702 + $0x88] sm:$0xff]
      %v1721 = vld [vmem:[%s1702 + $0x90] sm:$0xff]
      %v1722 = vld [vmem:[%s1702 + $0x98] sm:$0xff]
      %v1723 = vld [vmem:[%s1702 + $0xa0] sm:$0xff]
      %v1724 = vld [vmem:[%s1702 + $0xa8] sm:$0xff]
      %v1725 = vld [vmem:[%s1702 + $0xb0] sm:$0xff]
      %v1726 = vld [vmem:[%s1702 + $0xb8] sm:$0xff]
      %v1727 = vld [vmem:[%s1702 + $0xc0] sm:$0xff]
      %v1728 = vld [vmem:[%s1702 + $0xc8] sm:$0xff]
      %v1729 = vld [vmem:[%s1702 + $0xd0] sm:$0xff]
      %v1730 = vld [vmem:[%s1702 + $0xd8] sm:$0xff]
      %v1731 = vld [vmem:[%s1702 + $0xe0] sm:$0xff]
      %v1732 = vld [vmem:[%s1702 + $0xe8] sm:$0xff]
      %v1733 = vld [vmem:[%s1702 + $0xf0] sm:$0xff]
      %v1734 = vld [vmem:[%s1702 + $0xf8] sm:$0xff]
      %v1735 = vld [vmem:[#allocation2] sm:$0xff]
      %v1736 = vld [vmem:[#allocation2 + $0x8] sm:$0xff]
      %v1737 = vld [vmem:[#allocation2 + $0x10] sm:$0xff]
      %v1738 = vld [vmem:[#allocation2 + $0x18] sm:$0xff]
      %v1739 = vld [vmem:[#allocation2 + $0x20] sm:$0xff]
      %v1740 = vld [vmem:[#allocation2 + $0x28] sm:$0xff]
      %v1741 = vld [vmem:[#allocation2 + $0x30] sm:$0xff]
      %v1742 = vld [vmem:[#allocation2 + $0x38] sm:$0xff]
      %v1743 = vld [vmem:[#allocation2 + $0x40] sm:$0xff]
      %v1744 = vld [vmem:[#allocation2 + $0x48] sm:$0xff]
      %v1745 = vld [vmem:[#allocation2 + $0x50] sm:$0xff]
      %v1746 = vld [vmem:[#allocation2 + $0x58] sm:$0xff]
      %v1747 = vld [vmem:[#allocation2 + $0x60] sm:$0xff]
      %v1748 = vld [vmem:[#allocation2 + $0x68] sm:$0xff]
      %v1749 = vld [vmem:[#allocation2 + $0x70] sm:$0xff]
      %v1750 = vld [vmem:[#allocation2 + $0x78] sm:$0xff]
      %v1751 = vld [vmem:[#allocation2 + $0x80] sm:$0xff]
      %v1752 = vld [vmem:[#allocation2 + $0x88] sm:$0xff]
      %v1753 = vld [vmem:[#allocation2 + $0x90] sm:$0xff]
      %v1754 = vld [vmem:[#allocation2 + $0x98] sm:$0xff]
      %v1755 = vld [vmem:[#allocation2 + $0xa0] sm:$0xff]
      %v1756 = vld [vmem:[#allocation2 + $0xa8] sm:$0xff]
      %v1757 = vld [vmem:[#allocation2 + $0xb0] sm:$0xff]
      %v1758 = vld [vmem:[#allocation2 + $0xb8] sm:$0xff]
      %v1759 = vld [vmem:[#allocation2 + $0xc0] sm:$0xff]
      %v1760 = vld [vmem:[#allocation2 + $0xc8] sm:$0xff]
      %v1761 = vld [vmem:[#allocation2 + $0xd0] sm:$0xff]
      %v1762 = vld [vmem:[#allocation2 + $0xd8] sm:$0xff]
      %v1763 = vld [vmem:[#allocation2 + $0xe0] sm:$0xff]
      %v1764 = vld [vmem:[#allocation2 + $0xe8] sm:$0xff]
      %v1765 = vld [vmem:[#allocation2 + $0xf0] sm:$0xff]
      %v1766 = vld [vmem:[#allocation2 + $0xf8] sm:$0xff]
      %v1767 = vld [vmem:[#allocation2 + $0x100] sm:$0xff]
      %v1768 = vld [vmem:[#allocation2 + $0x108] sm:$0xff]
      %v1769 = vld [vmem:[#allocation2 + $0x110] sm:$0xff]
      %v1770 = vld [vmem:[#allocation2 + $0x118] sm:$0xff]
      %v1771 = vld [vmem:[#allocation2 + $0x120] sm:$0xff]
      %v1772 = vld [vmem:[#allocation2 + $0x128] sm:$0xff]
      %v1773 = vld [vmem:[#allocation2 + $0x130] sm:$0xff]
      %v1774 = vld [vmem:[#allocation2 + $0x138] sm:$0xff]
      %v1775 = vld [vmem:[#allocation2 + $0x140] sm:$0xff]
      %v1776 = vld [vmem:[#allocation2 + $0x148] sm:$0xff]
      %v1777 = vld [vmem:[#allocation2 + $0x150] sm:$0xff]
      %v1778 = vld [vmem:[#allocation2 + $0x158] sm:$0xff]
      %v1779 = vld [vmem:[#allocation2 + $0x160] sm:$0xff]
      %v1780 = vld [vmem:[#allocation2 + $0x168] sm:$0xff]
      %v1781 = vld [vmem:[#allocation2 + $0x170] sm:$0xff]
      %v1782 = vld [vmem:[#allocation2 + $0x178] sm:$0xff]
      %v1783 = vld [vmem:[#allocation2 + $0x180] sm:$0xff]
      %v1784 = vld [vmem:[#allocation2 + $0x188] sm:$0xff]
      %v1785 = vld [vmem:[#allocation2 + $0x190] sm:$0xff]
      %v1786 = vld [vmem:[#allocation2 + $0x198] sm:$0xff]
      %v1787 = vld [vmem:[#allocation2 + $0x1a0] sm:$0xff]
      %v1788 = vld [vmem:[#allocation2 + $0x1a8] sm:$0xff]
      %v1789 = vld [vmem:[#allocation2 + $0x1b0] sm:$0xff]
      %v1790 = vld [vmem:[#allocation2 + $0x1b8] sm:$0xff]
      %v1791 = vld [vmem:[#allocation2 + $0x1c0] sm:$0xff]
      %v1792 = vld [vmem:[#allocation2 + $0x1c8] sm:$0xff]
      %v1793 = vld [vmem:[#allocation2 + $0x1d0] sm:$0xff]
      %v1794 = vld [vmem:[#allocation2 + $0x1d8] sm:$0xff]
      %v1795 = vld [vmem:[#allocation2 + $0x1e0] sm:$0xff]
      %v1796 = vld [vmem:[#allocation2 + $0x1e8] sm:$0xff]
      %v1797 = vld [vmem:[#allocation2 + $0x1f0] sm:$0xff]
      %v1798 = vld [vmem:[#allocation2 + $0x1f8] sm:$0xff]
      %v1799 = vunpack.c.l.b16 %v1328
      %v1800 = vunpack.c.h.b16 %v1328
      %v1801 = vunpack.c.l.b16 %v1338
      %v1802 = vunpack.c.h.b16 %v1338
      %v1803 = vunpack.c.l.b16 %v1352
      %v1804 = vunpack.c.h.b16 %v1352
      %v1805 = vunpack.c.l.b16 %v1362
      %v1806 = vunpack.c.h.b16 %v1362
      %v1807 = vunpack.c.l.b16 %v1376
      %v1808 = vunpack.c.h.b16 %v1376
      %v1809 = vunpack.c.l.b16 %v1386
      %v1810 = vunpack.c.h.b16 %v1386
      %v1811 = vunpack.c.l.b16 %v1400
      %v1812 = vunpack.c.h.b16 %v1400
      %v1813 = vunpack.c.l.b16 %v1410
      %v1814 = vunpack.c.h.b16 %v1410
      %v1815 = vunpack.c.l.b16 %v1424
      %v1816 = vunpack.c.h.b16 %v1424
      %v1817 = vunpack.c.l.b16 %v1434
      %v1818 = vunpack.c.h.b16 %v1434
      %v1819 = vunpack.c.l.b16 %v1448
      %v1820 = vunpack.c.h.b16 %v1448
      %v1821 = vunpack.c.l.b16 %v1458
      %v1822 = vunpack.c.h.b16 %v1458
      %v1823 = vunpack.c.l.b16 %v1472
      %v1824 = vunpack.c.h.b16 %v1472
      %v1825 = vunpack.c.l.b16 %v1482
      %v1826 = vunpack.c.h.b16 %v1482
      %v1827 = vunpack.c.l.b16 %v1496
      %v1828 = vunpack.c.h.b16 %v1496
      %v1829 = vunpack.c.l.b16 %v1506
      %v1830 = vunpack.c.h.b16 %v1506
      %v1831 = vunpack.c.l.b16 %v1520
      %v1832 = vunpack.c.h.b16 %v1520
      %v1833 = vunpack.c.l.b16 %v1530
      %v1834 = vunpack.c.h.b16 %v1530
      %v1835 = vunpack.c.l.b16 %v1544
      %v1836 = vunpack.c.h.b16 %v1544
      %v1837 = vunpack.c.l.b16 %v1554
      %v1838 = vunpack.c.h.b16 %v1554
      %v1839 = vunpack.c.l.b16 %v1568
      %v1840 = vunpack.c.h.b16 %v1568
      %v1841 = vunpack.c.l.b16 %v1578
      %v1842 = vunpack.c.h.b16 %v1578
      %v1843 = vunpack.c.l.b16 %v1592
      %v1844 = vunpack.c.h.b16 %v1592
      %v1845 = vunpack.c.l.b16 %v1602
      %v1846 = vunpack.c.h.b16 %v1602
      %v1847 = vunpack.c.l.b16 %v1616
      %v1848 = vunpack.c.h.b16 %v1616
      %v1849 = vunpack.c.l.b16 %v1626
      %v1850 = vunpack.c.h.b16 %v1626
      %v1851 = vunpack.c.l.b16 %v1640
      %v1852 = vunpack.c.h.b16 %v1640
      %v1853 = vunpack.c.l.b16 %v1650
      %v1854 = vunpack.c.h.b16 %v1650
      %v1855 = vunpack.c.l.b16 %v1664
      %v1856 = vunpack.c.h.b16 %v1664
      %v1857 = vunpack.c.l.b16 %v1674
      %v1858 = vunpack.c.h.b16 %v1674
      %v1859 = vunpack.c.l.b16 %v1688
      %v1860 = vunpack.c.h.b16 %v1688
      %v1861 = vunpack.c.l.b16 %v1698
      %v1862 = vunpack.c.h.b16 %v1698
      %v1863 = vpack.c.b16 %v1801, %v1799
      %v1864 = vpack.c.b16 %v1802, %v1800
      %v1865 = vpack.c.b16 %v1805, %v1803
      %v1866 = vpack.c.b16 %v1806, %v1804
      %v1867 = vpack.c.b16 %v1809, %v1807
      %v1868 = vpack.c.b16 %v1810, %v1808
      %v1869 = vpack.c.b16 %v1813, %v1811
      %v1870 = vpack.c.b16 %v1814, %v1812
      %v1871 = vpack.c.b16 %v1817, %v1815
      %v1872 = vpack.c.b16 %v1818, %v1816
      %v1873 = vpack.c.b16 %v1821, %v1819
      %v1874 = vpack.c.b16 %v1822, %v1820
      %v1875 = vpack.c.b16 %v1825, %v1823
      %v1876 = vpack.c.b16 %v1826, %v1824
      %v1877 = vpack.c.b16 %v1829, %v1827
      %v1878 = vpack.c.b16 %v1830, %v1828
      %v1879 = vpack.c.b16 %v1833, %v1831
      %v1880 = vpack.c.b16 %v1834, %v1832
      %v1881 = vpack.c.b16 %v1837, %v1835
      %v1882 = vpack.c.b16 %v1838, %v1836
      %v1883 = vpack.c.b16 %v1841, %v1839
      %v1884 = vpack.c.b16 %v1842, %v1840
      %v1885 = vpack.c.b16 %v1845, %v1843
      %v1886 = vpack.c.b16 %v1846, %v1844
      %v1887 = vpack.c.b16 %v1849, %v1847
      %v1888 = vpack.c.b16 %v1850, %v1848
      %v1889 = vpack.c.b16 %v1853, %v1851
      %v1890 = vpack.c.b16 %v1854, %v1852
      %v1891 = vpack.c.b16 %v1857, %v1855
      %v1892 = vpack.c.b16 %v1858, %v1856
      %v1893 = vpack.c.b16 %v1861, %v1859
      %v1894 = vpack.c.b16 %v1862, %v1860
      %v1959 = vunpack.c.l.b16 %v1703
      %v1960 = vunpack.c.h.b16 %v1703
      %v1961 = vunpack.c.l.b16 %v1704
      %v1962 = vunpack.c.h.b16 %v1704
      %v1963 = vunpack.c.l.b16 %v1705
      %v1964 = vunpack.c.h.b16 %v1705
      %v1965 = vunpack.c.l.b16 %v1706
      %v1966 = vunpack.c.h.b16 %v1706
      %v1967 = vunpack.c.l.b16 %v1707
      %v1968 = vunpack.c.h.b16 %v1707
      %v1969 = vunpack.c.l.b16 %v1708
      %v1970 = vunpack.c.h.b16 %v1708
      %v1971 = vunpack.c.l.b16 %v1709
      %v1972 = vunpack.c.h.b16 %v1709
      %v1973 = vunpack.c.l.b16 %v1710
      %v1974 = vunpack.c.h.b16 %v1710
      %v1975 = vunpack.c.l.b16 %v1711
      %v1976 = vunpack.c.h.b16 %v1711
      %v1977 = vunpack.c.l.b16 %v1712
      %v1978 = vunpack.c.h.b16 %v1712
      %v1979 = vunpack.c.l.b16 %v1713
      %v1980 = vunpack.c.h.b16 %v1713
      %v1981 = vunpack.c.l.b16 %v1714
      %v1982 = vunpack.c.h.b16 %v1714
      %v1983 = vunpack.c.l.b16 %v1715
      %v1984 = vunpack.c.h.b16 %v1715
      %v1985 = vunpack.c.l.b16 %v1716
      %v1986 = vunpack.c.h.b16 %v1716
      %v1987 = vunpack.c.l.b16 %v1717
      %v1988 = vunpack.c.h.b16 %v1717
      %v1989 = vunpack.c.l.b16 %v1718
      %v1990 = vunpack.c.h.b16 %v1718
      %v1991 = vunpack.c.l.b16 %v1719
      %v1992 = vunpack.c.h.b16 %v1719
      %v1993 = vunpack.c.l.b16 %v1720
      %v1994 = vunpack.c.h.b16 %v1720
      %v1995 = vunpack.c.l.b16 %v1721
      %v1996 = vunpack.c.h.b16 %v1721
      %v1997 = vunpack.c.l.b16 %v1722
      %v1998 = vunpack.c.h.b16 %v1722
      %v1999 = vunpack.c.l.b16 %v1723
      %v2000 = vunpack.c.h.b16 %v1723
      %v2001 = vunpack.c.l.b16 %v1724
      %v2002 = vunpack.c.h.b16 %v1724
      %v2003 = vunpack.c.l.b16 %v1725
      %v2004 = vunpack.c.h.b16 %v1725
      %v2005 = vunpack.c.l.b16 %v1726
      %v2006 = vunpack.c.h.b16 %v1726
      %v2007 = vunpack.c.l.b16 %v1727
      %v2008 = vunpack.c.h.b16 %v1727
      %v2009 = vunpack.c.l.b16 %v1728
      %v2010 = vunpack.c.h.b16 %v1728
      %v2011 = vunpack.c.l.b16 %v1729
      %v2012 = vunpack.c.h.b16 %v1729
      %v2013 = vunpack.c.l.b16 %v1730
      %v2014 = vunpack.c.h.b16 %v1730
      %v2015 = vunpack.c.l.b16 %v1731
      %v2016 = vunpack.c.h.b16 %v1731
      %v2017 = vunpack.c.l.b16 %v1732
      %v2018 = vunpack.c.h.b16 %v1732
      %v2019 = vunpack.c.l.b16 %v1733
      %v2020 = vunpack.c.h.b16 %v1733
      %v2021 = vunpack.c.l.b16 %v1734
      %v2022 = vunpack.c.h.b16 %v1734
      %v2023 = vpack.c.b16 %v1961, %v1959
      %v2024 = vpack.c.b16 %v1962, %v1960
      %v2025 = vpack.c.b16 %v1965, %v1963
      %v2026 = vpack.c.b16 %v1966, %v1964
      %v2027 = vpack.c.b16 %v1969, %v1967
      %v2028 = vpack.c.b16 %v1970, %v1968
      %v2029 = vpack.c.b16 %v1973, %v1971
      %v2030 = vpack.c.b16 %v1974, %v1972
      %v2031 = vpack.c.b16 %v1977, %v1975
      %v2032 = vpack.c.b16 %v1978, %v1976
      %v2033 = vpack.c.b16 %v1981, %v1979
      %v2034 = vpack.c.b16 %v1982, %v1980
      %v2035 = vpack.c.b16 %v1985, %v1983
      %v2036 = vpack.c.b16 %v1986, %v1984
      %v2037 = vpack.c.b16 %v1989, %v1987
      %v2038 = vpack.c.b16 %v1990, %v1988
      %v2039 = vpack.c.b16 %v1993, %v1991
      %v2040 = vpack.c.b16 %v1994, %v1992
      %v2041 = vpack.c.b16 %v1997, %v1995
      %v2042 = vpack.c.b16 %v1998, %v1996
      %v2043 = vpack.c.b16 %v2001, %v1999
      %v2044 = vpack.c.b16 %v2002, %v2000
      %v2045 = vpack.c.b16 %v2005, %v2003
      %v2046 = vpack.c.b16 %v2006, %v2004
      %v2047 = vpack.c.b16 %v2009, %v2007
      %v2048 = vpack.c.b16 %v2010, %v2008
      %v2049 = vpack.c.b16 %v2013, %v2011
      %v2050 = vpack.c.b16 %v2014, %v2012
      %v2051 = vpack.c.b16 %v2017, %v2015
      %v2052 = vpack.c.b16 %v2018, %v2016
      %v2053 = vpack.c.b16 %v2021, %v2019
      %v2054 = vpack.c.b16 %v2022, %v2020
      %2087 = vmatpush.bf16.msra.mxu0 %v2037
      %2088 = vmatpush.bf16.msra.mxu0 %v2035
      %2089 = vmatpush.bf16.msra.mxu0 %v2033
      %2090 = vmatpush.bf16.msra.mxu0 %v2031
      %2091 = vmatpush.bf16.msra.mxu0 %v2029
      %2092 = vmatpush.bf16.msra.mxu0 %v2027
      %2093 = vmatpush.bf16.msra.mxu0 %v2025
      %2094 = vmatpush.bf16.msra.mxu0 %v2023
      %2095 = vmatmul.bf16.gmra.mxu0 %v1863
      %v2096 = vpop.f32.mrf.mxu0
      %v2097 = vadd.f32 0.0, %v2096
      %v2098 = vpop.f32.mrf.mxu0
      %v2099 = vadd.f32 0.0, %v2098
      %2100 = vmatmul.bf16.gmra.mxu0 %v1865
      %v2101 = vpop.f32.mrf.mxu0
      %v2102 = vadd.f32 0.0, %v2101
      %v2103 = vpop.f32.mrf.mxu0
      %v2104 = vadd.f32 0.0, %v2103
      %2105 = vmatmul.bf16.gmra.mxu0 %v1867
      %v2106 = vpop.f32.mrf.mxu0
      %v2107 = vadd.f32 0.0, %v2106
      %v2108 = vpop.f32.mrf.mxu0
      %v2109 = vadd.f32 0.0, %v2108
      %2110 = vmatmul.bf16.gmra.mxu0 %v1869
      %v2111 = vpop.f32.mrf.mxu0
      %v2112 = vadd.f32 0.0, %v2111
      %v2113 = vpop.f32.mrf.mxu0
      %v2114 = vadd.f32 0.0, %v2113
      %2115 = vmatmul.bf16.gmra.mxu0 %v1871
      %v2116 = vpop.f32.mrf.mxu0
      %v2117 = vadd.f32 0.0, %v2116
      %v2118 = vpop.f32.mrf.mxu0
      %v2119 = vadd.f32 0.0, %v2118
      %2120 = vmatmul.bf16.gmra.mxu0 %v1873
      %v2121 = vpop.f32.mrf.mxu0
      %v2122 = vadd.f32 0.0, %v2121
      %v2123 = vpop.f32.mrf.mxu0
      %v2124 = vadd.f32 0.0, %v2123
      %2125 = vmatmul.bf16.gmra.mxu0 %v1875
      %v2126 = vpop.f32.mrf.mxu0
      %v2127 = vadd.f32 0.0, %v2126
      %v2128 = vpop.f32.mrf.mxu0
      %v2129 = vadd.f32 0.0, %v2128
      %2130 = vmatmul.bf16.gmra.mxu0 %v1877
      %v2131 = vpop.f32.mrf.mxu0
      %v2132 = vadd.f32 0.0, %v2131
      %v2133 = vpop.f32.mrf.mxu0
      %v2134 = vadd.f32 0.0, %v2133
      %2135 = vmatmul.bf16.gmra.mxu0 %v1879
      %v2136 = vpop.f32.mrf.mxu0
      %v2137 = vadd.f32 0.0, %v2136
      %v2138 = vpop.f32.mrf.mxu0
      %v2139 = vadd.f32 0.0, %v2138
      %2140 = vmatmul.bf16.gmra.mxu0 %v1881
      %v2141 = vpop.f32.mrf.mxu0
      %v2142 = vadd.f32 0.0, %v2141
      %v2143 = vpop.f32.mrf.mxu0
      %v2144 = vadd.f32 0.0, %v2143
      %2145 = vmatmul.bf16.gmra.mxu0 %v1883
      %v2146 = vpop.f32.mrf.mxu0
      %v2147 = vadd.f32 0.0, %v2146
      %v2148 = vpop.f32.mrf.mxu0
      %v2149 = vadd.f32 0.0, %v2148
      %2150 = vmatmul.bf16.gmra.mxu0 %v1885
      %v2151 = vpop.f32.mrf.mxu0
      %v2152 = vadd.f32 0.0, %v2151
      %v2153 = vpop.f32.mrf.mxu0
      %v2154 = vadd.f32 0.0, %v2153
      %2155 = vmatmul.bf16.gmra.mxu0 %v1887
      %v2156 = vpop.f32.mrf.mxu0
      %v2157 = vadd.f32 0.0, %v2156
      %v2158 = vpop.f32.mrf.mxu0
      %v2159 = vadd.f32 0.0, %v2158
      %2160 = vmatmul.bf16.gmra.mxu0 %v1889
      %v2161 = vpop.f32.mrf.mxu0
      %v2162 = vadd.f32 0.0, %v2161
      %v2163 = vpop.f32.mrf.mxu0
      %v2164 = vadd.f32 0.0, %v2163
      %2165 = vmatmul.bf16.gmra.mxu0 %v1891
      %v2166 = vpop.f32.mrf.mxu0
      %v2167 = vadd.f32 0.0, %v2166
      %v2168 = vpop.f32.mrf.mxu0
      %v2169 = vadd.f32 0.0, %v2168
      %2170 = vmatmul.bf16.gmra.mxu0 %v1893
      %v2171 = vpop.f32.mrf.mxu0
      %v2172 = vadd.f32 0.0, %v2171
      %v2173 = vpop.f32.mrf.mxu0
      %v2174 = vadd.f32 0.0, %v2173
      %2175 = vdwg.mxu0
      %2176 = vmatpush.bf16.msra.mxu0 %v2053
      %2177 = vmatpush.bf16.msra.mxu0 %v2051
      %2178 = vmatpush.bf16.msra.mxu0 %v2049
      %2179 = vmatpush.bf16.msra.mxu0 %v2047
      %2180 = vmatpush.bf16.msra.mxu0 %v2045
      %2181 = vmatpush.bf16.msra.mxu0 %v2043
      %2182 = vmatpush.bf16.msra.mxu0 %v2041
      %2183 = vmatpush.bf16.msra.mxu0 %v2039
      %2184 = vmatmul.bf16.gmra.mxu0 %v1864
      %v2185 = vpop.f32.mrf.mxu0
      %v2186 = vadd.f32 %v2097, %v2185
      %v2187 = vpop.f32.mrf.mxu0
      %v2188 = vadd.f32 %v2099, %v2187
      %2189 = vmatmul.bf16.gmra.mxu0 %v1866
      %v2190 = vpop.f32.mrf.mxu0
      %v2191 = vadd.f32 %v2102, %v2190
      %v2192 = vpop.f32.mrf.mxu0
      %v2193 = vadd.f32 %v2104, %v2192
      %2194 = vmatmul.bf16.gmra.mxu0 %v1868
      %v2195 = vpop.f32.mrf.mxu0
      %v2196 = vadd.f32 %v2107, %v2195
      %v2197 = vpop.f32.mrf.mxu0
      %v2198 = vadd.f32 %v2109, %v2197
      %2199 = vmatmul.bf16.gmra.mxu0 %v1870
      %v2200 = vpop.f32.mrf.mxu0
      %v2201 = vadd.f32 %v2112, %v2200
      %v2202 = vpop.f32.mrf.mxu0
      %v2203 = vadd.f32 %v2114, %v2202
      %2204 = vmatmul.bf16.gmra.mxu0 %v1872
      %v2205 = vpop.f32.mrf.mxu0
      %v2206 = vadd.f32 %v2117, %v2205
      %v2207 = vpop.f32.mrf.mxu0
      %v2208 = vadd.f32 %v2119, %v2207
      %2209 = vmatmul.bf16.gmra.mxu0 %v1874
      %v2210 = vpop.f32.mrf.mxu0
      %v2211 = vadd.f32 %v2122, %v2210
      %v2212 = vpop.f32.mrf.mxu0
      %v2213 = vadd.f32 %v2124, %v2212
      %2214 = vmatmul.bf16.gmra.mxu0 %v1876
      %v2215 = vpop.f32.mrf.mxu0
      %v2216 = vadd.f32 %v2127, %v2215
      %v2217 = vpop.f32.mrf.mxu0
      %v2218 = vadd.f32 %v2129, %v2217
      %2219 = vmatmul.bf16.gmra.mxu0 %v1878
      %v2220 = vpop.f32.mrf.mxu0
      %v2221 = vadd.f32 %v2132, %v2220
      %v2222 = vpop.f32.mrf.mxu0
      %v2223 = vadd.f32 %v2134, %v2222
      %2224 = vmatmul.bf16.gmra.mxu0 %v1880
      %v2225 = vpop.f32.mrf.mxu0
      %v2226 = vadd.f32 %v2137, %v2225
      %v2227 = vpop.f32.mrf.mxu0
      %v2228 = vadd.f32 %v2139, %v2227
      %2229 = vmatmul.bf16.gmra.mxu0 %v1882
      %v2230 = vpop.f32.mrf.mxu0
      %v2231 = vadd.f32 %v2142, %v2230
      %v2232 = vpop.f32.mrf.mxu0
      %v2233 = vadd.f32 %v2144, %v2232
      %2234 = vmatmul.bf16.gmra.mxu0 %v1884
      %v2235 = vpop.f32.mrf.mxu0
      %v2236 = vadd.f32 %v2147, %v2235
      %v2237 = vpop.f32.mrf.mxu0
      %v2238 = vadd.f32 %v2149, %v2237
      %2239 = vmatmul.bf16.gmra.mxu0 %v1886
      %v2240 = vpop.f32.mrf.mxu0
      %v2241 = vadd.f32 %v2152, %v2240
      %v2242 = vpop.f32.mrf.mxu0
      %v2243 = vadd.f32 %v2154, %v2242
      %2244 = vmatmul.bf16.gmra.mxu0 %v1888
      %v2245 = vpop.f32.mrf.mxu0
      %v2246 = vadd.f32 %v2157, %v2245
      %v2247 = vpop.f32.mrf.mxu0
      %v2248 = vadd.f32 %v2159, %v2247
      %2249 = vmatmul.bf16.gmra.mxu0 %v1890
      %v2250 = vpop.f32.mrf.mxu0
      %v2251 = vadd.f32 %v2162, %v2250
      %v2252 = vpop.f32.mrf.mxu0
      %v2253 = vadd.f32 %v2164, %v2252
      %2254 = vmatmul.bf16.gmra.mxu0 %v1892
      %v2255 = vpop.f32.mrf.mxu0
      %v2256 = vadd.f32 %v2167, %v2255
      %v2257 = vpop.f32.mrf.mxu0
      %v2258 = vadd.f32 %v2169, %v2257
      %2259 = vmatmul.bf16.gmra.mxu0 %v1894
      %v2260 = vpop.f32.mrf.mxu0
      %v2261 = vadd.f32 %v2172, %v2260
      %v2262 = vpop.f32.mrf.mxu0
      %v2263 = vadd.f32 %v2174, %v2262
      %2264 = vdwg.mxu0
      %2265 = vmatpush.bf16.msra.mxu0 %v2038
      %2266 = vmatpush.bf16.msra.mxu0 %v2036
      %2267 = vmatpush.bf16.msra.mxu0 %v2034
      %2268 = vmatpush.bf16.msra.mxu0 %v2032
      %2269 = vmatpush.bf16.msra.mxu0 %v2030
      %2270 = vmatpush.bf16.msra.mxu0 %v2028
      %2271 = vmatpush.bf16.msra.mxu0 %v2026
      %2272 = vmatpush.bf16.msra.mxu0 %v2024
      %2273 = vmatmul.bf16.gmra.mxu0 %v1863
      %v2274 = vpop.f32.mrf.mxu0
      %v2275 = vadd.f32 0.0, %v2274
      %v2276 = vpop.f32.mrf.mxu0
      %v2277 = vadd.f32 0.0, %v2276
      %2278 = vmatmul.bf16.gmra.mxu0 %v1865
      %v2279 = vpop.f32.mrf.mxu0
      %v2280 = vadd.f32 0.0, %v2279
      %v2281 = vpop.f32.mrf.mxu0
      %v2282 = vadd.f32 0.0, %v2281
      %2283 = vmatmul.bf16.gmra.mxu0 %v1867
      %v2284 = vpop.f32.mrf.mxu0
      %v2285 = vadd.f32 0.0, %v2284
      %v2286 = vpop.f32.mrf.mxu0
      %v2287 = vadd.f32 0.0, %v2286
      %2288 = vmatmul.bf16.gmra.mxu0 %v1869
      %v2289 = vpop.f32.mrf.mxu0
      %v2290 = vadd.f32 0.0, %v2289
      %v2291 = vpop.f32.mrf.mxu0
      %v2292 = vadd.f32 0.0, %v2291
      %2293 = vmatmul.bf16.gmra.mxu0 %v1871
      %v2294 = vpop.f32.mrf.mxu0
      %v2295 = vadd.f32 0.0, %v2294
      %v2296 = vpop.f32.mrf.mxu0
      %v2297 = vadd.f32 0.0, %v2296
      %2298 = vmatmul.bf16.gmra.mxu0 %v1873
      %v2299 = vpop.f32.mrf.mxu0
      %v2300 = vadd.f32 0.0, %v2299
      %v2301 = vpop.f32.mrf.mxu0
      %v2302 = vadd.f32 0.0, %v2301
      %2303 = vmatmul.bf16.gmra.mxu0 %v1875
      %v2304 = vpop.f32.mrf.mxu0
      %v2305 = vadd.f32 0.0, %v2304
      %v2306 = vpop.f32.mrf.mxu0
      %v2307 = vadd.f32 0.0, %v2306
      %2308 = vmatmul.bf16.gmra.mxu0 %v1877
      %v2309 = vpop.f32.mrf.mxu0
      %v2310 = vadd.f32 0.0, %v2309
      %v2311 = vpop.f32.mrf.mxu0
      %v2312 = vadd.f32 0.0, %v2311
      %2313 = vmatmul.bf16.gmra.mxu0 %v1879
      %v2314 = vpop.f32.mrf.mxu0
      %v2315 = vadd.f32 0.0, %v2314
      %v2316 = vpop.f32.mrf.mxu0
      %v2317 = vadd.f32 0.0, %v2316
      %2318 = vmatmul.bf16.gmra.mxu0 %v1881
      %v2319 = vpop.f32.mrf.mxu0
      %v2320 = vadd.f32 0.0, %v2319
      %v2321 = vpop.f32.mrf.mxu0
      %v2322 = vadd.f32 0.0, %v2321
      %2323 = vmatmul.bf16.gmra.mxu0 %v1883
      %v2324 = vpop.f32.mrf.mxu0
      %v2325 = vadd.f32 0.0, %v2324
      %v2326 = vpop.f32.mrf.mxu0
      %v2327 = vadd.f32 0.0, %v2326
      %2328 = vmatmul.bf16.gmra.mxu0 %v1885
      %v2329 = vpop.f32.mrf.mxu0
      %v2330 = vadd.f32 0.0, %v2329
      %v2331 = vpop.f32.mrf.mxu0
      %v2332 = vadd.f32 0.0, %v2331
      %2333 = vmatmul.bf16.gmra.mxu0 %v1887
      %v2334 = vpop.f32.mrf.mxu0
      %v2335 = vadd.f32 0.0, %v2334
      %v2336 = vpop.f32.mrf.mxu0
      %v2337 = vadd.f32 0.0, %v2336
      %2338 = vmatmul.bf16.gmra.mxu0 %v1889
      %v2339 = vpop.f32.mrf.mxu0
      %v2340 = vadd.f32 0.0, %v2339
      %v2341 = vpop.f32.mrf.mxu0
      %v2342 = vadd.f32 0.0, %v2341
      %2343 = vmatmul.bf16.gmra.mxu0 %v1891
      %v2344 = vpop.f32.mrf.mxu0
      %v2345 = vadd.f32 0.0, %v2344
      %v2346 = vpop.f32.mrf.mxu0
      %v2347 = vadd.f32 0.0, %v2346
      %2348 = vmatmul.bf16.gmra.mxu0 %v1893
      %v2349 = vpop.f32.mrf.mxu0
      %v2350 = vadd.f32 0.0, %v2349
      %v2351 = vpop.f32.mrf.mxu0
      %v2352 = vadd.f32 0.0, %v2351
      %2353 = vdwg.mxu0
      %2354 = vmatpush.bf16.msra.mxu0 %v2054
      %2355 = vmatpush.bf16.msra.mxu0 %v2052
      %2356 = vmatpush.bf16.msra.mxu0 %v2050
      %2357 = vmatpush.bf16.msra.mxu0 %v2048
      %2358 = vmatpush.bf16.msra.mxu0 %v2046
      %2359 = vmatpush.bf16.msra.mxu0 %v2044
      %2360 = vmatpush.bf16.msra.mxu0 %v2042
      %2361 = vmatpush.bf16.msra.mxu0 %v2040
      %2362 = vmatmul.bf16.gmra.mxu0 %v1864
      %v2363 = vpop.f32.mrf.mxu0
      %v2364 = vadd.f32 %v2275, %v2363
      %v2365 = vpop.f32.mrf.mxu0
      %v2366 = vadd.f32 %v2277, %v2365
      %2367 = vmatmul.bf16.gmra.mxu0 %v1866
      %v2368 = vpop.f32.mrf.mxu0
      %v2369 = vadd.f32 %v2280, %v2368
      %v2370 = vpop.f32.mrf.mxu0
      %v2371 = vadd.f32 %v2282, %v2370
      %2372 = vmatmul.bf16.gmra.mxu0 %v1868
      %v2373 = vpop.f32.mrf.mxu0
      %v2374 = vadd.f32 %v2285, %v2373
      %v2375 = vpop.f32.mrf.mxu0
      %v2376 = vadd.f32 %v2287, %v2375
      %2377 = vmatmul.bf16.gmra.mxu0 %v1870
      %v2378 = vpop.f32.mrf.mxu0
      %v2379 = vadd.f32 %v2290, %v2378
      %v2380 = vpop.f32.mrf.mxu0
      %v2381 = vadd.f32 %v2292, %v2380
      %2382 = vmatmul.bf16.gmra.mxu0 %v1872
      %v2383 = vpop.f32.mrf.mxu0
      %v2384 = vadd.f32 %v2295, %v2383
      %v2385 = vpop.f32.mrf.mxu0
      %v2386 = vadd.f32 %v2297, %v2385
      %2387 = vmatmul.bf16.gmra.mxu0 %v1874
      %v2388 = vpop.f32.mrf.mxu0
      %v2389 = vadd.f32 %v2300, %v2388
      %v2390 = vpop.f32.mrf.mxu0
      %v2391 = vadd.f32 %v2302, %v2390
      %2392 = vmatmul.bf16.gmra.mxu0 %v1876
      %v2393 = vpop.f32.mrf.mxu0
      %v2394 = vadd.f32 %v2305, %v2393
      %v2395 = vpop.f32.mrf.mxu0
      %v2396 = vadd.f32 %v2307, %v2395
      %2397 = vmatmul.bf16.gmra.mxu0 %v1878
      %v2398 = vpop.f32.mrf.mxu0
      %v2399 = vadd.f32 %v2310, %v2398
      %v2400 = vpop.f32.mrf.mxu0
      %v2401 = vadd.f32 %v2312, %v2400
      %2402 = vmatmul.bf16.gmra.mxu0 %v1880
      %v2403 = vpop.f32.mrf.mxu0
      %v2404 = vadd.f32 %v2315, %v2403
      %v2405 = vpop.f32.mrf.mxu0
      %v2406 = vadd.f32 %v2317, %v2405
      %2407 = vmatmul.bf16.gmra.mxu0 %v1882
      %v2408 = vpop.f32.mrf.mxu0
      %v2409 = vadd.f32 %v2320, %v2408
      %v2410 = vpop.f32.mrf.mxu0
      %v2411 = vadd.f32 %v2322, %v2410
      %2412 = vmatmul.bf16.gmra.mxu0 %v1884
      %v2413 = vpop.f32.mrf.mxu0
      %v2414 = vadd.f32 %v2325, %v2413
      %v2415 = vpop.f32.mrf.mxu0
      %v2416 = vadd.f32 %v2327, %v2415
      %2417 = vmatmul.bf16.gmra.mxu0 %v1886
      %v2418 = vpop.f32.mrf.mxu0
      %v2419 = vadd.f32 %v2330, %v2418
      %v2420 = vpop.f32.mrf.mxu0
      %v2421 = vadd.f32 %v2332, %v2420
      %2422 = vmatmul.bf16.gmra.mxu0 %v1888
      %v2423 = vpop.f32.mrf.mxu0
      %v2424 = vadd.f32 %v2335, %v2423
      %v2425 = vpop.f32.mrf.mxu0
      %v2426 = vadd.f32 %v2337, %v2425
      %2427 = vmatmul.bf16.gmra.mxu0 %v1890
      %v2428 = vpop.f32.mrf.mxu0
      %v2429 = vadd.f32 %v2340, %v2428
      %v2430 = vpop.f32.mrf.mxu0
      %v2431 = vadd.f32 %v2342, %v2430
      %2432 = vmatmul.bf16.gmra.mxu0 %v1892
      %v2433 = vpop.f32.mrf.mxu0
      %v2434 = vadd.f32 %v2345, %v2433
      %v2435 = vpop.f32.mrf.mxu0
      %v2436 = vadd.f32 %v2347, %v2435
      %2437 = vmatmul.bf16.gmra.mxu0 %v1894
      %v2438 = vpop.f32.mrf.mxu0
      %v2439 = vadd.f32 %v2350, %v2438
      %v2440 = vpop.f32.mrf.mxu0
      %v2441 = vadd.f32 %v2352, %v2440
      %2442 = vdwg.mxu0
      %v2443 = vadd.f32 %v1735, %v2186
      %v2444 = vadd.f32 %v1736, %v2364
      %v2445 = vadd.f32 %v1737, %v2188
      %v2446 = vadd.f32 %v1738, %v2366
      %v2447 = vadd.f32 %v1739, %v2191
      %v2448 = vadd.f32 %v1740, %v2369
      %v2449 = vadd.f32 %v1741, %v2193
      %v2450 = vadd.f32 %v1742, %v2371
      %v2451 = vadd.f32 %v1743, %v2196
      %v2452 = vadd.f32 %v1744, %v2374
      %v2453 = vadd.f32 %v1745, %v2198
      %v2454 = vadd.f32 %v1746, %v2376
      %v2455 = vadd.f32 %v1747, %v2201
      %v2456 = vadd.f32 %v1748, %v2379
      %v2457 = vadd.f32 %v1749, %v2203
      %v2458 = vadd.f32 %v1750, %v2381
      %v2459 = vadd.f32 %v1751, %v2206
      %v2460 = vadd.f32 %v1752, %v2384
      %v2461 = vadd.f32 %v1753, %v2208
      %v2462 = vadd.f32 %v1754, %v2386
      %v2463 = vadd.f32 %v1755, %v2211
      %v2464 = vadd.f32 %v1756, %v2389
      %v2465 = vadd.f32 %v1757, %v2213
      %v2466 = vadd.f32 %v1758, %v2391
      %v2467 = vadd.f32 %v1759, %v2216
      %v2468 = vadd.f32 %v1760, %v2394
      %v2469 = vadd.f32 %v1761, %v2218
      %v2470 = vadd.f32 %v1762, %v2396
      %v2471 = vadd.f32 %v1763, %v2221
      %v2472 = vadd.f32 %v1764, %v2399
      %v2473 = vadd.f32 %v1765, %v2223
      %v2474 = vadd.f32 %v1766, %v2401
      %v2475 = vadd.f32 %v1767, %v2226
      %v2476 = vadd.f32 %v1768, %v2404
      %v2477 = vadd.f32 %v1769, %v2228
      %v2478 = vadd.f32 %v1770, %v2406
      %v2479 = vadd.f32 %v1771, %v2231
      %v2480 = vadd.f32 %v1772, %v2409
      %v2481 = vadd.f32 %v1773, %v2233
      %v2482 = vadd.f32 %v1774, %v2411
      %v2483 = vadd.f32 %v1775, %v2236
      %v2484 = vadd.f32 %v1776, %v2414
      %v2485 = vadd.f32 %v1777, %v2238
      %v2486 = vadd.f32 %v1778, %v2416
      %v2487 = vadd.f32 %v1779, %v2241
      %v2488 = vadd.f32 %v1780, %v2419
      %v2489 = vadd.f32 %v1781, %v2243
      %v2490 = vadd.f32 %v1782, %v2421
      %v2491 = vadd.f32 %v1783, %v2246
      %v2492 = vadd.f32 %v1784, %v2424
      %v2493 = vadd.f32 %v1785, %v2248
      %v2494 = vadd.f32 %v1786, %v2426
      %v2495 = vadd.f32 %v1787, %v2251
      %v2496 = vadd.f32 %v1788, %v2429
      %v2497 = vadd.f32 %v1789, %v2253
      %v2498 = vadd.f32 %v1790, %v2431
      %v2499 = vadd.f32 %v1791, %v2256
      %v2500 = vadd.f32 %v1792, %v2434
      %v2501 = vadd.f32 %v1793, %v2258
      %v2502 = vadd.f32 %v1794, %v2436
      %v2503 = vadd.f32 %v1795, %v2261
      %v2504 = vadd.f32 %v1796, %v2439
      %v2505 = vadd.f32 %v1797, %v2263
      %v2506 = vadd.f32 %v1798, %v2441
      %2507 = vst [vmem:[#allocation2] sm:$0xff] %v2443
      %2508 = vst [vmem:[#allocation2 + $0x8] sm:$0xff] %v2444
      %2509 = vst [vmem:[#allocation2 + $0x10] sm:$0xff] %v2445
      %2510 = vst [vmem:[#allocation2 + $0x18] sm:$0xff] %v2446
      %2511 = vst [vmem:[#allocation2 + $0x20] sm:$0xff] %v2447
      %2512 = vst [vmem:[#allocation2 + $0x28] sm:$0xff] %v2448
      %2513 = vst [vmem:[#allocation2 + $0x30] sm:$0xff] %v2449
      %2514 = vst [vmem:[#allocation2 + $0x38] sm:$0xff] %v2450
      %2515 = vst [vmem:[#allocation2 + $0x40] sm:$0xff] %v2451
      %2516 = vst [vmem:[#allocation2 + $0x48] sm:$0xff] %v2452
      %2517 = vst [vmem:[#allocation2 + $0x50] sm:$0xff] %v2453
      %2518 = vst [vmem:[#allocation2 + $0x58] sm:$0xff] %v2454
      %2519 = vst [vmem:[#allocation2 + $0x60] sm:$0xff] %v2455
      %2520 = vst [vmem:[#allocation2 + $0x68] sm:$0xff] %v2456
      %2521 = vst [vmem:[#allocation2 + $0x70] sm:$0xff] %v2457
      %2522 = vst [vmem:[#allocation2 + $0x78] sm:$0xff] %v2458
      %2523 = vst [vmem:[#allocation2 + $0x80] sm:$0xff] %v2459
      %2524 = vst [vmem:[#allocation2 + $0x88] sm:$0xff] %v2460
      %2525 = vst [vmem:[#allocation2 + $0x90] sm:$0xff] %v2461
      %2526 = vst [vmem:[#allocation2 + $0x98] sm:$0xff] %v2462
      %2527 = vst [vmem:[#allocation2 + $0xa0] sm:$0xff] %v2463
      %2528 = vst [vmem:[#allocation2 + $0xa8] sm:$0xff] %v2464
      %2529 = vst [vmem:[#allocation2 + $0xb0] sm:$0xff] %v2465
      %2530 = vst [vmem:[#allocation2 + $0xb8] sm:$0xff] %v2466
      %2531 = vst [vmem:[#allocation2 + $0xc0] sm:$0xff] %v2467
      %2532 = vst [vmem:[#allocation2 + $0xc8] sm:$0xff] %v2468
      %2533 = vst [vmem:[#allocation2 + $0xd0] sm:$0xff] %v2469
      %2534 = vst [vmem:[#allocation2 + $0xd8] sm:$0xff] %v2470
      %2535 = vst [vmem:[#allocation2 + $0xe0] sm:$0xff] %v2471
      %2536 = vst [vmem:[#allocation2 + $0xe8] sm:$0xff] %v2472
      %2537 = vst [vmem:[#allocation2 + $0xf0] sm:$0xff] %v2473
      %2538 = vst [vmem:[#allocation2 + $0xf8] sm:$0xff] %v2474
      %2539 = vst [vmem:[#allocation2 + $0x100] sm:$0xff] %v2475
      %2540 = vst [vmem:[#allocation2 + $0x108] sm:$0xff] %v2476
      %2541 = vst [vmem:[#allocation2 + $0x110] sm:$0xff] %v2477
      %2542 = vst [vmem:[#allocation2 + $0x118] sm:$0xff] %v2478
      %2543 = vst [vmem:[#allocation2 + $0x120] sm:$0xff] %v2479
      %2544 = vst [vmem:[#allocation2 + $0x128] sm:$0xff] %v2480
      %2545 = vst [vmem:[#allocation2 + $0x130] sm:$0xff] %v2481
      %2546 = vst [vmem:[#allocation2 + $0x138] sm:$0xff] %v2482
      %2547 = vst [vmem:[#allocation2 + $0x140] sm:$0xff] %v2483
      %2548 = vst [vmem:[#allocation2 + $0x148] sm:$0xff] %v2484
      %2549 = vst [vmem:[#allocation2 + $0x150] sm:$0xff] %v2485
      %2550 = vst [vmem:[#allocation2 + $0x158] sm:$0xff] %v2486
      %2551 = vst [vmem:[#allocation2 + $0x160] sm:$0xff] %v2487
      %2552 = vst [vmem:[#allocation2 + $0x168] sm:$0xff] %v2488
      %2553 = vst [vmem:[#allocation2 + $0x170] sm:$0xff] %v2489
      %2554 = vst [vmem:[#allocation2 + $0x178] sm:$0xff] %v2490
      %2555 = vst [vmem:[#allocation2 + $0x180] sm:$0xff] %v2491
      %2556 = vst [vmem:[#allocation2 + $0x188] sm:$0xff] %v2492
      %2557 = vst [vmem:[#allocation2 + $0x190] sm:$0xff] %v2493
      %2558 = vst [vmem:[#allocation2 + $0x198] sm:$0xff] %v2494
      %2559 = vst [vmem:[#allocation2 + $0x1a0] sm:$0xff] %v2495
      %2560 = vst [vmem:[#allocation2 + $0x1a8] sm:$0xff] %v2496
      %2561 = vst [vmem:[#allocation2 + $0x1b0] sm:$0xff] %v2497
      %2562 = vst [vmem:[#allocation2 + $0x1b8] sm:$0xff] %v2498
      %2563 = vst [vmem:[#allocation2 + $0x1c0] sm:$0xff] %v2499
      %2564 = vst [vmem:[#allocation2 + $0x1c8] sm:$0xff] %v2500
      %2565 = vst [vmem:[#allocation2 + $0x1d0] sm:$0xff] %v2501
      %2566 = vst [vmem:[#allocation2 + $0x1d8] sm:$0xff] %v2502
      %2567 = vst [vmem:[#allocation2 + $0x1e0] sm:$0xff] %v2503
      %2568 = vst [vmem:[#allocation2 + $0x1e8] sm:$0xff] %v2504
      %2569 = vst [vmem:[#allocation2 + $0x1f0] sm:$0xff] %v2505
      %2570 = vst [vmem:[#allocation2 + $0x1f8] sm:$0xff] %v2506
      %p2571 = scmp.eq.s32.totalorder %s23, 3
      // Predicated region
      $region37: #{video_decoder_forward.6} parent=31 // pred_check
        %p2572 = pneg %p2571
      $region38: #{video_decoder_forward.6} parent=31 // pred_check_branch
        %2574 = sbr.rel (%p2572) target = $region40
      $region39: #{video_decoder_forward.6} parent=31 // pred_region
        %v2575 = vld [vmem:[#allocation2] sm:$0xff]
        %v2576 = vld [vmem:[#allocation2 + $0x8] sm:$0xff]
        %v2577 = vld [vmem:[#allocation2 + $0x10] sm:$0xff]
        %v2578 = vld [vmem:[#allocation2 + $0x18] sm:$0xff]
        %v2579 = vld [vmem:[#allocation2 + $0x20] sm:$0xff]
        %v2580 = vld [vmem:[#allocation2 + $0x28] sm:$0xff]
        %v2581 = vld [vmem:[#allocation2 + $0x30] sm:$0xff]
        %v2582 = vld [vmem:[#allocation2 + $0x38] sm:$0xff]
        %v2583 = vld [vmem:[#allocation2 + $0x40] sm:$0xff]
        %v2584 = vld [vmem:[#allocation2 + $0x48] sm:$0xff]
        %v2585 = vld [vmem:[#allocation2 + $0x50] sm:$0xff]
        %v2586 = vld [vmem:[#allocation2 + $0x58] sm:$0xff]
        %v2587 = vld [vmem:[#allocation2 + $0x60] sm:$0xff]
        %v2588 = vld [vmem:[#allocation2 + $0x68] sm:$0xff]
        %v2589 = vld [vmem:[#allocation2 + $0x70] sm:$0xff]
        %v2590 = vld [vmem:[#allocation2 + $0x78] sm:$0xff]
        %v2591 = vld [vmem:[#allocation2 + $0x80] sm:$0xff]
        %v2592 = vld [vmem:[#allocation2 + $0x88] sm:$0xff]
        %v2593 = vld [vmem:[#allocation2 + $0x90] sm:$0xff]
        %v2594 = vld [vmem:[#allocation2 + $0x98] sm:$0xff]
        %v2595 = vld [vmem:[#allocation2 + $0xa0] sm:$0xff]
        %v2596 = vld [vmem:[#allocation2 + $0xa8] sm:$0xff]
        %v2597 = vld [vmem:[#allocation2 + $0xb0] sm:$0xff]
        %v2598 = vld [vmem:[#allocation2 + $0xb8] sm:$0xff]
        %v2599 = vld [vmem:[#allocation2 + $0xc0] sm:$0xff]
        %v2600 = vld [vmem:[#allocation2 + $0xc8] sm:$0xff]
        %v2601 = vld [vmem:[#allocation2 + $0xd0] sm:$0xff]
        %v2602 = vld [vmem:[#allocation2 + $0xd8] sm:$0xff]
        %v2603 = vld [vmem:[#allocation2 + $0xe0] sm:$0xff]
        %v2604 = vld [vmem:[#allocation2 + $0xe8] sm:$0xff]
        %v2605 = vld [vmem:[#allocation2 + $0xf0] sm:$0xff]
        %v2606 = vld [vmem:[#allocation2 + $0xf8] sm:$0xff]
        %v2607 = vld [vmem:[#allocation2 + $0x100] sm:$0xff]
        %v2608 = vld [vmem:[#allocation2 + $0x108] sm:$0xff]
        %v2609 = vld [vmem:[#allocation2 + $0x110] sm:$0xff]
        %v2610 = vld [vmem:[#allocation2 + $0x118] sm:$0xff]
        %v2611 = vld [vmem:[#allocation2 + $0x120] sm:$0xff]
        %v2612 = vld [vmem:[#allocation2 + $0x128] sm:$0xff]
        %v2613 = vld [vmem:[#allocation2 + $0x130] sm:$0xff]
        %v2614 = vld [vmem:[#allocation2 + $0x138] sm:$0xff]
        %v2615 = vld [vmem:[#allocation2 + $0x140] sm:$0xff]
        %v2616 = vld [vmem:[#allocation2 + $0x148] sm:$0xff]
        %v2617 = vld [vmem:[#allocation2 + $0x150] sm:$0xff]
        %v2618 = vld [vmem:[#allocation2 + $0x158] sm:$0xff]
        %v2619 = vld [vmem:[#allocation2 + $0x160] sm:$0xff]
        %v2620 = vld [vmem:[#allocation2 + $0x168] sm:$0xff]
        %v2621 = vld [vmem:[#allocation2 + $0x170] sm:$0xff]
        %v2622 = vld [vmem:[#allocation2 + $0x178] sm:$0xff]
        %v2623 = vld [vmem:[#allocation2 + $0x180] sm:$0xff]
        %v2624 = vld [vmem:[#allocation2 + $0x188] sm:$0xff]
        %v2625 = vld [vmem:[#allocation2 + $0x190] sm:$0xff]
        %v2626 = vld [vmem:[#allocation2 + $0x198] sm:$0xff]
        %v2627 = vld [vmem:[#allocation2 + $0x1a0] sm:$0xff]
        %v2628 = vld [vmem:[#allocation2 + $0x1a8] sm:$0xff]
        %v2629 = vld [vmem:[#allocation2 + $0x1b0] sm:$0xff]
        %v2630 = vld [vmem:[#allocation2 + $0x1b8] sm:$0xff]
        %v2631 = vld [vmem:[#allocation2 + $0x1c0] sm:$0xff]
        %v2632 = vld [vmem:[#allocation2 + $0x1c8] sm:$0xff]
        %v2633 = vld [vmem:[#allocation2 + $0x1d0] sm:$0xff]
        %v2634 = vld [vmem:[#allocation2 + $0x1d8] sm:$0xff]
        %v2635 = vld [vmem:[#allocation2 + $0x1e0] sm:$0xff]
        %v2636 = vld [vmem:[#allocation2 + $0x1e8] sm:$0xff]
        %v2637 = vld [vmem:[#allocation2 + $0x1f0] sm:$0xff]
        %v2638 = vld [vmem:[#allocation2 + $0x1f8] sm:$0xff]
        %v2639 = vld [vmem:[%s2] sm:$0x3]
        %v2641 = vperm.slane %v2639, 0
        %v2642 = vperm.slane %v2639, 1
        %v2645 = vadd.f32 %v2575, %v2641
        %v2646 = vadd.f32 %v2576, %v2642
        %v2647 = vadd.f32 %v2577, %v2641
        %v2648 = vadd.f32 %v2578, %v2642
        %v2649 = vadd.f32 %v2579, %v2641
        %v2650 = vadd.f32 %v2580, %v2642
        %v2651 = vadd.f32 %v2581, %v2641
        %v2652 = vadd.f32 %v2582, %v2642
        %v2653 = vadd.f32 %v2583, %v2641
        %v2654 = vadd.f32 %v2584, %v2642
        %v2655 = vadd.f32 %v2585, %v2641
        %v2656 = vadd.f32 %v2586, %v2642
        %v2657 = vadd.f32 %v2587, %v2641
        %v2658 = vadd.f32 %v2588, %v2642
        %v2659 = vadd.f32 %v2589, %v2641
        %v2660 = vadd.f32 %v2590, %v2642
        %v2661 = vadd.f32 %v2591, %v2641
        %v2662 = vadd.f32 %v2592, %v2642
        %v2663 = vadd.f32 %v2593, %v2641
        %v2664 = vadd.f32 %v2594, %v2642
        %v2665 = vadd.f32 %v2595, %v2641
        %v2666 = vadd.f32 %v2596, %v2642
        %v2667 = vadd.f32 %v2597, %v2641
        %v2668 = vadd.f32 %v2598, %v2642
        %v2669 = vadd.f32 %v2599, %v2641
        %v2670 = vadd.f32 %v2600, %v2642
        %v2671 = vadd.f32 %v2601, %v2641
        %v2672 = vadd.f32 %v2602, %v2642
        %v2673 = vadd.f32 %v2603, %v2641
        %v2674 = vadd.f32 %v2604, %v2642
        %v2675 = vadd.f32 %v2605, %v2641
        %v2676 = vadd.f32 %v2606, %v2642
        %v2677 = vadd.f32 %v2607, %v2641
        %v2678 = vadd.f32 %v2608, %v2642
        %v2679 = vadd.f32 %v2609, %v2641
        %v2680 = vadd.f32 %v2610, %v2642
        %v2681 = vadd.f32 %v2611, %v2641
        %v2682 = vadd.f32 %v2612, %v2642
        %v2683 = vadd.f32 %v2613, %v2641
        %v2684 = vadd.f32 %v2614, %v2642
        %v2685 = vadd.f32 %v2615, %v2641
        %v2686 = vadd.f32 %v2616, %v2642
        %v2687 = vadd.f32 %v2617, %v2641
        %v2688 = vadd.f32 %v2618, %v2642
        %v2689 = vadd.f32 %v2619, %v2641
        %v2690 = vadd.f32 %v2620, %v2642
        %v2691 = vadd.f32 %v2621, %v2641
        %v2692 = vadd.f32 %v2622, %v2642
        %v2693 = vadd.f32 %v2623, %v2641
        %v2694 = vadd.f32 %v2624, %v2642
        %v2695 = vadd.f32 %v2625, %v2641
        %v2696 = vadd.f32 %v2626, %v2642
        %v2697 = vadd.f32 %v2627, %v2641
        %v2698 = vadd.f32 %v2628, %v2642
        %v2699 = vadd.f32 %v2629, %v2641
        %v2700 = vadd.f32 %v2630, %v2642
        %v2701 = vadd.f32 %v2631, %v2641
        %v2702 = vadd.f32 %v2632, %v2642
        %v2703 = vadd.f32 %v2633, %v2641
        %v2704 = vadd.f32 %v2634, %v2642
        %v2705 = vadd.f32 %v2635, %v2641
        %v2706 = vadd.f32 %v2636, %v2642
        %v2707 = vadd.f32 %v2637, %v2641
        %v2708 = vadd.f32 %v2638, %v2642
        %v2709 = vmax.f32 %v2645, 0.0
        %v2710 = vmax.f32 %v2646, 0.0
        %v2711 = vmax.f32 %v2647, 0.0
        %v2712 = vmax.f32 %v2648, 0.0
        %v2713 = vmax.f32 %v2649, 0.0
        %v2714 = vmax.f32 %v2650, 0.0
        %v2715 = vmax.f32 %v2651, 0.0
        %v2716 = vmax.f32 %v2652, 0.0
        %v2717 = vmax.f32 %v2653, 0.0
        %v2718 = vmax.f32 %v2654, 0.0
        %v2719 = vmax.f32 %v2655, 0.0
        %v2720 = vmax.f32 %v2656, 0.0
        %v2721 = vmax.f32 %v2657, 0.0
        %v2722 = vmax.f32 %v2658, 0.0
        %v2723 = vmax.f32 %v2659, 0.0
        %v2724 = vmax.f32 %v2660, 0.0
        %v2725 = vmax.f32 %v2661, 0.0
        %v2726 = vmax.f32 %v2662, 0.0
        %v2727 = vmax.f32 %v2663, 0.0
        %v2728 = vmax.f32 %v2664, 0.0
        %v2729 = vmax.f32 %v2665, 0.0
        %v2730 = vmax.f32 %v2666, 0.0
        %v2731 = vmax.f32 %v2667, 0.0
        %v2732 = vmax.f32 %v2668, 0.0
        %v2733 = vmax.f32 %v2669, 0.0
        %v2734 = vmax.f32 %v2670, 0.0
        %v2735 = vmax.f32 %v2671, 0.0
        %v2736 = vmax.f32 %v2672, 0.0
        %v2737 = vmax.f32 %v2673, 0.0
        %v2738 = vmax.f32 %v2674, 0.0
        %v2739 = vmax.f32 %v2675, 0.0
        %v2740 = vmax.f32 %v2676, 0.0
        %v2741 = vmax.f32 %v2677, 0.0
        %v2742 = vmax.f32 %v2678, 0.0
        %v2743 = vmax.f32 %v2679, 0.0
        %v2744 = vmax.f32 %v2680, 0.0
        %v2745 = vmax.f32 %v2681, 0.0
        %v2746 = vmax.f32 %v2682, 0.0
        %v2747 = vmax.f32 %v2683, 0.0
        %v2748 = vmax.f32 %v2684, 0.0
        %v2749 = vmax.f32 %v2685, 0.0
        %v2750 = vmax.f32 %v2686, 0.0
        %v2751 = vmax.f32 %v2687, 0.0
        %v2752 = vmax.f32 %v2688, 0.0
        %v2753 = vmax.f32 %v2689, 0.0
        %v2754 = vmax.f32 %v2690, 0.0
        %v2755 = vmax.f32 %v2691, 0.0
        %v2756 = vmax.f32 %v2692, 0.0
        %v2757 = vmax.f32 %v2693, 0.0
        %v2758 = vmax.f32 %v2694, 0.0
        %v2759 = vmax.f32 %v2695, 0.0
        %v2760 = vmax.f32 %v2696, 0.0
        %v2761 = vmax.f32 %v2697, 0.0
        %v2762 = vmax.f32 %v2698, 0.0
        %v2763 = vmax.f32 %v2699, 0.0
        %v2764 = vmax.f32 %v2700, 0.0
        %v2765 = vmax.f32 %v2701, 0.0
        %v2766 = vmax.f32 %v2702, 0.0
        %v2767 = vmax.f32 %v2703, 0.0
        %v2768 = vmax.f32 %v2704, 0.0
        %v2769 = vmax.f32 %v2705, 0.0
        %v2770 = vmax.f32 %v2706, 0.0
        %v2771 = vmax.f32 %v2707, 0.0
        %v2772 = vmax.f32 %v2708, 0.0
        %v2773 = vpack.c.bf16 %v2710, %v2709
        %v2774 = vpack.c.bf16 %v2712, %v2711
        %v2775 = vpack.c.bf16 %v2714, %v2713
        %v2776 = vpack.c.bf16 %v2716, %v2715
        %v2777 = vpack.c.bf16 %v2718, %v2717
        %v2778 = vpack.c.bf16 %v2720, %v2719
        %v2779 = vpack.c.bf16 %v2722, %v2721
        %v2780 = vpack.c.bf16 %v2724, %v2723
        %v2781 = vpack.c.bf16 %v2726, %v2725
        %v2782 = vpack.c.bf16 %v2728, %v2727
        %v2783 = vpack.c.bf16 %v2730, %v2729
        %v2784 = vpack.c.bf16 %v2732, %v2731
        %v2785 = vpack.c.bf16 %v2734, %v2733
        %v2786 = vpack.c.bf16 %v2736, %v2735
        %v2787 = vpack.c.bf16 %v2738, %v2737
        %v2788 = vpack.c.bf16 %v2740, %v2739
        %v2789 = vpack.c.bf16 %v2742, %v2741
        %v2790 = vpack.c.bf16 %v2744, %v2743
        %v2791 = vpack.c.bf16 %v2746, %v2745
        %v2792 = vpack.c.bf16 %v2748, %v2747
        %v2793 = vpack.c.bf16 %v2750, %v2749
        %v2794 = vpack.c.bf16 %v2752, %v2751
        %v2795 = vpack.c.bf16 %v2754, %v2753
        %v2796 = vpack.c.bf16 %v2756, %v2755
        %v2797 = vpack.c.bf16 %v2758, %v2757
        %v2798 = vpack.c.bf16 %v2760, %v2759
        %v2799 = vpack.c.bf16 %v2762, %v2761
        %v2800 = vpack.c.bf16 %v2764, %v2763
        %v2801 = vpack.c.bf16 %v2766, %v2765
        %v2802 = vpack.c.bf16 %v2768, %v2767
        %v2803 = vpack.c.bf16 %v2770, %v2769
        %v2804 = vpack.c.bf16 %v2772, %v2771
        %2805 = vst [vmem:[%s258] sm:$0xff] %v2773
        %2806 = vst [vmem:[%s258 + $0x8] sm:$0xff] %v2774
        %2807 = vst [vmem:[%s258 + $0x10] sm:$0xff] %v2775
        %2808 = vst [vmem:[%s258 + $0x18] sm:$0xff] %v2776
        %2809 = vst [vmem:[%s258 + $0x20] sm:$0xff] %v2777
        %2810 = vst [vmem:[%s258 + $0x28] sm:$0xff] %v2778
        %2811 = vst [vmem:[%s258 + $0x30] sm:$0xff] %v2779
        %2812 = vst [vmem:[%s258 + $0x38] sm:$0xff] %v2780
        %2813 = vst [vmem:[%s258 + $0x40] sm:$0xff] %v2781
        %2814 = vst [vmem:[%s258 + $0x48] sm:$0xff] %v2782
        %2815 = vst [vmem:[%s258 + $0x50] sm:$0xff] %v2783
        %2816 = vst [vmem:[%s258 + $0x58] sm:$0xff] %v2784
        %2817 = vst [vmem:[%s258 + $0x60] sm:$0xff] %v2785
        %2818 = vst [vmem:[%s258 + $0x68] sm:$0xff] %v2786
        %2819 = vst [vmem:[%s258 + $0x70] sm:$0xff] %v2787
        %2820 = vst [vmem:[%s258 + $0x78] sm:$0xff] %v2788
        %2821 = vst [vmem:[%s258 + $0x80] sm:$0xff] %v2789
        %2822 = vst [vmem:[%s258 + $0x88] sm:$0xff] %v2790
        %2823 = vst [vmem:[%s258 + $0x90] sm:$0xff] %v2791
        %2824 = vst [vmem:[%s258 + $0x98] sm:$0xff] %v2792
        %2825 = vst [vmem:[%s258 + $0xa0] sm:$0xff] %v2793
        %2826 = vst [vmem:[%s258 + $0xa8] sm:$0xff] %v2794
        %2827 = vst [vmem:[%s258 + $0xb0] sm:$0xff] %v2795
        %2828 = vst [vmem:[%s258 + $0xb8] sm:$0xff] %v2796
        %2829 = vst [vmem:[%s258 + $0xc0] sm:$0xff] %v2797
        %2830 = vst [vmem:[%s258 + $0xc8] sm:$0xff] %v2798
        %2831 = vst [vmem:[%s258 + $0xd0] sm:$0xff] %v2799
        %2832 = vst [vmem:[%s258 + $0xd8] sm:$0xff] %v2800
        %2833 = vst [vmem:[%s258 + $0xe0] sm:$0xff] %v2801
        %2834 = vst [vmem:[%s258 + $0xe8] sm:$0xff] %v2802
        %2835 = vst [vmem:[%s258 + $0xf0] sm:$0xff] %v2803
        %2836 = vst [vmem:[%s258 + $0xf8] sm:$0xff] %v2804
      $region40: #{video_decoder_forward.6} parent=31 // pred_fallthru
        _
      %s2837 = smul.u32 16, %s22
      %p2838 = scmp.lt.s32.totalorder %s20, 1
      %s2839 = scalar_select %p2838, %s20, 1
      %p2840 = scmp.lt.s32.totalorder %s21, 4
      %s2841 = scalar_select %p2840, %s21, 4
      %p2842 = scmp.lt.s32.totalorder %s2837, 15
      %s2843 = scalar_select %p2842, %s2837, 15
      %s2844 = smul.addr %s2843, 4
      %s2845 = smul.addr %s2841, 64
      %s2846 = sadd.s32 %s2844, %s2845
      %s2847 = smul.addr %s2839, 320
      %s2848 = sadd.s32 %s2846, %s2847
      %s2849 = smul.addr %s2848, 4
      %s2850 = scalar_lea.vmem %s3, %s2849
      // Predicated region
      $region41: #{video_decoder_forward.6} parent=31 // pred_check
        %p2851 = pneg %p136
      $region42: #{video_decoder_forward.6} parent=31 // pred_check_branch
        %2853 = sbr.rel (%p2851) target = $region44
      $region43: #{video_decoder_forward.6} parent=31 // pred_region
        %s2854 = smul.u32 16, %s22
      $region44: #{video_decoder_forward.6} parent=31 // pred_fallthru
        _
    $region32: #{video_decoder_forward.6} parent=5 // pred_fallthru
      _
    %p2855 = scmp.le.s32.totalorder 2, %s9
    // Predicated region
    $region45: #{video_decoder_forward.6} parent=5 // pred_check
      %p2856 = pneg %p2855
    $region46: #{video_decoder_forward.6} parent=5 // pred_check_branch
      %2858 = sbr.rel (%p2856) target = $region48
    $region47: #{video_decoder_forward.6} parent=5 // pred_region
      %s2859 = ssub.s32 %s9, 2
      // Predicated region
      $region49: #{video_decoder_forward.6} parent=47 // pred_check
        %p2860 = pneg %p142
      $region50: #{video_decoder_forward.6} parent=47 // pred_check_branch
        %2862 = sbr.rel (%p2860) target = $region52
      $region51: #{video_decoder_forward.6} parent=47 // pred_region
        %s2863 = smul.u32 16, %s26
        %p2864 = scmp.lt.s32.totalorder %s24, 1
        %s2865 = scalar_select %p2864, %s24, 1
        %p2866 = scmp.lt.s32.totalorder %s25, 4
        %s2867 = scalar_select %p2866, %s25, 4
        %p2868 = scmp.lt.s32.totalorder %s2863, 15
        %s2869 = scalar_select %p2868, %s2863, 15
        %s2870 = smul.addr %s2869, 4
        %s2871 = smul.addr %s2867, 64
        %s2872 = sadd.s32 %s2870, %s2871
        %s2873 = smul.addr %s2865, 320
        %s2874 = sadd.s32 %s2872, %s2873
        %s2875 = smul.addr %s2874, 4
        %s2876 = scalar_lea.vmem %s3, %s2875
      $region52: #{video_decoder_forward.6} parent=47 // pred_fallthru
        _
    $region48: #{video_decoder_forward.6} parent=5 // pred_fallthru
      _
  $region6: #{video_decoder_forward.6} parent=0 // loop_footer
    %s13 = sadd.s32 1, %s9
  $region7: #{video_decoder_forward.6} parent=0 // loop_footer_branch
    %8 = sbr.rel target = $region3
  $region8: #{video_decoder_forward.6} parent=0 // loop_exit
    _

// kernel: video_decoder_forward.7
$region0: #{video_decoder_forward.7}
  #allocation0 [shape = 'u32[]', space=smem, size = 0x4, offset = 0x4, fixed_abs, tag = 'smem constant byte address 0x4 - core index']
  #allocation1 [shape = 'u32[72,128]{1,0:T(1,128)}', space=vmem, size = 0x9000, scoped, tag = 'internal scratch']
  #allocation2 [shape = 'f32[12,512]{1,0:T(8,128)}', space=vmem, size = 0x8000, scoped, tag = 'scratch operand']
  %s0 = inlined_call_operand.vmem [shape: bf16[2,9,32,40,128], index: 0, kind: input, shape index: {}]
  %s1 = inlined_call_operand.vmem [shape: bf16[8,12,128], index: 1, kind: input, shape index: {}]
  %s2 = inlined_call_operand.vmem [shape: f32[12,1], index: 2, kind: input, shape index: {}]
  %s3 = inlined_call_operand.vmem [shape: f32[2,6,12,1024], index: 3, kind: output, shape index: {}]
  %s4 = sld [smem:[#allocation0]]
  $region72: #{video_decoder_forward.7} parent=0
    _
  %s6 = ssub.s32 1, %s4
  %s7 = scalar_select 0, %s6, %s4
  $region1: #{video_decoder_forward.7} parent=0
    #allocation3 [shape = 'u8[65536]{0}', space=vmem, size = 0x10000, scoped, tag = 'output window, operand 0']
    loop: start=0, step=1, limit=98
    $region2: #{video_decoder_forward.7} parent=1 // loop_pre_header
      _
    $region3: #{video_decoder_forward.7} parent=1 // loop_header
      %s9 = sphi 0, %s13
      %p10 = scmp.ge.s32.totalorder %s9, 98
      %s16 = sphi 0, %s42
      %s17 = sphi 0, %s38
      %s18 = sphi 0, %s34
      %s19 = sphi 0, %s30
      %s20 = sphi 0, %s16
      %s21 = sphi 0, %s17
      %s22 = sphi 0, %s18
      %s23 = sphi 0, %s19
      %s24 = sphi 0, %s20
      %s25 = sphi 0, %s21
      %s26 = sphi 0, %s22
      %s27 = sphi 0, %s23
      %s51 = sphi 0, %s53
      %s54 = sphi 0, %s51
      %s55 = sphi 0, %s54
      %s71 = sphi 0, %s55
      %s75 = sphi 0, %s75
      %s77 = sphi 0, %s75
      %s78 = sphi 0, %s77
      %s92 = sphi 0, %s78
      %s96 = sphi 0, %s96
      %s98 = sphi 0, %s96
      %s99 = sphi 0, %s98
      %s113 = sphi 0, %s99
      %s123 = sphi 0, %s125
      %s126 = sphi 0, %s123
      %s127 = sphi 0, %s126
      %s143 = sphi 0, %s127
    $region4: #{video_decoder_forward.7} parent=1 // loop_header_branch
      %12 = sbr.rel (%p10) target = $region8
    $region5: #{video_decoder_forward.7} parent=1 // loop_body
      %s14 = ssub.s32 %s9, 1
      %s15 = ssub.s32 %s9, 2
      %s28 = sadd.s32 1, %s19
      %p29 = scmp.ge.s32.totalorder %s28, 4
      %s30 = scalar_select %p29, 0, %s28
      %s31 = sadd.s32 1, %s18
      %s32 = scalar_select %p29, %s31, %s18
      %p33 = scmp.ge.s32.totalorder %s32, 2
      %s34 = scalar_select %p33, 0, %s32
      %s35 = sadd.s32 1, %s17
      %s36 = scalar_select %p33, %s35, %s17
      %p37 = scmp.ge.s32.totalorder %s36, 6
      %s38 = scalar_select %p37, 0, %s36
      %s39 = sadd.s32 1, %s16
      %s40 = scalar_select %p37, %s39, %s16
      %p41 = scmp.ge.s32.totalorder %s40, 2
      %s42 = scalar_select %p41, 0, %s40
      %s43 = sadd.s32 %s17, %s19
      %s44 = sadd.s32 %s38, %s30
      %s45 = ssub.s32 %s16, %s42
      %s46 = ssub.s32 %s43, %s44
      %s47 = sor.u32 %s45, %s46
      %s48 = ssub.s32 %s18, %s34
      %s49 = sor.u32 %s47, %s48
      %p50 = scmp.eq.s32.totalorder %s49, 0
      %s52 = sadd.s32 %s51, 1
      %s53 = scalar_select %p50, %s51, %s52
      %p56 = pneg %p50
      %p57 = scmp.eq.s32.totalorder %s9, 95
      %p58 = por %p56, %p57
      %p59 = scmp.ne.s32.totalorder %s51, %s54
      %p60 = scmp.eq.s32.totalorder %s9, 0
      %p61 = por %p59, %p60
      %p62 = scmp.ne.s32.totalorder %s51, %s54
      %p63 = scmp.eq.s32.totalorder %s14, 95
      %p64 = por %p62, %p63
      %p65 = scmp.ne.s32.totalorder %s54, %s55
      %p66 = scmp.eq.s32.totalorder %s14, 0
      %p67 = por %p65, %p66
      %p68 = scmp.ne.s32.totalorder %s54, %s55
      %p69 = scmp.eq.s32.totalorder %s15, 95
      %p70 = por %p68, %p69
      %p72 = scmp.ne.s32.totalorder %s55, %s71
      %p73 = scmp.eq.s32.totalorder %s15, 0
      %p74 = por %p72, %p73
      %s76 = sadd.s32 %s75, 1
      %p79 = scmp.eq.s32.totalorder %s9, 95
      %p80 = scmp.ne.s32.totalorder %s75, %s77
      %p81 = scmp.eq.s32.totalorder %s9, 0
      %p82 = por %p80, %p81
      %p83 = scmp.ne.s32.totalorder %s75, %s77
      %p84 = scmp.eq.s32.totalorder %s14, 95
      %p85 = por %p83, %p84
      %p86 = scmp.ne.s32.totalorder %s77, %s78
      %p87 = scmp.eq.s32.totalorder %s14, 0
      %p88 = por %p86, %p87
      %p89 = scmp.ne.s32.totalorder %s77, %s78
      %p90 = scmp.eq.s32.totalorder %s15, 95
      %p91 = por %p89, %p90
      %p93 = scmp.ne.s32.totalorder %s78, %s92
      %p94 = scmp.eq.s32.totalorder %s15, 0
      %p95 = por %p93, %p94
      %s97 = sadd.s32 %s96, 1
      %p100 = scmp.eq.s32.totalorder %s9, 95
      %p101 = scmp.ne.s32.totalorder %s96, %s98
      %p102 = scmp.eq.s32.totalorder %s9, 0
      %p103 = por %p101, %p102
      %p104 = scmp.ne.s32.totalorder %s96, %s98
      %p105 = scmp.eq.s32.totalorder %s14, 95
      %p106 = por %p104, %p105
      %p107 = scmp.ne.s32.totalorder %s98, %s99
      %p108 = scmp.eq.s32.totalorder %s14, 0
      %p109 = por %p107, %p108
      %p110 = scmp.ne.s32.totalorder %s98, %s99
      %p111 = scmp.eq.s32.totalorder %s15, 95
      %p112 = por %p110, %p111
      %p114 = scmp.ne.s32.totalorder %s99, %s113
      %p115 = scmp.eq.s32.totalorder %s15, 0
      %p116 = por %p114, %p115
      %s117 = ssub.s32 %s16, %s42
      %s118 = ssub.s32 %s17, %s38
      %s119 = sor.u32 %s117, %s118
      %s120 = ssub.s32 %s18, %s34
      %s121 = sor.u32 %s119, %s120
      %p122 = scmp.eq.s32.totalorder %s121, 0
      %s124 = sadd.s32 %s123, 1
      %s125 = scalar_select %p122, %s123, %s124
      %p128 = pneg %p122
      %p129 = scmp.eq.s32.totalorder %s9, 95
      %p130 = por %p128, %p129
      %p131 = scmp.ne.s32.totalorder %s123, %s126
      %p132 = scmp.eq.s32.totalorder %s9, 0
      %p133 = por %p131, %p132
      %p134 = scmp.ne.s32.totalorder %s123, %s126
      %p135 = scmp.eq.s32.totalorder %s14, 95
      %p136 = por %p134, %p135
      %p137 = scmp.ne.s32.totalorder %s126, %s127
      %p138 = scmp.eq.s32.totalorder %s14, 0
      %p139 = por %p137, %p138
      %p140 = scmp.ne.s32.totalorder %s126, %s127
      %p141 = scmp.eq.s32.totalorder %s15, 95
      %p142 = por %p140, %p141
      %p144 = scmp.ne.s32.totalorder %s127, %s143
      %p145 = scmp.eq.s32.totalorder %s15, 0
      %p146 = por %p144, %p145
      %p147 = scmp.le.s32.totalorder 1, %s9
      %p148 = scmp.lt.s32.totalorder %s9, 97
      %p149 = pnand %p147, %p148
      %p150 = pneg %p149
      // Predicated region
      $region9: #{video_decoder_forward.7} parent=5 // pred_check
        _
      $region10: #{video_decoder_forward.7} parent=5 // pred_check_branch
        %152 = sbr.rel (%p149) target = $region12
      $region11: #{video_decoder_forward.7} parent=5 // pred_region
        %s153 = ssub.s32 %s9, 1
        // Predicated region
        $region13: #{video_decoder_forward.7} parent=11 // pred_check
          %p154 = pneg %p88
        $region14: #{video_decoder_forward.7} parent=11 // pred_check_branch
          %156 = sbr.rel (%p154) target = $region16
        $region15: #{video_decoder_forward.7} parent=11 // pred_region
          _
        $region16: #{video_decoder_forward.7} parent=11 // pred_fallthru
          _
        // Predicated region
        $region17: #{video_decoder_forward.7} parent=11 // pred_check
          %p157 = pneg %p109
        $region18: #{video_decoder_forward.7} parent=11 // pred_check_branch
          %159 = sbr.rel (%p157) target = $region20
        $region19: #{video_decoder_forward.7} parent=11 // pred_region
          _
        $region20: #{video_decoder_forward.7} parent=11 // pred_fallthru
          _
      $region12: #{video_decoder_forward.7} parent=5 // pred_fallthru
        _
      %p160 = scmp.lt.s32.totalorder %s9, 96
      // Predicated region
      $region21: #{video_decoder_forward.7} parent=5 // pred_check
        %p161 = pneg %p160
      $region22: #{video_decoder_forward.7} parent=5 // pred_check_branch
        %163 = sbr.rel (%p161) target = $region24
      $region23: #{video_decoder_forward.7} parent=5 // pred_region
        // Predicated region
        $region25: #{video_decoder_forward.7} parent=23 // pred_check
          %p164 = pneg %p61
        $region26: #{video_decoder_forward.7} parent=23 // pred_check_branch
          %166 = sbr.rel (%p164) target = $region28
        $region27: #{video_decoder_forward.7} parent=23 // pred_region
          %s167 = sadd.s32 %s17, %s19
          %s168 = smul.u32 16, %s18
          %p169 = scmp.lt.s32.totalorder %s16, 1
          %s170 = scalar_select %p169, %s16, 1
          %p171 = scmp.lt.s32.totalorder %s167, 8
          %s172 = scalar_select %p171, %s167, 8
          %p173 = scmp.lt.s32.totalorder %s168, 31
          %s174 = scalar_select %p173, %s168, 31
          %s175 = smul.addr %s174, 5
          %s176 = smul.addr %s172, 160
          %s177 = sadd.s32 %s175, %s176
          %s178 = smul.addr %s170, 1440
          %s179 = sadd.s32 %s177, %s178
          %s180 = smul.addr %s179, 4
          %s181 = scalar_lea.vmem %s0, %s180
          %s182 = sadd.s32 %s17, %s19
          %s183 = smul.u32 16, %s18
        $region28: #{video_decoder_forward.7} parent=23 // pred_fallthru
          _
      $region24: #{video_decoder_forward.7} parent=5 // pred_fallthru
        _
      %p184 = scmp.le.s32.totalorder 1, %s9
      %p185 = scmp.lt.s32.totalorder %s9, 97
      %p186 = pnand %p184, %p185
      %p187 = pneg %p186
      // Predicated region
      $region29: #{video_decoder_forward.7} parent=5 // pred_check
        _
      $region30: #{video_decoder_forward.7} parent=5 // pred_check_branch
        %189 = sbr.rel (%p186) target = $region32
      $region31: #{video_decoder_forward.7} parent=5 // pred_region
        %s190 = ssub.s32 %s9, 1
        %s191 = sadd.s32 %s21, %s23
        %s192 = smul.u32 16, %s22
        %p193 = scmp.lt.s32.totalorder %s20, 1
        %s194 = scalar_select %p193, %s20, 1
        %p195 = scmp.lt.s32.totalorder %s191, 8
        %s196 = scalar_select %p195, %s191, 8
        %p197 = scmp.lt.s32.totalorder %s192, 31
        %s198 = scalar_select %p197, %s192, 31
        %s199 = smul.addr %s198, 5
        %s200 = smul.addr %s196, 160
        %s201 = sadd.s32 %s199, %s200
        %s202 = smul.addr %s194, 1440
        %s203 = sadd.s32 %s201, %s202
        %s204 = smul.addr %s203, 4
        %s205 = scalar_lea.vmem %s0, %s204
        %p206 = pneg %p67
        %p207 = pneg %p64
        %p208 = pneg %p88
        %p209 = pneg %p85
        %p210 = pneg %p109
        %p211 = pneg %p106
        %p212 = pneg %p139
        %p213 = pneg %p136
        %s214 = sand.u32 %s126, 1
        %s215 = sand.u32 %s126, 1
        %s216 = smul.addr %s215, 64
        %s217 = scalar_lea.vmem [#allocation3], %s216
        %s218 = sadd.s32 %s21, %s23
        %s219 = smul.u32 16, %s22
        %p220 = scmp.lt.s32.totalorder %s20, 1
        %s221 = scalar_select %p220, %s20, 1
        %p222 = scmp.lt.s32.totalorder %s218, 8
        %s223 = scalar_select %p222, %s218, 8
        %p224 = scmp.lt.s32.totalorder %s219, 31
        %s225 = scalar_select %p224, %s219, 31
        %s226 = smul.addr %s225, 5
        %s227 = smul.addr %s223, 160
        %s228 = sadd.s32 %s226, %s227
        %s229 = smul.addr %s221, 1440
        %s230 = sadd.s32 %s228, %s229
        %s231 = smul.addr %s230, 4
        %s232 = scalar_lea.vmem %s0, %s231
        %s233 = sadd.s32 %s21, %s23
        %s234 = smul.u32 16, %s22
        %s235 = smul.u32 4, %s22
        %p236 = scmp.eq.s32.totalorder %s23, 0
        // Predicated region
        $region33: #{video_decoder_forward.7} parent=31 // pred_check
          %p237 = pneg %p236
        $region34: #{video_decoder_forward.7} parent=31 // pred_check_branch
          %239 = sbr.rel (%p237) target = $region36
        $region35: #{video_decoder_forward.7} parent=31 // pred_region
          %240 = vst [vmem:[#allocation2] sm:$0xff] 0.0
          %241 = vst [vmem:[#allocation2 + $0x8] sm:$0xff] 0.0
          %242 = vst [vmem:[#allocation2 + $0x10] sm:$0xff] 0.0
          %243 = vst [vmem:[#allocation2 + $0x18] sm:$0xff] 0.0
          %244 = vst [vmem:[#allocation2 + $0x20] sm:$0xf] 0.0
          %245 = vst [vmem:[#allocation2 + $0x28] sm:$0xf] 0.0
          %246 = vst [vmem:[#allocation2 + $0x30] sm:$0xf] 0.0
          %247 = vst [vmem:[#allocation2 + $0x38] sm:$0xf] 0.0
        $region36: #{video_decoder_forward.7} parent=31 // pred_fallthru
          _
        %v248 = vld [vmem:[%s232] sm:$0xf]
        %v249 = vld [vmem:[%s232 + $0x4] sm:$0xf]
        %v250 = vld [vmem:[%s232 + $0x8] sm:$0xf]
        %v251 = vld [vmem:[%s232 + $0xc] sm:$0xf]
        %v252 = vld [vmem:[%s232 + $0x14] sm:$0xf]
        %v253 = vld [vmem:[%s232 + $0x18] sm:$0xf]
        %v254 = vld [vmem:[%s232 + $0x1c] sm:$0xf]
        %v255 = vld [vmem:[%s232 + $0x20] sm:$0xf]
        %v256 = vld [vmem:[%s232 + $0x28] sm:$0xf]
        %v257 = vld [vmem:[%s232 + $0x2c] sm:$0xf]
        %v258 = vld [vmem:[%s232 + $0x30] sm:$0xf]
        %v259 = vld [vmem:[%s232 + $0x34] sm:$0xf]
        %v260 = vld [vmem:[%s232 + $0x3c] sm:$0xf]
        %v261 = vld [vmem:[%s232 + $0x40] sm:$0xf]
        %v262 = vld [vmem:[%s232 + $0x44] sm:$0xf]
        %v263 = vld [vmem:[%s232 + $0x48] sm:$0xf]
        %v264 = vld [vmem:[%s232 + $0x50] sm:$0xf]
        %v265 = vld [vmem:[%s232 + $0x54] sm:$0xf]
        %v266 = vld [vmem:[%s232 + $0x58] sm:$0xf]
        %v267 = vld [vmem:[%s232 + $0x5c] sm:$0xf]
        %v268 = vld [vmem:[%s232 + $0x64] sm:$0xf]
        %v269 = vld [vmem:[%s232 + $0x68] sm:$0xf]
        %v270 = vld [vmem:[%s232 + $0x6c] sm:$0xf]
        %v271 = vld [vmem:[%s232 + $0x70] sm:$0xf]
        %v272 = vld [vmem:[%s232 + $0x78] sm:$0xf]
        %v273 = vld [vmem:[%s232 + $0x7c] sm:$0xf]
        %v274 = vld [vmem:[%s232 + $0x80] sm:$0xf]
        %v275 = vld [vmem:[%s232 + $0x84] sm:$0xf]
        %v276 = vld [vmem:[%s232 + $0x8c] sm:$0xf]
        %v277 = vld [vmem:[%s232 + $0x90] sm:$0xf]
        %v278 = vld [vmem:[%s232 + $0x94] sm:$0xf]
        %v279 = vld [vmem:[%s232 + $0x98] sm:$0xf]
        %v280 = vld [vmem:[%s232 + $0xa0] sm:$0xf]
        %v281 = vld [vmem:[%s232 + $0xa4] sm:$0xf]
        %v282 = vld [vmem:[%s232 + $0xa8] sm:$0xf]
        %v283 = vld [vmem:[%s232 + $0xac] sm:$0xf]
        %v284 = vld [vmem:[%s232 + $0xb4] sm:$0xf]
        %v285 = vld [vmem:[%s232 + $0xb8] sm:$0xf]
        %v286 = vld [vmem:[%s232 + $0xbc] sm:$0xf]
        %v287 = vld [vmem:[%s232 + $0xc0] sm:$0xf]
        %v288 = vld [vmem:[%s232 + $0xc8] sm:$0xf]
        %v289 = vld [vmem:[%s232 + $0xcc] sm:$0xf]
        %v290 = vld [vmem:[%s232 + $0xd0] sm:$0xf]
        %v291 = vld [vmem:[%s232 + $0xd4] sm:$0xf]
        %v292 = vld [vmem:[%s232 + $0xdc] sm:$0xf]
        %v293 = vld [vmem:[%s232 + $0xe0] sm:$0xf]
        %v294 = vld [vmem:[%s232 + $0xe4] sm:$0xf]
        %v295 = vld [vmem:[%s232 + $0xe8] sm:$0xf]
        %v296 = vld [vmem:[%s232 + $0xf0] sm:$0xf]
        %v297 = vld [vmem:[%s232 + $0xf4] sm:$0xf]
        %v298 = vld [vmem:[%s232 + $0xf8] sm:$0xf]
        %v299 = vld [vmem:[%s232 + $0xfc] sm:$0xf]
        %v300 = vld [vmem:[%s232 + $0x104] sm:$0xf]
        %v301 = vld [vmem:[%s232 + $0x108] sm:$0xf]
        %v302 = vld [vmem:[%s232 + $0x10c] sm:$0xf]
        %v303 = vld [vmem:[%s232 + $0x110] sm:$0xf]
        %v304 = vld [vmem:[%s232 + $0x118] sm:$0xf]
        %v305 = vld [vmem:[%s232 + $0x11c] sm:$0xf]
        %v306 = vld [vmem:[%s232 + $0x120] sm:$0xf]
        %v307 = vld [vmem:[%s232 + $0x124] sm:$0xf]
        %v308 = vld [vmem:[%s232 + $0x12c] sm:$0xf]
        %v309 = vld [vmem:[%s232 + $0x130] sm:$0xf]
        %v310 = vld [vmem:[%s232 + $0x134] sm:$0xf]
        %v311 = vld [vmem:[%s232 + $0x138] sm:$0xf]
        %s312 = smul.u32 %s23, 2
        %s313 = smul.u32 %s312, 2
        %s314 = smul.addr %s313, 4
        %s315 = scalar_lea.vmem %s1, %s314
        %v316 = vld [vmem:[%s315] sm:$0xf]
        %v317 = vld [vmem:[%s315 + $0x4] sm:$0x3]
        %v318 = vld [vmem:[#allocation2] sm:$0xff]
        %v319 = vld [vmem:[#allocation2 + $0x8] sm:$0xff]
        %v320 = vld [vmem:[#allocation2 + $0x10] sm:$0xff]
        %v321 = vld [vmem:[#allocation2 + $0x18] sm:$0xff]
        %v322 = vld [vmem:[#allocation2 + $0x20] sm:$0xf]
        %v323 = vld [vmem:[#allocation2 + $0x28] sm:$0xf]
        %v324 = vld [vmem:[#allocation2 + $0x30] sm:$0xf]
        %v325 = vld [vmem:[#allocation2 + $0x38] sm:$0xf]
        %v328 = vunpack.c.l.b16 %v316
        %v329 = vunpack.c.l.b16 %v317
        %v330 = vpack.c.b16 %v329, %v328
        %v396 = vunpack.c.l.b16 %v248
        %v397 = vunpack.c.l.b16 %v249
        %v398 = vunpack.c.l.b16 %v250
        %v399 = vunpack.c.l.b16 %v251
        %v400 = vunpack.c.l.b16 %v252
        %v401 = vunpack.c.l.b16 %v253
        %v402 = vunpack.c.l.b16 %v254
        %v403 = vunpack.c.l.b16 %v255
        %v404 = vunpack.c.l.b16 %v256
        %v405 = vunpack.c.l.b16 %v257
        %v406 = vunpack.c.l.b16 %v258
        %v407 = vunpack.c.l.b16 %v259
        %v408 = vunpack.c.l.b16 %v260
        %v409 = vunpack.c.l.b16 %v261
        %v410 = vunpack.c.l.b16 %v262
        %v411 = vunpack.c.l.b16 %v263
        %v412 = vunpack.c.l.b16 %v264
        %v413 = vunpack.c.l.b16 %v265
        %v414 = vunpack.c.l.b16 %v266
        %v415 = vunpack.c.l.b16 %v267
        %v416 = vunpack.c.l.b16 %v268
        %v417 = vunpack.c.l.b16 %v269
        %v418 = vunpack.c.l.b16 %v270
        %v419 = vunpack.c.l.b16 %v271
        %v420 = vunpack.c.l.b16 %v272
        %v421 = vunpack.c.l.b16 %v273
        %v422 = vunpack.c.l.b16 %v274
        %v423 = vunpack.c.l.b16 %v275
        %v424 = vunpack.c.l.b16 %v276
        %v425 = vunpack.c.l.b16 %v277
        %v426 = vunpack.c.l.b16 %v278
        %v427 = vunpack.c.l.b16 %v279
        %v428 = vunpack.c.l.b16 %v280
        %v429 = vunpack.c.l.b16 %v281
        %v430 = vunpack.c.l.b16 %v282
        %v431 = vunpack.c.l.b16 %v283
        %v432 = vunpack.c.l.b16 %v284
        %v433 = vunpack.c.l.b16 %v285
        %v434 = vunpack.c.l.b16 %v286
        %v435 = vunpack.c.l.b16 %v287
        %v436 = vunpack.c.l.b16 %v288
        %v437 = vunpack.c.l.b16 %v289
        %v438 = vunpack.c.l.b16 %v290
        %v439 = vunpack.c.l.b16 %v291
        %v440 = vunpack.c.l.b16 %v292
        %v441 = vunpack.c.l.b16 %v293
        %v442 = vunpack.c.l.b16 %v294
        %v443 = vunpack.c.l.b16 %v295
        %v444 = vunpack.c.l.b16 %v296
        %v445 = vunpack.c.l.b16 %v297
        %v446 = vunpack.c.l.b16 %v298
        %v447 = vunpack.c.l.b16 %v299
        %v448 = vunpack.c.l.b16 %v300
        %v449 = vunpack.c.l.b16 %v301
        %v450 = vunpack.c.l.b16 %v302
        %v451 = vunpack.c.l.b16 %v303
        %v452 = vunpack.c.l.b16 %v304
        %v453 = vunpack.c.l.b16 %v305
        %v454 = vunpack.c.l.b16 %v306
        %v455 = vunpack.c.l.b16 %v307
        %v456 = vunpack.c.l.b16 %v308
        %v457 = vunpack.c.l.b16 %v309
        %v458 = vunpack.c.l.b16 %v310
        %v459 = vunpack.c.l.b16 %v311
        %v460 = vpack.c.b16 %v397, %v396
        %v461 = vpack.c.b16 %v399, %v398
        %v462 = vpack.c.b16 %v401, %v400
        %v463 = vpack.c.b16 %v403, %v402
        %v464 = vpack.c.b16 %v405, %v404
        %v465 = vpack.c.b16 %v407, %v406
        %v466 = vpack.c.b16 %v409, %v408
        %v467 = vpack.c.b16 %v411, %v410
        %v468 = vpack.c.b16 %v413, %v412
        %v469 = vpack.c.b16 %v415, %v414
        %v470 = vpack.c.b16 %v417, %v416
        %v471 = vpack.c.b16 %v419, %v418
        %v472 = vpack.c.b16 %v421, %v420
        %v473 = vpack.c.b16 %v423, %v422
        %v474 = vpack.c.b16 %v425, %v424
        %v475 = vpack.c.b16 %v427, %v426
        %v476 = vpack.c.b16 %v429, %v428
        %v477 = vpack.c.b16 %v431, %v430
        %v478 = vpack.c.b16 %v433, %v432
        %v479 = vpack.c.b16 %v435, %v434
        %v480 = vpack.c.b16 %v437, %v436
        %v481 = vpack.c.b16 %v439, %v438
        %v482 = vpack.c.b16 %v441, %v440
        %v483 = vpack.c.b16 %v443, %v442
        %v484 = vpack.c.b16 %v445, %v444
        %v485 = vpack.c.b16 %v447, %v446
        %v486 = vpack.c.b16 %v449, %v448
        %v487 = vpack.c.b16 %v451, %v450
        %v488 = vpack.c.b16 %v453, %v452
        %v489 = vpack.c.b16 %v455, %v454
        %v490 = vpack.c.b16 %v457, %v456
        %v491 = vpack.c.b16 %v459, %v458
        %524 = vmatpush.bf16.xpose.msra.mxu0 %v467
        %525 = vmatpush.bf16.xpose.msra.mxu0 %v466
        %526 = vmatpush.bf16.xpose.msra.mxu0 %v465
        %527 = vmatpush.bf16.xpose.msra.mxu0 %v464
        %528 = vmatpush.bf16.xpose.msra.mxu0 %v463
        %529 = vmatpush.bf16.xpose.msra.mxu0 %v462
        %530 = vmatpush.bf16.xpose.msra.mxu0 %v461
        %531 = vmatpush.bf16.xpose.msra.mxu0 %v460
        %532 = vmatmul.bf16.gmra.mxu0 %v330
        %v533 = vpop.f32.mrf.mxu0
        %v534 = vadd.f32 0.0, %v533
        %v535 = vpop.f32.mrf.mxu0
        %v536 = vadd.f32 0.0, %v535
        %537 = vdwg.mxu0
        %538 = vmatpush.bf16.xpose.msra.mxu0 %v475
        %539 = vmatpush.bf16.xpose.msra.mxu0 %v474
        %540 = vmatpush.bf16.xpose.msra.mxu0 %v473
        %541 = vmatpush.bf16.xpose.msra.mxu0 %v472
        %542 = vmatpush.bf16.xpose.msra.mxu0 %v471
        %543 = vmatpush.bf16.xpose.msra.mxu0 %v470
        %544 = vmatpush.bf16.xpose.msra.mxu0 %v469
        %545 = vmatpush.bf16.xpose.msra.mxu0 %v468
        %546 = vmatmul.bf16.gmra.mxu0 %v330
        %v547 = vpop.f32.mrf.mxu0
        %v548 = vadd.f32 0.0, %v547
        %v549 = vpop.f32.mrf.mxu0
        %v550 = vadd.f32 0.0, %v549
        %551 = vdwg.mxu0
        %552 = vmatpush.bf16.xpose.msra.mxu0 %v483
        %553 = vmatpush.bf16.xpose.msra.mxu0 %v482
        %554 = vmatpush.bf16.xpose.msra.mxu0 %v481
        %555 = vmatpush.bf16.xpose.msra.mxu0 %v480
        %556 = vmatpush.bf16.xpose.msra.mxu0 %v479
        %557 = vmatpush.bf16.xpose.msra.mxu0 %v478
        %558 = vmatpush.bf16.xpose.msra.mxu0 %v477
        %559 = vmatpush.bf16.xpose.msra.mxu0 %v476
        %560 = vmatmul.bf16.gmra.mxu0 %v330
        %v561 = vpop.f32.mrf.mxu0
        %v562 = vadd.f32 0.0, %v561
        %v563 = vpop.f32.mrf.mxu0
        %v564 = vadd.f32 0.0, %v563
        %565 = vdwg.mxu0
        %566 = vmatpush.bf16.xpose.msra.mxu0 %v491
        %567 = vmatpush.bf16.xpose.msra.mxu0 %v490
        %568 = vmatpush.bf16.xpose.msra.mxu0 %v489
        %569 = vmatpush.bf16.xpose.msra.mxu0 %v488
        %570 = vmatpush.bf16.xpose.msra.mxu0 %v487
        %571 = vmatpush.bf16.xpose.msra.mxu0 %v486
        %572 = vmatpush.bf16.xpose.msra.mxu0 %v485
        %573 = vmatpush.bf16.xpose.msra.mxu0 %v484
        %574 = vmatmul.bf16.gmra.mxu0 %v330
        %v575 = vpop.f32.mrf.mxu0
        %v576 = vadd.f32 0.0, %v575
        %v577 = vpop.f32.mrf.mxu0
        %v578 = vadd.f32 0.0, %v577
        %579 = vdwg.mxu0
        %v580 = vadd.f32 %v318, %v534
        %v581 = vadd.f32 %v319, %v548
        %v582 = vadd.f32 %v320, %v562
        %v583 = vadd.f32 %v321, %v576
        %v584 = vadd.f32 %v322, %v536
        %v585 = vadd.f32 %v323, %v550
        %v586 = vadd.f32 %v324, %v564
        %v587 = vadd.f32 %v325, %v578
        %588 = vst [vmem:[#allocation2] sm:$0xff] %v580
        %589 = vst [vmem:[#allocation2 + $0x8] sm:$0xff] %v581
        %590 = vst [vmem:[#allocation2 + $0x10] sm:$0xff] %v582
        %591 = vst [vmem:[#allocation2 + $0x18] sm:$0xff] %v583
        %592 = vst [vmem:[#allocation2 + $0x20] sm:$0xf] %v584
        %593 = vst [vmem:[#allocation2 + $0x28] sm:$0xf] %v585
        %594 = vst [vmem:[#allocation2 + $0x30] sm:$0xf] %v586
        %595 = vst [vmem:[#allocation2 + $0x38] sm:$0xf] %v587
        %v596 = vld [vmem:[%s232] sm:$0xf]
        %v597 = vld [vmem:[%s232 + $0x4] sm:$0xf]
        %v598 = vld [vmem:[%s232 + $0x8] sm:$0xf]
        %v599 = vld [vmem:[%s232 + $0xc] sm:$0xf]
        %v600 = vld [vmem:[%s232 + $0x10] sm:$0x1]
        %v601 = vld [vmem:[%s232 + $0x14] sm:$0xf]
        %v602 = vld [vmem:[%s232 + $0x18] sm:$0xf]
        %v603 = vld [vmem:[%s232 + $0x1c] sm:$0xf]
        %v604 = vld [vmem:[%s232 + $0x20] sm:$0xf]
        %v605 = vld [vmem:[%s232 + $0x24] sm:$0x1]
        %v606 = vld [vmem:[%s232 + $0x28] sm:$0xf]
        %v607 = vld [vmem:[%s232 + $0x2c] sm:$0xf]
        %v608 = vld [vmem:[%s232 + $0x30] sm:$0xf]
        %v609 = vld [vmem:[%s232 + $0x34] sm:$0xf]
        %v610 = vld [vmem:[%s232 + $0x38] sm:$0x1]
        %v611 = vld [vmem:[%s232 + $0x3c] sm:$0xf]
        %v612 = vld [vmem:[%s232 + $0x40] sm:$0xf]
        %v613 = vld [vmem:[%s232 + $0x44] sm:$0xf]
        %v614 = vld [vmem:[%s232 + $0x48] sm:$0xf]
        %v615 = vld [vmem:[%s232 + $0x4c] sm:$0x1]
        %v616 = vld [vmem:[%s232 + $0x50] sm:$0xf]
        %v617 = vld [vmem:[%s232 + $0x54] sm:$0xf]
        %v618 = vld [vmem:[%s232 + $0x58] sm:$0xf]
        %v619 = vld [vmem:[%s232 + $0x5c] sm:$0xf]
        %v620 = vld [vmem:[%s232 + $0x60] sm:$0x1]
        %v621 = vld [vmem:[%s232 + $0x64] sm:$0xf]
        %v622 = vld [vmem:[%s232 + $0x68] sm:$0xf]
        %v623 = vld [vmem:[%s232 + $0x6c] sm:$0xf]
        %v624 = vld [vmem:[%s232 + $0x70] sm:$0xf]
        %v625 = vld [vmem:[%s232 + $0x74] sm:$0x1]
        %v626 = vld [vmem:[%s232 + $0x78] sm:$0xf]
        %v627 = vld [vmem:[%s232 + $0x7c] sm:$0xf]
        %v628 = vld [vmem:[%s232 + $0x80] sm:$0xf]
        %v629 = vld [vmem:[%s232 + $0x84] sm:$0xf]
        %v630 = vld [vmem:[%s232 + $0x88] sm:$0x1]
        %v631 = vld [vmem:[%s232 + $0x8c] sm:$0xf]
        %v632 = vld [vmem:[%s232 + $0x90] sm:$0xf]
        %v633 = vld [vmem:[%s232 + $0x94] sm:$0xf]
        %v634 = vld [vmem:[%s232 + $0x98] sm:$0xf]
        %v635 = vld [vmem:[%s232 + $0x9c] sm:$0x1]
        %v636 = vld [vmem:[%s232 + $0xa0] sm:$0xf]
        %v637 = vld [vmem:[%s232 + $0xa4] sm:$0xf]
        %v638 = vld [vmem:[%s232 + $0xa8] sm:$0xf]
        %v639 = vld [vmem:[%s232 + $0xac] sm:$0xf]
        %v640 = vld [vmem:[%s232 + $0xb0] sm:$0x1]
        %v641 = vld [vmem:[%s232 + $0xb4] sm:$0xf]
        %v642 = vld [vmem:[%s232 + $0xb8] sm:$0xf]
        %v643 = vld [vmem:[%s232 + $0xbc] sm:$0xf]
        %v644 = vld [vmem:[%s232 + $0xc0] sm:$0xf]
        %v645 = vld [vmem:[%s232 + $0xc4] sm:$0x1]
        %v646 = vld [vmem:[%s232 + $0xc8] sm:$0xf]
        %v647 = vld [vmem:[%s232 + $0xcc] sm:$0xf]
        %v648 = vld [vmem:[%s232 + $0xd0] sm:$0xf]
        %v649 = vld [vmem:[%s232 + $0xd4] sm:$0xf]
        %v650 = vld [vmem:[%s232 + $0xd8] sm:$0x1]
        %v651 = vld [vmem:[%s232 + $0xdc] sm:$0xf]
        %v652 = vld [vmem:[%s232 + $0xe0] sm:$0xf]
        %v653 = vld [vmem:[%s232 + $0xe4] sm:$0xf]
        %v654 = vld [vmem:[%s232 + $0xe8] sm:$0xf]
        %v655 = vld [vmem:[%s232 + $0xec] sm:$0x1]
        %v656 = vld [vmem:[%s232 + $0xf0] sm:$0xf]
        %v657 = vld [vmem:[%s232 + $0xf4] sm:$0xf]
        %v658 = vld [vmem:[%s232 + $0xf8] sm:$0xf]
        %v659 = vld [vmem:[%s232 + $0xfc] sm:$0xf]
        %v660 = vld [vmem:[%s232 + $0x100] sm:$0x1]
        %v661 = vld [vmem:[%s232 + $0x104] sm:$0xf]
        %v662 = vld [vmem:[%s232 + $0x108] sm:$0xf]
        %v663 = vld [vmem:[%s232 + $0x10c] sm:$0xf]
        %v664 = vld [vmem:[%s232 + $0x110] sm:$0xf]
        %v665 = vld [vmem:[%s232 + $0x114] sm:$0x1]
        %v666 = vld [vmem:[%s232 + $0x118] sm:$0xf]
        %v667 = vld [vmem:[%s232 + $0x11c] sm:$0xf]
        %v668 = vld [vmem:[%s232 + $0x120] sm:$0xf]
        %v669 = vld [vmem:[%s232 + $0x124] sm:$0xf]
        %v670 = vld [vmem:[%s232 + $0x128] sm:$0x1]
        %v671 = vld [vmem:[%s232 + $0x12c] sm:$0xf]
        %v672 = vld [vmem:[%s232 + $0x130] sm:$0xf]
        %v673 = vld [vmem:[%s232 + $0x134] sm:$0xf]
        %v674 = vld [vmem:[%s232 + $0x138] sm:$0xf]
        %v675 = vld [vmem:[%s232 + $0x13c] sm:$0x1]
        %vm676 = vsmask.f32 3328
        %vm677 = vsmask.f32 7440
        %vm678 = vmor %vm676, %vm677
        %v680 = vshrl.u32 %v596, 16
        %v682 = vrot.slane %v680, 4
        %v683 = vshll.u32 %v596, 16
        %v685 = vrot.slane %v683, 5
        %v686 = vor.u32 %v682, %v685
        %v687 = vrot.slane %v686, 4
        %v689 = vshll.u32 %v597, 16
        %v691 = vrot.slane %v689, 5
        %v692 = vsel %vm678, %v687, %v691
        %v693 = vshrl.u32 %v597, 16
        %v695 = vrot.slane %v693, 4
        %v696 = vor.u32 %v695, %v691
        %v697 = vrot.slane %v696, 4
        %v699 = vshll.u32 %v598, 16
        %v701 = vrot.slane %v699, 5
        %v702 = vsel %vm678, %v697, %v701
        %v703 = vshrl.u32 %v598, 16
        %v705 = vrot.slane %v703, 4
        %v706 = vor.u32 %v705, %v701
        %v707 = vrot.slane %v706, 4
        %v709 = vshll.u32 %v599, 16
        %v711 = vrot.slane %v709, 5
        %v712 = vsel %vm678, %v707, %v711
        %v713 = vshrl.u32 %v599, 16
        %v715 = vrot.slane %v713, 4
        %v716 = vor.u32 %v715, %v711
        %v717 = vrot.slane %v716, 4
        %v719 = vshll.u32 %v600, 16
        %v721 = vrot.slane %v719, 5
        %v722 = vsel %vm678, %v717, %v721
        %v724 = vshrl.u32 %v601, 16
        %v726 = vrot.slane %v724, 4
        %v727 = vshll.u32 %v601, 16
        %v729 = vrot.slane %v727, 5
        %v730 = vor.u32 %v726, %v729
        %v731 = vrot.slane %v730, 4
        %v733 = vshll.u32 %v602, 16
        %v735 = vrot.slane %v733, 5
        %v736 = vsel %vm678, %v731, %v735
        %v737 = vshrl.u32 %v602, 16
        %v739 = vrot.slane %v737, 4
        %v740 = vor.u32 %v739, %v735
        %v741 = vrot.slane %v740, 4
        %v743 = vshll.u32 %v603, 16
        %v745 = vrot.slane %v743, 5
        %v746 = vsel %vm678, %v741, %v745
        %v747 = vshrl.u32 %v603, 16
        %v749 = vrot.slane %v747, 4
        %v750 = vor.u32 %v749, %v745
        %v751 = vrot.slane %v750, 4
        %v753 = vshll.u32 %v604, 16
        %v755 = vrot.slane %v753, 5
        %v756 = vsel %vm678, %v751, %v755
        %v757 = vshrl.u32 %v604, 16
        %v759 = vrot.slane %v757, 4
        %v760 = vor.u32 %v759, %v755
        %v761 = vrot.slane %v760, 4
        %v763 = vshll.u32 %v605, 16
        %v765 = vrot.slane %v763, 5
        %v766 = vsel %vm678, %v761, %v765
        %v768 = vshrl.u32 %v606, 16
        %v770 = vrot.slane %v768, 4
        %v771 = vshll.u32 %v606, 16
        %v773 = vrot.slane %v771, 5
        %v774 = vor.u32 %v770, %v773
        %v775 = vrot.slane %v774, 4
        %v777 = vshll.u32 %v607, 16
        %v779 = vrot.slane %v777, 5
        %v780 = vsel %vm678, %v775, %v779
        %v781 = vshrl.u32 %v607, 16
        %v783 = vrot.slane %v781, 4
        %v784 = vor.u32 %v783, %v779
        %v785 = vrot.slane %v784, 4
        %v787 = vshll.u32 %v608, 16
        %v789 = vrot.slane %v787, 5
        %v790 = vsel %vm678, %v785, %v789
        %v791 = vshrl.u32 %v608, 16
        %v793 = vrot.slane %v791, 4
        %v794 = vor.u32 %v793, %v789
        %v795 = vrot.slane %v794, 4
        %v797 = vshll.u32 %v609, 16
        %v799 = vrot.slane %v797, 5
        %v800 = vsel %vm678, %v795, %v799
        %v801 = vshrl.u32 %v609, 16
        %v803 = vrot.slane %v801, 4
        %v804 = vor.u32 %v803, %v799
        %v805 = vrot.slane %v804, 4
        %v807 = vshll.u32 %v610, 16
        %v809 = vrot.slane %v807, 5
        %v810 = vsel %vm678, %v805, %v809
        %v812 = vshrl.u32 %v611, 16
        %v814 = vrot.slane %v812, 4
        %v815 = vshll.u32 %v611, 16
        %v817 = vrot.slane %v815, 5
        %v818 = vor.u32 %v814, %v817
        %v819 = vrot.slane %v818, 4
        %v821 = vshll.u32 %v612, 16
        %v823 = vrot.slane %v821, 5
        %v824 = vsel %vm678, %v819, %v823
        %v825 = vshrl.u32 %v612, 16
        %v827 = vrot.slane %v825, 4
        %v828 = vor.u32 %v827, %v823
        %v829 = vrot.slane %v828, 4
        %v831 = vshll.u32 %v613, 16
        %v833 = vrot.slane %v831, 5
        %v834 = vsel %vm678, %v829, %v833
        %v835 = vshrl.u32 %v613, 16
        %v837 = vrot.slane %v835, 4
        %v838 = vor.u32 %v837, %v833
        %v839 = vrot.slane %v838, 4
        %v841 = vshll.u32 %v614, 16
        %v843 = vrot.slane %v841, 5
        %v844 = vsel %vm678, %v839, %v843
        %v845 = vshrl.u32 %v614, 16
        %v847 = vrot.slane %v845, 4
        %v848 = vor.u32 %v847, %v843
        %v849 = vrot.slane %v848, 4
        %v851 = vshll.u32 %v615, 16
        %v853 = vrot.slane %v851, 5
        %v854 = vsel %vm678, %v849, %v853
        %v856 = vshrl.u32 %v616, 16
        %v858 = vrot.slane %v856, 4
        %v859 = vshll.u32 %v616, 16
        %v861 = vrot.slane %v859, 5
        %v862 = vor.u32 %v858, %v861
        %v863 = vrot.slane %v862, 4
        %v865 = vshll.u32 %v617, 16
        %v867 = vrot.slane %v865, 5
        %v868 = vsel %vm678, %v863, %v867
        %v869 = vshrl.u32 %v617, 16
        %v871 = vrot.slane %v869, 4
        %v872 = vor.u32 %v871, %v867
        %v873 = vrot.slane %v872, 4
        %v875 = vshll.u32 %v618, 16
        %v877 = vrot.slane %v875, 5
        %v878 = vsel %vm678, %v873, %v877
        %v879 = vshrl.u32 %v618, 16
        %v881 = vrot.slane %v879, 4
        %v882 = vor.u32 %v881, %v877
        %v883 = vrot.slane %v882, 4
        %v885 = vshll.u32 %v619, 16
        %v887 = vrot.slane %v885, 5
        %v888 = vsel %vm678, %v883, %v887
        %v889 = vshrl.u32 %v619, 16
        %v891 = vrot.slane %v889, 4
        %v892 = vor.u32 %v891, %v887
        %v893 = vrot.slane %v892, 4
        %v895 = vshll.u32 %v620, 16
        %v897 = vrot.slane %v895, 5
        %v898 = vsel %vm678, %v893, %v897
        %v900 = vshrl.u32 %v621, 16
        %v902 = vrot.slane %v900, 4
        %v903 = vshll.u32 %v621, 16
        %v905 = vrot.slane %v903, 5
        %v906 = vor.u32 %v902, %v905
        %v907 = vrot.slane %v906, 4
        %v909 = vshll.u32 %v622, 16
        %v911 = vrot.slane %v909, 5
        %v912 = vsel %vm678, %v907, %v911
        %v913 = vshrl.u32 %v622, 16
        %v915 = vrot.slane %v913, 4
        %v916 = vor.u32 %v915, %v911
        %v917 = vrot.slane %v916, 4
        %v919 = vshll.u32 %v623, 16
        %v921 = vrot.slane %v919, 5
        %v922 = vsel %vm678, %v917, %v921
        %v923 = vshrl.u32 %v623, 16
        %v925 = vrot.slane %v923, 4
        %v926 = vor.u32 %v925, %v921
        %v927 = vrot.slane %v926, 4
        %v929 = vshll.u32 %v624, 16
        %v931 = vrot.slane %v929, 5
        %v932 = vsel %vm678, %v927, %v931
        %v933 = vshrl.u32 %v624, 16
        %v935 = vrot.slane %v933, 4
        %v936 = vor.u32 %v935, %v931
        %v937 = vrot.slane %v936, 4
        %v939 = vshll.u32 %v625, 16
        %v941 = vrot.slane %v939, 5
        %v942 = vsel %vm678, %v937, %v941
        %v944 = vshrl.u32 %v626, 16
        %v946 = vrot.slane %v944, 4
        %v947 = vshll.u32 %v626, 16
        %v949 = vrot.slane %v947, 5
        %v950 = vor.u32 %v946, %v949
        %v951 = vrot.slane %v950, 4
        %v953 = vshll.u32 %v627, 16
        %v955 = vrot.slane %v953, 5
        %v956 = vsel %vm678, %v951, %v955
        %v957 = vshrl.u32 %v627, 16
        %v959 = vrot.slane %v957, 4
        %v960 = vor.u32 %v959, %v955
        %v961 = vrot.slane %v960, 4
        %v963 = vshll.u32 %v628, 16
        %v965 = vrot.slane %v963, 5
        %v966 = vsel %vm678, %v961, %v965
        %v967 = vshrl.u32 %v628, 16
        %v969 = vrot.slane %v967, 4
        %v970 = vor.u32 %v969, %v965
        %v971 = vrot.slane %v970, 4
        %v973 = vshll.u32 %v629, 16
        %v975 = vrot.slane %v973, 5
        %v976 = vsel %vm678, %v971, %v975
        %v977 = vshrl.u32 %v629, 16
        %v979 = vrot.slane %v977, 4
        %v980 = vor.u32 %v979, %v975
        %v981 = vrot.slane %v980, 4
        %v983 = vshll.u32 %v630, 16
        %v985 = vrot.slane %v983, 5
        %v986 = vsel %vm678, %v981, %v985
        %v988 = vshrl.u32 %v631, 16
        %v990 = vrot.slane %v988, 4
        %v991 = vshll.u32 %v631, 16
        %v993 = vrot.slane %v991, 5
        %v994 = vor.u32 %v990, %v993
        %v995 = vrot.slane %v994, 4
        %v997 = vshll.u32 %v632, 16
        %v999 = vrot.slane %v997, 5
        %v1000 = vsel %vm678, %v995, %v999
        %v1001 = vshrl.u32 %v632, 16
        %v1003 = vrot.slane %v1001, 4
        %v1004 = vor.u32 %v1003, %v999
        %v1005 = vrot.slane %v1004, 4
        %v1007 = vshll.u32 %v633, 16
        %v1009 = vrot.slane %v1007, 5
        %v1010 = vsel %vm678, %v1005, %v1009
        %v1011 = vshrl.u32 %v633, 16
        %v1013 = vrot.slane %v1011, 4
        %v1014 = vor.u32 %v1013, %v1009
        %v1015 = vrot.slane %v1014, 4
        %v1017 = vshll.u32 %v634, 16
        %v1019 = vrot.slane %v1017, 5
        %v1020 = vsel %vm678, %v1015, %v1019
        %v1021 = vshrl.u32 %v634, 16
        %v1023 = vrot.slane %v1021, 4
        %v1024 = vor.u32 %v1023, %v1019
        %v1025 = vrot.slane %v1024, 4
        %v1027 = vshll.u32 %v635, 16
        %v1029 = vrot.slane %v1027, 5
        %v1030 = vsel %vm678, %v1025, %v1029
        %v1032 = vshrl.u32 %v636, 16
        %v1034 = vrot.slane %v1032, 4
        %v1035 = vshll.u32 %v636, 16
        %v1037 = vrot.slane %v1035, 5
        %v1038 = vor.u32 %v1034, %v1037
        %v1039 = vrot.slane %v1038, 4
        %v1041 = vshll.u32 %v637, 16
        %v1043 = vrot.slane %v1041, 5
        %v1044 = vsel %vm678, %v1039, %v1043
        %v1045 = vshrl.u32 %v637, 16
        %v1047 = vrot.slane %v1045, 4
        %v1048 = vor.u32 %v1047, %v1043
        %v1049 = vrot.slane %v1048, 4
        %v1051 = vshll.u32 %v638, 16
        %v1053 = vrot.slane %v1051, 5
        %v1054 = vsel %vm678, %v1049, %v1053
        %v1055 = vshrl.u32 %v638, 16
        %v1057 = vrot.slane %v1055, 4
        %v1058 = vor.u32 %v1057, %v1053
        %v1059 = vrot.slane %v1058, 4
        %v1061 = vshll.u32 %v639, 16
        %v1063 = vrot.slane %v1061, 5
        %v1064 = vsel %vm678, %v1059, %v1063
        %v1065 = vshrl.u32 %v639, 16
        %v1067 = vrot.slane %v1065, 4
        %v1068 = vor.u32 %v1067, %v1063
        %v1069 = vrot.slane %v1068, 4
        %v1071 = vshll.u32 %v640, 16
        %v1073 = vrot.slane %v1071, 5
        %v1074 = vsel %vm678, %v1069, %v1073
        %v1076 = vshrl.u32 %v641, 16
        %v1078 = vrot.slane %v1076, 4
        %v1079 = vshll.u32 %v641, 16
        %v1081 = vrot.slane %v1079, 5
        %v1082 = vor.u32 %v1078, %v1081
        %v1083 = vrot.slane %v1082, 4
        %v1085 = vshll.u32 %v642, 16
        %v1087 = vrot.slane %v1085, 5
        %v1088 = vsel %vm678, %v1083, %v1087
        %v1089 = vshrl.u32 %v642, 16
        %v1091 = vrot.slane %v1089, 4
        %v1092 = vor.u32 %v1091, %v1087
        %v1093 = vrot.slane %v1092, 4
        %v1095 = vshll.u32 %v643, 16
        %v1097 = vrot.slane %v1095, 5
        %v1098 = vsel %vm678, %v1093, %v1097
        %v1099 = vshrl.u32 %v643, 16
        %v1101 = vrot.slane %v1099, 4
        %v1102 = vor.u32 %v1101, %v1097
        %v1103 = vrot.slane %v1102, 4
        %v1105 = vshll.u32 %v644, 16
        %v1107 = vrot.slane %v1105, 5
        %v1108 = vsel %vm678, %v1103, %v1107
        %v1109 = vshrl.u32 %v644, 16
        %v1111 = vrot.slane %v1109, 4
        %v1112 = vor.u32 %v1111, %v1107
        %v1113 = vrot.slane %v1112, 4
        %v1115 = vshll.u32 %v645, 16
        %v1117 = vrot.slane %v1115, 5
        %v1118 = vsel %vm678, %v1113, %v1117
        %v1120 = vshrl.u32 %v646, 16
        %v1122 = vrot.slane %v1120, 4
        %v1123 = vshll.u32 %v646, 16
        %v1125 = vrot.slane %v1123, 5
        %v1126 = vor.u32 %v1122, %v1125
        %v1127 = vrot.slane %v1126, 4
        %v1129 = vshll.u32 %v647, 16
        %v1131 = vrot.slane %v1129, 5
        %v1132 = vsel %vm678, %v1127, %v1131
        %v1133 = vshrl.u32 %v647, 16
        %v1135 = vrot.slane %v1133, 4
        %v1136 = vor.u32 %v1135, %v1131
        %v1137 = vrot.slane %v1136, 4
        %v1139 = vshll.u32 %v648, 16
        %v1141 = vrot.slane %v1139, 5
        %v1142 = vsel %vm678, %v1137, %v1141
        %v1143 = vshrl.u32 %v648, 16
        %v1145 = vrot.slane %v1143, 4
        %v1146 = vor.u32 %v1145, %v1141
        %v1147 = vrot.slane %v1146, 4
        %v1149 = vshll.u32 %v649, 16
        %v1151 = vrot.slane %v1149, 5
        %v1152 = vsel %vm678, %v1147, %v1151
        %v1153 = vshrl.u32 %v649, 16
        %v1155 = vrot.slane %v1153, 4
        %v1156 = vor.u32 %v1155, %v1151
        %v1157 = vrot.slane %v1156, 4
        %v1159 = vshll.u32 %v650, 16
        %v1161 = vrot.slane %v1159, 5
        %v1162 = vsel %vm678, %v1157, %v1161
        %v1164 = vshrl.u32 %v651, 16
        %v1166 = vrot.slane %v1164, 4
        %v1167 = vshll.u32 %v651, 16
        %v1169 = vrot.slane %v1167, 5
        %v1170 = vor.u32 %v1166, %v1169
        %v1171 = vrot.slane %v1170, 4
        %v1173 = vshll.u32 %v652, 16
        %v1175 = vrot.slane %v1173, 5
        %v1176 = vsel %vm678, %v1171, %v1175
        %v1177 = vshrl.u32 %v652, 16
        %v1179 = vrot.slane %v1177, 4
        %v1180 = vor.u32 %v1179, %v1175
        %v1181 = vrot.slane %v1180, 4
        %v1183 = vshll.u32 %v653, 16
        %v1185 = vrot.slane %v1183, 5
        %v1186 = vsel %vm678, %v1181, %v1185
        %v1187 = vshrl.u32 %v653, 16
        %v1189 = vrot.slane %v1187, 4
        %v1190 = vor.u32 %v1189, %v1185
        %v1191 = vrot.slane %v1190, 4
        %v1193 = vshll.u32 %v654, 16
        %v1195 = vrot.slane %v1193, 5
        %v1196 = vsel %vm678, %v1191, %v1195
        %v1197 = vshrl.u32 %v654, 16
        %v1199 = vrot.slane %v1197, 4
        %v1200 = vor.u32 %v1199, %v1195
        %v1201 = vrot.slane %v1200, 4
        %v1203 = vshll.u32 %v655, 16
        %v1205 = vrot.slane %v1203, 5
        %v1206 = vsel %vm678, %v1201, %v1205
        %v1208 = vshrl.u32 %v656, 16
        %v1210 = vrot.slane %v1208, 4
        %v1211 = vshll.u32 %v656, 16
        %v1213 = vrot.slane %v1211, 5
        %v1214 = vor.u32 %v1210, %v1213
        %v1215 = vrot.slane %v1214, 4
        %v1217 = vshll.u32 %v657, 16
        %v1219 = vrot.slane %v1217, 5
        %v1220 = vsel %vm678, %v1215, %v1219
        %v1221 = vshrl.u32 %v657, 16
        %v1223 = vrot.slane %v1221, 4
        %v1224 = vor.u32 %v1223, %v1219
        %v1225 = vrot.slane %v1224, 4
        %v1227 = vshll.u32 %v658, 16
        %v1229 = vrot.slane %v1227, 5
        %v1230 = vsel %vm678, %v1225, %v1229
        %v1231 = vshrl.u32 %v658, 16
        %v1233 = vrot.slane %v1231, 4
        %v1234 = vor.u32 %v1233, %v1229
        %v1235 = vrot.slane %v1234, 4
        %v1237 = vshll.u32 %v659, 16
        %v1239 = vrot.slane %v1237, 5
        %v1240 = vsel %vm678, %v1235, %v1239
        %v1241 = vshrl.u32 %v659, 16
        %v1243 = vrot.slane %v1241, 4
        %v1244 = vor.u32 %v1243, %v1239
        %v1245 = vrot.slane %v1244, 4
        %v1247 = vshll.u32 %v660, 16
        %v1249 = vrot.slane %v1247, 5
        %v1250 = vsel %vm678, %v1245, %v1249
        %v1252 = vshrl.u32 %v661, 16
        %v1254 = vrot.slane %v1252, 4
        %v1255 = vshll.u32 %v661, 16
        %v1257 = vrot.slane %v1255, 5
        %v1258 = vor.u32 %v1254, %v1257
        %v1259 = vrot.slane %v1258, 4
        %v1261 = vshll.u32 %v662, 16
        %v1263 = vrot.slane %v1261, 5
        %v1264 = vsel %vm678, %v1259, %v1263
        %v1265 = vshrl.u32 %v662, 16
        %v1267 = vrot.slane %v1265, 4
        %v1268 = vor.u32 %v1267, %v1263
        %v1269 = vrot.slane %v1268, 4
        %v1271 = vshll.u32 %v663, 16
        %v1273 = vrot.slane %v1271, 5
        %v1274 = vsel %vm678, %v1269, %v1273
        %v1275 = vshrl.u32 %v663, 16
        %v1277 = vrot.slane %v1275, 4
        %v1278 = vor.u32 %v1277, %v1273
        %v1279 = vrot.slane %v1278, 4
        %v1281 = vshll.u32 %v664, 16
        %v1283 = vrot.slane %v1281, 5
        %v1284 = vsel %vm678, %v1279, %v1283
        %v1285 = vshrl.u32 %v664, 16
        %v1287 = vrot.slane %v1285, 4
        %v1288 = vor.u32 %v1287, %v1283
        %v1289 = vrot.slane %v1288, 4
        %v1291 = vshll.u32 %v665, 16
        %v1293 = vrot.slane %v1291, 5
        %v1294 = vsel %vm678, %v1289, %v1293
        %v1296 = vshrl.u32 %v666, 16
        %v1298 = vrot.slane %v1296, 4
        %v1299 = vshll.u32 %v666, 16
        %v1301 = vrot.slane %v1299, 5
        %v1302 = vor.u32 %v1298, %v1301
        %v1303 = vrot.slane %v1302, 4
        %v1305 = vshll.u32 %v667, 16
        %v1307 = vrot.slane %v1305, 5
        %v1308 = vsel %vm678, %v1303, %v1307
        %v1309 = vshrl.u32 %v667, 16
        %v1311 = vrot.slane %v1309, 4
        %v1312 = vor.u32 %v1311, %v1307
        %v1313 = vrot.slane %v1312, 4
        %v1315 = vshll.u32 %v668, 16
        %v1317 = vrot.slane %v1315, 5
        %v1318 = vsel %vm678, %v1313, %v1317
        %v1319 = vshrl.u32 %v668, 16
        %v1321 = vrot.slane %v1319, 4
        %v1322 = vor.u32 %v1321, %v1317
        %v1323 = vrot.slane %v1322, 4
        %v1325 = vshll.u32 %v669, 16
        %v1327 = vrot.slane %v1325, 5
        %v1328 = vsel %vm678, %v1323, %v1327
        %v1329 = vshrl.u32 %v669, 16
        %v1331 = vrot.slane %v1329, 4
        %v1332 = vor.u32 %v1331, %v1327
        %v1333 = vrot.slane %v1332, 4
        %v1335 = vshll.u32 %v670, 16
        %v1337 = vrot.slane %v1335, 5
        %v1338 = vsel %vm678, %v1333, %v1337
        %v1340 = vshrl.u32 %v671, 16
        %v1342 = vrot.slane %v1340, 4
        %v1343 = vshll.u32 %v671, 16
        %v1345 = vrot.slane %v1343, 5
        %v1346 = vor.u32 %v1342, %v1345
        %v1347 = vrot.slane %v1346, 4
        %v1349 = vshll.u32 %v672, 16
        %v1351 = vrot.slane %v1349, 5
        %v1352 = vsel %vm678, %v1347, %v1351
        %v1353 = vshrl.u32 %v672, 16
        %v1355 = vrot.slane %v1353, 4
        %v1356 = vor.u32 %v1355, %v1351
        %v1357 = vrot.slane %v1356, 4
        %v1359 = vshll.u32 %v673, 16
        %v1361 = vrot.slane %v1359, 5
        %v1362 = vsel %vm678, %v1357, %v1361
        %v1363 = vshrl.u32 %v673, 16
        %v1365 = vrot.slane %v1363, 4
        %v1366 = vor.u32 %v1365, %v1361
        %v1367 = vrot.slane %v1366, 4
        %v1369 = vshll.u32 %v674, 16
        %v1371 = vrot.slane %v1369, 5
        %v1372 = vsel %vm678, %v1367, %v1371
        %v1373 = vshrl.u32 %v674, 16
        %v1375 = vrot.slane %v1373, 4
        %v1376 = vor.u32 %v1375, %v1371
        %v1377 = vrot.slane %v1376, 4
        %v1379 = vshll.u32 %v675, 16
        %v1381 = vrot.slane %v1379, 5
        %v1382 = vsel %vm678, %v1377, %v1381
        %s1383 = sadd.s32 %s312, 1
        %s1384 = smul.u32 %s1383, 2
        %s1385 = smul.addr %s1384, 4
        %s1386 = scalar_lea.vmem %s1, %s1385
        %v1387 = vld [vmem:[%s1386] sm:$0xf]
        %v1388 = vld [vmem:[%s1386 + $0x4] sm:$0x3]
        %v1389 = vld [vmem:[#allocation2] sm:$0xff]
        %v1390 = vld [vmem:[#allocation2 + $0x8] sm:$0xff]
        %v1391 = vld [vmem:[#allocation2 + $0x10] sm:$0xff]
        %v1392 = vld [vmem:[#allocation2 + $0x18] sm:$0xff]
        %v1393 = vld [vmem:[#allocation2 + $0x20] sm:$0xf]
        %v1394 = vld [vmem:[#allocation2 + $0x28] sm:$0xf]
        %v1395 = vld [vmem:[#allocation2 + $0x30] sm:$0xf]
        %v1396 = vld [vmem:[#allocation2 + $0x38] sm:$0xf]
        %v1399 = vunpack.c.l.b16 %v1387
        %v1400 = vunpack.c.l.b16 %v1388
        %v1401 = vpack.c.b16 %v1400, %v1399
        %v1403 = vunpack.c.l.b16 %v692
        %v1404 = vunpack.c.l.b16 %v702
        %v1405 = vunpack.c.l.b16 %v712
        %v1406 = vunpack.c.l.b16 %v722
        %v1407 = vunpack.c.l.b16 %v736
        %v1408 = vunpack.c.l.b16 %v746
        %v1409 = vunpack.c.l.b16 %v756
        %v1410 = vunpack.c.l.b16 %v766
        %v1411 = vunpack.c.l.b16 %v780
        %v1412 = vunpack.c.l.b16 %v790
        %v1413 = vunpack.c.l.b16 %v800
        %v1414 = vunpack.c.l.b16 %v810
        %v1415 = vunpack.c.l.b16 %v824
        %v1416 = vunpack.c.l.b16 %v834
        %v1417 = vunpack.c.l.b16 %v844
        %v1418 = vunpack.c.l.b16 %v854
        %v1419 = vunpack.c.l.b16 %v868
        %v1420 = vunpack.c.l.b16 %v878
        %v1421 = vunpack.c.l.b16 %v888
        %v1422 = vunpack.c.l.b16 %v898
        %v1423 = vunpack.c.l.b16 %v912
        %v1424 = vunpack.c.l.b16 %v922
        %v1425 = vunpack.c.l.b16 %v932
        %v1426 = vunpack.c.l.b16 %v942
        %v1427 = vunpack.c.l.b16 %v956
        %v1428 = vunpack.c.l.b16 %v966
        %v1429 = vunpack.c.l.b16 %v976
        %v1430 = vunpack.c.l.b16 %v986
        %v1431 = vunpack.c.l.b16 %v1000
        %v1432 = vunpack.c.l.b16 %v1010
        %v1433 = vunpack.c.l.b16 %v1020
        %v1434 = vunpack.c.l.b16 %v1030
        %v1435 = vunpack.c.l.b16 %v1044
        %v1436 = vunpack.c.l.b16 %v1054
        %v1437 = vunpack.c.l.b16 %v1064
        %v1438 = vunpack.c.l.b16 %v1074
        %v1439 = vunpack.c.l.b16 %v1088
        %v1440 = vunpack.c.l.b16 %v1098
        %v1441 = vunpack.c.l.b16 %v1108
        %v1442 = vunpack.c.l.b16 %v1118
        %v1443 = vunpack.c.l.b16 %v1132
        %v1444 = vunpack.c.l.b16 %v1142
        %v1445 = vunpack.c.l.b16 %v1152
        %v1446 = vunpack.c.l.b16 %v1162
        %v1447 = vunpack.c.l.b16 %v1176
        %v1448 = vunpack.c.l.b16 %v1186
        %v1449 = vunpack.c.l.b16 %v1196
        %v1450 = vunpack.c.l.b16 %v1206
        %v1451 = vunpack.c.l.b16 %v1220
        %v1452 = vunpack.c.l.b16 %v1230
        %v1453 = vunpack.c.l.b16 %v1240
        %v1454 = vunpack.c.l.b16 %v1250
        %v1455 = vunpack.c.l.b16 %v1264
        %v1456 = vunpack.c.l.b16 %v1274
        %v1457 = vunpack.c.l.b16 %v1284
        %v1458 = vunpack.c.l.b16 %v1294
        %v1459 = vunpack.c.l.b16 %v1308
        %v1460 = vunpack.c.l.b16 %v1318
        %v1461 = vunpack.c.l.b16 %v1328
        %v1462 = vunpack.c.l.b16 %v1338
        %v1463 = vunpack.c.l.b16 %v1352
        %v1464 = vunpack.c.l.b16 %v1362
        %v1465 = vunpack.c.l.b16 %v1372
        %v1466 = vunpack.c.l.b16 %v1382
        %v1467 = vpack.c.b16 %v1404, %v1403
        %v1468 = vpack.c.b16 %v1406, %v1405
        %v1469 = vpack.c.b16 %v1408, %v1407
        %v1470 = vpack.c.b16 %v1410, %v1409
        %v1471 = vpack.c.b16 %v1412, %v1411
        %v1472 = vpack.c.b16 %v1414, %v1413
        %v1473 = vpack.c.b16 %v1416, %v1415
        %v1474 = vpack.c.b16 %v1418, %v1417
        %v1475 = vpack.c.b16 %v1420, %v1419
        %v1476 = vpack.c.b16 %v1422, %v1421
        %v1477 = vpack.c.b16 %v1424, %v1423
        %v1478 = vpack.c.b16 %v1426, %v1425
        %v1479 = vpack.c.b16 %v1428, %v1427
        %v1480 = vpack.c.b16 %v1430, %v1429
        %v1481 = vpack.c.b16 %v1432, %v1431
        %v1482 = vpack.c.b16 %v1434, %v1433
        %v1483 = vpack.c.b16 %v1436, %v1435
        %v1484 = vpack.c.b16 %v1438, %v1437
        %v1485 = vpack.c.b16 %v1440, %v1439
        %v1486 = vpack.c.b16 %v1442, %v1441
        %v1487 = vpack.c.b16 %v1444, %v1443
        %v1488 = vpack.c.b16 %v1446, %v1445
        %v1489 = vpack.c.b16 %v1448, %v1447
        %v1490 = vpack.c.b16 %v1450, %v1449
        %v1491 = vpack.c.b16 %v1452, %v1451
        %v1492 = vpack.c.b16 %v1454, %v1453
        %v1493 = vpack.c.b16 %v1456, %v1455
        %v1494 = vpack.c.b16 %v1458, %v1457
        %v1495 = vpack.c.b16 %v1460, %v1459
        %v1496 = vpack.c.b16 %v1462, %v1461
        %v1497 = vpack.c.b16 %v1464, %v1463
        %v1498 = vpack.c.b16 %v1466, %v1465
        %1531 = vmatpush.bf16.xpose.msra.mxu0 %v1474
        %1532 = vmatpush.bf16.xpose.msra.mxu0 %v1473
        %1533 = vmatpush.bf16.xpose.msra.mxu0 %v1472
        %1534 = vmatpush.bf16.xpose.msra.mxu0 %v1471
        %1535 = vmatpush.bf16.xpose.msra.mxu0 %v1470
        %1536 = vmatpush.bf16.xpose.msra.mxu0 %v1469
        %1537 = vmatpush.bf16.xpose.msra.mxu0 %v1468
        %1538 = vmatpush.bf16.xpose.msra.mxu0 %v1467
        %1539 = vmatmul.bf16.gmra.mxu0 %v1401
        %v1540 = vpop.f32.mrf.mxu0
        %v1541 = vadd.f32 0.0, %v1540
        %v1542 = vpop.f32.mrf.mxu0
        %v1543 = vadd.f32 0.0, %v1542
        %1544 = vdwg.mxu0
        %1545 = vmatpush.bf16.xpose.msra.mxu0 %v1482
        %1546 = vmatpush.bf16.xpose.msra.mxu0 %v1481
        %1547 = vmatpush.bf16.xpose.msra.mxu0 %v1480
        %1548 = vmatpush.bf16.xpose.msra.mxu0 %v1479
        %1549 = vmatpush.bf16.xpose.msra.mxu0 %v1478
        %1550 = vmatpush.bf16.xpose.msra.mxu0 %v1477
        %1551 = vmatpush.bf16.xpose.msra.mxu0 %v1476
        %1552 = vmatpush.bf16.xpose.msra.mxu0 %v1475
        %1553 = vmatmul.bf16.gmra.mxu0 %v1401
        %v1554 = vpop.f32.mrf.mxu0
        %v1555 = vadd.f32 0.0, %v1554
        %v1556 = vpop.f32.mrf.mxu0
        %v1557 = vadd.f32 0.0, %v1556
        %1558 = vdwg.mxu0
        %1559 = vmatpush.bf16.xpose.msra.mxu0 %v1490
        %1560 = vmatpush.bf16.xpose.msra.mxu0 %v1489
        %1561 = vmatpush.bf16.xpose.msra.mxu0 %v1488
        %1562 = vmatpush.bf16.xpose.msra.mxu0 %v1487
        %1563 = vmatpush.bf16.xpose.msra.mxu0 %v1486
        %1564 = vmatpush.bf16.xpose.msra.mxu0 %v1485
        %1565 = vmatpush.bf16.xpose.msra.mxu0 %v1484
        %1566 = vmatpush.bf16.xpose.msra.mxu0 %v1483
        %1567 = vmatmul.bf16.gmra.mxu0 %v1401
        %v1568 = vpop.f32.mrf.mxu0
        %v1569 = vadd.f32 0.0, %v1568
        %v1570 = vpop.f32.mrf.mxu0
        %v1571 = vadd.f32 0.0, %v1570
        %1572 = vdwg.mxu0
        %1573 = vmatpush.bf16.xpose.msra.mxu0 %v1498
        %1574 = vmatpush.bf16.xpose.msra.mxu0 %v1497
        %1575 = vmatpush.bf16.xpose.msra.mxu0 %v1496
        %1576 = vmatpush.bf16.xpose.msra.mxu0 %v1495
        %1577 = vmatpush.bf16.xpose.msra.mxu0 %v1494
        %1578 = vmatpush.bf16.xpose.msra.mxu0 %v1493
        %1579 = vmatpush.bf16.xpose.msra.mxu0 %v1492
        %1580 = vmatpush.bf16.xpose.msra.mxu0 %v1491
        %1581 = vmatmul.bf16.gmra.mxu0 %v1401
        %v1582 = vpop.f32.mrf.mxu0
        %v1583 = vadd.f32 0.0, %v1582
        %v1584 = vpop.f32.mrf.mxu0
        %v1585 = vadd.f32 0.0, %v1584
        %1586 = vdwg.mxu0
        %v1587 = vadd.f32 %v1389, %v1541
        %v1588 = vadd.f32 %v1390, %v1555
        %v1589 = vadd.f32 %v1391, %v1569
        %v1590 = vadd.f32 %v1392, %v1583
        %v1591 = vadd.f32 %v1393, %v1543
        %v1592 = vadd.f32 %v1394, %v1557
        %v1593 = vadd.f32 %v1395, %v1571
        %v1594 = vadd.f32 %v1396, %v1585
        %1595 = vst [vmem:[#allocation2] sm:$0xff] %v1587
        %1596 = vst [vmem:[#allocation2 + $0x8] sm:$0xff] %v1588
        %1597 = vst [vmem:[#allocation2 + $0x10] sm:$0xff] %v1589
        %1598 = vst [vmem:[#allocation2 + $0x18] sm:$0xff] %v1590
        %1599 = vst [vmem:[#allocation2 + $0x20] sm:$0xf] %v1591
        %1600 = vst [vmem:[#allocation2 + $0x28] sm:$0xf] %v1592
        %1601 = vst [vmem:[#allocation2 + $0x30] sm:$0xf] %v1593
        %1602 = vst [vmem:[#allocation2 + $0x38] sm:$0xf] %v1594
        %p1603 = scmp.eq.s32.totalorder %s23, 3
        // Predicated region
        $region37: #{video_decoder_forward.7} parent=31 // pred_check
          %p1604 = pneg %p1603
        $region38: #{video_decoder_forward.7} parent=31 // pred_check_branch
          %1606 = sbr.rel (%p1604) target = $region40
        $region39: #{video_decoder_forward.7} parent=31 // pred_region
          %v1607 = vld [vmem:[#allocation2] sm:$0xff]
          %v1608 = vld [vmem:[#allocation2 + $0x8] sm:$0xff]
          %v1609 = vld [vmem:[#allocation2 + $0x10] sm:$0xff]
          %v1610 = vld [vmem:[#allocation2 + $0x18] sm:$0xff]
          %v1611 = vld [vmem:[#allocation2 + $0x20] sm:$0xf]
          %v1612 = vld [vmem:[#allocation2 + $0x28] sm:$0xf]
          %v1613 = vld [vmem:[#allocation2 + $0x30] sm:$0xf]
          %v1614 = vld [vmem:[#allocation2 + $0x38] sm:$0xf]
          %v1615 = vld [vmem:[%s2] sm:$0xff]
          %v1616 = vld [vmem:[%s2 + $0x8] sm:$0xf]
          %1618 = vset.pattern.permute.xlu0 0
          %1619 = vperm.xlu0 %1618, %v1615
          %v1620 = vpop.permute.xlu0 %1619
          %1623 = vset.pattern.permute.xlu0 0
          %1624 = vperm.xlu0 %1623, %v1616
          %v1625 = vpop.permute.xlu0 %1624
          %v1627 = vadd.f32 %v1607, %v1620
          %v1628 = vadd.f32 %v1608, %v1620
          %v1629 = vadd.f32 %v1609, %v1620
          %v1630 = vadd.f32 %v1610, %v1620
          %v1631 = vadd.f32 %v1611, %v1625
          %v1632 = vadd.f32 %v1612, %v1625
          %v1633 = vadd.f32 %v1613, %v1625
          %v1634 = vadd.f32 %v1614, %v1625
          %v1635 = vmax.f32 %v1627, 0.0
          %v1636 = vmax.f32 %v1628, 0.0
          %v1637 = vmax.f32 %v1629, 0.0
          %v1638 = vmax.f32 %v1630, 0.0
          %v1639 = vmax.f32 %v1631, 0.0
          %v1640 = vmax.f32 %v1632, 0.0
          %v1641 = vmax.f32 %v1633, 0.0
          %v1642 = vmax.f32 %v1634, 0.0
          %1643 = vst [vmem:[%s217] sm:$0xff] %v1635
          %1644 = vst [vmem:[%s217 + $0x8] sm:$0xff] %v1636
          %1645 = vst [vmem:[%s217 + $0x10] sm:$0xff] %v1637
          %1646 = vst [vmem:[%s217 + $0x18] sm:$0xff] %v1638
          %1647 = vst [vmem:[%s217 + $0x20] sm:$0xf] %v1639
          %1648 = vst [vmem:[%s217 + $0x28] sm:$0xf] %v1640
          %1649 = vst [vmem:[%s217 + $0x30] sm:$0xf] %v1641
          %1650 = vst [vmem:[%s217 + $0x38] sm:$0xf] %v1642
        $region40: #{video_decoder_forward.7} parent=31 // pred_fallthru
          _
        %s1651 = sand.u32 %s126, 1
        %s1652 = sand.u32 %s126, 1
        %s1653 = smul.addr %s1652, 64
        %s1654 = scalar_lea.vmem [#allocation3], %s1653
        // Predicated region
        $region41: #{video_decoder_forward.7} parent=31 // pred_check
          %p1655 = pneg %p136
        $region42: #{video_decoder_forward.7} parent=31 // pred_check_branch
          %1657 = sbr.rel (%p1655) target = $region44
        $region43: #{video_decoder_forward.7} parent=31 // pred_region
          %s1658 = smul.u32 4, %s22
          %s1659 = smul.addr %s21, 16
          %s1660 = sadd.s32 %s1658, %s1659
          %s1661 = smul.addr %s20, 96
          %s1662 = sadd.s32 %s1660, %s1661
          %s1663 = smul.addr %s1662, 8
          %s1664 = scalar_lea.vmem %s3, %s1663
          // Predicated region
          $region45: #{video_decoder_forward.7} parent=43 // pred_check
            _
          $region46: #{video_decoder_forward.7} parent=43 // pred_check_branch
            %1666 = sbr.rel (0) target = $region48
          $region47: #{video_decoder_forward.7} parent=43 // pred_region
            // Predicated region
            $region49: #{video_decoder_forward.7} parent=47 // pred_check
              _
            $region50: #{video_decoder_forward.7} parent=47 // pred_check_branch
              %1668 = sbr.rel (0) target = $region52
            $region51: #{video_decoder_forward.7} parent=47 // pred_region
              loop: start=0, step=1, limit=1
              $region53: #{video_decoder_forward.7} parent=51 // loop_pre_header
                _
              $region54: #{video_decoder_forward.7} parent=51 // loop_header
                %s1670 = sphi 0, %s1674
                %p1671 = scmp.ge.s32.totalorder %s1670, 1
                %s1675 = sphi %s1654, %s1654
                %s1676 = sphi %s1664, %s1664
              $region55: #{video_decoder_forward.7} parent=51 // loop_header_branch
                %1673 = sbr.rel (%p1671) target = $region59
              $region56: #{video_decoder_forward.7} parent=51 // loop_body
                %v1677 = vld [vmem:[%s1675] sm:$0xff]
                %1678 = vst [vmem:[%s1676] sm:$0xff] %v1677
                %v1679 = vld [vmem:[%s1675 + $0x8] sm:$0xff]
                %1680 = vst [vmem:[%s1676 + $0x8] sm:$0xff] %v1679
                %v1681 = vld [vmem:[%s1675 + $0x10] sm:$0xff]
                %1682 = vst [vmem:[%s1676 + $0x10] sm:$0xff] %v1681
                %v1683 = vld [vmem:[%s1675 + $0x18] sm:$0xff]
                %1684 = vst [vmem:[%s1676 + $0x18] sm:$0xff] %v1683
                %v1685 = vld [vmem:[%s1675 + $0x20] sm:$0xff]
                %1686 = vst [vmem:[%s1676 + $0x40] sm:$0xff] %v1685
                %v1687 = vld [vmem:[%s1675 + $0x28] sm:$0xff]
                %1688 = vst [vmem:[%s1676 + $0x48] sm:$0xff] %v1687
                %v1689 = vld [vmem:[%s1675 + $0x30] sm:$0xff]
                %1690 = vst [vmem:[%s1676 + $0x50] sm:$0xff] %v1689
                %v1691 = vld [vmem:[%s1675 + $0x38] sm:$0xff]
                %1692 = vst [vmem:[%s1676 + $0x58] sm:$0xff] %v1691
              $region57: #{video_decoder_forward.7} parent=51 // loop_footer
                %s1674 = sadd.s32 1, %s1670
              $region58: #{video_decoder_forward.7} parent=51 // loop_footer_branch
                %1669 = sbr.rel target = $region54
              $region59: #{video_decoder_forward.7} parent=51 // loop_exit
                _
            $region52: #{video_decoder_forward.7} parent=47 // pred_fallthru
              _
            // Predicated region
            $region60: #{video_decoder_forward.7} parent=47 // pred_check
              _
            $region61: #{video_decoder_forward.7} parent=47 // pred_check_branch
              %1694 = sbr.rel target = $region63
            $region62: #{video_decoder_forward.7} parent=47 // pred_region
              _
            $region63: #{video_decoder_forward.7} parent=47 // pred_fallthru
              _
          $region48: #{video_decoder_forward.7} parent=43 // pred_fallthru
            _
          %1695 = vnop
        $region44: #{video_decoder_forward.7} parent=31 // pred_fallthru
          _
      $region32: #{video_decoder_forward.7} parent=5 // pred_fallthru
        _
      %p1696 = scmp.le.s32.totalorder 2, %s9
      // Predicated region
      $region64: #{video_decoder_forward.7} parent=5 // pred_check
        %p1697 = pneg %p1696
      $region65: #{video_decoder_forward.7} parent=5 // pred_check_branch
        %1699 = sbr.rel (%p1697) target = $region67
      $region66: #{video_decoder_forward.7} parent=5 // pred_region
        %s1700 = ssub.s32 %s9, 2
        // Predicated region
        $region68: #{video_decoder_forward.7} parent=66 // pred_check
          %p1701 = pneg %p142
        $region69: #{video_decoder_forward.7} parent=66 // pred_check_branch
          %1703 = sbr.rel (%p1701) target = $region71
        $region70: #{video_decoder_forward.7} parent=66 // pred_region
          %s1704 = sand.u32 %s127, 1
          %s1705 = sand.u32 %s127, 1
          %s1706 = smul.addr %s1705, 64
          %s1707 = scalar_lea.vmem [#allocation3], %s1706
        $region71: #{video_decoder_forward.7} parent=66 // pred_fallthru
          _
      $region67: #{video_decoder_forward.7} parent=5 // pred_fallthru
        _
    $region6: #{video_decoder_forward.7} parent=1 // loop_footer
      %s13 = sadd.s32 1, %s9
    $region7: #{video_decoder_forward.7} parent=1 // loop_footer_branch
      %8 = sbr.rel target = $region3
    $region8: #{video_decoder_forward.7} parent=1 // loop_exit
      _

</llo_original>
